<compile_context>
chip_gen: v7x
topology: tpu7x:2x2x1
jax: 0.10.0
libtpu: 0.0.40
codegen_flags: <defaults>
</compile_context>

<pallas_src>
import jax
import jax.numpy as jnp
import numpy as np
from jax.experimental import pallas as pl
from jax.experimental.pallas import tpu as pltpu


# ----------------------------- Pallas kernels ------------------------------

def _conv_relu_pool_kernel(xe_ref, xo_ref, w_ref, b_ref, o_ref):
    """Fused 5x5 'same' conv + bias + ReLU + 2x2 max-pool for ONE image.

    xe_ref/xo_ref: even / odd rows of the zero-padded NHWC image, rows
                   flattened to (Hp/2, Wp*C).
    w_ref:         (2, K, Wp*C, Wo*O) banded weights; w_ref[dw, kh] maps an
                   input row block (shifted by kh) to the pooled output
                   columns with pool column-offset dw.
    b_ref:         (1, Wo*O) bias tiled across output columns.
    o_ref:         (Ho, Wo*O) pooled NHWC output (flattened over (Wo, O)).
    """
    Ho, WoO = o_ref.shape
    K = w_ref.shape[1]
    f32 = jnp.float32

    acc_ee = jnp.zeros((Ho, WoO), f32)   # (even out-row, even out-col)
    acc_eo = jnp.zeros((Ho, WoO), f32)   # (even out-row, odd  out-col)
    acc_oe = jnp.zeros((Ho, WoO), f32)   # (odd  out-row, even out-col)
    acc_oo = jnp.zeros((Ho, WoO), f32)   # (odd  out-row, odd  out-col)

    for kh in range(K):                  # K = 5, fully unrolled
        m = kh // 2
        if kh % 2 == 0:
            lhs_e = xe_ref[pl.ds(m, Ho), :]       # padded rows 2*ho + kh
            lhs_o = xo_ref[pl.ds(m, Ho), :]       # padded rows 2*ho + 1 + kh
        else:
            lhs_e = xo_ref[pl.ds(m, Ho), :]
            lhs_o = xe_ref[pl.ds(m + 1, Ho), :]
        w_even = w_ref[0, kh]
        w_odd = w_ref[1, kh]
        acc_ee += jnp.dot(lhs_e, w_even, preferred_element_type=f32)
        acc_eo += jnp.dot(lhs_e, w_odd, preferred_element_type=f32)
        acc_oe += jnp.dot(lhs_o, w_even, preferred_element_type=f32)
        acc_oo += jnp.dot(lhs_o, w_odd, preferred_element_type=f32)

    # 2x2 max-pool over the four accumulators, then bias + ReLU (commutes with
    # the max because the bias is shared by the 4 candidates and ReLU is
    # monotone), then a single lane-dense store.
    pooled = jnp.maximum(jnp.maximum(acc_ee, acc_eo), jnp.maximum(acc_oe, acc_oo))
    o_ref[...] = jnp.maximum(pooled + b_ref[...], 0.0).astype(o_ref.dtype)


def _fc_stack_kernel(x_ref, w1_ref, b1_ref, w2_ref, b2_ref, w3_ref, b3_ref,
                     out_ref, emb_ref):
    """fc1 -> fc2a -> fc2b in one kernel; intermediates stay in VMEM/vregs."""
    f32 = jnp.float32
    e = jnp.dot(x_ref[...], w1_ref[...], preferred_element_type=f32) + b1_ref[...]
    emb_ref[...] = e.astype(emb_ref.dtype)
    h = jnp.dot(e, w2_ref[...], preferred_element_type=f32) + b2_ref[...]
    o = jnp.dot(h, w3_ref[...], preferred_element_type=f32) + b3_ref[...]
    out_ref[...] = o.astype(out_ref.dtype)


# ------------------------------- wrappers -----------------------------------

def conv_relu_pool(x, w_banded, b_tiled, *, pad=2):
    """x: (N, H, W, C) NHWC.  Returns pooled NHWC activations (N, H/2, W/2, O)."""
    N, H, W, C = x.shape
    _, K, WpC, WoO = w_banded.shape
    Hp, Wp = H + 2 * pad, W + 2 * pad
    Ho, Wo = H // 2, W // 2
    O = WoO // Wo
    assert WpC == Wp * C

    xp = jnp.pad(x, ((0, 0), (pad, pad), (pad, pad), (0, 0)))
    xp = xp.reshape(N, Hp, Wp * C)                 # rows flattened as (w, c)
    xe, xo = xp[:, 0::2, :], xp[:, 1::2, :]        # even / odd padded rows
    Hpe, Hpo = xe.shape[1], xo.shape[1]

    out = pl.pallas_call(
        _conv_relu_pool_kernel,
        out_shape=jax.ShapeDtypeStruct((N, Ho, WoO), jnp.float32),
        grid=(N,),
        in_specs=[
            pl.BlockSpec((None, Hpe, WpC), lambda n: (n, 0, 0)),
            pl.BlockSpec((None, Hpo, WpC), lambda n: (n, 0, 0)),
            pl.BlockSpec((2, K, WpC, WoO), lambda n: (0, 0, 0, 0)),
            pl.BlockSpec((1, WoO), lambda n: (0, 0)),
        ],
        out_specs=pl.BlockSpec((None, Ho, WoO), lambda n: (n, 0, 0)),
        compiler_params=pltpu.CompilerParams(
            dimension_semantics=("parallel",)),
    )(xe, xo, w_banded, b_tiled)
    return out.reshape(N, Ho, Wo, O)


def fc_stack(x, w1, b1, w2, b2, w3, b3):
    """One pallas_call for the whole FC stack; returns (padded logits, embedding)."""
    N, F = x.shape
    D1, D2, D3 = w1.shape[1], w2.shape[1], w3.shape[1]
    out, emb = pl.pallas_call(
        _fc_stack_kernel,
        out_shape=(jax.ShapeDtypeStruct((N, D3), jnp.float32),
                   jax.ShapeDtypeStruct((N, D1), jnp.float32)),
        in_specs=[
            pl.BlockSpec((N, F), lambda: (0, 0)),
            pl.BlockSpec((F, D1), lambda: (0, 0)),
            pl.BlockSpec((1, D1), lambda: (0, 0)),
            pl.BlockSpec((D1, D2), lambda: (0, 0)),
            pl.BlockSpec((1, D2), lambda: (0, 0)),
            pl.BlockSpec((D2, D3), lambda: (0, 0)),
            pl.BlockSpec((1, D3), lambda: (0, 0)),
        ],
        out_specs=(pl.BlockSpec((N, D3), lambda: (0, 0)),
                   pl.BlockSpec((N, D1), lambda: (0, 0))),
    )(x, w1, b1, w2, b2, w3, b3)
    return out, emb


# --------------------------- parameter preparation ---------------------------

def _banded_conv_weight(w, W_in, *, pad=2):
    """Torch conv weight (O, C, K, K) -> (2, K, Wp*C, Wo*O) banded matmul weight.

    banded[dw, kh, w_in*C + c, wo*O + o] = w[o, c, kh, kw] where
    kw = w_in - (2*wo + dw), zero otherwise.  Built once at prep time.
    """
    O, C, K, _ = w.shape
    Wp, Wo = W_in + 2 * pad, W_in // 2
    wt = jnp.transpose(w, (2, 3, 1, 0))                      # (kh, kw, C, O)
    sel = np.zeros((2, K, Wp, Wo), np.float32)
    for dw in range(2):
        for kw in range(K):
            for wo in range(Wo):
                sel[dw, kw, 2 * wo + dw + kw, wo] = 1.0
    banded = jnp.einsum("dkpw,hkco->dhpcwo", jnp.asarray(sel), wt)
    return banded.reshape(2, K, Wp * C, Wo * O).astype(jnp.float32)


def _tiled_bias(b, Wo):
    return jnp.tile(b, Wo).reshape(1, -1).astype(jnp.float32)


def init_params(key):
    """Torch-layout parameters (as nn.Module would hold them)."""
    ks = jax.random.split(key, 8)
    s = 0.05
    return {
        "conv1_w": jax.random.normal(ks[0], (16, 1, 5, 5), jnp.float32) * s,
        "conv1_b": jax.random.normal(ks[1], (16,), jnp.float32) * s,
        "conv2_w": jax.random.normal(ks[2], (32, 16, 5, 5), jnp.float32) * s,
        "conv2_b": jax.random.normal(ks[3], (32,), jnp.float32) * s,
        "fc1_w": jax.random.normal(ks[4], (256, 32 * 7 * 7), jnp.float32) * s,
        "fc1_b": jnp.zeros((256,), jnp.float32),
        "fc2a_w": jax.random.normal(ks[5], (128, 256), jnp.float32) * s,
        "fc2a_b": jnp.zeros((128,), jnp.float32),
        "fc2b_w": jax.random.normal(ks[6], (10, 128), jnp.float32) * s,
        "fc2b_b": jnp.zeros((10,), jnp.float32),
    }


def prepare_params(p):
    """Torch-layout params -> kernel-ready params (run ONCE, not per forward)."""
    # fc1 columns permuted from NCHW-flatten order to NHWC-flatten order,
    # then pre-transposed to (in, out).
    fc1_w = p["fc1_w"].reshape(256, 32, 7, 7).transpose(0, 2, 3, 1).reshape(256, -1)
    return {
        "conv1_w": _banded_conv_weight(p["conv1_w"], 28),
        "conv1_b": _tiled_bias(p["conv1_b"], 14),
        "conv2_w": _banded_conv_weight(p["conv2_w"], 14),
        "conv2_b": _tiled_bias(p["conv2_b"], 7),
        "fc1_w": fc1_w.T,                                     # (1568, 256)
        "fc1_b": p["fc1_b"].reshape(1, -1),
        "fc2a_w": p["fc2a_w"].T,                              # (256, 128)
        "fc2a_b": p["fc2a_b"].reshape(1, -1),
        "fc2b_w": jnp.pad(p["fc2b_w"].T, ((0, 0), (0, 118))),  # (128, 128) lane-dense
        "fc2b_b": jnp.pad(p["fc2b_b"], (0, 118)).reshape(1, -1),
    }


# -------------------------------- forward -----------------------------------

NUM_CLASSES = 10


def cnn_forward(kp, x):
    """x: (N, 1, 28, 28) NCHW (torch convention).  Returns (output, embedding)."""
    x = jnp.transpose(x, (0, 2, 3, 1))                       # NHWC (free: C == 1)
    x = conv_relu_pool(x, kp["conv1_w"], kp["conv1_b"])      # (N, 14, 14, 16)
    x = conv_relu_pool(x, kp["conv2_w"], kp["conv2_b"])      # (N, 7, 7, 32)
    n = x.shape[0]
    x = x.reshape(n, 7 * 7 * 32)                             # NHWC flatten (fc1_w matches)
    out_pad, embedding = fc_stack(x, kp["fc1_w"], kp["fc1_b"],
                                  kp["fc2a_w"], kp["fc2a_b"],
                                  kp["fc2b_w"], kp["fc2b_b"])
    return out_pad[:, :NUM_CLASSES], embedding


# ----------------------------- pure-JAX reference ----------------------------

def reference_forward(p, x):
    def conv(x, w, b):
        y = jax.lax.conv_general_dilated(
            x, w, window_strides=(1, 1), padding=((2, 2), (2, 2)),
            dimension_numbers=("NCHW", "OIHW", "NCHW"))
        return jax.nn.relu(y + b.reshape(1, -1, 1, 1))

    def pool(x):
        N, C, H, W = x.shape
        return jnp.max(x.reshape(N, C, H // 2, 2, W // 2, 2), axis=(3, 5))

    x = pool(conv(x, p["conv1_w"], p["conv1_b"]))
    x = pool(conv(x, p["conv2_w"], p["conv2_b"]))
    x = x.reshape(x.shape[0], -1)
    emb = x @ p["fc1_w"].T + p["fc1_b"]
    out = (emb @ p["fc2a_w"].T + p["fc2a_b"]) @ p["fc2b_w"].T + p["fc2b_b"]
    return out, emb


if __name__ == "__main__":
    key = jax.random.PRNGKey(0)
    pkey, xkey = jax.random.split(key)
    params = init_params(pkey)
    kparams = prepare_params(params)
    # Input must be (N, 1, 28, 28) so the flatten yields 32*7*7 features.
    x = jax.random.normal(xkey, (2, 1, 28, 28), jnp.float32)

    output, embedding = jax.jit(cnn_forward)(kparams, x)
    jax.block_until_ready((output, embedding))

    assert output.shape == (2, 10), output.shape
    assert embedding.shape == (2, 256), embedding.shape

    ref_out, ref_emb = reference_forward(params, x)
    assert jnp.allclose(embedding, ref_emb, atol=2e-2, rtol=2e-2), \
        float(jnp.max(jnp.abs(embedding - ref_emb)))
    assert jnp.allclose(output, ref_out, atol=2e-2, rtol=2e-2), \
        float(jnp.max(jnp.abs(output - ref_out)))
    print("KERNEL_OK")
</pallas_src>

<mosaic_0001>
module attributes {stable_mosaic.version = 11 : i64} {
  func.func @_conv_relu_pool_kernel(%arg0: i32, %arg1: memref<1x16x32xf32, #tpu.memory_space<vmem>>, %arg2: memref<1x16x32xf32, #tpu.memory_space<vmem>>, %arg3: memref<2x5x32x224xf32, #tpu.memory_space<vmem>>, %arg4: memref<1x224xf32, #tpu.memory_space<vmem>>, %arg5: memref<1x14x224xf32, #tpu.memory_space<vmem>>) attributes {dimension_semantics = [#tpu.dimension_semantics<parallel>], iteration_bounds = array<i64: 2>, scalar_prefetch = 0 : i64, scratch_operands = 0 : i64, tpu.core_type = #tpu.core_type<tc>, window_params = [{transform_indices = @transform_0, window_bounds = array<i64: 1, 16, 32>}, {transform_indices = @transform_1, window_bounds = array<i64: 1, 16, 32>}, {pipeline_mode = #tpu.pipeline_mode<synchronous>, transform_indices = @transform_2, window_bounds = array<i64: 2, 5, 32, 224>}, {pipeline_mode = #tpu.pipeline_mode<synchronous>, transform_indices = @transform_3, window_bounds = array<i64: 1, 224>}, {transform_indices = @transform_4, window_bounds = array<i64: 1, 14, 224>}]} {
    %cst = arith.constant 0.000000e+00 : f32
    %0 = vector.broadcast %cst : f32 to vector<14x224xf32>
    %cst_0 = arith.constant 0.000000e+00 : f32
    %1 = vector.broadcast %cst_0 : f32 to vector<14x224xf32>
    %cst_1 = arith.constant 0.000000e+00 : f32
    %2 = vector.broadcast %cst_1 : f32 to vector<14x224xf32>
    %cst_2 = arith.constant 0.000000e+00 : f32
    %3 = vector.broadcast %cst_2 : f32 to vector<14x224xf32>
    %c0 = arith.constant 0 : index
    %c0_3 = arith.constant 0 : index
    %c0_4 = arith.constant 0 : index
    %4 = vector.load %arg1[%c0, %c0_3, %c0_4] : memref<1x16x32xf32, #tpu.memory_space<vmem>>, vector<1x14x32xf32>
    %5 = vector.shape_cast %4 : vector<1x14x32xf32> to vector<14x32xf32>
    %c0_5 = arith.constant 0 : index
    %c0_6 = arith.constant 0 : index
    %c0_7 = arith.constant 0 : index
    %6 = vector.load %arg2[%c0_5, %c0_6, %c0_7] : memref<1x16x32xf32, #tpu.memory_space<vmem>>, vector<1x14x32xf32>
    %7 = vector.shape_cast %6 : vector<1x14x32xf32> to vector<14x32xf32>
    %c0_8 = arith.constant 0 : index
    %c0_9 = arith.constant 0 : index
    %c0_10 = arith.constant 0 : index
    %c0_11 = arith.constant 0 : index
    %8 = vector.load %arg3[%c0_8, %c0_9, %c0_10, %c0_11] : memref<2x5x32x224xf32, #tpu.memory_space<vmem>>, vector<1x1x32x224xf32>
    %9 = vector.shape_cast %8 : vector<1x1x32x224xf32> to vector<32x224xf32>
    %c1 = arith.constant 1 : index
    %c0_12 = arith.constant 0 : index
    %c0_13 = arith.constant 0 : index
    %c0_14 = arith.constant 0 : index
    %10 = vector.load %arg3[%c1, %c0_12, %c0_13, %c0_14] : memref<2x5x32x224xf32, #tpu.memory_space<vmem>>, vector<1x1x32x224xf32>
    %11 = vector.shape_cast %10 : vector<1x1x32x224xf32> to vector<32x224xf32>
    %cst_15 = arith.constant dense<0.000000e+00> : vector<14x224xf32>
    %12 = tpu.matmul %5, %9, %cst_15 {dimension_numbers = #tpu.dot_dimension_numbers<[1], [0], [0], [1], [0, 0, 1, 1], [], []>} : vector<14x32xf32>, vector<32x224xf32>, vector<14x224xf32> -> vector<14x224xf32>
    %13 = arith.addf %0, %12 : vector<14x224xf32>
    %cst_16 = arith.constant dense<0.000000e+00> : vector<14x224xf32>
    %14 = tpu.matmul %5, %11, %cst_16 {dimension_numbers = #tpu.dot_dimension_numbers<[1], [0], [0], [1], [0, 0, 1, 1], [], []>} : vector<14x32xf32>, vector<32x224xf32>, vector<14x224xf32> -> vector<14x224xf32>
    %15 = arith.addf %1, %14 : vector<14x224xf32>
    %cst_17 = arith.constant dense<0.000000e+00> : vector<14x224xf32>
    %16 = tpu.matmul %7, %9, %cst_17 {dimension_numbers = #tpu.dot_dimension_numbers<[1], [0], [0], [1], [0, 0, 1, 1], [], []>} : vector<14x32xf32>, vector<32x224xf32>, vector<14x224xf32> -> vector<14x224xf32>
    %17 = arith.addf %2, %16 : vector<14x224xf32>
    %cst_18 = arith.constant dense<0.000000e+00> : vector<14x224xf32>
    %18 = tpu.matmul %7, %11, %cst_18 {dimension_numbers = #tpu.dot_dimension_numbers<[1], [0], [0], [1], [0, 0, 1, 1], [], []>} : vector<14x32xf32>, vector<32x224xf32>, vector<14x224xf32> -> vector<14x224xf32>
    %19 = arith.addf %3, %18 : vector<14x224xf32>
    %c0_19 = arith.constant 0 : index
    %c0_20 = arith.constant 0 : index
    %c0_21 = arith.constant 0 : index
    %20 = vector.load %arg2[%c0_19, %c0_20, %c0_21] : memref<1x16x32xf32, #tpu.memory_space<vmem>>, vector<1x14x32xf32>
    %21 = vector.shape_cast %20 : vector<1x14x32xf32> to vector<14x32xf32>
    %c0_22 = arith.constant 0 : index
    %c1_23 = arith.constant 1 : index
    %c0_24 = arith.constant 0 : index
    %22 = vector.load %arg1[%c0_22, %c1_23, %c0_24] : memref<1x16x32xf32, #tpu.memory_space<vmem>>, vector<1x14x32xf32>
    %23 = vector.shape_cast %22 : vector<1x14x32xf32> to vector<14x32xf32>
    %c0_25 = arith.constant 0 : index
    %c1_26 = arith.constant 1 : index
    %c0_27 = arith.constant 0 : index
    %c0_28 = arith.constant 0 : index
    %24 = vector.load %arg3[%c0_25, %c1_26, %c0_27, %c0_28] : memref<2x5x32x224xf32, #tpu.memory_space<vmem>>, vector<1x1x32x224xf32>
    %25 = vector.shape_cast %24 : vector<1x1x32x224xf32> to vector<32x224xf32>
    %c1_29 = arith.constant 1 : index
    %c1_30 = arith.constant 1 : index
    %c0_31 = arith.constant 0 : index
    %c0_32 = arith.constant 0 : index
    %26 = vector.load %arg3[%c1_29, %c1_30, %c0_31, %c0_32] : memref<2x5x32x224xf32, #tpu.memory_space<vmem>>, vector<1x1x32x224xf32>
    %27 = vector.shape_cast %26 : vector<1x1x32x224xf32> to vector<32x224xf32>
    %cst_33 = arith.constant dense<0.000000e+00> : vector<14x224xf32>
    %28 = tpu.matmul %21, %25, %cst_33 {dimension_numbers = #tpu.dot_dimension_numbers<[1], [0], [0], [1], [0, 0, 1, 1], [], []>} : vector<14x32xf32>, vector<32x224xf32>, vector<14x224xf32> -> vector<14x224xf32>
    %29 = arith.addf %13, %28 : vector<14x224xf32>
    %cst_34 = arith.constant dense<0.000000e+00> : vector<14x224xf32>
    %30 = tpu.matmul %21, %27, %cst_34 {dimension_numbers = #tpu.dot_dimension_numbers<[1], [0], [0], [1], [0, 0, 1, 1], [], []>} : vector<14x32xf32>, vector<32x224xf32>, vector<14x224xf32> -> vector<14x224xf32>
    %31 = arith.addf %15, %30 : vector<14x224xf32>
    %cst_35 = arith.constant dense<0.000000e+00> : vector<14x224xf32>
    %32 = tpu.matmul %23, %25, %cst_35 {dimension_numbers = #tpu.dot_dimension_numbers<[1], [0], [0], [1], [0, 0, 1, 1], [], []>} : vector<14x32xf32>, vector<32x224xf32>, vector<14x224xf32> -> vector<14x224xf32>
    %33 = arith.addf %17, %32 : vector<14x224xf32>
    %cst_36 = arith.constant dense<0.000000e+00> : vector<14x224xf32>
    %34 = tpu.matmul %23, %27, %cst_36 {dimension_numbers = #tpu.dot_dimension_numbers<[1], [0], [0], [1], [0, 0, 1, 1], [], []>} : vector<14x32xf32>, vector<32x224xf32>, vector<14x224xf32> -> vector<14x224xf32>
    %35 = arith.addf %19, %34 : vector<14x224xf32>
    %c0_37 = arith.constant 0 : index
    %c1_38 = arith.constant 1 : index
    %c0_39 = arith.constant 0 : index
    %36 = vector.load %arg1[%c0_37, %c1_38, %c0_39] : memref<1x16x32xf32, #tpu.memory_space<vmem>>, vector<1x14x32xf32>
    %37 = vector.shape_cast %36 : vector<1x14x32xf32> to vector<14x32xf32>
    %c0_40 = arith.constant 0 : index
    %c1_41 = arith.constant 1 : index
    %c0_42 = arith.constant 0 : index
    %38 = vector.load %arg2[%c0_40, %c1_41, %c0_42] : memref<1x16x32xf32, #tpu.memory_space<vmem>>, vector<1x14x32xf32>
    %39 = vector.shape_cast %38 : vector<1x14x32xf32> to vector<14x32xf32>
    %c0_43 = arith.constant 0 : index
    %c2 = arith.constant 2 : index
    %c0_44 = arith.constant 0 : index
    %c0_45 = arith.constant 0 : index
    %40 = vector.load %arg3[%c0_43, %c2, %c0_44, %c0_45] : memref<2x5x32x224xf32, #tpu.memory_space<vmem>>, vector<1x1x32x224xf32>
    %41 = vector.shape_cast %40 : vector<1x1x32x224xf32> to vector<32x224xf32>
    %c1_46 = arith.constant 1 : index
    %c2_47 = arith.constant 2 : index
    %c0_48 = arith.constant 0 : index
    %c0_49 = arith.constant 0 : index
    %42 = vector.load %arg3[%c1_46, %c2_47, %c0_48, %c0_49] : memref<2x5x32x224xf32, #tpu.memory_space<vmem>>, vector<1x1x32x224xf32>
    %43 = vector.shape_cast %42 : vector<1x1x32x224xf32> to vector<32x224xf32>
    %cst_50 = arith.constant dense<0.000000e+00> : vector<14x224xf32>
    %44 = tpu.matmul %37, %41, %cst_50 {dimension_numbers = #tpu.dot_dimension_numbers<[1], [0], [0], [1], [0, 0, 1, 1], [], []>} : vector<14x32xf32>, vector<32x224xf32>, vector<14x224xf32> -> vector<14x224xf32>
    %45 = arith.addf %29, %44 : vector<14x224xf32>
    %cst_51 = arith.constant dense<0.000000e+00> : vector<14x224xf32>
    %46 = tpu.matmul %37, %43, %cst_51 {dimension_numbers = #tpu.dot_dimension_numbers<[1], [0], [0], [1], [0, 0, 1, 1], [], []>} : vector<14x32xf32>, vector<32x224xf32>, vector<14x224xf32> -> vector<14x224xf32>
    %47 = arith.addf %31, %46 : vector<14x224xf32>
    %cst_52 = arith.constant dense<0.000000e+00> : vector<14x224xf32>
    %48 = tpu.matmul %39, %41, %cst_52 {dimension_numbers = #tpu.dot_dimension_numbers<[1], [0], [0], [1], [0, 0, 1, 1], [], []>} : vector<14x32xf32>, vector<32x224xf32>, vector<14x224xf32> -> vector<14x224xf32>
    %49 = arith.addf %33, %48 : vector<14x224xf32>
    %cst_53 = arith.constant dense<0.000000e+00> : vector<14x224xf32>
    %50 = tpu.matmul %39, %43, %cst_53 {dimension_numbers = #tpu.dot_dimension_numbers<[1], [0], [0], [1], [0, 0, 1, 1], [], []>} : vector<14x32xf32>, vector<32x224xf32>, vector<14x224xf32> -> vector<14x224xf32>
    %51 = arith.addf %35, %50 : vector<14x224xf32>
    %c0_54 = arith.constant 0 : index
    %c1_55 = arith.constant 1 : index
    %c0_56 = arith.constant 0 : index
    %52 = vector.load %arg2[%c0_54, %c1_55, %c0_56] : memref<1x16x32xf32, #tpu.memory_space<vmem>>, vector<1x14x32xf32>
    %53 = vector.shape_cast %52 : vector<1x14x32xf32> to vector<14x32xf32>
    %c0_57 = arith.constant 0 : index
    %c2_58 = arith.constant 2 : index
    %c0_59 = arith.constant 0 : index
    %54 = vector.load %arg1[%c0_57, %c2_58, %c0_59] : memref<1x16x32xf32, #tpu.memory_space<vmem>>, vector<1x14x32xf32>
    %55 = vector.shape_cast %54 : vector<1x14x32xf32> to vector<14x32xf32>
    %c0_60 = arith.constant 0 : index
    %c3 = arith.constant 3 : index
    %c0_61 = arith.constant 0 : index
    %c0_62 = arith.constant 0 : index
    %56 = vector.load %arg3[%c0_60, %c3, %c0_61, %c0_62] : memref<2x5x32x224xf32, #tpu.memory_space<vmem>>, vector<1x1x32x224xf32>
    %57 = vector.shape_cast %56 : vector<1x1x32x224xf32> to vector<32x224xf32>
    %c1_63 = arith.constant 1 : index
    %c3_64 = arith.constant 3 : index
    %c0_65 = arith.constant 0 : index
    %c0_66 = arith.constant 0 : index
    %58 = vector.load %arg3[%c1_63, %c3_64, %c0_65, %c0_66] : memref<2x5x32x224xf32, #tpu.memory_space<vmem>>, vector<1x1x32x224xf32>
    %59 = vector.shape_cast %58 : vector<1x1x32x224xf32> to vector<32x224xf32>
    %cst_67 = arith.constant dense<0.000000e+00> : vector<14x224xf32>
    %60 = tpu.matmul %53, %57, %cst_67 {dimension_numbers = #tpu.dot_dimension_numbers<[1], [0], [0], [1], [0, 0, 1, 1], [], []>} : vector<14x32xf32>, vector<32x224xf32>, vector<14x224xf32> -> vector<14x224xf32>
    %61 = arith.addf %45, %60 : vector<14x224xf32>
    %cst_68 = arith.constant dense<0.000000e+00> : vector<14x224xf32>
    %62 = tpu.matmul %53, %59, %cst_68 {dimension_numbers = #tpu.dot_dimension_numbers<[1], [0], [0], [1], [0, 0, 1, 1], [], []>} : vector<14x32xf32>, vector<32x224xf32>, vector<14x224xf32> -> vector<14x224xf32>
    %63 = arith.addf %47, %62 : vector<14x224xf32>
    %cst_69 = arith.constant dense<0.000000e+00> : vector<14x224xf32>
    %64 = tpu.matmul %55, %57, %cst_69 {dimension_numbers = #tpu.dot_dimension_numbers<[1], [0], [0], [1], [0, 0, 1, 1], [], []>} : vector<14x32xf32>, vector<32x224xf32>, vector<14x224xf32> -> vector<14x224xf32>
    %65 = arith.addf %49, %64 : vector<14x224xf32>
    %cst_70 = arith.constant dense<0.000000e+00> : vector<14x224xf32>
    %66 = tpu.matmul %55, %59, %cst_70 {dimension_numbers = #tpu.dot_dimension_numbers<[1], [0], [0], [1], [0, 0, 1, 1], [], []>} : vector<14x32xf32>, vector<32x224xf32>, vector<14x224xf32> -> vector<14x224xf32>
    %67 = arith.addf %51, %66 : vector<14x224xf32>
    %c0_71 = arith.constant 0 : index
    %c2_72 = arith.constant 2 : index
    %c0_73 = arith.constant 0 : index
    %68 = vector.load %arg1[%c0_71, %c2_72, %c0_73] : memref<1x16x32xf32, #tpu.memory_space<vmem>>, vector<1x14x32xf32>
    %69 = vector.shape_cast %68 : vector<1x14x32xf32> to vector<14x32xf32>
    %c0_74 = arith.constant 0 : index
    %c2_75 = arith.constant 2 : index
    %c0_76 = arith.constant 0 : index
    %70 = vector.load %arg2[%c0_74, %c2_75, %c0_76] : memref<1x16x32xf32, #tpu.memory_space<vmem>>, vector<1x14x32xf32>
    %71 = vector.shape_cast %70 : vector<1x14x32xf32> to vector<14x32xf32>
    %c0_77 = arith.constant 0 : index
    %c4 = arith.constant 4 : index
    %c0_78 = arith.constant 0 : index
    %c0_79 = arith.constant 0 : index
    %72 = vector.load %arg3[%c0_77, %c4, %c0_78, %c0_79] : memref<2x5x32x224xf32, #tpu.memory_space<vmem>>, vector<1x1x32x224xf32>
    %73 = vector.shape_cast %72 : vector<1x1x32x224xf32> to vector<32x224xf32>
    %c1_80 = arith.constant 1 : index
    %c4_81 = arith.constant 4 : index
    %c0_82 = arith.constant 0 : index
    %c0_83 = arith.constant 0 : index
    %74 = vector.load %arg3[%c1_80, %c4_81, %c0_82, %c0_83] : memref<2x5x32x224xf32, #tpu.memory_space<vmem>>, vector<1x1x32x224xf32>
    %75 = vector.shape_cast %74 : vector<1x1x32x224xf32> to vector<32x224xf32>
    %cst_84 = arith.constant dense<0.000000e+00> : vector<14x224xf32>
    %76 = tpu.matmul %69, %73, %cst_84 {dimension_numbers = #tpu.dot_dimension_numbers<[1], [0], [0], [1], [0, 0, 1, 1], [], []>} : vector<14x32xf32>, vector<32x224xf32>, vector<14x224xf32> -> vector<14x224xf32>
    %77 = arith.addf %61, %76 : vector<14x224xf32>
    %cst_85 = arith.constant dense<0.000000e+00> : vector<14x224xf32>
    %78 = tpu.matmul %69, %75, %cst_85 {dimension_numbers = #tpu.dot_dimension_numbers<[1], [0], [0], [1], [0, 0, 1, 1], [], []>} : vector<14x32xf32>, vector<32x224xf32>, vector<14x224xf32> -> vector<14x224xf32>
    %79 = arith.addf %63, %78 : vector<14x224xf32>
    %cst_86 = arith.constant dense<0.000000e+00> : vector<14x224xf32>
    %80 = tpu.matmul %71, %73, %cst_86 {dimension_numbers = #tpu.dot_dimension_numbers<[1], [0], [0], [1], [0, 0, 1, 1], [], []>} : vector<14x32xf32>, vector<32x224xf32>, vector<14x224xf32> -> vector<14x224xf32>
    %81 = arith.addf %65, %80 : vector<14x224xf32>
    %cst_87 = arith.constant dense<0.000000e+00> : vector<14x224xf32>
    %82 = tpu.matmul %71, %75, %cst_87 {dimension_numbers = #tpu.dot_dimension_numbers<[1], [0], [0], [1], [0, 0, 1, 1], [], []>} : vector<14x32xf32>, vector<32x224xf32>, vector<14x224xf32> -> vector<14x224xf32>
    %83 = arith.addf %67, %82 : vector<14x224xf32>
    %84 = arith.maximumf %77, %79 : vector<14x224xf32>
    %85 = arith.maximumf %81, %83 : vector<14x224xf32>
    %86 = arith.maximumf %84, %85 : vector<14x224xf32>
    %c0_88 = arith.constant 0 : index
    %c0_89 = arith.constant 0 : index
    %87 = vector.load %arg4[%c0_88, %c0_89] : memref<1x224xf32, #tpu.memory_space<vmem>>, vector<1x224xf32>
    %88 = vector.broadcast %87 : vector<1x224xf32> to vector<14x224xf32>
    %89 = arith.addf %86, %88 : vector<14x224xf32>
    %cst_90 = arith.constant 0.000000e+00 : f32
    %90 = vector.broadcast %cst_90 : f32 to vector<14x224xf32>
    %91 = arith.maximumf %89, %90 : vector<14x224xf32>
    %c0_91 = arith.constant 0 : index
    %c0_92 = arith.constant 0 : index
    %c0_93 = arith.constant 0 : index
    %92 = vector.load %arg5[%c0_91, %c0_92, %c0_93] : memref<1x14x224xf32, #tpu.memory_space<vmem>>, vector<1x14x224xf32>
    %93 = vector.shape_cast %92 : vector<1x14x224xf32> to vector<14x224xf32>
    %94 = vector.shape_cast %91 : vector<14x224xf32> to vector<1x14x224xf32>
    tpu.vector_store %arg5[%c0_91, %c0_92, %c0_93], %94 {strides = array<i32>} : memref<1x14x224xf32, #tpu.memory_space<vmem>>, vector<1x14x224xf32>,
    return
  }
  func.func @transform_0(%arg0: i32) -> (i32, i32, i32) {
    %c0_i32 = arith.constant 0 : i32
    %c0_i32_0 = arith.constant 0 : i32
    %c0_i32_1 = arith.constant 0 : i32
    return %arg0, %c0_i32, %c0_i32_0 : i32, i32, i32
  }
  func.func @transform_1(%arg0: i32) -> (i32, i32, i32) {
    %c0_i32 = arith.constant 0 : i32
    %c0_i32_0 = arith.constant 0 : i32
    %c0_i32_1 = arith.constant 0 : i32
    return %arg0, %c0_i32, %c0_i32_0 : i32, i32, i32
  }
  func.func @transform_2(%arg0: i32) -> (i32, i32, i32, i32) {
    %c0_i32 = arith.constant 0 : i32
    %c0_i32_0 = arith.constant 0 : i32
    %c0_i32_1 = arith.constant 0 : i32
    %c0_i32_2 = arith.constant 0 : i32
    %c0_i32_3 = arith.constant 0 : i32
    return %c0_i32, %c0_i32_0, %c0_i32_1, %c0_i32_2 : i32, i32, i32, i32
  }
  func.func @transform_3(%arg0: i32) -> (i32, i32) {
    %c0_i32 = arith.constant 0 : i32
    %c0_i32_0 = arith.constant 0 : i32
    %c0_i32_1 = arith.constant 0 : i32
    return %c0_i32, %c0_i32_0 : i32, i32
  }
  func.func @transform_4(%arg0: i32) -> (i32, i32, i32) {
    %c0_i32 = arith.constant 0 : i32
    %c0_i32_0 = arith.constant 0 : i32
    %c0_i32_1 = arith.constant 0 : i32
    return %arg0, %c0_i32, %c0_i32_0 : i32, i32, i32
  }
}

module attributes {stable_mosaic.version = 11 : i64} {
  func.func @_conv_relu_pool_kernel(%arg0: i32, %arg1: memref<1x9x288xf32, #tpu.memory_space<vmem>>, %arg2: memref<1x9x288xf32, #tpu.memory_space<vmem>>, %arg3: memref<2x5x288x224xf32, #tpu.memory_space<vmem>>, %arg4: memref<1x224xf32, #tpu.memory_space<vmem>>, %arg5: memref<1x7x224xf32, #tpu.memory_space<vmem>>) attributes {dimension_semantics = [#tpu.dimension_semantics<parallel>], iteration_bounds = array<i64: 2>, scalar_prefetch = 0 : i64, scratch_operands = 0 : i64, tpu.core_type = #tpu.core_type<tc>, window_params = [{transform_indices = @transform_0, window_bounds = array<i64: 1, 9, 288>}, {transform_indices = @transform_1, window_bounds = array<i64: 1, 9, 288>}, {pipeline_mode = #tpu.pipeline_mode<synchronous>, transform_indices = @transform_2, window_bounds = array<i64: 2, 5, 288, 224>}, {pipeline_mode = #tpu.pipeline_mode<synchronous>, transform_indices = @transform_3, window_bounds = array<i64: 1, 224>}, {transform_indices = @transform_4, window_bounds = array<i64: 1, 7, 224>}]} {
    %cst = arith.constant 0.000000e+00 : f32
    %0 = vector.broadcast %cst : f32 to vector<7x224xf32>
    %cst_0 = arith.constant 0.000000e+00 : f32
    %1 = vector.broadcast %cst_0 : f32 to vector<7x224xf32>
    %cst_1 = arith.constant 0.000000e+00 : f32
    %2 = vector.broadcast %cst_1 : f32 to vector<7x224xf32>
    %cst_2 = arith.constant 0.000000e+00 : f32
    %3 = vector.broadcast %cst_2 : f32 to vector<7x224xf32>
    %c0 = arith.constant 0 : index
    %c0_3 = arith.constant 0 : index
    %c0_4 = arith.constant 0 : index
    %4 = vector.load %arg1[%c0, %c0_3, %c0_4] : memref<1x9x288xf32, #tpu.memory_space<vmem>>, vector<1x7x288xf32>
    %5 = vector.shape_cast %4 : vector<1x7x288xf32> to vector<7x288xf32>
    %c0_5 = arith.constant 0 : index
    %c0_6 = arith.constant 0 : index
    %c0_7 = arith.constant 0 : index
    %6 = vector.load %arg2[%c0_5, %c0_6, %c0_7] : memref<1x9x288xf32, #tpu.memory_space<vmem>>, vector<1x7x288xf32>
    %7 = vector.shape_cast %6 : vector<1x7x288xf32> to vector<7x288xf32>
    %c0_8 = arith.constant 0 : index
    %c0_9 = arith.constant 0 : index
    %c0_10 = arith.constant 0 : index
    %c0_11 = arith.constant 0 : index
    %8 = vector.load %arg3[%c0_8, %c0_9, %c0_10, %c0_11] : memref<2x5x288x224xf32, #tpu.memory_space<vmem>>, vector<1x1x288x224xf32>
    %9 = vector.shape_cast %8 : vector<1x1x288x224xf32> to vector<288x224xf32>
    %c1 = arith.constant 1 : index
    %c0_12 = arith.constant 0 : index
    %c0_13 = arith.constant 0 : index
    %c0_14 = arith.constant 0 : index
    %10 = vector.load %arg3[%c1, %c0_12, %c0_13, %c0_14] : memref<2x5x288x224xf32, #tpu.memory_space<vmem>>, vector<1x1x288x224xf32>
    %11 = vector.shape_cast %10 : vector<1x1x288x224xf32> to vector<288x224xf32>
    %cst_15 = arith.constant dense<0.000000e+00> : vector<7x224xf32>
    %12 = tpu.matmul %5, %9, %cst_15 {dimension_numbers = #tpu.dot_dimension_numbers<[1], [0], [0], [1], [0, 0, 1, 1], [], []>} : vector<7x288xf32>, vector<288x224xf32>, vector<7x224xf32> -> vector<7x224xf32>
    %13 = arith.addf %0, %12 : vector<7x224xf32>
    %cst_16 = arith.constant dense<0.000000e+00> : vector<7x224xf32>
    %14 = tpu.matmul %5, %11, %cst_16 {dimension_numbers = #tpu.dot_dimension_numbers<[1], [0], [0], [1], [0, 0, 1, 1], [], []>} : vector<7x288xf32>, vector<288x224xf32>, vector<7x224xf32> -> vector<7x224xf32>
    %15 = arith.addf %1, %14 : vector<7x224xf32>
    %cst_17 = arith.constant dense<0.000000e+00> : vector<7x224xf32>
    %16 = tpu.matmul %7, %9, %cst_17 {dimension_numbers = #tpu.dot_dimension_numbers<[1], [0], [0], [1], [0, 0, 1, 1], [], []>} : vector<7x288xf32>, vector<288x224xf32>, vector<7x224xf32> -> vector<7x224xf32>
    %17 = arith.addf %2, %16 : vector<7x224xf32>
    %cst_18 = arith.constant dense<0.000000e+00> : vector<7x224xf32>
    %18 = tpu.matmul %7, %11, %cst_18 {dimension_numbers = #tpu.dot_dimension_numbers<[1], [0], [0], [1], [0, 0, 1, 1], [], []>} : vector<7x288xf32>, vector<288x224xf32>, vector<7x224xf32> -> vector<7x224xf32>
    %19 = arith.addf %3, %18 : vector<7x224xf32>
    %c0_19 = arith.constant 0 : index
    %c0_20 = arith.constant 0 : index
    %c0_21 = arith.constant 0 : index
    %20 = vector.load %arg2[%c0_19, %c0_20, %c0_21] : memref<1x9x288xf32, #tpu.memory_space<vmem>>, vector<1x7x288xf32>
    %21 = vector.shape_cast %20 : vector<1x7x288xf32> to vector<7x288xf32>
    %c0_22 = arith.constant 0 : index
    %c1_23 = arith.constant 1 : index
    %c0_24 = arith.constant 0 : index
    %22 = vector.load %arg1[%c0_22, %c1_23, %c0_24] : memref<1x9x288xf32, #tpu.memory_space<vmem>>, vector<1x7x288xf32>
    %23 = vector.shape_cast %22 : vector<1x7x288xf32> to vector<7x288xf32>
    %c0_25 = arith.constant 0 : index
    %c1_26 = arith.constant 1 : index
    %c0_27 = arith.constant 0 : index
    %c0_28 = arith.constant 0 : index
    %24 = vector.load %arg3[%c0_25, %c1_26, %c0_27, %c0_28] : memref<2x5x288x224xf32, #tpu.memory_space<vmem>>, vector<1x1x288x224xf32>
    %25 = vector.shape_cast %24 : vector<1x1x288x224xf32> to vector<288x224xf32>
    %c1_29 = arith.constant 1 : index
    %c1_30 = arith.constant 1 : index
    %c0_31 = arith.constant 0 : index
    %c0_32 = arith.constant 0 : index
    %26 = vector.load %arg3[%c1_29, %c1_30, %c0_31, %c0_32] : memref<2x5x288x224xf32, #tpu.memory_space<vmem>>, vector<1x1x288x224xf32>
    %27 = vector.shape_cast %26 : vector<1x1x288x224xf32> to vector<288x224xf32>
    %cst_33 = arith.constant dense<0.000000e+00> : vector<7x224xf32>
    %28 = tpu.matmul %21, %25, %cst_33 {dimension_numbers = #tpu.dot_dimension_numbers<[1], [0], [0], [1], [0, 0, 1, 1], [], []>} : vector<7x288xf32>, vector<288x224xf32>, vector<7x224xf32> -> vector<7x224xf32>
    %29 = arith.addf %13, %28 : vector<7x224xf32>
    %cst_34 = arith.constant dense<0.000000e+00> : vector<7x224xf32>
    %30 = tpu.matmul %21, %27, %cst_34 {dimension_numbers = #tpu.dot_dimension_numbers<[1], [0], [0], [1], [0, 0, 1, 1], [], []>} : vector<7x288xf32>, vector<288x224xf32>, vector<7x224xf32> -> vector<7x224xf32>
    %31 = arith.addf %15, %30 : vector<7x224xf32>
    %cst_35 = arith.constant dense<0.000000e+00> : vector<7x224xf32>
    %32 = tpu.matmul %23, %25, %cst_35 {dimension_numbers = #tpu.dot_dimension_numbers<[1], [0], [0], [1], [0, 0, 1, 1], [], []>} : vector<7x288xf32>, vector<288x224xf32>, vector<7x224xf32> -> vector<7x224xf32>
    %33 = arith.addf %17, %32 : vector<7x224xf32>
    %cst_36 = arith.constant dense<0.000000e+00> : vector<7x224xf32>
    %34 = tpu.matmul %23, %27, %cst_36 {dimension_numbers = #tpu.dot_dimension_numbers<[1], [0], [0], [1], [0, 0, 1, 1], [], []>} : vector<7x288xf32>, vector<288x224xf32>, vector<7x224xf32> -> vector<7x224xf32>
    %35 = arith.addf %19, %34 : vector<7x224xf32>
    %c0_37 = arith.constant 0 : index
    %c1_38 = arith.constant 1 : index
    %c0_39 = arith.constant 0 : index
    %36 = vector.load %arg1[%c0_37, %c1_38, %c0_39] : memref<1x9x288xf32, #tpu.memory_space<vmem>>, vector<1x7x288xf32>
    %37 = vector.shape_cast %36 : vector<1x7x288xf32> to vector<7x288xf32>
    %c0_40 = arith.constant 0 : index
    %c1_41 = arith.constant 1 : index
    %c0_42 = arith.constant 0 : index
    %38 = vector.load %arg2[%c0_40, %c1_41, %c0_42] : memref<1x9x288xf32, #tpu.memory_space<vmem>>, vector<1x7x288xf32>
    %39 = vector.shape_cast %38 : vector<1x7x288xf32> to vector<7x288xf32>
    %c0_43 = arith.constant 0 : index
    %c2 = arith.constant 2 : index
    %c0_44 = arith.constant 0 : index
    %c0_45 = arith.constant 0 : index
    %40 = vector.load %arg3[%c0_43, %c2, %c0_44, %c0_45] : memref<2x5x288x224xf32, #tpu.memory_space<vmem>>, vector<1x1x288x224xf32>
    %41 = vector.shape_cast %40 : vector<1x1x288x224xf32> to vector<288x224xf32>
    %c1_46 = arith.constant 1 : index
    %c2_47 = arith.constant 2 : index
    %c0_48 = arith.constant 0 : index
    %c0_49 = arith.constant 0 : index
    %42 = vector.load %arg3[%c1_46, %c2_47, %c0_48, %c0_49] : memref<2x5x288x224xf32, #tpu.memory_space<vmem>>, vector<1x1x288x224xf32>
    %43 = vector.shape_cast %42 : vector<1x1x288x224xf32> to vector<288x224xf32>
    %cst_50 = arith.constant dense<0.000000e+00> : vector<7x224xf32>
    %44 = tpu.matmul %37, %41, %cst_50 {dimension_numbers = #tpu.dot_dimension_numbers<[1], [0], [0], [1], [0, 0, 1, 1], [], []>} : vector<7x288xf32>, vector<288x224xf32>, vector<7x224xf32> -> vector<7x224xf32>
    %45 = arith.addf %29, %44 : vector<7x224xf32>
    %cst_51 = arith.constant dense<0.000000e+00> : vector<7x224xf32>
    %46 = tpu.matmul %37, %43, %cst_51 {dimension_numbers = #tpu.dot_dimension_numbers<[1], [0], [0], [1], [0, 0, 1, 1], [], []>} : vector<7x288xf32>, vector<288x224xf32>, vector<7x224xf32> -> vector<7x224xf32>
    %47 = arith.addf %31, %46 : vector<7x224xf32>
    %cst_52 = arith.constant dense<0.000000e+00> : vector<7x224xf32>
    %48 = tpu.matmul %39, %41, %cst_52 {dimension_numbers = #tpu.dot_dimension_numbers<[1], [0], [0], [1], [0, 0, 1, 1], [], []>} : vector<7x288xf32>, vector<288x224xf32>, vector<7x224xf32> -> vector<7x224xf32>
    %49 = arith.addf %33, %48 : vector<7x224xf32>
    %cst_53 = arith.constant dense<0.000000e+00> : vector<7x224xf32>
    %50 = tpu.matmul %39, %43, %cst_53 {dimension_numbers = #tpu.dot_dimension_numbers<[1], [0], [0], [1], [0, 0, 1, 1], [], []>} : vector<7x288xf32>, vector<288x224xf32>, vector<7x224xf32> -> vector<7x224xf32>
    %51 = arith.addf %35, %50 : vector<7x224xf32>
    %c0_54 = arith.constant 0 : index
    %c1_55 = arith.constant 1 : index
    %c0_56 = arith.constant 0 : index
    %52 = vector.load %arg2[%c0_54, %c1_55, %c0_56] : memref<1x9x288xf32, #tpu.memory_space<vmem>>, vector<1x7x288xf32>
    %53 = vector.shape_cast %52 : vector<1x7x288xf32> to vector<7x288xf32>
    %c0_57 = arith.constant 0 : index
    %c2_58 = arith.constant 2 : index
    %c0_59 = arith.constant 0 : index
    %54 = vector.load %arg1[%c0_57, %c2_58, %c0_59] : memref<1x9x288xf32, #tpu.memory_space<vmem>>, vector<1x7x288xf32>
    %55 = vector.shape_cast %54 : vector<1x7x288xf32> to vector<7x288xf32>
    %c0_60 = arith.constant 0 : index
    %c3 = arith.constant 3 : index
    %c0_61 = arith.constant 0 : index
    %c0_62 = arith.constant 0 : index
    %56 = vector.load %arg3[%c0_60, %c3, %c0_61, %c0_62] : memref<2x5x288x224xf32, #tpu.memory_space<vmem>>, vector<1x1x288x224xf32>
    %57 = vector.shape_cast %56 : vector<1x1x288x224xf32> to vector<288x224xf32>
    %c1_63 = arith.constant 1 : index
    %c3_64 = arith.constant 3 : index
    %c0_65 = arith.constant 0 : index
    %c0_66 = arith.constant 0 : index
    %58 = vector.load %arg3[%c1_63, %c3_64, %c0_65, %c0_66] : memref<2x5x288x224xf32, #tpu.memory_space<vmem>>, vector<1x1x288x224xf32>
    %59 = vector.shape_cast %58 : vector<1x1x288x224xf32> to vector<288x224xf32>
    %cst_67 = arith.constant dense<0.000000e+00> : vector<7x224xf32>
    %60 = tpu.matmul %53, %57, %cst_67 {dimension_numbers = #tpu.dot_dimension_numbers<[1], [0], [0], [1], [0, 0, 1, 1], [], []>} : vector<7x288xf32>, vector<288x224xf32>, vector<7x224xf32> -> vector<7x224xf32>
    %61 = arith.addf %45, %60 : vector<7x224xf32>
    %cst_68 = arith.constant dense<0.000000e+00> : vector<7x224xf32>
    %62 = tpu.matmul %53, %59, %cst_68 {dimension_numbers = #tpu.dot_dimension_numbers<[1], [0], [0], [1], [0, 0, 1, 1], [], []>} : vector<7x288xf32>, vector<288x224xf32>, vector<7x224xf32> -> vector<7x224xf32>
    %63 = arith.addf %47, %62 : vector<7x224xf32>
    %cst_69 = arith.constant dense<0.000000e+00> : vector<7x224xf32>
    %64 = tpu.matmul %55, %57, %cst_69 {dimension_numbers = #tpu.dot_dimension_numbers<[1], [0], [0], [1], [0, 0, 1, 1], [], []>} : vector<7x288xf32>, vector<288x224xf32>, vector<7x224xf32> -> vector<7x224xf32>
    %65 = arith.addf %49, %64 : vector<7x224xf32>
    %cst_70 = arith.constant dense<0.000000e+00> : vector<7x224xf32>
    %66 = tpu.matmul %55, %59, %cst_70 {dimension_numbers = #tpu.dot_dimension_numbers<[1], [0], [0], [1], [0, 0, 1, 1], [], []>} : vector<7x288xf32>, vector<288x224xf32>, vector<7x224xf32> -> vector<7x224xf32>
    %67 = arith.addf %51, %66 : vector<7x224xf32>
    %c0_71 = arith.constant 0 : index
    %c2_72 = arith.constant 2 : index
    %c0_73 = arith.constant 0 : index
    %68 = vector.load %arg1[%c0_71, %c2_72, %c0_73] : memref<1x9x288xf32, #tpu.memory_space<vmem>>, vector<1x7x288xf32>
    %69 = vector.shape_cast %68 : vector<1x7x288xf32> to vector<7x288xf32>
    %c0_74 = arith.constant 0 : index
    %c2_75 = arith.constant 2 : index
    %c0_76 = arith.constant 0 : index
    %70 = vector.load %arg2[%c0_74, %c2_75, %c0_76] : memref<1x9x288xf32, #tpu.memory_space<vmem>>, vector<1x7x288xf32>
    %71 = vector.shape_cast %70 : vector<1x7x288xf32> to vector<7x288xf32>
    %c0_77 = arith.constant 0 : index
    %c4 = arith.constant 4 : index
    %c0_78 = arith.constant 0 : index
    %c0_79 = arith.constant 0 : index
    %72 = vector.load %arg3[%c0_77, %c4, %c0_78, %c0_79] : memref<2x5x288x224xf32, #tpu.memory_space<vmem>>, vector<1x1x288x224xf32>
    %73 = vector.shape_cast %72 : vector<1x1x288x224xf32> to vector<288x224xf32>
    %c1_80 = arith.constant 1 : index
    %c4_81 = arith.constant 4 : index
    %c0_82 = arith.constant 0 : index
    %c0_83 = arith.constant 0 : index
    %74 = vector.load %arg3[%c1_80, %c4_81, %c0_82, %c0_83] : memref<2x5x288x224xf32, #tpu.memory_space<vmem>>, vector<1x1x288x224xf32>
    %75 = vector.shape_cast %74 : vector<1x1x288x224xf32> to vector<288x224xf32>
    %cst_84 = arith.constant dense<0.000000e+00> : vector<7x224xf32>
    %76 = tpu.matmul %69, %73, %cst_84 {dimension_numbers = #tpu.dot_dimension_numbers<[1], [0], [0], [1], [0, 0, 1, 1], [], []>} : vector<7x288xf32>, vector<288x224xf32>, vector<7x224xf32> -> vector<7x224xf32>
    %77 = arith.addf %61, %76 : vector<7x224xf32>
    %cst_85 = arith.constant dense<0.000000e+00> : vector<7x224xf32>
    %78 = tpu.matmul %69, %75, %cst_85 {dimension_numbers = #tpu.dot_dimension_numbers<[1], [0], [0], [1], [0, 0, 1, 1], [], []>} : vector<7x288xf32>, vector<288x224xf32>, vector<7x224xf32> -> vector<7x224xf32>
    %79 = arith.addf %63, %78 : vector<7x224xf32>
    %cst_86 = arith.constant dense<0.000000e+00> : vector<7x224xf32>
    %80 = tpu.matmul %71, %73, %cst_86 {dimension_numbers = #tpu.dot_dimension_numbers<[1], [0], [0], [1], [0, 0, 1, 1], [], []>} : vector<7x288xf32>, vector<288x224xf32>, vector<7x224xf32> -> vector<7x224xf32>
    %81 = arith.addf %65, %80 : vector<7x224xf32>
    %cst_87 = arith.constant dense<0.000000e+00> : vector<7x224xf32>
    %82 = tpu.matmul %71, %75, %cst_87 {dimension_numbers = #tpu.dot_dimension_numbers<[1], [0], [0], [1], [0, 0, 1, 1], [], []>} : vector<7x288xf32>, vector<288x224xf32>, vector<7x224xf32> -> vector<7x224xf32>
    %83 = arith.addf %67, %82 : vector<7x224xf32>
    %84 = arith.maximumf %77, %79 : vector<7x224xf32>
    %85 = arith.maximumf %81, %83 : vector<7x224xf32>
    %86 = arith.maximumf %84, %85 : vector<7x224xf32>
    %c0_88 = arith.constant 0 : index
    %c0_89 = arith.constant 0 : index
    %87 = vector.load %arg4[%c0_88, %c0_89] : memref<1x224xf32, #tpu.memory_space<vmem>>, vector<1x224xf32>
    %88 = vector.broadcast %87 : vector<1x224xf32> to vector<7x224xf32>
    %89 = arith.addf %86, %88 : vector<7x224xf32>
    %cst_90 = arith.constant 0.000000e+00 : f32
    %90 = vector.broadcast %cst_90 : f32 to vector<7x224xf32>
    %91 = arith.maximumf %89, %90 : vector<7x224xf32>
    %c0_91 = arith.constant 0 : index
    %c0_92 = arith.constant 0 : index
    %c0_93 = arith.constant 0 : index
    %92 = vector.load %arg5[%c0_91, %c0_92, %c0_93] : memref<1x7x224xf32, #tpu.memory_space<vmem>>, vector<1x7x224xf32>
    %93 = vector.shape_cast %92 : vector<1x7x224xf32> to vector<7x224xf32>
    %94 = vector.shape_cast %91 : vector<7x224xf32> to vector<1x7x224xf32>
    tpu.vector_store %arg5[%c0_91, %c0_92, %c0_93], %94 {strides = array<i32>} : memref<1x7x224xf32, #tpu.memory_space<vmem>>, vector<1x7x224xf32>,
    return
  }
  func.func @transform_0(%arg0: i32) -> (i32, i32, i32) {
    %c0_i32 = arith.constant 0 : i32
    %c0_i32_0 = arith.constant 0 : i32
    %c0_i32_1 = arith.constant 0 : i32
    return %arg0, %c0_i32, %c0_i32_0 : i32, i32, i32
  }
  func.func @transform_1(%arg0: i32) -> (i32, i32, i32) {
    %c0_i32 = arith.constant 0 : i32
    %c0_i32_0 = arith.constant 0 : i32
    %c0_i32_1 = arith.constant 0 : i32
    return %arg0, %c0_i32, %c0_i32_0 : i32, i32, i32
  }
  func.func @transform_2(%arg0: i32) -> (i32, i32, i32, i32) {
    %c0_i32 = arith.constant 0 : i32
    %c0_i32_0 = arith.constant 0 : i32
    %c0_i32_1 = arith.constant 0 : i32
    %c0_i32_2 = arith.constant 0 : i32
    %c0_i32_3 = arith.constant 0 : i32
    return %c0_i32, %c0_i32_0, %c0_i32_1, %c0_i32_2 : i32, i32, i32, i32
  }
  func.func @transform_3(%arg0: i32) -> (i32, i32) {
    %c0_i32 = arith.constant 0 : i32
    %c0_i32_0 = arith.constant 0 : i32
    %c0_i32_1 = arith.constant 0 : i32
    return %c0_i32, %c0_i32_0 : i32, i32
  }
  func.func @transform_4(%arg0: i32) -> (i32, i32, i32) {
    %c0_i32 = arith.constant 0 : i32
    %c0_i32_0 = arith.constant 0 : i32
    %c0_i32_1 = arith.constant 0 : i32
    return %arg0, %c0_i32, %c0_i32_0 : i32, i32, i32
  }
}

module attributes {stable_mosaic.version = 11 : i64} {
  func.func @_fc_stack_kernel(%arg0: memref<2x1568xf32, #tpu.memory_space<vmem>>, %arg1: memref<1568x256xf32, #tpu.memory_space<vmem>>, %arg2: memref<1x256xf32, #tpu.memory_space<vmem>>, %arg3: memref<256x128xf32, #tpu.memory_space<vmem>>, %arg4: memref<1x128xf32, #tpu.memory_space<vmem>>, %arg5: memref<128x128xf32, #tpu.memory_space<vmem>>, %arg6: memref<1x128xf32, #tpu.memory_space<vmem>>, %arg7: memref<2x128xf32, #tpu.memory_space<vmem>>, %arg8: memref<2x256xf32, #tpu.memory_space<vmem>>) attributes {dimension_semantics = [], scalar_prefetch = 0 : i64, scratch_operands = 0 : i64, tpu.core_type = #tpu.core_type<tc>} {
    %c0 = arith.constant 0 : index
    %c0_0 = arith.constant 0 : index
    %0 = vector.load %arg0[%c0, %c0_0] : memref<2x1568xf32, #tpu.memory_space<vmem>>, vector<2x1568xf32>
    %c0_1 = arith.constant 0 : index
    %c0_2 = arith.constant 0 : index
    %1 = vector.load %arg1[%c0_1, %c0_2] : memref<1568x256xf32, #tpu.memory_space<vmem>>, vector<1568x256xf32>
    %cst = arith.constant dense<0.000000e+00> : vector<2x256xf32>
    %2 = tpu.matmul %0, %1, %cst {dimension_numbers = #tpu.dot_dimension_numbers<[1], [0], [0], [1], [0, 0, 1, 1], [], []>} : vector<2x1568xf32>, vector<1568x256xf32>, vector<2x256xf32> -> vector<2x256xf32>
    %c0_3 = arith.constant 0 : index
    %c0_4 = arith.constant 0 : index
    %3 = vector.load %arg2[%c0_3, %c0_4] : memref<1x256xf32, #tpu.memory_space<vmem>>, vector<1x256xf32>
    %4 = vector.broadcast %3 : vector<1x256xf32> to vector<2x256xf32>
    %5 = arith.addf %2, %4 : vector<2x256xf32>
    %c0_5 = arith.constant 0 : index
    %c0_6 = arith.constant 0 : index
    %6 = vector.load %arg8[%c0_5, %c0_6] : memref<2x256xf32, #tpu.memory_space<vmem>>, vector<2x256xf32>
    tpu.vector_store %arg8[%c0_5, %c0_6], %5 {strides = array<i32>} : memref<2x256xf32, #tpu.memory_space<vmem>>, vector<2x256xf32>,
    %c0_7 = arith.constant 0 : index
    %c0_8 = arith.constant 0 : index
    %7 = vector.load %arg3[%c0_7, %c0_8] : memref<256x128xf32, #tpu.memory_space<vmem>>, vector<256x128xf32>
    %cst_9 = arith.constant dense<0.000000e+00> : vector<2x128xf32>
    %8 = tpu.matmul %5, %7, %cst_9 {dimension_numbers = #tpu.dot_dimension_numbers<[1], [0], [0], [1], [0, 0, 1, 1], [], []>} : vector<2x256xf32>, vector<256x128xf32>, vector<2x128xf32> -> vector<2x128xf32>
    %c0_10 = arith.constant 0 : index
    %c0_11 = arith.constant 0 : index
    %9 = vector.load %arg4[%c0_10, %c0_11] : memref<1x128xf32, #tpu.memory_space<vmem>>, vector<1x128xf32>
    %10 = vector.broadcast %9 : vector<1x128xf32> to vector<2x128xf32>
    %11 = arith.addf %8, %10 : vector<2x128xf32>
    %c0_12 = arith.constant 0 : index
    %c0_13 = arith.constant 0 : index
    %12 = vector.load %arg5[%c0_12, %c0_13] : memref<128x128xf32, #tpu.memory_space<vmem>>, vector<128x128xf32>
    %cst_14 = arith.constant dense<0.000000e+00> : vector<2x128xf32>
    %13 = tpu.matmul %11, %12, %cst_14 {dimension_numbers = #tpu.dot_dimension_numbers<[1], [0], [0], [1], [0, 0, 1, 1], [], []>} : vector<2x128xf32>, vector<128x128xf32>, vector<2x128xf32> -> vector<2x128xf32>
    %c0_15 = arith.constant 0 : index
    %c0_16 = arith.constant 0 : index
    %14 = vector.load %arg6[%c0_15, %c0_16] : memref<1x128xf32, #tpu.memory_space<vmem>>, vector<1x128xf32>
    %15 = vector.broadcast %14 : vector<1x128xf32> to vector<2x128xf32>
    %16 = arith.addf %13, %15 : vector<2x128xf32>
    %c0_17 = arith.constant 0 : index
    %c0_18 = arith.constant 0 : index
    %17 = vector.load %arg7[%c0_17, %c0_18] : memref<2x128xf32, #tpu.memory_space<vmem>>, vector<2x128xf32>
    tpu.vector_store %arg7[%c0_17, %c0_18], %16 {strides = array<i32>} : memref<2x128xf32, #tpu.memory_space<vmem>>, vector<2x128xf32>,
    return
  }
}

</mosaic_0001>

<llo_original>
// kernel: cnn_forward.3
$region0: #{cnn_forward.3}
  #allocation0 [shape = 'u32[]', space=smem, size = 0x4, offset = 0x4, fixed_abs, tag = 'smem constant byte address 0x4 - core index']
  #allocation1 [shape = 'u32[144,128]{1,0:T(1,128)}', space=vmem, size = 0x12000, scoped, tag = 'internal scratch']
  %s0 = inlined_call_operand.vmem [shape: f32[2,16,32], index: 0, kind: input, shape index: {}]
  %s1 = inlined_call_operand.vmem [shape: f32[2,16,32], index: 1, kind: input, shape index: {}]
  %s2 = inlined_call_operand.hbm [shape: f32[2,5,32,224], index: 2, kind: input, shape index: {}]
  %s3 = inlined_call_operand.hbm [shape: f32[1,224], index: 3, kind: input, shape index: {}]
  %s4 = inlined_call_operand.vmem [shape: f32[2,14,224], index: 4, kind: output, shape index: {}]
  %s5 = sld [smem:[#allocation0]]
  $region57: #{cnn_forward.3} parent=0
    _
  %s7 = ssub.s32 1, %s5
  %s8 = scalar_select 0, %s7, %s5
  $region1: #{cnn_forward.3} parent=0
    #allocation2 [shape = 'u8[327680]{0}', space=vmem, size = 0x50000, scoped, tag = 'input window, operand 2, single buffered']
    #allocation3 [shape = 's32[2]{0}', space=sflag, size = 0x8, scoped, tag = 'scoped memory for cnn_forward.3']
    #allocation4 [shape = 'u8[1024]{0}', space=vmem, size = 0x400, scoped, tag = 'input window, operand 3, single buffered']
    #allocation5 [shape = 's32[1]{0}', space=sflag, size = 0x4, scoped, tag = 'scoped memory for cnn_forward.3']
    %9 = vsyncpa [#allocation3], 0
    %10 = vsyncpa [#allocation5], 0
    loop: start=0, step=1, limit=4
    $region2: #{cnn_forward.3} parent=1 // loop_pre_header
      _
    $region3: #{cnn_forward.3} parent=1 // loop_header
      %s12 = sphi 0, %s16
      %p13 = scmp.ge.s32.totalorder %s12, 4
      %s22 = sphi 0, %s24
      %s25 = sphi 0, %s22
      %s26 = sphi 0, %s25
      %s42 = sphi 0, %s26
      %s48 = sphi 0, %s50
      %s51 = sphi 0, %s48
      %s52 = sphi 0, %s51
      %s68 = sphi 0, %s52
      %s72 = sphi 0, %s72
      %s74 = sphi 0, %s72
      %s75 = sphi 0, %s74
      %s89 = sphi 0, %s75
      %s93 = sphi 0, %s93
      %s95 = sphi 0, %s93
      %s96 = sphi 0, %s95
      %s110 = sphi 0, %s96
      %s116 = sphi 0, %s118
      %s119 = sphi 0, %s116
      %s120 = sphi 0, %s119
      %s136 = sphi 0, %s120
    $region4: #{cnn_forward.3} parent=1 // loop_header_branch
      %15 = sbr.rel (%p13) target = $region8
    $region5: #{cnn_forward.3} parent=1 // loop_body
      %s17 = ssub.s32 %s12, 1
      %s18 = ssub.s32 %s12, 2
      %s19 = sadd.s32 %s12, 1
      %s20 = ssub.s32 %s12, %s19
      %p21 = scmp.eq.s32.totalorder %s20, 0
      %s23 = sadd.s32 %s22, 1
      %s24 = scalar_select %p21, %s22, %s23
      %p27 = pneg %p21
      %p28 = scmp.eq.s32.totalorder %s12, 1
      %p29 = por %p27, %p28
      %p30 = scmp.ne.s32.totalorder %s22, %s25
      %p31 = scmp.eq.s32.totalorder %s12, 0
      %p32 = por %p30, %p31
      %p33 = scmp.ne.s32.totalorder %s22, %s25
      %p34 = scmp.eq.s32.totalorder %s17, 1
      %p35 = por %p33, %p34
      %p36 = scmp.ne.s32.totalorder %s25, %s26
      %p37 = scmp.eq.s32.totalorder %s17, 0
      %p38 = por %p36, %p37
      %p39 = scmp.ne.s32.totalorder %s25, %s26
      %p40 = scmp.eq.s32.totalorder %s18, 1
      %p41 = por %p39, %p40
      %p43 = scmp.ne.s32.totalorder %s26, %s42
      %p44 = scmp.eq.s32.totalorder %s18, 0
      %p45 = por %p43, %p44
      %s46 = ssub.s32 %s12, %s19
      %p47 = scmp.eq.s32.totalorder %s46, 0
      %s49 = sadd.s32 %s48, 1
      %s50 = scalar_select %p47, %s48, %s49
      %p53 = pneg %p47
      %p54 = scmp.eq.s32.totalorder %s12, 1
      %p55 = por %p53, %p54
      %p56 = scmp.ne.s32.totalorder %s48, %s51
      %p57 = scmp.eq.s32.totalorder %s12, 0
      %p58 = por %p56, %p57
      %p59 = scmp.ne.s32.totalorder %s48, %s51
      %p60 = scmp.eq.s32.totalorder %s17, 1
      %p61 = por %p59, %p60
      %p62 = scmp.ne.s32.totalorder %s51, %s52
      %p63 = scmp.eq.s32.totalorder %s17, 0
      %p64 = por %p62, %p63
      %p65 = scmp.ne.s32.totalorder %s51, %s52
      %p66 = scmp.eq.s32.totalorder %s18, 1
      %p67 = por %p65, %p66
      %p69 = scmp.ne.s32.totalorder %s52, %s68
      %p70 = scmp.eq.s32.totalorder %s18, 0
      %p71 = por %p69, %p70
      %s73 = sadd.s32 %s72, 1
      %p76 = scmp.eq.s32.totalorder %s12, 1
      %p77 = scmp.ne.s32.totalorder %s72, %s74
      %p78 = scmp.eq.s32.totalorder %s12, 0
      %p79 = por %p77, %p78
      %p80 = scmp.ne.s32.totalorder %s72, %s74
      %p81 = scmp.eq.s32.totalorder %s17, 1
      %p82 = por %p80, %p81
      %p83 = scmp.ne.s32.totalorder %s74, %s75
      %p84 = scmp.eq.s32.totalorder %s17, 0
      %p85 = por %p83, %p84
      %p86 = scmp.ne.s32.totalorder %s74, %s75
      %p87 = scmp.eq.s32.totalorder %s18, 1
      %p88 = por %p86, %p87
      %p90 = scmp.ne.s32.totalorder %s75, %s89
      %p91 = scmp.eq.s32.totalorder %s18, 0
      %p92 = por %p90, %p91
      %s94 = sadd.s32 %s93, 1
      %p97 = scmp.eq.s32.totalorder %s12, 1
      %p98 = scmp.ne.s32.totalorder %s93, %s95
      %p99 = scmp.eq.s32.totalorder %s12, 0
      %p100 = por %p98, %p99
      %p101 = scmp.ne.s32.totalorder %s93, %s95
      %p102 = scmp.eq.s32.totalorder %s17, 1
      %p103 = por %p101, %p102
      %p104 = scmp.ne.s32.totalorder %s95, %s96
      %p105 = scmp.eq.s32.totalorder %s17, 0
      %p106 = por %p104, %p105
      %p107 = scmp.ne.s32.totalorder %s95, %s96
      %p108 = scmp.eq.s32.totalorder %s18, 1
      %p109 = por %p107, %p108
      %p111 = scmp.ne.s32.totalorder %s96, %s110
      %p112 = scmp.eq.s32.totalorder %s18, 0
      %p113 = por %p111, %p112
      %s114 = ssub.s32 %s12, %s19
      %p115 = scmp.eq.s32.totalorder %s114, 0
      %s117 = sadd.s32 %s116, 1
      %s118 = scalar_select %p115, %s116, %s117
      %p121 = pneg %p115
      %p122 = scmp.eq.s32.totalorder %s12, 1
      %p123 = por %p121, %p122
      %p124 = scmp.ne.s32.totalorder %s116, %s119
      %p125 = scmp.eq.s32.totalorder %s12, 0
      %p126 = por %p124, %p125
      %p127 = scmp.ne.s32.totalorder %s116, %s119
      %p128 = scmp.eq.s32.totalorder %s17, 1
      %p129 = por %p127, %p128
      %p130 = scmp.ne.s32.totalorder %s119, %s120
      %p131 = scmp.eq.s32.totalorder %s17, 0
      %p132 = por %p130, %p131
      %p133 = scmp.ne.s32.totalorder %s119, %s120
      %p134 = scmp.eq.s32.totalorder %s18, 1
      %p135 = por %p133, %p134
      %p137 = scmp.ne.s32.totalorder %s120, %s136
      %p138 = scmp.eq.s32.totalorder %s18, 0
      %p139 = por %p137, %p138
      %p140 = scmp.le.s32.totalorder 1, %s12
      %p141 = scmp.lt.s32.totalorder %s12, 3
      %p142 = pnand %p140, %p141
      %p143 = pneg %p142
      // Predicated region
      $region9: #{cnn_forward.3} parent=5 // pred_check
        _
      $region10: #{cnn_forward.3} parent=5 // pred_check_branch
        %145 = sbr.rel (%p142) target = $region12
      $region11: #{cnn_forward.3} parent=5 // pred_region
        %s146 = ssub.s32 %s12, 1
        // Predicated region
        $region13: #{cnn_forward.3} parent=11 // pred_check
          %p147 = pneg %p85
        $region14: #{cnn_forward.3} parent=11 // pred_check_branch
          %149 = sbr.rel (%p147) target = $region16
        $region15: #{cnn_forward.3} parent=11 // pred_region
          %s151 = ssub.s32 10240, 10240
          %152 = vsyncadd [#allocation3], %s151
          %s153 = sshll.u32 [#allocation2], 4
          %s154 = int_to_ptr.vmem [resolvable:$true] %s153
          %159 = dma.hbm_to_vmem [thread:$0]  %s2, 10240, %s154, [#allocation3], 256, 256, 16
        $region16: #{cnn_forward.3} parent=11 // pred_fallthru
          _
        // Predicated region
        $region17: #{cnn_forward.3} parent=11 // pred_check
          %p160 = pneg %p106
        $region18: #{cnn_forward.3} parent=11 // pred_check_branch
          %162 = sbr.rel (%p160) target = $region20
        $region19: #{cnn_forward.3} parent=11 // pred_region
          %s164 = ssub.s32 32, 32
          %165 = vsyncadd [#allocation5], %s164
          %s167 = sshll.u32 [#allocation4], 4
          %s168 = int_to_ptr.vmem [resolvable:$true] %s167
          %170 = dma.hbm_to_vmem [thread:$0]  %s3, 32, %s168, [#allocation5]
        $region20: #{cnn_forward.3} parent=11 // pred_fallthru
          _
      $region12: #{cnn_forward.3} parent=5 // pred_fallthru
        _
      %p171 = scmp.lt.s32.totalorder %s12, 2
      // Predicated region
      $region21: #{cnn_forward.3} parent=5 // pred_check
        %p172 = pneg %p171
      $region22: #{cnn_forward.3} parent=5 // pred_check_branch
        %174 = sbr.rel (%p172) target = $region24
      $region23: #{cnn_forward.3} parent=5 // pred_region
        // Predicated region
        $region25: #{cnn_forward.3} parent=23 // pred_check
          %p175 = pneg %p32
        $region26: #{cnn_forward.3} parent=23 // pred_check_branch
          %177 = sbr.rel (%p175) target = $region28
        $region27: #{cnn_forward.3} parent=23 // pred_region
          %p178 = scmp.lt.s32.totalorder %s12, 1
          %s179 = scalar_select %p178, %s12, 1
          %s180 = smul.addr %s179, 2
          %s181 = smul.addr %s180, 8
          %s182 = scalar_lea.vmem %s0, %s181
        $region28: #{cnn_forward.3} parent=23 // pred_fallthru
          _
        // Predicated region
        $region29: #{cnn_forward.3} parent=23 // pred_check
          %p183 = pneg %p58
        $region30: #{cnn_forward.3} parent=23 // pred_check_branch
          %185 = sbr.rel (%p183) target = $region32
        $region31: #{cnn_forward.3} parent=23 // pred_region
          %p186 = scmp.lt.s32.totalorder %s12, 1
          %s187 = scalar_select %p186, %s12, 1
          %s188 = smul.addr %s187, 2
          %s189 = smul.addr %s188, 8
          %s190 = scalar_lea.vmem %s1, %s189
        $region32: #{cnn_forward.3} parent=23 // pred_fallthru
          _
      $region24: #{cnn_forward.3} parent=5 // pred_fallthru
        _
      %p191 = scmp.le.s32.totalorder 1, %s12
      %p192 = scmp.lt.s32.totalorder %s12, 3
      %p193 = pnand %p191, %p192
      %p194 = pneg %p193
      // Predicated region
      $region33: #{cnn_forward.3} parent=5 // pred_check
        _
      $region34: #{cnn_forward.3} parent=5 // pred_check_branch
        %196 = sbr.rel (%p193) target = $region36
      $region35: #{cnn_forward.3} parent=5 // pred_region
        %s197 = ssub.s32 %s12, 1
        // Predicated region
        $region37: #{cnn_forward.3} parent=35 // pred_check
          %p198 = pneg %p85
        $region38: #{cnn_forward.3} parent=35 // pred_check_branch
          %200 = sbr.rel (%p198) target = $region40
        $region39: #{cnn_forward.3} parent=35 // pred_region
          %201 = dma.done [#allocation3], 10240
        $region40: #{cnn_forward.3} parent=35 // pred_fallthru
          _
        // Predicated region
        $region41: #{cnn_forward.3} parent=35 // pred_check
          %p202 = pneg %p106
        $region42: #{cnn_forward.3} parent=35 // pred_check_branch
          %204 = sbr.rel (%p202) target = $region44
        $region43: #{cnn_forward.3} parent=35 // pred_region
          %205 = dma.done [#allocation5], 32
        $region44: #{cnn_forward.3} parent=35 // pred_fallthru
          _
        %p206 = scmp.lt.s32.totalorder %s17, 1
        %s207 = scalar_select %p206, %s17, 1
        %s208 = smul.addr %s207, 2
        %s209 = smul.addr %s208, 8
        %s210 = scalar_lea.vmem %s0, %s209
        %p211 = pneg %p38
        %p212 = pneg %p35
        %p213 = scmp.lt.s32.totalorder %s17, 1
        %s214 = scalar_select %p213, %s17, 1
        %s215 = smul.addr %s214, 2
        %s216 = smul.addr %s215, 8
        %s217 = scalar_lea.vmem %s1, %s216
        %p218 = pneg %p64
        %p219 = pneg %p61
        %p220 = pneg %p85
        %p221 = pneg %p82
        %p222 = pneg %p106
        %p223 = pneg %p103
        %p224 = pneg %p132
        %p225 = pneg %p129
        %p226 = scmp.lt.s32.totalorder %s17, 1
        %s227 = scalar_select %p226, %s17, 1
        %s228 = smul.addr %s227, 4
        %s229 = smul.addr %s228, 8
        %s230 = scalar_lea.vmem %s4, %s229
        %p231 = scmp.lt.s32.totalorder %s17, 1
        %s232 = scalar_select %p231, %s17, 1
        %s233 = smul.addr %s232, 2
        %s234 = smul.addr %s233, 8
        %s235 = scalar_lea.vmem %s0, %s234
        %p236 = scmp.lt.s32.totalorder %s17, 1
        %s237 = scalar_select %p236, %s17, 1
        %s238 = smul.addr %s237, 2
        %s239 = smul.addr %s238, 8
        %s240 = scalar_lea.vmem %s1, %s239
        %p241 = scmp.lt.s32.totalorder %s17, 1
        %s242 = scalar_select %p241, %s17, 1
        %s243 = smul.addr %s242, 4
        %s244 = smul.addr %s243, 8
        %s245 = scalar_lea.vmem %s4, %s244
        %v246 = vld [vmem:[%s235] sm:$0xff]
        %v247 = vld [vmem:[%s235 + $0x8] sm:$0x3f]
        %v248 = vld [vmem:[%s240] sm:$0xff]
        %v249 = vld [vmem:[%s240 + $0x8] sm:$0x3f]
        %v250 = vld [vmem:[#allocation2] sm:$0xff]
        %v251 = vld [vmem:[#allocation2 + $0x8] sm:$0xff]
        %v252 = vld [vmem:[#allocation2 + $0x10] sm:$0xff]
        %v253 = vld [vmem:[#allocation2 + $0x18] sm:$0xff]
        %v254 = vld [vmem:[#allocation2 + $0x20] sm:$0xff]
        %v255 = vld [vmem:[#allocation2 + $0x28] sm:$0xff]
        %v256 = vld [vmem:[#allocation2 + $0x30] sm:$0xff]
        %v257 = vld [vmem:[#allocation2 + $0x38] sm:$0xff]
        %s258 = scalar_lea.vmem [#allocation2], 320
        %v259 = vld [vmem:[%s258] sm:$0xff]
        %v260 = vld [vmem:[%s258 + $0x8] sm:$0xff]
        %v261 = vld [vmem:[%s258 + $0x10] sm:$0xff]
        %v262 = vld [vmem:[%s258 + $0x18] sm:$0xff]
        %v263 = vld [vmem:[%s258 + $0x20] sm:$0xff]
        %v264 = vld [vmem:[%s258 + $0x28] sm:$0xff]
        %v265 = vld [vmem:[%s258 + $0x30] sm:$0xff]
        %v266 = vld [vmem:[%s258 + $0x38] sm:$0xff]
        %v267 = vld [vmem:[%s235 + $0x1] sm:$0xff]
        %v268 = vld [vmem:[%s235 + $0x9] sm:$0x3f]
        %s269 = scalar_lea.vmem [#allocation2], 64
        %v270 = vld [vmem:[%s269] sm:$0xff]
        %v271 = vld [vmem:[%s269 + $0x8] sm:$0xff]
        %v272 = vld [vmem:[%s269 + $0x10] sm:$0xff]
        %v273 = vld [vmem:[%s269 + $0x18] sm:$0xff]
        %v274 = vld [vmem:[%s269 + $0x20] sm:$0xff]
        %v275 = vld [vmem:[%s269 + $0x28] sm:$0xff]
        %v276 = vld [vmem:[%s269 + $0x30] sm:$0xff]
        %v277 = vld [vmem:[%s269 + $0x38] sm:$0xff]
        %s278 = scalar_lea.vmem [#allocation2], 384
        %v279 = vld [vmem:[%s278] sm:$0xff]
        %v280 = vld [vmem:[%s278 + $0x8] sm:$0xff]
        %v281 = vld [vmem:[%s278 + $0x10] sm:$0xff]
        %v282 = vld [vmem:[%s278 + $0x18] sm:$0xff]
        %v283 = vld [vmem:[%s278 + $0x20] sm:$0xff]
        %v284 = vld [vmem:[%s278 + $0x28] sm:$0xff]
        %v285 = vld [vmem:[%s278 + $0x30] sm:$0xff]
        %v286 = vld [vmem:[%s278 + $0x38] sm:$0xff]
        %vm287 = vcmask 261120
        %v289 = vsel %vm287, %v248, 0
        %v292 = vsel %vm287, %v249, 0
        %294 = vmatprep.subr.mxu0 %v271
        %295 = vmatpush1.msra.mxu0 %v270
        %296 = vmatprep.subr.mxu0 %v273
        %297 = vmatpush1.msra.mxu0 %v272
        %298 = vmatprep.subr.mxu0 %v275
        %299 = vmatpush1.msra.mxu0 %v274
        %300 = vmatprep.subr.mxu0 %v277
        %301 = vmatpush1.msra.mxu0 %v276
        %302 = vmatprep.subr.mxu0 0.0
        %303 = vmatpush1.msra.mxu0 0.0
        %304 = vmatprep.subr.mxu0 0.0
        %305 = vmatpush1.msra.mxu0 0.0
        %306 = vmatprep.subr.mxu0 0.0
        %307 = vmatpush1.msra.mxu0 0.0
        %308 = vmatprep.subr.mxu0 0.0
        %309 = vmatpush1.msra.mxu0 0.0
        %310 = vmatprep.subr.mxu0 0.0
        %311 = vmatpush1.msra.mxu0 0.0
        %312 = vmatprep.subr.mxu0 0.0
        %313 = vmatpush1.msra.mxu0 0.0
        %314 = vmatprep.subr.mxu0 0.0
        %315 = vmatpush1.msra.mxu0 0.0
        %316 = vmatprep.subr.mxu0 0.0
        %317 = vmatpush1.msra.mxu0 0.0
        %318 = vmatprep.subr.mxu0 0.0
        %319 = vmatpush1.msra.mxu0 0.0
        %320 = vmatprep.subr.mxu0 0.0
        %321 = vmatpush1.msra.mxu0 0.0
        %322 = vmatprep.subr.mxu0 0.0
        %323 = vmatpush1.msra.mxu0 0.0
        %324 = vmatprep.subr.mxu0 0.0
        %325 = vmatpush1.msra.mxu0 0.0
        %326 = vmatprep.subr.mxu0 0.0
        %327 = vmatpush1.msra.mxu0 0.0
        %328 = vmatprep.subr.mxu0 0.0
        %329 = vmatpush1.msra.mxu0 0.0
        %330 = vmatprep.subr.mxu0 0.0
        %331 = vmatpush1.msra.mxu0 0.0
        %332 = vmatprep.subr.mxu0 0.0
        %333 = vmatpush1.msra.mxu0 0.0
        %334 = vmatprep.subr.mxu0 0.0
        %335 = vmatpush1.msra.mxu0 0.0
        %336 = vmatprep.subr.mxu0 0.0
        %337 = vmatpush1.msra.mxu0 0.0
        %338 = vmatprep.subr.mxu0 0.0
        %339 = vmatpush1.msra.mxu0 0.0
        %340 = vmatprep.subr.mxu0 0.0
        %341 = vmatpush1.msra.mxu0 0.0
        %342 = vmatprep.subr.mxu0 0.0
        %343 = vmatpush1.msra.mxu0 0.0
        %344 = vmatprep.subr.mxu0 0.0
        %345 = vmatpush1.msra.mxu0 0.0
        %346 = vmatprep.subr.mxu0 0.0
        %347 = vmatpush1.msra.mxu0 0.0
        %348 = vmatprep.subr.mxu0 0.0
        %349 = vmatpush1.msra.mxu0 0.0
        %350 = vmatprep.subr.mxu0 0.0
        %351 = vmatpush1.msra.mxu0 0.0
        %352 = vmatprep.subr.mxu0 0.0
        %353 = vmatpush1.msra.mxu0 0.0
        %354 = vmatprep.subr.mxu0 0.0
        %355 = vmatpush1.msra.mxu0 0.0
        %356 = vmatprep.subr.mxu0 0.0
        %357 = vmatpush1.msra.mxu0 0.0
        %358 = vmatprep.mubr.f32.mxu0 0.0
        %359 = vmatmul.mubr.f32.gmra.mrb[0].mxu0 %v289
        %v360 = vpop.f32.mrb[0].mxu0
        %v361 = vadd.f32 0.0, %v360
        %v362 = vpop.f32.mrb[0].mxu0
        %v363 = vadd.f32 0.0, %v362
        %364 = vmatprep.mubr.f32.mxu0 0.0
        %365 = vmatmul.mubr.f32.gmra.mrb[0].mxu0 %v292
        %v366 = vpop.f32.mrb[0].mxu0
        %v367 = vadd.f32 0.0, %v366
        %v368 = vpop.f32.mrb[0].mxu0
        %v369 = vadd.f32 0.0, %v368
        %370 = vdwg.mxu0
        %v372 = vsel %vm287, %v246, 0
        %v375 = vsel %vm287, %v247, 0
        %377 = vmatprep.subr.mxu0 %v251
        %378 = vmatpush1.msra.mxu0 %v250
        %379 = vmatprep.subr.mxu0 %v253
        %380 = vmatpush1.msra.mxu0 %v252
        %381 = vmatprep.subr.mxu0 %v255
        %382 = vmatpush1.msra.mxu0 %v254
        %383 = vmatprep.subr.mxu0 %v257
        %384 = vmatpush1.msra.mxu0 %v256
        %385 = vmatprep.subr.mxu0 0.0
        %386 = vmatpush1.msra.mxu0 0.0
        %387 = vmatprep.subr.mxu0 0.0
        %388 = vmatpush1.msra.mxu0 0.0
        %389 = vmatprep.subr.mxu0 0.0
        %390 = vmatpush1.msra.mxu0 0.0
        %391 = vmatprep.subr.mxu0 0.0
        %392 = vmatpush1.msra.mxu0 0.0
        %393 = vmatprep.subr.mxu0 0.0
        %394 = vmatpush1.msra.mxu0 0.0
        %395 = vmatprep.subr.mxu0 0.0
        %396 = vmatpush1.msra.mxu0 0.0
        %397 = vmatprep.subr.mxu0 0.0
        %398 = vmatpush1.msra.mxu0 0.0
        %399 = vmatprep.subr.mxu0 0.0
        %400 = vmatpush1.msra.mxu0 0.0
        %401 = vmatprep.subr.mxu0 0.0
        %402 = vmatpush1.msra.mxu0 0.0
        %403 = vmatprep.subr.mxu0 0.0
        %404 = vmatpush1.msra.mxu0 0.0
        %405 = vmatprep.subr.mxu0 0.0
        %406 = vmatpush1.msra.mxu0 0.0
        %407 = vmatprep.subr.mxu0 0.0
        %408 = vmatpush1.msra.mxu0 0.0
        %409 = vmatprep.subr.mxu0 0.0
        %410 = vmatpush1.msra.mxu0 0.0
        %411 = vmatprep.subr.mxu0 0.0
        %412 = vmatpush1.msra.mxu0 0.0
        %413 = vmatprep.subr.mxu0 0.0
        %414 = vmatpush1.msra.mxu0 0.0
        %415 = vmatprep.subr.mxu0 0.0
        %416 = vmatpush1.msra.mxu0 0.0
        %417 = vmatprep.subr.mxu0 0.0
        %418 = vmatpush1.msra.mxu0 0.0
        %419 = vmatprep.subr.mxu0 0.0
        %420 = vmatpush1.msra.mxu0 0.0
        %421 = vmatprep.subr.mxu0 0.0
        %422 = vmatpush1.msra.mxu0 0.0
        %423 = vmatprep.subr.mxu0 0.0
        %424 = vmatpush1.msra.mxu0 0.0
        %425 = vmatprep.subr.mxu0 0.0
        %426 = vmatpush1.msra.mxu0 0.0
        %427 = vmatprep.subr.mxu0 0.0
        %428 = vmatpush1.msra.mxu0 0.0
        %429 = vmatprep.subr.mxu0 0.0
        %430 = vmatpush1.msra.mxu0 0.0
        %431 = vmatprep.subr.mxu0 0.0
        %432 = vmatpush1.msra.mxu0 0.0
        %433 = vmatprep.subr.mxu0 0.0
        %434 = vmatpush1.msra.mxu0 0.0
        %435 = vmatprep.subr.mxu0 0.0
        %436 = vmatpush1.msra.mxu0 0.0
        %437 = vmatprep.subr.mxu0 0.0
        %438 = vmatpush1.msra.mxu0 0.0
        %439 = vmatprep.subr.mxu0 0.0
        %440 = vmatpush1.msra.mxu0 0.0
        %441 = vmatprep.mubr.f32.mxu0 0.0
        %442 = vmatmul.mubr.f32.gmra.mrb[0].mxu0 %v372
        %v443 = vpop.f32.mrb[0].mxu0
        %v444 = vadd.f32 %v361, %v443
        %v445 = vpop.f32.mrb[0].mxu0
        %v446 = vadd.f32 %v363, %v445
        %447 = vmatprep.mubr.f32.mxu0 0.0
        %448 = vmatmul.mubr.f32.gmra.mrb[0].mxu0 %v375
        %v449 = vpop.f32.mrb[0].mxu0
        %v450 = vadd.f32 %v367, %v449
        %v451 = vpop.f32.mrb[0].mxu0
        %v452 = vadd.f32 %v369, %v451
        %453 = vdwg.mxu0
        %454 = vmatprep.subr.mxu0 %v280
        %455 = vmatpush1.msra.mxu0 %v279
        %456 = vmatprep.subr.mxu0 %v282
        %457 = vmatpush1.msra.mxu0 %v281
        %458 = vmatprep.subr.mxu0 %v284
        %459 = vmatpush1.msra.mxu0 %v283
        %460 = vmatprep.subr.mxu0 %v286
        %461 = vmatpush1.msra.mxu0 %v285
        %462 = vmatprep.subr.mxu0 0.0
        %463 = vmatpush1.msra.mxu0 0.0
        %464 = vmatprep.subr.mxu0 0.0
        %465 = vmatpush1.msra.mxu0 0.0
        %466 = vmatprep.subr.mxu0 0.0
        %467 = vmatpush1.msra.mxu0 0.0
        %468 = vmatprep.subr.mxu0 0.0
        %469 = vmatpush1.msra.mxu0 0.0
        %470 = vmatprep.subr.mxu0 0.0
        %471 = vmatpush1.msra.mxu0 0.0
        %472 = vmatprep.subr.mxu0 0.0
        %473 = vmatpush1.msra.mxu0 0.0
        %474 = vmatprep.subr.mxu0 0.0
        %475 = vmatpush1.msra.mxu0 0.0
        %476 = vmatprep.subr.mxu0 0.0
        %477 = vmatpush1.msra.mxu0 0.0
        %478 = vmatprep.subr.mxu0 0.0
        %479 = vmatpush1.msra.mxu0 0.0
        %480 = vmatprep.subr.mxu0 0.0
        %481 = vmatpush1.msra.mxu0 0.0
        %482 = vmatprep.subr.mxu0 0.0
        %483 = vmatpush1.msra.mxu0 0.0
        %484 = vmatprep.subr.mxu0 0.0
        %485 = vmatpush1.msra.mxu0 0.0
        %486 = vmatprep.subr.mxu0 0.0
        %487 = vmatpush1.msra.mxu0 0.0
        %488 = vmatprep.subr.mxu0 0.0
        %489 = vmatpush1.msra.mxu0 0.0
        %490 = vmatprep.subr.mxu0 0.0
        %491 = vmatpush1.msra.mxu0 0.0
        %492 = vmatprep.subr.mxu0 0.0
        %493 = vmatpush1.msra.mxu0 0.0
        %494 = vmatprep.subr.mxu0 0.0
        %495 = vmatpush1.msra.mxu0 0.0
        %496 = vmatprep.subr.mxu0 0.0
        %497 = vmatpush1.msra.mxu0 0.0
        %498 = vmatprep.subr.mxu0 0.0
        %499 = vmatpush1.msra.mxu0 0.0
        %500 = vmatprep.subr.mxu0 0.0
        %501 = vmatpush1.msra.mxu0 0.0
        %502 = vmatprep.subr.mxu0 0.0
        %503 = vmatpush1.msra.mxu0 0.0
        %504 = vmatprep.subr.mxu0 0.0
        %505 = vmatpush1.msra.mxu0 0.0
        %506 = vmatprep.subr.mxu0 0.0
        %507 = vmatpush1.msra.mxu0 0.0
        %508 = vmatprep.subr.mxu0 0.0
        %509 = vmatpush1.msra.mxu0 0.0
        %510 = vmatprep.subr.mxu0 0.0
        %511 = vmatpush1.msra.mxu0 0.0
        %512 = vmatprep.subr.mxu0 0.0
        %513 = vmatpush1.msra.mxu0 0.0
        %514 = vmatprep.subr.mxu0 0.0
        %515 = vmatpush1.msra.mxu0 0.0
        %516 = vmatprep.subr.mxu0 0.0
        %517 = vmatpush1.msra.mxu0 0.0
        %518 = vmatprep.mubr.f32.mxu0 0.0
        %519 = vmatmul.mubr.f32.gmra.mrb[0].mxu0 %v289
        %v520 = vpop.f32.mrb[0].mxu0
        %v521 = vadd.f32 0.0, %v520
        %v522 = vpop.f32.mrb[0].mxu0
        %v523 = vadd.f32 0.0, %v522
        %524 = vmatprep.mubr.f32.mxu0 0.0
        %525 = vmatmul.mubr.f32.gmra.mrb[0].mxu0 %v292
        %v526 = vpop.f32.mrb[0].mxu0
        %v527 = vadd.f32 0.0, %v526
        %v528 = vpop.f32.mrb[0].mxu0
        %v529 = vadd.f32 0.0, %v528
        %530 = vdwg.mxu0
        %531 = vmatprep.subr.mxu0 %v260
        %532 = vmatpush1.msra.mxu0 %v259
        %533 = vmatprep.subr.mxu0 %v262
        %534 = vmatpush1.msra.mxu0 %v261
        %535 = vmatprep.subr.mxu0 %v264
        %536 = vmatpush1.msra.mxu0 %v263
        %537 = vmatprep.subr.mxu0 %v266
        %538 = vmatpush1.msra.mxu0 %v265
        %539 = vmatprep.subr.mxu0 0.0
        %540 = vmatpush1.msra.mxu0 0.0
        %541 = vmatprep.subr.mxu0 0.0
        %542 = vmatpush1.msra.mxu0 0.0
        %543 = vmatprep.subr.mxu0 0.0
        %544 = vmatpush1.msra.mxu0 0.0
        %545 = vmatprep.subr.mxu0 0.0
        %546 = vmatpush1.msra.mxu0 0.0
        %547 = vmatprep.subr.mxu0 0.0
        %548 = vmatpush1.msra.mxu0 0.0
        %549 = vmatprep.subr.mxu0 0.0
        %550 = vmatpush1.msra.mxu0 0.0
        %551 = vmatprep.subr.mxu0 0.0
        %552 = vmatpush1.msra.mxu0 0.0
        %553 = vmatprep.subr.mxu0 0.0
        %554 = vmatpush1.msra.mxu0 0.0
        %555 = vmatprep.subr.mxu0 0.0
        %556 = vmatpush1.msra.mxu0 0.0
        %557 = vmatprep.subr.mxu0 0.0
        %558 = vmatpush1.msra.mxu0 0.0
        %559 = vmatprep.subr.mxu0 0.0
        %560 = vmatpush1.msra.mxu0 0.0
        %561 = vmatprep.subr.mxu0 0.0
        %562 = vmatpush1.msra.mxu0 0.0
        %563 = vmatprep.subr.mxu0 0.0
        %564 = vmatpush1.msra.mxu0 0.0
        %565 = vmatprep.subr.mxu0 0.0
        %566 = vmatpush1.msra.mxu0 0.0
        %567 = vmatprep.subr.mxu0 0.0
        %568 = vmatpush1.msra.mxu0 0.0
        %569 = vmatprep.subr.mxu0 0.0
        %570 = vmatpush1.msra.mxu0 0.0
        %571 = vmatprep.subr.mxu0 0.0
        %572 = vmatpush1.msra.mxu0 0.0
        %573 = vmatprep.subr.mxu0 0.0
        %574 = vmatpush1.msra.mxu0 0.0
        %575 = vmatprep.subr.mxu0 0.0
        %576 = vmatpush1.msra.mxu0 0.0
        %577 = vmatprep.subr.mxu0 0.0
        %578 = vmatpush1.msra.mxu0 0.0
        %579 = vmatprep.subr.mxu0 0.0
        %580 = vmatpush1.msra.mxu0 0.0
        %581 = vmatprep.subr.mxu0 0.0
        %582 = vmatpush1.msra.mxu0 0.0
        %583 = vmatprep.subr.mxu0 0.0
        %584 = vmatpush1.msra.mxu0 0.0
        %585 = vmatprep.subr.mxu0 0.0
        %586 = vmatpush1.msra.mxu0 0.0
        %587 = vmatprep.subr.mxu0 0.0
        %588 = vmatpush1.msra.mxu0 0.0
        %589 = vmatprep.subr.mxu0 0.0
        %590 = vmatpush1.msra.mxu0 0.0
        %591 = vmatprep.subr.mxu0 0.0
        %592 = vmatpush1.msra.mxu0 0.0
        %593 = vmatprep.subr.mxu0 0.0
        %594 = vmatpush1.msra.mxu0 0.0
        %595 = vmatprep.mubr.f32.mxu0 0.0
        %596 = vmatmul.mubr.f32.gmra.mrb[0].mxu0 %v372
        %v597 = vpop.f32.mrb[0].mxu0
        %v598 = vadd.f32 %v521, %v597
        %v599 = vpop.f32.mrb[0].mxu0
        %v600 = vadd.f32 %v523, %v599
        %601 = vmatprep.mubr.f32.mxu0 0.0
        %602 = vmatmul.mubr.f32.gmra.mrb[0].mxu0 %v375
        %v603 = vpop.f32.mrb[0].mxu0
        %v604 = vadd.f32 %v527, %v603
        %v605 = vpop.f32.mrb[0].mxu0
        %v606 = vadd.f32 %v529, %v605
        %607 = vdwg.mxu0
        %v609 = vsel %vm287, %v267, 0
        %v612 = vsel %vm287, %v268, 0
        %614 = vmatprep.subr.mxu0 %v271
        %615 = vmatpush1.msra.mxu0 %v270
        %616 = vmatprep.subr.mxu0 %v273
        %617 = vmatpush1.msra.mxu0 %v272
        %618 = vmatprep.subr.mxu0 %v275
        %619 = vmatpush1.msra.mxu0 %v274
        %620 = vmatprep.subr.mxu0 %v277
        %621 = vmatpush1.msra.mxu0 %v276
        %622 = vmatprep.subr.mxu0 0.0
        %623 = vmatpush1.msra.mxu0 0.0
        %624 = vmatprep.subr.mxu0 0.0
        %625 = vmatpush1.msra.mxu0 0.0
        %626 = vmatprep.subr.mxu0 0.0
        %627 = vmatpush1.msra.mxu0 0.0
        %628 = vmatprep.subr.mxu0 0.0
        %629 = vmatpush1.msra.mxu0 0.0
        %630 = vmatprep.subr.mxu0 0.0
        %631 = vmatpush1.msra.mxu0 0.0
        %632 = vmatprep.subr.mxu0 0.0
        %633 = vmatpush1.msra.mxu0 0.0
        %634 = vmatprep.subr.mxu0 0.0
        %635 = vmatpush1.msra.mxu0 0.0
        %636 = vmatprep.subr.mxu0 0.0
        %637 = vmatpush1.msra.mxu0 0.0
        %638 = vmatprep.subr.mxu0 0.0
        %639 = vmatpush1.msra.mxu0 0.0
        %640 = vmatprep.subr.mxu0 0.0
        %641 = vmatpush1.msra.mxu0 0.0
        %642 = vmatprep.subr.mxu0 0.0
        %643 = vmatpush1.msra.mxu0 0.0
        %644 = vmatprep.subr.mxu0 0.0
        %645 = vmatpush1.msra.mxu0 0.0
        %646 = vmatprep.subr.mxu0 0.0
        %647 = vmatpush1.msra.mxu0 0.0
        %648 = vmatprep.subr.mxu0 0.0
        %649 = vmatpush1.msra.mxu0 0.0
        %650 = vmatprep.subr.mxu0 0.0
        %651 = vmatpush1.msra.mxu0 0.0
        %652 = vmatprep.subr.mxu0 0.0
        %653 = vmatpush1.msra.mxu0 0.0
        %654 = vmatprep.subr.mxu0 0.0
        %655 = vmatpush1.msra.mxu0 0.0
        %656 = vmatprep.subr.mxu0 0.0
        %657 = vmatpush1.msra.mxu0 0.0
        %658 = vmatprep.subr.mxu0 0.0
        %659 = vmatpush1.msra.mxu0 0.0
        %660 = vmatprep.subr.mxu0 0.0
        %661 = vmatpush1.msra.mxu0 0.0
        %662 = vmatprep.subr.mxu0 0.0
        %663 = vmatpush1.msra.mxu0 0.0
        %664 = vmatprep.subr.mxu0 0.0
        %665 = vmatpush1.msra.mxu0 0.0
        %666 = vmatprep.subr.mxu0 0.0
        %667 = vmatpush1.msra.mxu0 0.0
        %668 = vmatprep.subr.mxu0 0.0
        %669 = vmatpush1.msra.mxu0 0.0
        %670 = vmatprep.subr.mxu0 0.0
        %671 = vmatpush1.msra.mxu0 0.0
        %672 = vmatprep.subr.mxu0 0.0
        %673 = vmatpush1.msra.mxu0 0.0
        %674 = vmatprep.subr.mxu0 0.0
        %675 = vmatpush1.msra.mxu0 0.0
        %676 = vmatprep.subr.mxu0 0.0
        %677 = vmatpush1.msra.mxu0 0.0
        %678 = vmatprep.mubr.f32.mxu0 0.0
        %679 = vmatmul.mubr.f32.gmra.mrb[0].mxu0 %v609
        %v680 = vpop.f32.mrb[0].mxu0
        %v681 = vadd.f32 0.0, %v680
        %v682 = vpop.f32.mrb[0].mxu0
        %v683 = vadd.f32 0.0, %v682
        %684 = vmatprep.mubr.f32.mxu0 0.0
        %685 = vmatmul.mubr.f32.gmra.mrb[0].mxu0 %v612
        %v686 = vpop.f32.mrb[0].mxu0
        %v687 = vadd.f32 0.0, %v686
        %v688 = vpop.f32.mrb[0].mxu0
        %v689 = vadd.f32 0.0, %v688
        %690 = vdwg.mxu0
        %691 = vmatprep.subr.mxu0 %v251
        %692 = vmatpush1.msra.mxu0 %v250
        %693 = vmatprep.subr.mxu0 %v253
        %694 = vmatpush1.msra.mxu0 %v252
        %695 = vmatprep.subr.mxu0 %v255
        %696 = vmatpush1.msra.mxu0 %v254
        %697 = vmatprep.subr.mxu0 %v257
        %698 = vmatpush1.msra.mxu0 %v256
        %699 = vmatprep.subr.mxu0 0.0
        %700 = vmatpush1.msra.mxu0 0.0
        %701 = vmatprep.subr.mxu0 0.0
        %702 = vmatpush1.msra.mxu0 0.0
        %703 = vmatprep.subr.mxu0 0.0
        %704 = vmatpush1.msra.mxu0 0.0
        %705 = vmatprep.subr.mxu0 0.0
        %706 = vmatpush1.msra.mxu0 0.0
        %707 = vmatprep.subr.mxu0 0.0
        %708 = vmatpush1.msra.mxu0 0.0
        %709 = vmatprep.subr.mxu0 0.0
        %710 = vmatpush1.msra.mxu0 0.0
        %711 = vmatprep.subr.mxu0 0.0
        %712 = vmatpush1.msra.mxu0 0.0
        %713 = vmatprep.subr.mxu0 0.0
        %714 = vmatpush1.msra.mxu0 0.0
        %715 = vmatprep.subr.mxu0 0.0
        %716 = vmatpush1.msra.mxu0 0.0
        %717 = vmatprep.subr.mxu0 0.0
        %718 = vmatpush1.msra.mxu0 0.0
        %719 = vmatprep.subr.mxu0 0.0
        %720 = vmatpush1.msra.mxu0 0.0
        %721 = vmatprep.subr.mxu0 0.0
        %722 = vmatpush1.msra.mxu0 0.0
        %723 = vmatprep.subr.mxu0 0.0
        %724 = vmatpush1.msra.mxu0 0.0
        %725 = vmatprep.subr.mxu0 0.0
        %726 = vmatpush1.msra.mxu0 0.0
        %727 = vmatprep.subr.mxu0 0.0
        %728 = vmatpush1.msra.mxu0 0.0
        %729 = vmatprep.subr.mxu0 0.0
        %730 = vmatpush1.msra.mxu0 0.0
        %731 = vmatprep.subr.mxu0 0.0
        %732 = vmatpush1.msra.mxu0 0.0
        %733 = vmatprep.subr.mxu0 0.0
        %734 = vmatpush1.msra.mxu0 0.0
        %735 = vmatprep.subr.mxu0 0.0
        %736 = vmatpush1.msra.mxu0 0.0
        %737 = vmatprep.subr.mxu0 0.0
        %738 = vmatpush1.msra.mxu0 0.0
        %739 = vmatprep.subr.mxu0 0.0
        %740 = vmatpush1.msra.mxu0 0.0
        %741 = vmatprep.subr.mxu0 0.0
        %742 = vmatpush1.msra.mxu0 0.0
        %743 = vmatprep.subr.mxu0 0.0
        %744 = vmatpush1.msra.mxu0 0.0
        %745 = vmatprep.subr.mxu0 0.0
        %746 = vmatpush1.msra.mxu0 0.0
        %747 = vmatprep.subr.mxu0 0.0
        %748 = vmatpush1.msra.mxu0 0.0
        %749 = vmatprep.subr.mxu0 0.0
        %750 = vmatpush1.msra.mxu0 0.0
        %751 = vmatprep.subr.mxu0 0.0
        %752 = vmatpush1.msra.mxu0 0.0
        %753 = vmatprep.subr.mxu0 0.0
        %754 = vmatpush1.msra.mxu0 0.0
        %755 = vmatprep.mubr.f32.mxu0 0.0
        %756 = vmatmul.mubr.f32.gmra.mrb[0].mxu0 %v289
        %v757 = vpop.f32.mrb[0].mxu0
        %v758 = vadd.f32 %v681, %v757
        %v759 = vpop.f32.mrb[0].mxu0
        %v760 = vadd.f32 %v683, %v759
        %761 = vmatprep.mubr.f32.mxu0 0.0
        %762 = vmatmul.mubr.f32.gmra.mrb[0].mxu0 %v292
        %v763 = vpop.f32.mrb[0].mxu0
        %v764 = vadd.f32 %v687, %v763
        %v765 = vpop.f32.mrb[0].mxu0
        %v766 = vadd.f32 %v689, %v765
        %767 = vdwg.mxu0
        %768 = vmatprep.subr.mxu0 %v280
        %769 = vmatpush1.msra.mxu0 %v279
        %770 = vmatprep.subr.mxu0 %v282
        %771 = vmatpush1.msra.mxu0 %v281
        %772 = vmatprep.subr.mxu0 %v284
        %773 = vmatpush1.msra.mxu0 %v283
        %774 = vmatprep.subr.mxu0 %v286
        %775 = vmatpush1.msra.mxu0 %v285
        %776 = vmatprep.subr.mxu0 0.0
        %777 = vmatpush1.msra.mxu0 0.0
        %778 = vmatprep.subr.mxu0 0.0
        %779 = vmatpush1.msra.mxu0 0.0
        %780 = vmatprep.subr.mxu0 0.0
        %781 = vmatpush1.msra.mxu0 0.0
        %782 = vmatprep.subr.mxu0 0.0
        %783 = vmatpush1.msra.mxu0 0.0
        %784 = vmatprep.subr.mxu0 0.0
        %785 = vmatpush1.msra.mxu0 0.0
        %786 = vmatprep.subr.mxu0 0.0
        %787 = vmatpush1.msra.mxu0 0.0
        %788 = vmatprep.subr.mxu0 0.0
        %789 = vmatpush1.msra.mxu0 0.0
        %790 = vmatprep.subr.mxu0 0.0
        %791 = vmatpush1.msra.mxu0 0.0
        %792 = vmatprep.subr.mxu0 0.0
        %793 = vmatpush1.msra.mxu0 0.0
        %794 = vmatprep.subr.mxu0 0.0
        %795 = vmatpush1.msra.mxu0 0.0
        %796 = vmatprep.subr.mxu0 0.0
        %797 = vmatpush1.msra.mxu0 0.0
        %798 = vmatprep.subr.mxu0 0.0
        %799 = vmatpush1.msra.mxu0 0.0
        %800 = vmatprep.subr.mxu0 0.0
        %801 = vmatpush1.msra.mxu0 0.0
        %802 = vmatprep.subr.mxu0 0.0
        %803 = vmatpush1.msra.mxu0 0.0
        %804 = vmatprep.subr.mxu0 0.0
        %805 = vmatpush1.msra.mxu0 0.0
        %806 = vmatprep.subr.mxu0 0.0
        %807 = vmatpush1.msra.mxu0 0.0
        %808 = vmatprep.subr.mxu0 0.0
        %809 = vmatpush1.msra.mxu0 0.0
        %810 = vmatprep.subr.mxu0 0.0
        %811 = vmatpush1.msra.mxu0 0.0
        %812 = vmatprep.subr.mxu0 0.0
        %813 = vmatpush1.msra.mxu0 0.0
        %814 = vmatprep.subr.mxu0 0.0
        %815 = vmatpush1.msra.mxu0 0.0
        %816 = vmatprep.subr.mxu0 0.0
        %817 = vmatpush1.msra.mxu0 0.0
        %818 = vmatprep.subr.mxu0 0.0
        %819 = vmatpush1.msra.mxu0 0.0
        %820 = vmatprep.subr.mxu0 0.0
        %821 = vmatpush1.msra.mxu0 0.0
        %822 = vmatprep.subr.mxu0 0.0
        %823 = vmatpush1.msra.mxu0 0.0
        %824 = vmatprep.subr.mxu0 0.0
        %825 = vmatpush1.msra.mxu0 0.0
        %826 = vmatprep.subr.mxu0 0.0
        %827 = vmatpush1.msra.mxu0 0.0
        %828 = vmatprep.subr.mxu0 0.0
        %829 = vmatpush1.msra.mxu0 0.0
        %830 = vmatprep.subr.mxu0 0.0
        %831 = vmatpush1.msra.mxu0 0.0
        %832 = vmatprep.mubr.f32.mxu0 0.0
        %833 = vmatmul.mubr.f32.gmra.mrb[0].mxu0 %v609
        %v834 = vpop.f32.mrb[0].mxu0
        %v835 = vadd.f32 0.0, %v834
        %v836 = vpop.f32.mrb[0].mxu0
        %v837 = vadd.f32 0.0, %v836
        %838 = vmatprep.mubr.f32.mxu0 0.0
        %839 = vmatmul.mubr.f32.gmra.mrb[0].mxu0 %v612
        %v840 = vpop.f32.mrb[0].mxu0
        %v841 = vadd.f32 0.0, %v840
        %v842 = vpop.f32.mrb[0].mxu0
        %v843 = vadd.f32 0.0, %v842
        %844 = vdwg.mxu0
        %845 = vmatprep.subr.mxu0 %v260
        %846 = vmatpush1.msra.mxu0 %v259
        %847 = vmatprep.subr.mxu0 %v262
        %848 = vmatpush1.msra.mxu0 %v261
        %849 = vmatprep.subr.mxu0 %v264
        %850 = vmatpush1.msra.mxu0 %v263
        %851 = vmatprep.subr.mxu0 %v266
        %852 = vmatpush1.msra.mxu0 %v265
        %853 = vmatprep.subr.mxu0 0.0
        %854 = vmatpush1.msra.mxu0 0.0
        %855 = vmatprep.subr.mxu0 0.0
        %856 = vmatpush1.msra.mxu0 0.0
        %857 = vmatprep.subr.mxu0 0.0
        %858 = vmatpush1.msra.mxu0 0.0
        %859 = vmatprep.subr.mxu0 0.0
        %860 = vmatpush1.msra.mxu0 0.0
        %861 = vmatprep.subr.mxu0 0.0
        %862 = vmatpush1.msra.mxu0 0.0
        %863 = vmatprep.subr.mxu0 0.0
        %864 = vmatpush1.msra.mxu0 0.0
        %865 = vmatprep.subr.mxu0 0.0
        %866 = vmatpush1.msra.mxu0 0.0
        %867 = vmatprep.subr.mxu0 0.0
        %868 = vmatpush1.msra.mxu0 0.0
        %869 = vmatprep.subr.mxu0 0.0
        %870 = vmatpush1.msra.mxu0 0.0
        %871 = vmatprep.subr.mxu0 0.0
        %872 = vmatpush1.msra.mxu0 0.0
        %873 = vmatprep.subr.mxu0 0.0
        %874 = vmatpush1.msra.mxu0 0.0
        %875 = vmatprep.subr.mxu0 0.0
        %876 = vmatpush1.msra.mxu0 0.0
        %877 = vmatprep.subr.mxu0 0.0
        %878 = vmatpush1.msra.mxu0 0.0
        %879 = vmatprep.subr.mxu0 0.0
        %880 = vmatpush1.msra.mxu0 0.0
        %881 = vmatprep.subr.mxu0 0.0
        %882 = vmatpush1.msra.mxu0 0.0
        %883 = vmatprep.subr.mxu0 0.0
        %884 = vmatpush1.msra.mxu0 0.0
        %885 = vmatprep.subr.mxu0 0.0
        %886 = vmatpush1.msra.mxu0 0.0
        %887 = vmatprep.subr.mxu0 0.0
        %888 = vmatpush1.msra.mxu0 0.0
        %889 = vmatprep.subr.mxu0 0.0
        %890 = vmatpush1.msra.mxu0 0.0
        %891 = vmatprep.subr.mxu0 0.0
        %892 = vmatpush1.msra.mxu0 0.0
        %893 = vmatprep.subr.mxu0 0.0
        %894 = vmatpush1.msra.mxu0 0.0
        %895 = vmatprep.subr.mxu0 0.0
        %896 = vmatpush1.msra.mxu0 0.0
        %897 = vmatprep.subr.mxu0 0.0
        %898 = vmatpush1.msra.mxu0 0.0
        %899 = vmatprep.subr.mxu0 0.0
        %900 = vmatpush1.msra.mxu0 0.0
        %901 = vmatprep.subr.mxu0 0.0
        %902 = vmatpush1.msra.mxu0 0.0
        %903 = vmatprep.subr.mxu0 0.0
        %904 = vmatpush1.msra.mxu0 0.0
        %905 = vmatprep.subr.mxu0 0.0
        %906 = vmatpush1.msra.mxu0 0.0
        %907 = vmatprep.subr.mxu0 0.0
        %908 = vmatpush1.msra.mxu0 0.0
        %909 = vmatprep.mubr.f32.mxu0 0.0
        %910 = vmatmul.mubr.f32.gmra.mrb[0].mxu0 %v289
        %v911 = vpop.f32.mrb[0].mxu0
        %v912 = vadd.f32 %v835, %v911
        %v913 = vpop.f32.mrb[0].mxu0
        %v914 = vadd.f32 %v837, %v913
        %915 = vmatprep.mubr.f32.mxu0 0.0
        %916 = vmatmul.mubr.f32.gmra.mrb[0].mxu0 %v292
        %v917 = vpop.f32.mrb[0].mxu0
        %v918 = vadd.f32 %v841, %v917
        %v919 = vpop.f32.mrb[0].mxu0
        %v920 = vadd.f32 %v843, %v919
        %921 = vdwg.mxu0
        %v922 = vld [vmem:[%s240 + $0x1] sm:$0xff]
        %v923 = vld [vmem:[%s240 + $0x9] sm:$0x3f]
        %s924 = scalar_lea.vmem [#allocation2], 128
        %v925 = vld [vmem:[%s924] sm:$0xff]
        %v926 = vld [vmem:[%s924 + $0x8] sm:$0xff]
        %v927 = vld [vmem:[%s924 + $0x10] sm:$0xff]
        %v928 = vld [vmem:[%s924 + $0x18] sm:$0xff]
        %v929 = vld [vmem:[%s924 + $0x20] sm:$0xff]
        %v930 = vld [vmem:[%s924 + $0x28] sm:$0xff]
        %v931 = vld [vmem:[%s924 + $0x30] sm:$0xff]
        %v932 = vld [vmem:[%s924 + $0x38] sm:$0xff]
        %s933 = scalar_lea.vmem [#allocation2], 448
        %v934 = vld [vmem:[%s933] sm:$0xff]
        %v935 = vld [vmem:[%s933 + $0x8] sm:$0xff]
        %v936 = vld [vmem:[%s933 + $0x10] sm:$0xff]
        %v937 = vld [vmem:[%s933 + $0x18] sm:$0xff]
        %v938 = vld [vmem:[%s933 + $0x20] sm:$0xff]
        %v939 = vld [vmem:[%s933 + $0x28] sm:$0xff]
        %v940 = vld [vmem:[%s933 + $0x30] sm:$0xff]
        %v941 = vld [vmem:[%s933 + $0x38] sm:$0xff]
        %942 = vmatprep.subr.mxu0 %v926
        %943 = vmatpush1.msra.mxu0 %v925
        %944 = vmatprep.subr.mxu0 %v928
        %945 = vmatpush1.msra.mxu0 %v927
        %946 = vmatprep.subr.mxu0 %v930
        %947 = vmatpush1.msra.mxu0 %v929
        %948 = vmatprep.subr.mxu0 %v932
        %949 = vmatpush1.msra.mxu0 %v931
        %950 = vmatprep.subr.mxu0 0.0
        %951 = vmatpush1.msra.mxu0 0.0
        %952 = vmatprep.subr.mxu0 0.0
        %953 = vmatpush1.msra.mxu0 0.0
        %954 = vmatprep.subr.mxu0 0.0
        %955 = vmatpush1.msra.mxu0 0.0
        %956 = vmatprep.subr.mxu0 0.0
        %957 = vmatpush1.msra.mxu0 0.0
        %958 = vmatprep.subr.mxu0 0.0
        %959 = vmatpush1.msra.mxu0 0.0
        %960 = vmatprep.subr.mxu0 0.0
        %961 = vmatpush1.msra.mxu0 0.0
        %962 = vmatprep.subr.mxu0 0.0
        %963 = vmatpush1.msra.mxu0 0.0
        %964 = vmatprep.subr.mxu0 0.0
        %965 = vmatpush1.msra.mxu0 0.0
        %966 = vmatprep.subr.mxu0 0.0
        %967 = vmatpush1.msra.mxu0 0.0
        %968 = vmatprep.subr.mxu0 0.0
        %969 = vmatpush1.msra.mxu0 0.0
        %970 = vmatprep.subr.mxu0 0.0
        %971 = vmatpush1.msra.mxu0 0.0
        %972 = vmatprep.subr.mxu0 0.0
        %973 = vmatpush1.msra.mxu0 0.0
        %974 = vmatprep.subr.mxu0 0.0
        %975 = vmatpush1.msra.mxu0 0.0
        %976 = vmatprep.subr.mxu0 0.0
        %977 = vmatpush1.msra.mxu0 0.0
        %978 = vmatprep.subr.mxu0 0.0
        %979 = vmatpush1.msra.mxu0 0.0
        %980 = vmatprep.subr.mxu0 0.0
        %981 = vmatpush1.msra.mxu0 0.0
        %982 = vmatprep.subr.mxu0 0.0
        %983 = vmatpush1.msra.mxu0 0.0
        %984 = vmatprep.subr.mxu0 0.0
        %985 = vmatpush1.msra.mxu0 0.0
        %986 = vmatprep.subr.mxu0 0.0
        %987 = vmatpush1.msra.mxu0 0.0
        %988 = vmatprep.subr.mxu0 0.0
        %989 = vmatpush1.msra.mxu0 0.0
        %990 = vmatprep.subr.mxu0 0.0
        %991 = vmatpush1.msra.mxu0 0.0
        %992 = vmatprep.subr.mxu0 0.0
        %993 = vmatpush1.msra.mxu0 0.0
        %994 = vmatprep.subr.mxu0 0.0
        %995 = vmatpush1.msra.mxu0 0.0
        %996 = vmatprep.subr.mxu0 0.0
        %997 = vmatpush1.msra.mxu0 0.0
        %998 = vmatprep.subr.mxu0 0.0
        %999 = vmatpush1.msra.mxu0 0.0
        %1000 = vmatprep.subr.mxu0 0.0
        %1001 = vmatpush1.msra.mxu0 0.0
        %1002 = vmatprep.subr.mxu0 0.0
        %1003 = vmatpush1.msra.mxu0 0.0
        %1004 = vmatprep.subr.mxu0 0.0
        %1005 = vmatpush1.msra.mxu0 0.0
        %1006 = vmatprep.mubr.f32.mxu0 0.0
        %1007 = vmatmul.mubr.f32.gmra.mrb[0].mxu0 %v609
        %v1008 = vpop.f32.mrb[0].mxu0
        %v1009 = vadd.f32 0.0, %v1008
        %v1010 = vpop.f32.mrb[0].mxu0
        %v1011 = vadd.f32 0.0, %v1010
        %1012 = vmatprep.mubr.f32.mxu0 0.0
        %1013 = vmatmul.mubr.f32.gmra.mrb[0].mxu0 %v612
        %v1014 = vpop.f32.mrb[0].mxu0
        %v1015 = vadd.f32 0.0, %v1014
        %v1016 = vpop.f32.mrb[0].mxu0
        %v1017 = vadd.f32 0.0, %v1016
        %1018 = vdwg.mxu0
        %v1019 = vadd.f32 %v444, %v1009
        %v1020 = vadd.f32 %v446, %v1011
        %v1021 = vadd.f32 %v450, %v1015
        %v1022 = vadd.f32 %v452, %v1017
        %1023 = vmatprep.subr.mxu0 %v935
        %1024 = vmatpush1.msra.mxu0 %v934
        %1025 = vmatprep.subr.mxu0 %v937
        %1026 = vmatpush1.msra.mxu0 %v936
        %1027 = vmatprep.subr.mxu0 %v939
        %1028 = vmatpush1.msra.mxu0 %v938
        %1029 = vmatprep.subr.mxu0 %v941
        %1030 = vmatpush1.msra.mxu0 %v940
        %1031 = vmatprep.subr.mxu0 0.0
        %1032 = vmatpush1.msra.mxu0 0.0
        %1033 = vmatprep.subr.mxu0 0.0
        %1034 = vmatpush1.msra.mxu0 0.0
        %1035 = vmatprep.subr.mxu0 0.0
        %1036 = vmatpush1.msra.mxu0 0.0
        %1037 = vmatprep.subr.mxu0 0.0
        %1038 = vmatpush1.msra.mxu0 0.0
        %1039 = vmatprep.subr.mxu0 0.0
        %1040 = vmatpush1.msra.mxu0 0.0
        %1041 = vmatprep.subr.mxu0 0.0
        %1042 = vmatpush1.msra.mxu0 0.0
        %1043 = vmatprep.subr.mxu0 0.0
        %1044 = vmatpush1.msra.mxu0 0.0
        %1045 = vmatprep.subr.mxu0 0.0
        %1046 = vmatpush1.msra.mxu0 0.0
        %1047 = vmatprep.subr.mxu0 0.0
        %1048 = vmatpush1.msra.mxu0 0.0
        %1049 = vmatprep.subr.mxu0 0.0
        %1050 = vmatpush1.msra.mxu0 0.0
        %1051 = vmatprep.subr.mxu0 0.0
        %1052 = vmatpush1.msra.mxu0 0.0
        %1053 = vmatprep.subr.mxu0 0.0
        %1054 = vmatpush1.msra.mxu0 0.0
        %1055 = vmatprep.subr.mxu0 0.0
        %1056 = vmatpush1.msra.mxu0 0.0
        %1057 = vmatprep.subr.mxu0 0.0
        %1058 = vmatpush1.msra.mxu0 0.0
        %1059 = vmatprep.subr.mxu0 0.0
        %1060 = vmatpush1.msra.mxu0 0.0
        %1061 = vmatprep.subr.mxu0 0.0
        %1062 = vmatpush1.msra.mxu0 0.0
        %1063 = vmatprep.subr.mxu0 0.0
        %1064 = vmatpush1.msra.mxu0 0.0
        %1065 = vmatprep.subr.mxu0 0.0
        %1066 = vmatpush1.msra.mxu0 0.0
        %1067 = vmatprep.subr.mxu0 0.0
        %1068 = vmatpush1.msra.mxu0 0.0
        %1069 = vmatprep.subr.mxu0 0.0
        %1070 = vmatpush1.msra.mxu0 0.0
        %1071 = vmatprep.subr.mxu0 0.0
        %1072 = vmatpush1.msra.mxu0 0.0
        %1073 = vmatprep.subr.mxu0 0.0
        %1074 = vmatpush1.msra.mxu0 0.0
        %1075 = vmatprep.subr.mxu0 0.0
        %1076 = vmatpush1.msra.mxu0 0.0
        %1077 = vmatprep.subr.mxu0 0.0
        %1078 = vmatpush1.msra.mxu0 0.0
        %1079 = vmatprep.subr.mxu0 0.0
        %1080 = vmatpush1.msra.mxu0 0.0
        %1081 = vmatprep.subr.mxu0 0.0
        %1082 = vmatpush1.msra.mxu0 0.0
        %1083 = vmatprep.subr.mxu0 0.0
        %1084 = vmatpush1.msra.mxu0 0.0
        %1085 = vmatprep.subr.mxu0 0.0
        %1086 = vmatpush1.msra.mxu0 0.0
        %1087 = vmatprep.mubr.f32.mxu0 0.0
        %1088 = vmatmul.mubr.f32.gmra.mrb[0].mxu0 %v609
        %v1089 = vpop.f32.mrb[0].mxu0
        %v1090 = vadd.f32 0.0, %v1089
        %v1091 = vpop.f32.mrb[0].mxu0
        %v1092 = vadd.f32 0.0, %v1091
        %1093 = vmatprep.mubr.f32.mxu0 0.0
        %1094 = vmatmul.mubr.f32.gmra.mrb[0].mxu0 %v612
        %v1095 = vpop.f32.mrb[0].mxu0
        %v1096 = vadd.f32 0.0, %v1095
        %v1097 = vpop.f32.mrb[0].mxu0
        %v1098 = vadd.f32 0.0, %v1097
        %1099 = vdwg.mxu0
        %v1100 = vadd.f32 %v598, %v1090
        %v1101 = vadd.f32 %v600, %v1092
        %v1102 = vadd.f32 %v604, %v1096
        %v1103 = vadd.f32 %v606, %v1098
        %v1105 = vsel %vm287, %v922, 0
        %v1108 = vsel %vm287, %v923, 0
        %1110 = vmatprep.subr.mxu0 %v926
        %1111 = vmatpush1.msra.mxu0 %v925
        %1112 = vmatprep.subr.mxu0 %v928
        %1113 = vmatpush1.msra.mxu0 %v927
        %1114 = vmatprep.subr.mxu0 %v930
        %1115 = vmatpush1.msra.mxu0 %v929
        %1116 = vmatprep.subr.mxu0 %v932
        %1117 = vmatpush1.msra.mxu0 %v931
        %1118 = vmatprep.subr.mxu0 0.0
        %1119 = vmatpush1.msra.mxu0 0.0
        %1120 = vmatprep.subr.mxu0 0.0
        %1121 = vmatpush1.msra.mxu0 0.0
        %1122 = vmatprep.subr.mxu0 0.0
        %1123 = vmatpush1.msra.mxu0 0.0
        %1124 = vmatprep.subr.mxu0 0.0
        %1125 = vmatpush1.msra.mxu0 0.0
        %1126 = vmatprep.subr.mxu0 0.0
        %1127 = vmatpush1.msra.mxu0 0.0
        %1128 = vmatprep.subr.mxu0 0.0
        %1129 = vmatpush1.msra.mxu0 0.0
        %1130 = vmatprep.subr.mxu0 0.0
        %1131 = vmatpush1.msra.mxu0 0.0
        %1132 = vmatprep.subr.mxu0 0.0
        %1133 = vmatpush1.msra.mxu0 0.0
        %1134 = vmatprep.subr.mxu0 0.0
        %1135 = vmatpush1.msra.mxu0 0.0
        %1136 = vmatprep.subr.mxu0 0.0
        %1137 = vmatpush1.msra.mxu0 0.0
        %1138 = vmatprep.subr.mxu0 0.0
        %1139 = vmatpush1.msra.mxu0 0.0
        %1140 = vmatprep.subr.mxu0 0.0
        %1141 = vmatpush1.msra.mxu0 0.0
        %1142 = vmatprep.subr.mxu0 0.0
        %1143 = vmatpush1.msra.mxu0 0.0
        %1144 = vmatprep.subr.mxu0 0.0
        %1145 = vmatpush1.msra.mxu0 0.0
        %1146 = vmatprep.subr.mxu0 0.0
        %1147 = vmatpush1.msra.mxu0 0.0
        %1148 = vmatprep.subr.mxu0 0.0
        %1149 = vmatpush1.msra.mxu0 0.0
        %1150 = vmatprep.subr.mxu0 0.0
        %1151 = vmatpush1.msra.mxu0 0.0
        %1152 = vmatprep.subr.mxu0 0.0
        %1153 = vmatpush1.msra.mxu0 0.0
        %1154 = vmatprep.subr.mxu0 0.0
        %1155 = vmatpush1.msra.mxu0 0.0
        %1156 = vmatprep.subr.mxu0 0.0
        %1157 = vmatpush1.msra.mxu0 0.0
        %1158 = vmatprep.subr.mxu0 0.0
        %1159 = vmatpush1.msra.mxu0 0.0
        %1160 = vmatprep.subr.mxu0 0.0
        %1161 = vmatpush1.msra.mxu0 0.0
        %1162 = vmatprep.subr.mxu0 0.0
        %1163 = vmatpush1.msra.mxu0 0.0
        %1164 = vmatprep.subr.mxu0 0.0
        %1165 = vmatpush1.msra.mxu0 0.0
        %1166 = vmatprep.subr.mxu0 0.0
        %1167 = vmatpush1.msra.mxu0 0.0
        %1168 = vmatprep.subr.mxu0 0.0
        %1169 = vmatpush1.msra.mxu0 0.0
        %1170 = vmatprep.subr.mxu0 0.0
        %1171 = vmatpush1.msra.mxu0 0.0
        %1172 = vmatprep.subr.mxu0 0.0
        %1173 = vmatpush1.msra.mxu0 0.0
        %1174 = vmatprep.mubr.f32.mxu0 0.0
        %1175 = vmatmul.mubr.f32.gmra.mrb[0].mxu0 %v1105
        %v1176 = vpop.f32.mrb[0].mxu0
        %v1177 = vadd.f32 0.0, %v1176
        %v1178 = vpop.f32.mrb[0].mxu0
        %v1179 = vadd.f32 0.0, %v1178
        %1180 = vmatprep.mubr.f32.mxu0 0.0
        %1181 = vmatmul.mubr.f32.gmra.mrb[0].mxu0 %v1108
        %v1182 = vpop.f32.mrb[0].mxu0
        %v1183 = vadd.f32 0.0, %v1182
        %v1184 = vpop.f32.mrb[0].mxu0
        %v1185 = vadd.f32 0.0, %v1184
        %1186 = vdwg.mxu0
        %v1187 = vadd.f32 %v758, %v1177
        %v1188 = vadd.f32 %v760, %v1179
        %v1189 = vadd.f32 %v764, %v1183
        %v1190 = vadd.f32 %v766, %v1185
        %1191 = vmatprep.subr.mxu0 %v935
        %1192 = vmatpush1.msra.mxu0 %v934
        %1193 = vmatprep.subr.mxu0 %v937
        %1194 = vmatpush1.msra.mxu0 %v936
        %1195 = vmatprep.subr.mxu0 %v939
        %1196 = vmatpush1.msra.mxu0 %v938
        %1197 = vmatprep.subr.mxu0 %v941
        %1198 = vmatpush1.msra.mxu0 %v940
        %1199 = vmatprep.subr.mxu0 0.0
        %1200 = vmatpush1.msra.mxu0 0.0
        %1201 = vmatprep.subr.mxu0 0.0
        %1202 = vmatpush1.msra.mxu0 0.0
        %1203 = vmatprep.subr.mxu0 0.0
        %1204 = vmatpush1.msra.mxu0 0.0
        %1205 = vmatprep.subr.mxu0 0.0
        %1206 = vmatpush1.msra.mxu0 0.0
        %1207 = vmatprep.subr.mxu0 0.0
        %1208 = vmatpush1.msra.mxu0 0.0
        %1209 = vmatprep.subr.mxu0 0.0
        %1210 = vmatpush1.msra.mxu0 0.0
        %1211 = vmatprep.subr.mxu0 0.0
        %1212 = vmatpush1.msra.mxu0 0.0
        %1213 = vmatprep.subr.mxu0 0.0
        %1214 = vmatpush1.msra.mxu0 0.0
        %1215 = vmatprep.subr.mxu0 0.0
        %1216 = vmatpush1.msra.mxu0 0.0
        %1217 = vmatprep.subr.mxu0 0.0
        %1218 = vmatpush1.msra.mxu0 0.0
        %1219 = vmatprep.subr.mxu0 0.0
        %1220 = vmatpush1.msra.mxu0 0.0
        %1221 = vmatprep.subr.mxu0 0.0
        %1222 = vmatpush1.msra.mxu0 0.0
        %1223 = vmatprep.subr.mxu0 0.0
        %1224 = vmatpush1.msra.mxu0 0.0
        %1225 = vmatprep.subr.mxu0 0.0
        %1226 = vmatpush1.msra.mxu0 0.0
        %1227 = vmatprep.subr.mxu0 0.0
        %1228 = vmatpush1.msra.mxu0 0.0
        %1229 = vmatprep.subr.mxu0 0.0
        %1230 = vmatpush1.msra.mxu0 0.0
        %1231 = vmatprep.subr.mxu0 0.0
        %1232 = vmatpush1.msra.mxu0 0.0
        %1233 = vmatprep.subr.mxu0 0.0
        %1234 = vmatpush1.msra.mxu0 0.0
        %1235 = vmatprep.subr.mxu0 0.0
        %1236 = vmatpush1.msra.mxu0 0.0
        %1237 = vmatprep.subr.mxu0 0.0
        %1238 = vmatpush1.msra.mxu0 0.0
        %1239 = vmatprep.subr.mxu0 0.0
        %1240 = vmatpush1.msra.mxu0 0.0
        %1241 = vmatprep.subr.mxu0 0.0
        %1242 = vmatpush1.msra.mxu0 0.0
        %1243 = vmatprep.subr.mxu0 0.0
        %1244 = vmatpush1.msra.mxu0 0.0
        %1245 = vmatprep.subr.mxu0 0.0
        %1246 = vmatpush1.msra.mxu0 0.0
        %1247 = vmatprep.subr.mxu0 0.0
        %1248 = vmatpush1.msra.mxu0 0.0
        %1249 = vmatprep.subr.mxu0 0.0
        %1250 = vmatpush1.msra.mxu0 0.0
        %1251 = vmatprep.subr.mxu0 0.0
        %1252 = vmatpush1.msra.mxu0 0.0
        %1253 = vmatprep.subr.mxu0 0.0
        %1254 = vmatpush1.msra.mxu0 0.0
        %1255 = vmatprep.mubr.f32.mxu0 0.0
        %1256 = vmatmul.mubr.f32.gmra.mrb[0].mxu0 %v1105
        %v1257 = vpop.f32.mrb[0].mxu0
        %v1258 = vadd.f32 0.0, %v1257
        %v1259 = vpop.f32.mrb[0].mxu0
        %v1260 = vadd.f32 0.0, %v1259
        %1261 = vmatprep.mubr.f32.mxu0 0.0
        %1262 = vmatmul.mubr.f32.gmra.mrb[0].mxu0 %v1108
        %v1263 = vpop.f32.mrb[0].mxu0
        %v1264 = vadd.f32 0.0, %v1263
        %v1265 = vpop.f32.mrb[0].mxu0
        %v1266 = vadd.f32 0.0, %v1265
        %1267 = vdwg.mxu0
        %v1268 = vadd.f32 %v912, %v1258
        %v1269 = vadd.f32 %v914, %v1260
        %v1270 = vadd.f32 %v918, %v1264
        %v1271 = vadd.f32 %v920, %v1266
        %v1272 = vld [vmem:[%s235 + $0x2] sm:$0xff]
        %v1273 = vld [vmem:[%s235 + $0xa] sm:$0x3f]
        %s1274 = scalar_lea.vmem [#allocation2], 192
        %v1275 = vld [vmem:[%s1274] sm:$0xff]
        %v1276 = vld [vmem:[%s1274 + $0x8] sm:$0xff]
        %v1277 = vld [vmem:[%s1274 + $0x10] sm:$0xff]
        %v1278 = vld [vmem:[%s1274 + $0x18] sm:$0xff]
        %v1279 = vld [vmem:[%s1274 + $0x20] sm:$0xff]
        %v1280 = vld [vmem:[%s1274 + $0x28] sm:$0xff]
        %v1281 = vld [vmem:[%s1274 + $0x30] sm:$0xff]
        %v1282 = vld [vmem:[%s1274 + $0x38] sm:$0xff]
        %s1283 = scalar_lea.vmem [#allocation2], 512
        %v1284 = vld [vmem:[%s1283] sm:$0xff]
        %v1285 = vld [vmem:[%s1283 + $0x8] sm:$0xff]
        %v1286 = vld [vmem:[%s1283 + $0x10] sm:$0xff]
        %v1287 = vld [vmem:[%s1283 + $0x18] sm:$0xff]
        %v1288 = vld [vmem:[%s1283 + $0x20] sm:$0xff]
        %v1289 = vld [vmem:[%s1283 + $0x28] sm:$0xff]
        %v1290 = vld [vmem:[%s1283 + $0x30] sm:$0xff]
        %v1291 = vld [vmem:[%s1283 + $0x38] sm:$0xff]
        %1292 = vmatprep.subr.mxu0 %v1276
        %1293 = vmatpush1.msra.mxu0 %v1275
        %1294 = vmatprep.subr.mxu0 %v1278
        %1295 = vmatpush1.msra.mxu0 %v1277
        %1296 = vmatprep.subr.mxu0 %v1280
        %1297 = vmatpush1.msra.mxu0 %v1279
        %1298 = vmatprep.subr.mxu0 %v1282
        %1299 = vmatpush1.msra.mxu0 %v1281
        %1300 = vmatprep.subr.mxu0 0.0
        %1301 = vmatpush1.msra.mxu0 0.0
        %1302 = vmatprep.subr.mxu0 0.0
        %1303 = vmatpush1.msra.mxu0 0.0
        %1304 = vmatprep.subr.mxu0 0.0
        %1305 = vmatpush1.msra.mxu0 0.0
        %1306 = vmatprep.subr.mxu0 0.0
        %1307 = vmatpush1.msra.mxu0 0.0
        %1308 = vmatprep.subr.mxu0 0.0
        %1309 = vmatpush1.msra.mxu0 0.0
        %1310 = vmatprep.subr.mxu0 0.0
        %1311 = vmatpush1.msra.mxu0 0.0
        %1312 = vmatprep.subr.mxu0 0.0
        %1313 = vmatpush1.msra.mxu0 0.0
        %1314 = vmatprep.subr.mxu0 0.0
        %1315 = vmatpush1.msra.mxu0 0.0
        %1316 = vmatprep.subr.mxu0 0.0
        %1317 = vmatpush1.msra.mxu0 0.0
        %1318 = vmatprep.subr.mxu0 0.0
        %1319 = vmatpush1.msra.mxu0 0.0
        %1320 = vmatprep.subr.mxu0 0.0
        %1321 = vmatpush1.msra.mxu0 0.0
        %1322 = vmatprep.subr.mxu0 0.0
        %1323 = vmatpush1.msra.mxu0 0.0
        %1324 = vmatprep.subr.mxu0 0.0
        %1325 = vmatpush1.msra.mxu0 0.0
        %1326 = vmatprep.subr.mxu0 0.0
        %1327 = vmatpush1.msra.mxu0 0.0
        %1328 = vmatprep.subr.mxu0 0.0
        %1329 = vmatpush1.msra.mxu0 0.0
        %1330 = vmatprep.subr.mxu0 0.0
        %1331 = vmatpush1.msra.mxu0 0.0
        %1332 = vmatprep.subr.mxu0 0.0
        %1333 = vmatpush1.msra.mxu0 0.0
        %1334 = vmatprep.subr.mxu0 0.0
        %1335 = vmatpush1.msra.mxu0 0.0
        %1336 = vmatprep.subr.mxu0 0.0
        %1337 = vmatpush1.msra.mxu0 0.0
        %1338 = vmatprep.subr.mxu0 0.0
        %1339 = vmatpush1.msra.mxu0 0.0
        %1340 = vmatprep.subr.mxu0 0.0
        %1341 = vmatpush1.msra.mxu0 0.0
        %1342 = vmatprep.subr.mxu0 0.0
        %1343 = vmatpush1.msra.mxu0 0.0
        %1344 = vmatprep.subr.mxu0 0.0
        %1345 = vmatpush1.msra.mxu0 0.0
        %1346 = vmatprep.subr.mxu0 0.0
        %1347 = vmatpush1.msra.mxu0 0.0
        %1348 = vmatprep.subr.mxu0 0.0
        %1349 = vmatpush1.msra.mxu0 0.0
        %1350 = vmatprep.subr.mxu0 0.0
        %1351 = vmatpush1.msra.mxu0 0.0
        %1352 = vmatprep.subr.mxu0 0.0
        %1353 = vmatpush1.msra.mxu0 0.0
        %1354 = vmatprep.subr.mxu0 0.0
        %1355 = vmatpush1.msra.mxu0 0.0
        %1356 = vmatprep.mubr.f32.mxu0 0.0
        %1357 = vmatmul.mubr.f32.gmra.mrb[0].mxu0 %v1105
        %v1358 = vpop.f32.mrb[0].mxu0
        %v1359 = vadd.f32 0.0, %v1358
        %v1360 = vpop.f32.mrb[0].mxu0
        %v1361 = vadd.f32 0.0, %v1360
        %1362 = vmatprep.mubr.f32.mxu0 0.0
        %1363 = vmatmul.mubr.f32.gmra.mrb[0].mxu0 %v1108
        %v1364 = vpop.f32.mrb[0].mxu0
        %v1365 = vadd.f32 0.0, %v1364
        %v1366 = vpop.f32.mrb[0].mxu0
        %v1367 = vadd.f32 0.0, %v1366
        %1368 = vdwg.mxu0
        %v1369 = vadd.f32 %v1019, %v1359
        %v1370 = vadd.f32 %v1020, %v1361
        %v1371 = vadd.f32 %v1021, %v1365
        %v1372 = vadd.f32 %v1022, %v1367
        %1373 = vmatprep.subr.mxu0 %v1285
        %1374 = vmatpush1.msra.mxu0 %v1284
        %1375 = vmatprep.subr.mxu0 %v1287
        %1376 = vmatpush1.msra.mxu0 %v1286
        %1377 = vmatprep.subr.mxu0 %v1289
        %1378 = vmatpush1.msra.mxu0 %v1288
        %1379 = vmatprep.subr.mxu0 %v1291
        %1380 = vmatpush1.msra.mxu0 %v1290
        %1381 = vmatprep.subr.mxu0 0.0
        %1382 = vmatpush1.msra.mxu0 0.0
        %1383 = vmatprep.subr.mxu0 0.0
        %1384 = vmatpush1.msra.mxu0 0.0
        %1385 = vmatprep.subr.mxu0 0.0
        %1386 = vmatpush1.msra.mxu0 0.0
        %1387 = vmatprep.subr.mxu0 0.0
        %1388 = vmatpush1.msra.mxu0 0.0
        %1389 = vmatprep.subr.mxu0 0.0
        %1390 = vmatpush1.msra.mxu0 0.0
        %1391 = vmatprep.subr.mxu0 0.0
        %1392 = vmatpush1.msra.mxu0 0.0
        %1393 = vmatprep.subr.mxu0 0.0
        %1394 = vmatpush1.msra.mxu0 0.0
        %1395 = vmatprep.subr.mxu0 0.0
        %1396 = vmatpush1.msra.mxu0 0.0
        %1397 = vmatprep.subr.mxu0 0.0
        %1398 = vmatpush1.msra.mxu0 0.0
        %1399 = vmatprep.subr.mxu0 0.0
        %1400 = vmatpush1.msra.mxu0 0.0
        %1401 = vmatprep.subr.mxu0 0.0
        %1402 = vmatpush1.msra.mxu0 0.0
        %1403 = vmatprep.subr.mxu0 0.0
        %1404 = vmatpush1.msra.mxu0 0.0
        %1405 = vmatprep.subr.mxu0 0.0
        %1406 = vmatpush1.msra.mxu0 0.0
        %1407 = vmatprep.subr.mxu0 0.0
        %1408 = vmatpush1.msra.mxu0 0.0
        %1409 = vmatprep.subr.mxu0 0.0
        %1410 = vmatpush1.msra.mxu0 0.0
        %1411 = vmatprep.subr.mxu0 0.0
        %1412 = vmatpush1.msra.mxu0 0.0
        %1413 = vmatprep.subr.mxu0 0.0
        %1414 = vmatpush1.msra.mxu0 0.0
        %1415 = vmatprep.subr.mxu0 0.0
        %1416 = vmatpush1.msra.mxu0 0.0
        %1417 = vmatprep.subr.mxu0 0.0
        %1418 = vmatpush1.msra.mxu0 0.0
        %1419 = vmatprep.subr.mxu0 0.0
        %1420 = vmatpush1.msra.mxu0 0.0
        %1421 = vmatprep.subr.mxu0 0.0
        %1422 = vmatpush1.msra.mxu0 0.0
        %1423 = vmatprep.subr.mxu0 0.0
        %1424 = vmatpush1.msra.mxu0 0.0
        %1425 = vmatprep.subr.mxu0 0.0
        %1426 = vmatpush1.msra.mxu0 0.0
        %1427 = vmatprep.subr.mxu0 0.0
        %1428 = vmatpush1.msra.mxu0 0.0
        %1429 = vmatprep.subr.mxu0 0.0
        %1430 = vmatpush1.msra.mxu0 0.0
        %1431 = vmatprep.subr.mxu0 0.0
        %1432 = vmatpush1.msra.mxu0 0.0
        %1433 = vmatprep.subr.mxu0 0.0
        %1434 = vmatpush1.msra.mxu0 0.0
        %1435 = vmatprep.subr.mxu0 0.0
        %1436 = vmatpush1.msra.mxu0 0.0
        %1437 = vmatprep.mubr.f32.mxu0 0.0
        %1438 = vmatmul.mubr.f32.gmra.mrb[0].mxu0 %v1105
        %v1439 = vpop.f32.mrb[0].mxu0
        %v1440 = vadd.f32 0.0, %v1439
        %v1441 = vpop.f32.mrb[0].mxu0
        %v1442 = vadd.f32 0.0, %v1441
        %1443 = vmatprep.mubr.f32.mxu0 0.0
        %1444 = vmatmul.mubr.f32.gmra.mrb[0].mxu0 %v1108
        %v1445 = vpop.f32.mrb[0].mxu0
        %v1446 = vadd.f32 0.0, %v1445
        %v1447 = vpop.f32.mrb[0].mxu0
        %v1448 = vadd.f32 0.0, %v1447
        %1449 = vdwg.mxu0
        %v1450 = vadd.f32 %v1100, %v1440
        %v1451 = vadd.f32 %v1101, %v1442
        %v1452 = vadd.f32 %v1102, %v1446
        %v1453 = vadd.f32 %v1103, %v1448
        %v1455 = vsel %vm287, %v1272, 0
        %v1458 = vsel %vm287, %v1273, 0
        %1460 = vmatprep.subr.mxu0 %v1276
        %1461 = vmatpush1.msra.mxu0 %v1275
        %1462 = vmatprep.subr.mxu0 %v1278
        %1463 = vmatpush1.msra.mxu0 %v1277
        %1464 = vmatprep.subr.mxu0 %v1280
        %1465 = vmatpush1.msra.mxu0 %v1279
        %1466 = vmatprep.subr.mxu0 %v1282
        %1467 = vmatpush1.msra.mxu0 %v1281
        %1468 = vmatprep.subr.mxu0 0.0
        %1469 = vmatpush1.msra.mxu0 0.0
        %1470 = vmatprep.subr.mxu0 0.0
        %1471 = vmatpush1.msra.mxu0 0.0
        %1472 = vmatprep.subr.mxu0 0.0
        %1473 = vmatpush1.msra.mxu0 0.0
        %1474 = vmatprep.subr.mxu0 0.0
        %1475 = vmatpush1.msra.mxu0 0.0
        %1476 = vmatprep.subr.mxu0 0.0
        %1477 = vmatpush1.msra.mxu0 0.0
        %1478 = vmatprep.subr.mxu0 0.0
        %1479 = vmatpush1.msra.mxu0 0.0
        %1480 = vmatprep.subr.mxu0 0.0
        %1481 = vmatpush1.msra.mxu0 0.0
        %1482 = vmatprep.subr.mxu0 0.0
        %1483 = vmatpush1.msra.mxu0 0.0
        %1484 = vmatprep.subr.mxu0 0.0
        %1485 = vmatpush1.msra.mxu0 0.0
        %1486 = vmatprep.subr.mxu0 0.0
        %1487 = vmatpush1.msra.mxu0 0.0
        %1488 = vmatprep.subr.mxu0 0.0
        %1489 = vmatpush1.msra.mxu0 0.0
        %1490 = vmatprep.subr.mxu0 0.0
        %1491 = vmatpush1.msra.mxu0 0.0
        %1492 = vmatprep.subr.mxu0 0.0
        %1493 = vmatpush1.msra.mxu0 0.0
        %1494 = vmatprep.subr.mxu0 0.0
        %1495 = vmatpush1.msra.mxu0 0.0
        %1496 = vmatprep.subr.mxu0 0.0
        %1497 = vmatpush1.msra.mxu0 0.0
        %1498 = vmatprep.subr.mxu0 0.0
        %1499 = vmatpush1.msra.mxu0 0.0
        %1500 = vmatprep.subr.mxu0 0.0
        %1501 = vmatpush1.msra.mxu0 0.0
        %1502 = vmatprep.subr.mxu0 0.0
        %1503 = vmatpush1.msra.mxu0 0.0
        %1504 = vmatprep.subr.mxu0 0.0
        %1505 = vmatpush1.msra.mxu0 0.0
        %1506 = vmatprep.subr.mxu0 0.0
        %1507 = vmatpush1.msra.mxu0 0.0
        %1508 = vmatprep.subr.mxu0 0.0
        %1509 = vmatpush1.msra.mxu0 0.0
        %1510 = vmatprep.subr.mxu0 0.0
        %1511 = vmatpush1.msra.mxu0 0.0
        %1512 = vmatprep.subr.mxu0 0.0
        %1513 = vmatpush1.msra.mxu0 0.0
        %1514 = vmatprep.subr.mxu0 0.0
        %1515 = vmatpush1.msra.mxu0 0.0
        %1516 = vmatprep.subr.mxu0 0.0
        %1517 = vmatpush1.msra.mxu0 0.0
        %1518 = vmatprep.subr.mxu0 0.0
        %1519 = vmatpush1.msra.mxu0 0.0
        %1520 = vmatprep.subr.mxu0 0.0
        %1521 = vmatpush1.msra.mxu0 0.0
        %1522 = vmatprep.subr.mxu0 0.0
        %1523 = vmatpush1.msra.mxu0 0.0
        %1524 = vmatprep.mubr.f32.mxu0 0.0
        %1525 = vmatmul.mubr.f32.gmra.mrb[0].mxu0 %v1455
        %v1526 = vpop.f32.mrb[0].mxu0
        %v1527 = vadd.f32 0.0, %v1526
        %v1528 = vpop.f32.mrb[0].mxu0
        %v1529 = vadd.f32 0.0, %v1528
        %1530 = vmatprep.mubr.f32.mxu0 0.0
        %1531 = vmatmul.mubr.f32.gmra.mrb[0].mxu0 %v1458
        %v1532 = vpop.f32.mrb[0].mxu0
        %v1533 = vadd.f32 0.0, %v1532
        %v1534 = vpop.f32.mrb[0].mxu0
        %v1535 = vadd.f32 0.0, %v1534
        %1536 = vdwg.mxu0
        %v1537 = vadd.f32 %v1187, %v1527
        %v1538 = vadd.f32 %v1188, %v1529
        %v1539 = vadd.f32 %v1189, %v1533
        %v1540 = vadd.f32 %v1190, %v1535
        %1541 = vmatprep.subr.mxu0 %v1285
        %1542 = vmatpush1.msra.mxu0 %v1284
        %1543 = vmatprep.subr.mxu0 %v1287
        %1544 = vmatpush1.msra.mxu0 %v1286
        %1545 = vmatprep.subr.mxu0 %v1289
        %1546 = vmatpush1.msra.mxu0 %v1288
        %1547 = vmatprep.subr.mxu0 %v1291
        %1548 = vmatpush1.msra.mxu0 %v1290
        %1549 = vmatprep.subr.mxu0 0.0
        %1550 = vmatpush1.msra.mxu0 0.0
        %1551 = vmatprep.subr.mxu0 0.0
        %1552 = vmatpush1.msra.mxu0 0.0
        %1553 = vmatprep.subr.mxu0 0.0
        %1554 = vmatpush1.msra.mxu0 0.0
        %1555 = vmatprep.subr.mxu0 0.0
        %1556 = vmatpush1.msra.mxu0 0.0
        %1557 = vmatprep.subr.mxu0 0.0
        %1558 = vmatpush1.msra.mxu0 0.0
        %1559 = vmatprep.subr.mxu0 0.0
        %1560 = vmatpush1.msra.mxu0 0.0
        %1561 = vmatprep.subr.mxu0 0.0
        %1562 = vmatpush1.msra.mxu0 0.0
        %1563 = vmatprep.subr.mxu0 0.0
        %1564 = vmatpush1.msra.mxu0 0.0
        %1565 = vmatprep.subr.mxu0 0.0
        %1566 = vmatpush1.msra.mxu0 0.0
        %1567 = vmatprep.subr.mxu0 0.0
        %1568 = vmatpush1.msra.mxu0 0.0
        %1569 = vmatprep.subr.mxu0 0.0
        %1570 = vmatpush1.msra.mxu0 0.0
        %1571 = vmatprep.subr.mxu0 0.0
        %1572 = vmatpush1.msra.mxu0 0.0
        %1573 = vmatprep.subr.mxu0 0.0
        %1574 = vmatpush1.msra.mxu0 0.0
        %1575 = vmatprep.subr.mxu0 0.0
        %1576 = vmatpush1.msra.mxu0 0.0
        %1577 = vmatprep.subr.mxu0 0.0
        %1578 = vmatpush1.msra.mxu0 0.0
        %1579 = vmatprep.subr.mxu0 0.0
        %1580 = vmatpush1.msra.mxu0 0.0
        %1581 = vmatprep.subr.mxu0 0.0
        %1582 = vmatpush1.msra.mxu0 0.0
        %1583 = vmatprep.subr.mxu0 0.0
        %1584 = vmatpush1.msra.mxu0 0.0
        %1585 = vmatprep.subr.mxu0 0.0
        %1586 = vmatpush1.msra.mxu0 0.0
        %1587 = vmatprep.subr.mxu0 0.0
        %1588 = vmatpush1.msra.mxu0 0.0
        %1589 = vmatprep.subr.mxu0 0.0
        %1590 = vmatpush1.msra.mxu0 0.0
        %1591 = vmatprep.subr.mxu0 0.0
        %1592 = vmatpush1.msra.mxu0 0.0
        %1593 = vmatprep.subr.mxu0 0.0
        %1594 = vmatpush1.msra.mxu0 0.0
        %1595 = vmatprep.subr.mxu0 0.0
        %1596 = vmatpush1.msra.mxu0 0.0
        %1597 = vmatprep.subr.mxu0 0.0
        %1598 = vmatpush1.msra.mxu0 0.0
        %1599 = vmatprep.subr.mxu0 0.0
        %1600 = vmatpush1.msra.mxu0 0.0
        %1601 = vmatprep.subr.mxu0 0.0
        %1602 = vmatpush1.msra.mxu0 0.0
        %1603 = vmatprep.subr.mxu0 0.0
        %1604 = vmatpush1.msra.mxu0 0.0
        %1605 = vmatprep.mubr.f32.mxu0 0.0
        %1606 = vmatmul.mubr.f32.gmra.mrb[0].mxu0 %v1455
        %v1607 = vpop.f32.mrb[0].mxu0
        %v1608 = vadd.f32 0.0, %v1607
        %v1609 = vpop.f32.mrb[0].mxu0
        %v1610 = vadd.f32 0.0, %v1609
        %1611 = vmatprep.mubr.f32.mxu0 0.0
        %1612 = vmatmul.mubr.f32.gmra.mrb[0].mxu0 %v1458
        %v1613 = vpop.f32.mrb[0].mxu0
        %v1614 = vadd.f32 0.0, %v1613
        %v1615 = vpop.f32.mrb[0].mxu0
        %v1616 = vadd.f32 0.0, %v1615
        %1617 = vdwg.mxu0
        %v1618 = vadd.f32 %v1268, %v1608
        %v1619 = vadd.f32 %v1269, %v1610
        %v1620 = vadd.f32 %v1270, %v1614
        %v1621 = vadd.f32 %v1271, %v1616
        %v1622 = vld [vmem:[%s240 + $0x2] sm:$0xff]
        %v1623 = vld [vmem:[%s240 + $0xa] sm:$0x3f]
        %s1624 = scalar_lea.vmem [#allocation2], 256
        %v1625 = vld [vmem:[%s1624] sm:$0xff]
        %v1626 = vld [vmem:[%s1624 + $0x8] sm:$0xff]
        %v1627 = vld [vmem:[%s1624 + $0x10] sm:$0xff]
        %v1628 = vld [vmem:[%s1624 + $0x18] sm:$0xff]
        %v1629 = vld [vmem:[%s1624 + $0x20] sm:$0xff]
        %v1630 = vld [vmem:[%s1624 + $0x28] sm:$0xff]
        %v1631 = vld [vmem:[%s1624 + $0x30] sm:$0xff]
        %v1632 = vld [vmem:[%s1624 + $0x38] sm:$0xff]
        %s1633 = scalar_lea.vmem [#allocation2], 576
        %v1634 = vld [vmem:[%s1633] sm:$0xff]
        %v1635 = vld [vmem:[%s1633 + $0x8] sm:$0xff]
        %v1636 = vld [vmem:[%s1633 + $0x10] sm:$0xff]
        %v1637 = vld [vmem:[%s1633 + $0x18] sm:$0xff]
        %v1638 = vld [vmem:[%s1633 + $0x20] sm:$0xff]
        %v1639 = vld [vmem:[%s1633 + $0x28] sm:$0xff]
        %v1640 = vld [vmem:[%s1633 + $0x30] sm:$0xff]
        %v1641 = vld [vmem:[%s1633 + $0x38] sm:$0xff]
        %1642 = vmatprep.subr.mxu0 %v1626
        %1643 = vmatpush1.msra.mxu0 %v1625
        %1644 = vmatprep.subr.mxu0 %v1628
        %1645 = vmatpush1.msra.mxu0 %v1627
        %1646 = vmatprep.subr.mxu0 %v1630
        %1647 = vmatpush1.msra.mxu0 %v1629
        %1648 = vmatprep.subr.mxu0 %v1632
        %1649 = vmatpush1.msra.mxu0 %v1631
        %1650 = vmatprep.subr.mxu0 0.0
        %1651 = vmatpush1.msra.mxu0 0.0
        %1652 = vmatprep.subr.mxu0 0.0
        %1653 = vmatpush1.msra.mxu0 0.0
        %1654 = vmatprep.subr.mxu0 0.0
        %1655 = vmatpush1.msra.mxu0 0.0
        %1656 = vmatprep.subr.mxu0 0.0
        %1657 = vmatpush1.msra.mxu0 0.0
        %1658 = vmatprep.subr.mxu0 0.0
        %1659 = vmatpush1.msra.mxu0 0.0
        %1660 = vmatprep.subr.mxu0 0.0
        %1661 = vmatpush1.msra.mxu0 0.0
        %1662 = vmatprep.subr.mxu0 0.0
        %1663 = vmatpush1.msra.mxu0 0.0
        %1664 = vmatprep.subr.mxu0 0.0
        %1665 = vmatpush1.msra.mxu0 0.0
        %1666 = vmatprep.subr.mxu0 0.0
        %1667 = vmatpush1.msra.mxu0 0.0
        %1668 = vmatprep.subr.mxu0 0.0
        %1669 = vmatpush1.msra.mxu0 0.0
        %1670 = vmatprep.subr.mxu0 0.0
        %1671 = vmatpush1.msra.mxu0 0.0
        %1672 = vmatprep.subr.mxu0 0.0
        %1673 = vmatpush1.msra.mxu0 0.0
        %1674 = vmatprep.subr.mxu0 0.0
        %1675 = vmatpush1.msra.mxu0 0.0
        %1676 = vmatprep.subr.mxu0 0.0
        %1677 = vmatpush1.msra.mxu0 0.0
        %1678 = vmatprep.subr.mxu0 0.0
        %1679 = vmatpush1.msra.mxu0 0.0
        %1680 = vmatprep.subr.mxu0 0.0
        %1681 = vmatpush1.msra.mxu0 0.0
        %1682 = vmatprep.subr.mxu0 0.0
        %1683 = vmatpush1.msra.mxu0 0.0
        %1684 = vmatprep.subr.mxu0 0.0
        %1685 = vmatpush1.msra.mxu0 0.0
        %1686 = vmatprep.subr.mxu0 0.0
        %1687 = vmatpush1.msra.mxu0 0.0
        %1688 = vmatprep.subr.mxu0 0.0
        %1689 = vmatpush1.msra.mxu0 0.0
        %1690 = vmatprep.subr.mxu0 0.0
        %1691 = vmatpush1.msra.mxu0 0.0
        %1692 = vmatprep.subr.mxu0 0.0
        %1693 = vmatpush1.msra.mxu0 0.0
        %1694 = vmatprep.subr.mxu0 0.0
        %1695 = vmatpush1.msra.mxu0 0.0
        %1696 = vmatprep.subr.mxu0 0.0
        %1697 = vmatpush1.msra.mxu0 0.0
        %1698 = vmatprep.subr.mxu0 0.0
        %1699 = vmatpush1.msra.mxu0 0.0
        %1700 = vmatprep.subr.mxu0 0.0
        %1701 = vmatpush1.msra.mxu0 0.0
        %1702 = vmatprep.subr.mxu0 0.0
        %1703 = vmatpush1.msra.mxu0 0.0
        %1704 = vmatprep.subr.mxu0 0.0
        %1705 = vmatpush1.msra.mxu0 0.0
        %1706 = vmatprep.mubr.f32.mxu0 0.0
        %1707 = vmatmul.mubr.f32.gmra.mrb[0].mxu0 %v1455
        %v1708 = vpop.f32.mrb[0].mxu0
        %v1709 = vadd.f32 0.0, %v1708
        %v1710 = vpop.f32.mrb[0].mxu0
        %v1711 = vadd.f32 0.0, %v1710
        %1712 = vmatprep.mubr.f32.mxu0 0.0
        %1713 = vmatmul.mubr.f32.gmra.mrb[0].mxu0 %v1458
        %v1714 = vpop.f32.mrb[0].mxu0
        %v1715 = vadd.f32 0.0, %v1714
        %v1716 = vpop.f32.mrb[0].mxu0
        %v1717 = vadd.f32 0.0, %v1716
        %1718 = vdwg.mxu0
        %v1719 = vadd.f32 %v1369, %v1709
        %v1720 = vadd.f32 %v1370, %v1711
        %v1721 = vadd.f32 %v1371, %v1715
        %v1722 = vadd.f32 %v1372, %v1717
        %1723 = vmatprep.subr.mxu0 %v1635
        %1724 = vmatpush1.msra.mxu0 %v1634
        %1725 = vmatprep.subr.mxu0 %v1637
        %1726 = vmatpush1.msra.mxu0 %v1636
        %1727 = vmatprep.subr.mxu0 %v1639
        %1728 = vmatpush1.msra.mxu0 %v1638
        %1729 = vmatprep.subr.mxu0 %v1641
        %1730 = vmatpush1.msra.mxu0 %v1640
        %1731 = vmatprep.subr.mxu0 0.0
        %1732 = vmatpush1.msra.mxu0 0.0
        %1733 = vmatprep.subr.mxu0 0.0
        %1734 = vmatpush1.msra.mxu0 0.0
        %1735 = vmatprep.subr.mxu0 0.0
        %1736 = vmatpush1.msra.mxu0 0.0
        %1737 = vmatprep.subr.mxu0 0.0
        %1738 = vmatpush1.msra.mxu0 0.0
        %1739 = vmatprep.subr.mxu0 0.0
        %1740 = vmatpush1.msra.mxu0 0.0
        %1741 = vmatprep.subr.mxu0 0.0
        %1742 = vmatpush1.msra.mxu0 0.0
        %1743 = vmatprep.subr.mxu0 0.0
        %1744 = vmatpush1.msra.mxu0 0.0
        %1745 = vmatprep.subr.mxu0 0.0
        %1746 = vmatpush1.msra.mxu0 0.0
        %1747 = vmatprep.subr.mxu0 0.0
        %1748 = vmatpush1.msra.mxu0 0.0
        %1749 = vmatprep.subr.mxu0 0.0
        %1750 = vmatpush1.msra.mxu0 0.0
        %1751 = vmatprep.subr.mxu0 0.0
        %1752 = vmatpush1.msra.mxu0 0.0
        %1753 = vmatprep.subr.mxu0 0.0
        %1754 = vmatpush1.msra.mxu0 0.0
        %1755 = vmatprep.subr.mxu0 0.0
        %1756 = vmatpush1.msra.mxu0 0.0
        %1757 = vmatprep.subr.mxu0 0.0
        %1758 = vmatpush1.msra.mxu0 0.0
        %1759 = vmatprep.subr.mxu0 0.0
        %1760 = vmatpush1.msra.mxu0 0.0
        %1761 = vmatprep.subr.mxu0 0.0
        %1762 = vmatpush1.msra.mxu0 0.0
        %1763 = vmatprep.subr.mxu0 0.0
        %1764 = vmatpush1.msra.mxu0 0.0
        %1765 = vmatprep.subr.mxu0 0.0
        %1766 = vmatpush1.msra.mxu0 0.0
        %1767 = vmatprep.subr.mxu0 0.0
        %1768 = vmatpush1.msra.mxu0 0.0
        %1769 = vmatprep.subr.mxu0 0.0
        %1770 = vmatpush1.msra.mxu0 0.0
        %1771 = vmatprep.subr.mxu0 0.0
        %1772 = vmatpush1.msra.mxu0 0.0
        %1773 = vmatprep.subr.mxu0 0.0
        %1774 = vmatpush1.msra.mxu0 0.0
        %1775 = vmatprep.subr.mxu0 0.0
        %1776 = vmatpush1.msra.mxu0 0.0
        %1777 = vmatprep.subr.mxu0 0.0
        %1778 = vmatpush1.msra.mxu0 0.0
        %1779 = vmatprep.subr.mxu0 0.0
        %1780 = vmatpush1.msra.mxu0 0.0
        %1781 = vmatprep.subr.mxu0 0.0
        %1782 = vmatpush1.msra.mxu0 0.0
        %1783 = vmatprep.subr.mxu0 0.0
        %1784 = vmatpush1.msra.mxu0 0.0
        %1785 = vmatprep.subr.mxu0 0.0
        %1786 = vmatpush1.msra.mxu0 0.0
        %1787 = vmatprep.mubr.f32.mxu0 0.0
        %1788 = vmatmul.mubr.f32.gmra.mrb[0].mxu0 %v1455
        %v1789 = vpop.f32.mrb[0].mxu0
        %v1790 = vadd.f32 0.0, %v1789
        %v1791 = vpop.f32.mrb[0].mxu0
        %v1792 = vadd.f32 0.0, %v1791
        %1793 = vmatprep.mubr.f32.mxu0 0.0
        %1794 = vmatmul.mubr.f32.gmra.mrb[0].mxu0 %v1458
        %v1795 = vpop.f32.mrb[0].mxu0
        %v1796 = vadd.f32 0.0, %v1795
        %v1797 = vpop.f32.mrb[0].mxu0
        %v1798 = vadd.f32 0.0, %v1797
        %1799 = vdwg.mxu0
        %v1800 = vadd.f32 %v1450, %v1790
        %v1801 = vadd.f32 %v1451, %v1792
        %v1802 = vadd.f32 %v1452, %v1796
        %v1803 = vadd.f32 %v1453, %v1798
        %v1805 = vsel %vm287, %v1622, 0
        %v1808 = vsel %vm287, %v1623, 0
        %1810 = vmatprep.subr.mxu0 %v1626
        %1811 = vmatpush1.msra.mxu0 %v1625
        %1812 = vmatprep.subr.mxu0 %v1628
        %1813 = vmatpush1.msra.mxu0 %v1627
        %1814 = vmatprep.subr.mxu0 %v1630
        %1815 = vmatpush1.msra.mxu0 %v1629
        %1816 = vmatprep.subr.mxu0 %v1632
        %1817 = vmatpush1.msra.mxu0 %v1631
        %1818 = vmatprep.subr.mxu0 0.0
        %1819 = vmatpush1.msra.mxu0 0.0
        %1820 = vmatprep.subr.mxu0 0.0
        %1821 = vmatpush1.msra.mxu0 0.0
        %1822 = vmatprep.subr.mxu0 0.0
        %1823 = vmatpush1.msra.mxu0 0.0
        %1824 = vmatprep.subr.mxu0 0.0
        %1825 = vmatpush1.msra.mxu0 0.0
        %1826 = vmatprep.subr.mxu0 0.0
        %1827 = vmatpush1.msra.mxu0 0.0
        %1828 = vmatprep.subr.mxu0 0.0
        %1829 = vmatpush1.msra.mxu0 0.0
        %1830 = vmatprep.subr.mxu0 0.0
        %1831 = vmatpush1.msra.mxu0 0.0
        %1832 = vmatprep.subr.mxu0 0.0
        %1833 = vmatpush1.msra.mxu0 0.0
        %1834 = vmatprep.subr.mxu0 0.0
        %1835 = vmatpush1.msra.mxu0 0.0
        %1836 = vmatprep.subr.mxu0 0.0
        %1837 = vmatpush1.msra.mxu0 0.0
        %1838 = vmatprep.subr.mxu0 0.0
        %1839 = vmatpush1.msra.mxu0 0.0
        %1840 = vmatprep.subr.mxu0 0.0
        %1841 = vmatpush1.msra.mxu0 0.0
        %1842 = vmatprep.subr.mxu0 0.0
        %1843 = vmatpush1.msra.mxu0 0.0
        %1844 = vmatprep.subr.mxu0 0.0
        %1845 = vmatpush1.msra.mxu0 0.0
        %1846 = vmatprep.subr.mxu0 0.0
        %1847 = vmatpush1.msra.mxu0 0.0
        %1848 = vmatprep.subr.mxu0 0.0
        %1849 = vmatpush1.msra.mxu0 0.0
        %1850 = vmatprep.subr.mxu0 0.0
        %1851 = vmatpush1.msra.mxu0 0.0
        %1852 = vmatprep.subr.mxu0 0.0
        %1853 = vmatpush1.msra.mxu0 0.0
        %1854 = vmatprep.subr.mxu0 0.0
        %1855 = vmatpush1.msra.mxu0 0.0
        %1856 = vmatprep.subr.mxu0 0.0
        %1857 = vmatpush1.msra.mxu0 0.0
        %1858 = vmatprep.subr.mxu0 0.0
        %1859 = vmatpush1.msra.mxu0 0.0
        %1860 = vmatprep.subr.mxu0 0.0
        %1861 = vmatpush1.msra.mxu0 0.0
        %1862 = vmatprep.subr.mxu0 0.0
        %1863 = vmatpush1.msra.mxu0 0.0
        %1864 = vmatprep.subr.mxu0 0.0
        %1865 = vmatpush1.msra.mxu0 0.0
        %1866 = vmatprep.subr.mxu0 0.0
        %1867 = vmatpush1.msra.mxu0 0.0
        %1868 = vmatprep.subr.mxu0 0.0
        %1869 = vmatpush1.msra.mxu0 0.0
        %1870 = vmatprep.subr.mxu0 0.0
        %1871 = vmatpush1.msra.mxu0 0.0
        %1872 = vmatprep.subr.mxu0 0.0
        %1873 = vmatpush1.msra.mxu0 0.0
        %1874 = vmatprep.mubr.f32.mxu0 0.0
        %1875 = vmatmul.mubr.f32.gmra.mrb[0].mxu0 %v1805
        %v1876 = vpop.f32.mrb[0].mxu0
        %v1877 = vadd.f32 0.0, %v1876
        %v1878 = vpop.f32.mrb[0].mxu0
        %v1879 = vadd.f32 0.0, %v1878
        %1880 = vmatprep.mubr.f32.mxu0 0.0
        %1881 = vmatmul.mubr.f32.gmra.mrb[0].mxu0 %v1808
        %v1882 = vpop.f32.mrb[0].mxu0
        %v1883 = vadd.f32 0.0, %v1882
        %v1884 = vpop.f32.mrb[0].mxu0
        %v1885 = vadd.f32 0.0, %v1884
        %1886 = vdwg.mxu0
        %v1887 = vadd.f32 %v1537, %v1877
        %v1888 = vadd.f32 %v1538, %v1879
        %v1889 = vadd.f32 %v1539, %v1883
        %v1890 = vadd.f32 %v1540, %v1885
        %1891 = vmatprep.subr.mxu0 %v1635
        %1892 = vmatpush1.msra.mxu0 %v1634
        %1893 = vmatprep.subr.mxu0 %v1637
        %1894 = vmatpush1.msra.mxu0 %v1636
        %1895 = vmatprep.subr.mxu0 %v1639
        %1896 = vmatpush1.msra.mxu0 %v1638
        %1897 = vmatprep.subr.mxu0 %v1641
        %1898 = vmatpush1.msra.mxu0 %v1640
        %1899 = vmatprep.subr.mxu0 0.0
        %1900 = vmatpush1.msra.mxu0 0.0
        %1901 = vmatprep.subr.mxu0 0.0
        %1902 = vmatpush1.msra.mxu0 0.0
        %1903 = vmatprep.subr.mxu0 0.0
        %1904 = vmatpush1.msra.mxu0 0.0
        %1905 = vmatprep.subr.mxu0 0.0
        %1906 = vmatpush1.msra.mxu0 0.0
        %1907 = vmatprep.subr.mxu0 0.0
        %1908 = vmatpush1.msra.mxu0 0.0
        %1909 = vmatprep.subr.mxu0 0.0
        %1910 = vmatpush1.msra.mxu0 0.0
        %1911 = vmatprep.subr.mxu0 0.0
        %1912 = vmatpush1.msra.mxu0 0.0
        %1913 = vmatprep.subr.mxu0 0.0
        %1914 = vmatpush1.msra.mxu0 0.0
        %1915 = vmatprep.subr.mxu0 0.0
        %1916 = vmatpush1.msra.mxu0 0.0
        %1917 = vmatprep.subr.mxu0 0.0
        %1918 = vmatpush1.msra.mxu0 0.0
        %1919 = vmatprep.subr.mxu0 0.0
        %1920 = vmatpush1.msra.mxu0 0.0
        %1921 = vmatprep.subr.mxu0 0.0
        %1922 = vmatpush1.msra.mxu0 0.0
        %1923 = vmatprep.subr.mxu0 0.0
        %1924 = vmatpush1.msra.mxu0 0.0
        %1925 = vmatprep.subr.mxu0 0.0
        %1926 = vmatpush1.msra.mxu0 0.0
        %1927 = vmatprep.subr.mxu0 0.0
        %1928 = vmatpush1.msra.mxu0 0.0
        %1929 = vmatprep.subr.mxu0 0.0
        %1930 = vmatpush1.msra.mxu0 0.0
        %1931 = vmatprep.subr.mxu0 0.0
        %1932 = vmatpush1.msra.mxu0 0.0
        %1933 = vmatprep.subr.mxu0 0.0
        %1934 = vmatpush1.msra.mxu0 0.0
        %1935 = vmatprep.subr.mxu0 0.0
        %1936 = vmatpush1.msra.mxu0 0.0
        %1937 = vmatprep.subr.mxu0 0.0
        %1938 = vmatpush1.msra.mxu0 0.0
        %1939 = vmatprep.subr.mxu0 0.0
        %1940 = vmatpush1.msra.mxu0 0.0
        %1941 = vmatprep.subr.mxu0 0.0
        %1942 = vmatpush1.msra.mxu0 0.0
        %1943 = vmatprep.subr.mxu0 0.0
        %1944 = vmatpush1.msra.mxu0 0.0
        %1945 = vmatprep.subr.mxu0 0.0
        %1946 = vmatpush1.msra.mxu0 0.0
        %1947 = vmatprep.subr.mxu0 0.0
        %1948 = vmatpush1.msra.mxu0 0.0
        %1949 = vmatprep.subr.mxu0 0.0
        %1950 = vmatpush1.msra.mxu0 0.0
        %1951 = vmatprep.subr.mxu0 0.0
        %1952 = vmatpush1.msra.mxu0 0.0
        %1953 = vmatprep.subr.mxu0 0.0
        %1954 = vmatpush1.msra.mxu0 0.0
        %1955 = vmatprep.mubr.f32.mxu0 0.0
        %1956 = vmatmul.mubr.f32.gmra.mrb[0].mxu0 %v1805
        %v1957 = vpop.f32.mrb[0].mxu0
        %v1958 = vadd.f32 0.0, %v1957
        %v1959 = vpop.f32.mrb[0].mxu0
        %v1960 = vadd.f32 0.0, %v1959
        %1961 = vmatprep.mubr.f32.mxu0 0.0
        %1962 = vmatmul.mubr.f32.gmra.mrb[0].mxu0 %v1808
        %v1963 = vpop.f32.mrb[0].mxu0
        %v1964 = vadd.f32 0.0, %v1963
        %v1965 = vpop.f32.mrb[0].mxu0
        %v1966 = vadd.f32 0.0, %v1965
        %1967 = vdwg.mxu0
        %v1968 = vadd.f32 %v1618, %v1958
        %v1969 = vadd.f32 %v1619, %v1960
        %v1970 = vadd.f32 %v1620, %v1964
        %v1971 = vadd.f32 %v1621, %v1966
        %v1972 = vmax.f32 %v1719, %v1800
        %v1973 = vmax.f32 %v1720, %v1801
        %v1974 = vmax.f32 %v1721, %v1802
        %v1975 = vmax.f32 %v1722, %v1803
        %v1976 = vmax.f32 %v1887, %v1968
        %v1977 = vmax.f32 %v1888, %v1969
        %v1978 = vmax.f32 %v1889, %v1970
        %v1979 = vmax.f32 %v1890, %v1971
        %v1980 = vmax.f32 %v1972, %v1976
        %v1981 = vmax.f32 %v1973, %v1977
        %v1982 = vmax.f32 %v1974, %v1978
        %v1983 = vmax.f32 %v1975, %v1979
        %v1984 = vld [vmem:[#allocation4] sm:$0x3]
        %v1986 = vlaneseq
        %v1987 = vshrl.u32 %v1986, 7
        %v1988 = vsub.s32 0, %v1987
        %v1989 = vrot.slane %v1984, %v1988
        %v1990 = vlaneseq
        %v1991 = vshrl.u32 %v1990, 7
        %v1992 = vsub.s32 1, %v1991
        %v1993 = vrot.slane %v1984, %v1992
        %v1996 = vadd.f32 %v1980, %v1989
        %v1997 = vadd.f32 %v1981, %v1993
        %v1998 = vadd.f32 %v1982, %v1989
        %v1999 = vadd.f32 %v1983, %v1993
        %v2000 = vmax.f32 %v1996, 0.0
        %v2001 = vmax.f32 %v1997, 0.0
        %v2002 = vmax.f32 %v1998, 0.0
        %v2003 = vmax.f32 %v1999, 0.0
        %2004 = vst [vmem:[%s245] sm:$0xff] %v2000
        %vm2005 = vcmask 785408
        %2006 = vst.msk [vmem:[%s245 + $0x8] sm:$0xff] %vm2005, %v2001
        %2007 = vst [vmem:[%s245 + $0x10] sm:$0x3f] %v2002
        %vm2008 = vcmask 783360
        %2009 = vst.msk [vmem:[%s245 + $0x18] sm:$0x3f] %vm2008, %v2003
        %p2010 = scmp.lt.s32.totalorder %s17, 1
        %s2011 = scalar_select %p2010, %s17, 1
        %s2012 = smul.addr %s2011, 4
        %s2013 = smul.addr %s2012, 8
        %s2014 = scalar_lea.vmem %s4, %s2013
        // Predicated region
        $region45: #{cnn_forward.3} parent=35 // pred_check
          %p2015 = pneg %p129
        $region46: #{cnn_forward.3} parent=35 // pred_check_branch
          %2017 = sbr.rel (%p2015) target = $region48
        $region47: #{cnn_forward.3} parent=35 // pred_region
          _
        $region48: #{cnn_forward.3} parent=35 // pred_fallthru
          _
      $region36: #{cnn_forward.3} parent=5 // pred_fallthru
        _
      %p2018 = scmp.le.s32.totalorder 2, %s12
      // Predicated region
      $region49: #{cnn_forward.3} parent=5 // pred_check
        %p2019 = pneg %p2018
      $region50: #{cnn_forward.3} parent=5 // pred_check_branch
        %2021 = sbr.rel (%p2019) target = $region52
      $region51: #{cnn_forward.3} parent=5 // pred_region
        %s2022 = ssub.s32 %s12, 2
        // Predicated region
        $region53: #{cnn_forward.3} parent=51 // pred_check
          %p2023 = pneg %p135
        $region54: #{cnn_forward.3} parent=51 // pred_check_branch
          %2025 = sbr.rel (%p2023) target = $region56
        $region55: #{cnn_forward.3} parent=51 // pred_region
          %p2026 = scmp.lt.s32.totalorder %s18, 1
          %s2027 = scalar_select %p2026, %s18, 1
          %s2028 = smul.addr %s2027, 4
          %s2029 = smul.addr %s2028, 8
          %s2030 = scalar_lea.vmem %s4, %s2029
        $region56: #{cnn_forward.3} parent=51 // pred_fallthru
          _
      $region52: #{cnn_forward.3} parent=5 // pred_fallthru
        _
    $region6: #{cnn_forward.3} parent=1 // loop_footer
      %s16 = sadd.s32 1, %s12
    $region7: #{cnn_forward.3} parent=1 // loop_footer_branch
      %11 = sbr.rel target = $region3
    $region8: #{cnn_forward.3} parent=1 // loop_exit
      _
    %2031 = vsyncpa [#allocation3], 1
    %s2032 = scalar_lea.sflag [#allocation3], 1
    %2033 = vsyncpa %s2032, 1
    %2034 = vsyncpa [#allocation5], 1

// kernel: cnn_forward.5
$region0: #{cnn_forward.5}
  #allocation0 [shape = 'u32[]', space=smem, size = 0x4, offset = 0x4, fixed_abs, tag = 'smem constant byte address 0x4 - core index']
  #allocation1 [shape = 'u32[144,128]{1,0:T(1,128)}', space=vmem, size = 0x12000, scoped, tag = 'internal scratch']
  %s0 = inlined_call_operand.vmem [shape: f32[2,1568], index: 0, kind: input, shape index: {}]
  %s1 = inlined_call_operand.vmem [shape: f32[1568,256], index: 1, kind: input, shape index: {}]
  %s2 = inlined_call_operand.vmem [shape: f32[1,256], index: 2, kind: input, shape index: {}]
  %s3 = inlined_call_operand.vmem [shape: f32[256,128], index: 3, kind: input, shape index: {}]
  %s4 = inlined_call_operand.vmem [shape: f32[1,128], index: 4, kind: input, shape index: {}]
  %s5 = inlined_call_operand.vmem [shape: f32[128,128], index: 5, kind: input, shape index: {}]
  %s6 = inlined_call_operand.vmem [shape: f32[1,128], index: 6, kind: input, shape index: {}]
  %s7 = inlined_call_operand.hbm [shape: f32[2,128], index: 7, kind: output, shape index: {0}]
  %s8 = inlined_call_operand.hbm [shape: f32[2,256], index: 8, kind: output, shape index: {1}]
  %9 = xla_tuple %s7, %s8
  %s10 = sld [smem:[#allocation0]]
  $region46: #{cnn_forward.5} parent=0
    _
  %s12 = ssub.s32 1, %s10
  %s13 = scalar_select 0, %s12, %s10
  $region1: #{cnn_forward.5} parent=0
    #allocation2 [shape = 'u8[1024]{0}', space=vmem, size = 0x400, scoped, tag = 'output window, operand 0, single buffered']
    #allocation3 [shape = 's32[1]{0}', space=sflag, size = 0x4, scoped, tag = 'scoped memory for cnn_forward.5']
    #allocation4 [shape = 'u8[2048]{0}', space=vmem, size = 0x800, scoped, tag = 'output window, operand 1, single buffered']
    #allocation5 [shape = 's32[1]{0}', space=sflag, size = 0x4, scoped, tag = 'scoped memory for cnn_forward.5']
    %14 = vsyncpa [#allocation3], 0
    %15 = vsyncpa [#allocation5], 0
    // Predicated region
    $region2: #{cnn_forward.5} parent=1 // pred_check
      _
    $region3: #{cnn_forward.5} parent=1 // pred_check_branch
      %17 = sbr.rel (0) target = $region5
    $region4: #{cnn_forward.5} parent=1 // pred_region
      _
    $region5: #{cnn_forward.5} parent=1 // pred_fallthru
      _
    // Predicated region
    $region6: #{cnn_forward.5} parent=1 // pred_check
      _
    $region7: #{cnn_forward.5} parent=1 // pred_check_branch
      %19 = sbr.rel (0) target = $region9
    $region8: #{cnn_forward.5} parent=1 // pred_region
      _
    $region9: #{cnn_forward.5} parent=1 // pred_fallthru
      _
    // Predicated region
    $region10: #{cnn_forward.5} parent=1 // pred_check
      _
    $region11: #{cnn_forward.5} parent=1 // pred_check_branch
      %21 = sbr.rel (0) target = $region13
    $region12: #{cnn_forward.5} parent=1 // pred_region
      _
    $region13: #{cnn_forward.5} parent=1 // pred_fallthru
      _
    // Predicated region
    $region14: #{cnn_forward.5} parent=1 // pred_check
      _
    $region15: #{cnn_forward.5} parent=1 // pred_check_branch
      %23 = sbr.rel (0) target = $region17
    $region16: #{cnn_forward.5} parent=1 // pred_region
      _
    $region17: #{cnn_forward.5} parent=1 // pred_fallthru
      _
    // Predicated region
    $region18: #{cnn_forward.5} parent=1 // pred_check
      _
    $region19: #{cnn_forward.5} parent=1 // pred_check_branch
      %25 = sbr.rel (0) target = $region21
    $region20: #{cnn_forward.5} parent=1 // pred_region
      _
    $region21: #{cnn_forward.5} parent=1 // pred_fallthru
      _
    // Predicated region
    $region22: #{cnn_forward.5} parent=1 // pred_check
      _
    $region23: #{cnn_forward.5} parent=1 // pred_check_branch
      %27 = sbr.rel (0) target = $region25
    $region24: #{cnn_forward.5} parent=1 // pred_region
      _
    $region25: #{cnn_forward.5} parent=1 // pred_fallthru
      _
    // Predicated region
    $region26: #{cnn_forward.5} parent=1 // pred_check
      _
    $region27: #{cnn_forward.5} parent=1 // pred_check_branch
      %29 = sbr.rel (0) target = $region29
    $region28: #{cnn_forward.5} parent=1 // pred_region
      _
    $region29: #{cnn_forward.5} parent=1 // pred_fallthru
      _
    %v30 = vld [vmem:[%s0] sm:$0xff]
    %v31 = vld [vmem:[%s0 + $0x8] sm:$0xff]
    %v32 = vld [vmem:[%s0 + $0x10] sm:$0xff]
    %v33 = vld [vmem:[%s0 + $0x18] sm:$0x3]
    %v34 = vld [vmem:[%s1] sm:$0xff]
    %v35 = vld [vmem:[%s1 + $0x8] sm:$0xff]
    %v36 = vld [vmem:[%s1 + $0x10] sm:$0xff]
    %v37 = vld [vmem:[%s1 + $0x18] sm:$0xff]
    %v38 = vld [vmem:[%s1 + $0x20] sm:$0xff]
    %v39 = vld [vmem:[%s1 + $0x28] sm:$0xff]
    %v40 = vld [vmem:[%s1 + $0x30] sm:$0xff]
    %v41 = vld [vmem:[%s1 + $0x38] sm:$0xff]
    %v42 = vld [vmem:[%s1 + $0x40] sm:$0xff]
    %v43 = vld [vmem:[%s1 + $0x48] sm:$0xff]
    %v44 = vld [vmem:[%s1 + $0x50] sm:$0xff]
    %v45 = vld [vmem:[%s1 + $0x58] sm:$0xff]
    %v46 = vld [vmem:[%s1 + $0x60] sm:$0xff]
    %v47 = vld [vmem:[%s1 + $0x68] sm:$0xff]
    %v48 = vld [vmem:[%s1 + $0x70] sm:$0xff]
    %v49 = vld [vmem:[%s1 + $0x78] sm:$0xff]
    %v50 = vld [vmem:[%s1 + $0x80] sm:$0xff]
    %v51 = vld [vmem:[%s1 + $0x88] sm:$0xff]
    %v52 = vld [vmem:[%s1 + $0x90] sm:$0xff]
    %v53 = vld [vmem:[%s1 + $0x98] sm:$0xff]
    %v54 = vld [vmem:[%s1 + $0xa0] sm:$0xff]
    %v55 = vld [vmem:[%s1 + $0xa8] sm:$0xff]
    %v56 = vld [vmem:[%s1 + $0xb0] sm:$0xff]
    %v57 = vld [vmem:[%s1 + $0xb8] sm:$0xff]
    %v58 = vld [vmem:[%s1 + $0xc0] sm:$0xff]
    %v59 = vld [vmem:[%s1 + $0xc8] sm:$0xff]
    %v60 = vld [vmem:[%s1 + $0xd0] sm:$0xff]
    %v61 = vld [vmem:[%s1 + $0xd8] sm:$0xff]
    %v62 = vld [vmem:[%s1 + $0xe0] sm:$0xff]
    %v63 = vld [vmem:[%s1 + $0xe8] sm:$0xff]
    %v64 = vld [vmem:[%s1 + $0xf0] sm:$0xff]
    %v65 = vld [vmem:[%s1 + $0xf8] sm:$0xff]
    %v66 = vld [vmem:[%s1 + $0x100] sm:$0xff]
    %v67 = vld [vmem:[%s1 + $0x108] sm:$0xff]
    %v68 = vld [vmem:[%s1 + $0x110] sm:$0xff]
    %v69 = vld [vmem:[%s1 + $0x118] sm:$0xff]
    %v70 = vld [vmem:[%s1 + $0x120] sm:$0xff]
    %v71 = vld [vmem:[%s1 + $0x128] sm:$0xff]
    %v72 = vld [vmem:[%s1 + $0x130] sm:$0xff]
    %v73 = vld [vmem:[%s1 + $0x138] sm:$0xff]
    %v74 = vld [vmem:[%s1 + $0x140] sm:$0xff]
    %v75 = vld [vmem:[%s1 + $0x148] sm:$0xff]
    %v76 = vld [vmem:[%s1 + $0x150] sm:$0xff]
    %v77 = vld [vmem:[%s1 + $0x158] sm:$0xff]
    %v78 = vld [vmem:[%s1 + $0x160] sm:$0xff]
    %v79 = vld [vmem:[%s1 + $0x168] sm:$0xff]
    %v80 = vld [vmem:[%s1 + $0x170] sm:$0xff]
    %v81 = vld [vmem:[%s1 + $0x178] sm:$0xff]
    %v82 = vld [vmem:[%s1 + $0x180] sm:$0xff]
    %v83 = vld [vmem:[%s1 + $0x188] sm:$0xff]
    %v84 = vld [vmem:[%s1 + $0x190] sm:$0xff]
    %v85 = vld [vmem:[%s1 + $0x198] sm:$0xff]
    %v86 = vld [vmem:[%s1 + $0x1a0] sm:$0xff]
    %v87 = vld [vmem:[%s1 + $0x1a8] sm:$0xff]
    %v88 = vld [vmem:[%s1 + $0x1b0] sm:$0xff]
    %v89 = vld [vmem:[%s1 + $0x1b8] sm:$0xff]
    %v90 = vld [vmem:[%s1 + $0x1c0] sm:$0xff]
    %v91 = vld [vmem:[%s1 + $0x1c8] sm:$0xff]
    %v92 = vld [vmem:[%s1 + $0x1d0] sm:$0xff]
    %v93 = vld [vmem:[%s1 + $0x1d8] sm:$0xff]
    %v94 = vld [vmem:[%s1 + $0x1e0] sm:$0xff]
    %v95 = vld [vmem:[%s1 + $0x1e8] sm:$0xff]
    %v96 = vld [vmem:[%s1 + $0x1f0] sm:$0xff]
    %v97 = vld [vmem:[%s1 + $0x1f8] sm:$0xff]
    %v98 = vld [vmem:[%s1 + $0x200] sm:$0xff]
    %v99 = vld [vmem:[%s1 + $0x208] sm:$0xff]
    %v100 = vld [vmem:[%s1 + $0x210] sm:$0xff]
    %v101 = vld [vmem:[%s1 + $0x218] sm:$0xff]
    %v102 = vld [vmem:[%s1 + $0x220] sm:$0xff]
    %v103 = vld [vmem:[%s1 + $0x228] sm:$0xff]
    %v104 = vld [vmem:[%s1 + $0x230] sm:$0xff]
    %v105 = vld [vmem:[%s1 + $0x238] sm:$0xff]
    %v106 = vld [vmem:[%s1 + $0x240] sm:$0xff]
    %v107 = vld [vmem:[%s1 + $0x248] sm:$0xff]
    %v108 = vld [vmem:[%s1 + $0x250] sm:$0xff]
    %v109 = vld [vmem:[%s1 + $0x258] sm:$0xff]
    %v110 = vld [vmem:[%s1 + $0x260] sm:$0xff]
    %v111 = vld [vmem:[%s1 + $0x268] sm:$0xff]
    %v112 = vld [vmem:[%s1 + $0x270] sm:$0xff]
    %v113 = vld [vmem:[%s1 + $0x278] sm:$0xff]
    %v114 = vld [vmem:[%s1 + $0x280] sm:$0xff]
    %v115 = vld [vmem:[%s1 + $0x288] sm:$0xff]
    %v116 = vld [vmem:[%s1 + $0x290] sm:$0xff]
    %v117 = vld [vmem:[%s1 + $0x298] sm:$0xff]
    %v118 = vld [vmem:[%s1 + $0x2a0] sm:$0xff]
    %v119 = vld [vmem:[%s1 + $0x2a8] sm:$0xff]
    %v120 = vld [vmem:[%s1 + $0x2b0] sm:$0xff]
    %v121 = vld [vmem:[%s1 + $0x2b8] sm:$0xff]
    %v122 = vld [vmem:[%s1 + $0x2c0] sm:$0xff]
    %v123 = vld [vmem:[%s1 + $0x2c8] sm:$0xff]
    %v124 = vld [vmem:[%s1 + $0x2d0] sm:$0xff]
    %v125 = vld [vmem:[%s1 + $0x2d8] sm:$0xff]
    %v126 = vld [vmem:[%s1 + $0x2e0] sm:$0xff]
    %v127 = vld [vmem:[%s1 + $0x2e8] sm:$0xff]
    %v128 = vld [vmem:[%s1 + $0x2f0] sm:$0xff]
    %v129 = vld [vmem:[%s1 + $0x2f8] sm:$0xff]
    %v130 = vld [vmem:[%s1 + $0x300] sm:$0xff]
    %v131 = vld [vmem:[%s1 + $0x308] sm:$0xff]
    %v132 = vld [vmem:[%s1 + $0x310] sm:$0xff]
    %v133 = vld [vmem:[%s1 + $0x318] sm:$0xff]
    %v134 = vld [vmem:[%s1 + $0x320] sm:$0xff]
    %v135 = vld [vmem:[%s1 + $0x328] sm:$0xff]
    %v136 = vld [vmem:[%s1 + $0x330] sm:$0xff]
    %v137 = vld [vmem:[%s1 + $0x338] sm:$0xff]
    %v138 = vld [vmem:[%s1 + $0x340] sm:$0xff]
    %v139 = vld [vmem:[%s1 + $0x348] sm:$0xff]
    %v140 = vld [vmem:[%s1 + $0x350] sm:$0xff]
    %v141 = vld [vmem:[%s1 + $0x358] sm:$0xff]
    %v142 = vld [vmem:[%s1 + $0x360] sm:$0xff]
    %v143 = vld [vmem:[%s1 + $0x368] sm:$0xff]
    %v144 = vld [vmem:[%s1 + $0x370] sm:$0xff]
    %v145 = vld [vmem:[%s1 + $0x378] sm:$0xff]
    %v146 = vld [vmem:[%s1 + $0x380] sm:$0xff]
    %v147 = vld [vmem:[%s1 + $0x388] sm:$0xff]
    %v148 = vld [vmem:[%s1 + $0x390] sm:$0xff]
    %v149 = vld [vmem:[%s1 + $0x398] sm:$0xff]
    %v150 = vld [vmem:[%s1 + $0x3a0] sm:$0xff]
    %v151 = vld [vmem:[%s1 + $0x3a8] sm:$0xff]
    %v152 = vld [vmem:[%s1 + $0x3b0] sm:$0xff]
    %v153 = vld [vmem:[%s1 + $0x3b8] sm:$0xff]
    %v154 = vld [vmem:[%s1 + $0x3c0] sm:$0xff]
    %v155 = vld [vmem:[%s1 + $0x3c8] sm:$0xff]
    %v156 = vld [vmem:[%s1 + $0x3d0] sm:$0xff]
    %v157 = vld [vmem:[%s1 + $0x3d8] sm:$0xff]
    %v158 = vld [vmem:[%s1 + $0x3e0] sm:$0xff]
    %v159 = vld [vmem:[%s1 + $0x3e8] sm:$0xff]
    %v160 = vld [vmem:[%s1 + $0x3f0] sm:$0xff]
    %v161 = vld [vmem:[%s1 + $0x3f8] sm:$0xff]
    %v162 = vld [vmem:[%s1 + $0x400] sm:$0xff]
    %v163 = vld [vmem:[%s1 + $0x408] sm:$0xff]
    %v164 = vld [vmem:[%s1 + $0x410] sm:$0xff]
    %v165 = vld [vmem:[%s1 + $0x418] sm:$0xff]
    %v166 = vld [vmem:[%s1 + $0x420] sm:$0xff]
    %v167 = vld [vmem:[%s1 + $0x428] sm:$0xff]
    %v168 = vld [vmem:[%s1 + $0x430] sm:$0xff]
    %v169 = vld [vmem:[%s1 + $0x438] sm:$0xff]
    %v170 = vld [vmem:[%s1 + $0x440] sm:$0xff]
    %v171 = vld [vmem:[%s1 + $0x448] sm:$0xff]
    %v172 = vld [vmem:[%s1 + $0x450] sm:$0xff]
    %v173 = vld [vmem:[%s1 + $0x458] sm:$0xff]
    %v174 = vld [vmem:[%s1 + $0x460] sm:$0xff]
    %v175 = vld [vmem:[%s1 + $0x468] sm:$0xff]
    %v176 = vld [vmem:[%s1 + $0x470] sm:$0xff]
    %v177 = vld [vmem:[%s1 + $0x478] sm:$0xff]
    %v178 = vld [vmem:[%s1 + $0x480] sm:$0xff]
    %v179 = vld [vmem:[%s1 + $0x488] sm:$0xff]
    %v180 = vld [vmem:[%s1 + $0x490] sm:$0xff]
    %v181 = vld [vmem:[%s1 + $0x498] sm:$0xff]
    %v182 = vld [vmem:[%s1 + $0x4a0] sm:$0xff]
    %v183 = vld [vmem:[%s1 + $0x4a8] sm:$0xff]
    %v184 = vld [vmem:[%s1 + $0x4b0] sm:$0xff]
    %v185 = vld [vmem:[%s1 + $0x4b8] sm:$0xff]
    %v186 = vld [vmem:[%s1 + $0x4c0] sm:$0xff]
    %v187 = vld [vmem:[%s1 + $0x4c8] sm:$0xff]
    %v188 = vld [vmem:[%s1 + $0x4d0] sm:$0xff]
    %v189 = vld [vmem:[%s1 + $0x4d8] sm:$0xff]
    %v190 = vld [vmem:[%s1 + $0x4e0] sm:$0xff]
    %v191 = vld [vmem:[%s1 + $0x4e8] sm:$0xff]
    %v192 = vld [vmem:[%s1 + $0x4f0] sm:$0xff]
    %v193 = vld [vmem:[%s1 + $0x4f8] sm:$0xff]
    %v194 = vld [vmem:[%s1 + $0x500] sm:$0xff]
    %v195 = vld [vmem:[%s1 + $0x508] sm:$0xff]
    %v196 = vld [vmem:[%s1 + $0x510] sm:$0xff]
    %v197 = vld [vmem:[%s1 + $0x518] sm:$0xff]
    %v198 = vld [vmem:[%s1 + $0x520] sm:$0xff]
    %v199 = vld [vmem:[%s1 + $0x528] sm:$0xff]
    %v200 = vld [vmem:[%s1 + $0x530] sm:$0xff]
    %v201 = vld [vmem:[%s1 + $0x538] sm:$0xff]
    %v202 = vld [vmem:[%s1 + $0x540] sm:$0xff]
    %v203 = vld [vmem:[%s1 + $0x548] sm:$0xff]
    %v204 = vld [vmem:[%s1 + $0x550] sm:$0xff]
    %v205 = vld [vmem:[%s1 + $0x558] sm:$0xff]
    %v206 = vld [vmem:[%s1 + $0x560] sm:$0xff]
    %v207 = vld [vmem:[%s1 + $0x568] sm:$0xff]
    %v208 = vld [vmem:[%s1 + $0x570] sm:$0xff]
    %v209 = vld [vmem:[%s1 + $0x578] sm:$0xff]
    %v210 = vld [vmem:[%s1 + $0x580] sm:$0xff]
    %v211 = vld [vmem:[%s1 + $0x588] sm:$0xff]
    %v212 = vld [vmem:[%s1 + $0x590] sm:$0xff]
    %v213 = vld [vmem:[%s1 + $0x598] sm:$0xff]
    %v214 = vld [vmem:[%s1 + $0x5a0] sm:$0xff]
    %v215 = vld [vmem:[%s1 + $0x5a8] sm:$0xff]
    %v216 = vld [vmem:[%s1 + $0x5b0] sm:$0xff]
    %v217 = vld [vmem:[%s1 + $0x5b8] sm:$0xff]
    %v218 = vld [vmem:[%s1 + $0x5c0] sm:$0xff]
    %v219 = vld [vmem:[%s1 + $0x5c8] sm:$0xff]
    %v220 = vld [vmem:[%s1 + $0x5d0] sm:$0xff]
    %v221 = vld [vmem:[%s1 + $0x5d8] sm:$0xff]
    %v222 = vld [vmem:[%s1 + $0x5e0] sm:$0xff]
    %v223 = vld [vmem:[%s1 + $0x5e8] sm:$0xff]
    %v224 = vld [vmem:[%s1 + $0x5f0] sm:$0xff]
    %v225 = vld [vmem:[%s1 + $0x5f8] sm:$0xff]
    %v226 = vld [vmem:[%s1 + $0x600] sm:$0xff]
    %v227 = vld [vmem:[%s1 + $0x608] sm:$0xff]
    %v228 = vld [vmem:[%s1 + $0x610] sm:$0xff]
    %v229 = vld [vmem:[%s1 + $0x618] sm:$0xff]
    %v230 = vld [vmem:[%s1 + $0x620] sm:$0xff]
    %v231 = vld [vmem:[%s1 + $0x628] sm:$0xff]
    %v232 = vld [vmem:[%s1 + $0x630] sm:$0xff]
    %v233 = vld [vmem:[%s1 + $0x638] sm:$0xff]
    %v234 = vld [vmem:[%s1 + $0x640] sm:$0xff]
    %v235 = vld [vmem:[%s1 + $0x648] sm:$0xff]
    %v236 = vld [vmem:[%s1 + $0x650] sm:$0xff]
    %v237 = vld [vmem:[%s1 + $0x658] sm:$0xff]
    %v238 = vld [vmem:[%s1 + $0x660] sm:$0xff]
    %v239 = vld [vmem:[%s1 + $0x668] sm:$0xff]
    %v240 = vld [vmem:[%s1 + $0x670] sm:$0xff]
    %v241 = vld [vmem:[%s1 + $0x678] sm:$0xff]
    %v242 = vld [vmem:[%s1 + $0x680] sm:$0xff]
    %v243 = vld [vmem:[%s1 + $0x688] sm:$0xff]
    %v244 = vld [vmem:[%s1 + $0x690] sm:$0xff]
    %v245 = vld [vmem:[%s1 + $0x698] sm:$0xff]
    %v246 = vld [vmem:[%s1 + $0x6a0] sm:$0xff]
    %v247 = vld [vmem:[%s1 + $0x6a8] sm:$0xff]
    %v248 = vld [vmem:[%s1 + $0x6b0] sm:$0xff]
    %v249 = vld [vmem:[%s1 + $0x6b8] sm:$0xff]
    %v250 = vld [vmem:[%s1 + $0x6c0] sm:$0xff]
    %v251 = vld [vmem:[%s1 + $0x6c8] sm:$0xff]
    %v252 = vld [vmem:[%s1 + $0x6d0] sm:$0xff]
    %v253 = vld [vmem:[%s1 + $0x6d8] sm:$0xff]
    %v254 = vld [vmem:[%s1 + $0x6e0] sm:$0xff]
    %v255 = vld [vmem:[%s1 + $0x6e8] sm:$0xff]
    %v256 = vld [vmem:[%s1 + $0x6f0] sm:$0xff]
    %v257 = vld [vmem:[%s1 + $0x6f8] sm:$0xff]
    %v258 = vld [vmem:[%s1 + $0x700] sm:$0xff]
    %v259 = vld [vmem:[%s1 + $0x708] sm:$0xff]
    %v260 = vld [vmem:[%s1 + $0x710] sm:$0xff]
    %v261 = vld [vmem:[%s1 + $0x718] sm:$0xff]
    %v262 = vld [vmem:[%s1 + $0x720] sm:$0xff]
    %v263 = vld [vmem:[%s1 + $0x728] sm:$0xff]
    %v264 = vld [vmem:[%s1 + $0x730] sm:$0xff]
    %v265 = vld [vmem:[%s1 + $0x738] sm:$0xff]
    %v266 = vld [vmem:[%s1 + $0x740] sm:$0xff]
    %v267 = vld [vmem:[%s1 + $0x748] sm:$0xff]
    %v268 = vld [vmem:[%s1 + $0x750] sm:$0xff]
    %v269 = vld [vmem:[%s1 + $0x758] sm:$0xff]
    %v270 = vld [vmem:[%s1 + $0x760] sm:$0xff]
    %v271 = vld [vmem:[%s1 + $0x768] sm:$0xff]
    %v272 = vld [vmem:[%s1 + $0x770] sm:$0xff]
    %v273 = vld [vmem:[%s1 + $0x778] sm:$0xff]
    %v274 = vld [vmem:[%s1 + $0x780] sm:$0xff]
    %v275 = vld [vmem:[%s1 + $0x788] sm:$0xff]
    %v276 = vld [vmem:[%s1 + $0x790] sm:$0xff]
    %v277 = vld [vmem:[%s1 + $0x798] sm:$0xff]
    %v278 = vld [vmem:[%s1 + $0x7a0] sm:$0xff]
    %v279 = vld [vmem:[%s1 + $0x7a8] sm:$0xff]
    %v280 = vld [vmem:[%s1 + $0x7b0] sm:$0xff]
    %v281 = vld [vmem:[%s1 + $0x7b8] sm:$0xff]
    %v282 = vld [vmem:[%s1 + $0x7c0] sm:$0xff]
    %v283 = vld [vmem:[%s1 + $0x7c8] sm:$0xff]
    %v284 = vld [vmem:[%s1 + $0x7d0] sm:$0xff]
    %v285 = vld [vmem:[%s1 + $0x7d8] sm:$0xff]
    %v286 = vld [vmem:[%s1 + $0x7e0] sm:$0xff]
    %v287 = vld [vmem:[%s1 + $0x7e8] sm:$0xff]
    %v288 = vld [vmem:[%s1 + $0x7f0] sm:$0xff]
    %v289 = vld [vmem:[%s1 + $0x7f8] sm:$0xff]
    %v290 = vld [vmem:[%s1 + $0x800] sm:$0xff]
    %v291 = vld [vmem:[%s1 + $0x808] sm:$0xff]
    %v292 = vld [vmem:[%s1 + $0x810] sm:$0xff]
    %v293 = vld [vmem:[%s1 + $0x818] sm:$0xff]
    %v294 = vld [vmem:[%s1 + $0x820] sm:$0xff]
    %v295 = vld [vmem:[%s1 + $0x828] sm:$0xff]
    %v296 = vld [vmem:[%s1 + $0x830] sm:$0xff]
    %v297 = vld [vmem:[%s1 + $0x838] sm:$0xff]
    %v298 = vld [vmem:[%s1 + $0x840] sm:$0xff]
    %v299 = vld [vmem:[%s1 + $0x848] sm:$0xff]
    %v300 = vld [vmem:[%s1 + $0x850] sm:$0xff]
    %v301 = vld [vmem:[%s1 + $0x858] sm:$0xff]
    %v302 = vld [vmem:[%s1 + $0x860] sm:$0xff]
    %v303 = vld [vmem:[%s1 + $0x868] sm:$0xff]
    %v304 = vld [vmem:[%s1 + $0x870] sm:$0xff]
    %v305 = vld [vmem:[%s1 + $0x878] sm:$0xff]
    %v306 = vld [vmem:[%s1 + $0x880] sm:$0xff]
    %v307 = vld [vmem:[%s1 + $0x888] sm:$0xff]
    %v308 = vld [vmem:[%s1 + $0x890] sm:$0xff]
    %v309 = vld [vmem:[%s1 + $0x898] sm:$0xff]
    %v310 = vld [vmem:[%s1 + $0x8a0] sm:$0xff]
    %v311 = vld [vmem:[%s1 + $0x8a8] sm:$0xff]
    %v312 = vld [vmem:[%s1 + $0x8b0] sm:$0xff]
    %v313 = vld [vmem:[%s1 + $0x8b8] sm:$0xff]
    %v314 = vld [vmem:[%s1 + $0x8c0] sm:$0xff]
    %v315 = vld [vmem:[%s1 + $0x8c8] sm:$0xff]
    %v316 = vld [vmem:[%s1 + $0x8d0] sm:$0xff]
    %v317 = vld [vmem:[%s1 + $0x8d8] sm:$0xff]
    %v318 = vld [vmem:[%s1 + $0x8e0] sm:$0xff]
    %v319 = vld [vmem:[%s1 + $0x8e8] sm:$0xff]
    %v320 = vld [vmem:[%s1 + $0x8f0] sm:$0xff]
    %v321 = vld [vmem:[%s1 + $0x8f8] sm:$0xff]
    %v322 = vld [vmem:[%s1 + $0x900] sm:$0xff]
    %v323 = vld [vmem:[%s1 + $0x908] sm:$0xff]
    %v324 = vld [vmem:[%s1 + $0x910] sm:$0xff]
    %v325 = vld [vmem:[%s1 + $0x918] sm:$0xff]
    %v326 = vld [vmem:[%s1 + $0x920] sm:$0xff]
    %v327 = vld [vmem:[%s1 + $0x928] sm:$0xff]
    %v328 = vld [vmem:[%s1 + $0x930] sm:$0xff]
    %v329 = vld [vmem:[%s1 + $0x938] sm:$0xff]
    %v330 = vld [vmem:[%s1 + $0x940] sm:$0xff]
    %v331 = vld [vmem:[%s1 + $0x948] sm:$0xff]
    %v332 = vld [vmem:[%s1 + $0x950] sm:$0xff]
    %v333 = vld [vmem:[%s1 + $0x958] sm:$0xff]
    %v334 = vld [vmem:[%s1 + $0x960] sm:$0xff]
    %v335 = vld [vmem:[%s1 + $0x968] sm:$0xff]
    %v336 = vld [vmem:[%s1 + $0x970] sm:$0xff]
    %v337 = vld [vmem:[%s1 + $0x978] sm:$0xff]
    %v338 = vld [vmem:[%s1 + $0x980] sm:$0xff]
    %v339 = vld [vmem:[%s1 + $0x988] sm:$0xff]
    %v340 = vld [vmem:[%s1 + $0x990] sm:$0xff]
    %v341 = vld [vmem:[%s1 + $0x998] sm:$0xff]
    %v342 = vld [vmem:[%s1 + $0x9a0] sm:$0xff]
    %v343 = vld [vmem:[%s1 + $0x9a8] sm:$0xff]
    %v344 = vld [vmem:[%s1 + $0x9b0] sm:$0xff]
    %v345 = vld [vmem:[%s1 + $0x9b8] sm:$0xff]
    %v346 = vld [vmem:[%s1 + $0x9c0] sm:$0xff]
    %v347 = vld [vmem:[%s1 + $0x9c8] sm:$0xff]
    %v348 = vld [vmem:[%s1 + $0x9d0] sm:$0xff]
    %v349 = vld [vmem:[%s1 + $0x9d8] sm:$0xff]
    %v350 = vld [vmem:[%s1 + $0x9e0] sm:$0xff]
    %v351 = vld [vmem:[%s1 + $0x9e8] sm:$0xff]
    %v352 = vld [vmem:[%s1 + $0x9f0] sm:$0xff]
    %v353 = vld [vmem:[%s1 + $0x9f8] sm:$0xff]
    %v354 = vld [vmem:[%s1 + $0xa00] sm:$0xff]
    %v355 = vld [vmem:[%s1 + $0xa08] sm:$0xff]
    %v356 = vld [vmem:[%s1 + $0xa10] sm:$0xff]
    %v357 = vld [vmem:[%s1 + $0xa18] sm:$0xff]
    %v358 = vld [vmem:[%s1 + $0xa20] sm:$0xff]
    %v359 = vld [vmem:[%s1 + $0xa28] sm:$0xff]
    %v360 = vld [vmem:[%s1 + $0xa30] sm:$0xff]
    %v361 = vld [vmem:[%s1 + $0xa38] sm:$0xff]
    %v362 = vld [vmem:[%s1 + $0xa40] sm:$0xff]
    %v363 = vld [vmem:[%s1 + $0xa48] sm:$0xff]
    %v364 = vld [vmem:[%s1 + $0xa50] sm:$0xff]
    %v365 = vld [vmem:[%s1 + $0xa58] sm:$0xff]
    %v366 = vld [vmem:[%s1 + $0xa60] sm:$0xff]
    %v367 = vld [vmem:[%s1 + $0xa68] sm:$0xff]
    %v368 = vld [vmem:[%s1 + $0xa70] sm:$0xff]
    %v369 = vld [vmem:[%s1 + $0xa78] sm:$0xff]
    %v370 = vld [vmem:[%s1 + $0xa80] sm:$0xff]
    %v371 = vld [vmem:[%s1 + $0xa88] sm:$0xff]
    %v372 = vld [vmem:[%s1 + $0xa90] sm:$0xff]
    %v373 = vld [vmem:[%s1 + $0xa98] sm:$0xff]
    %v374 = vld [vmem:[%s1 + $0xaa0] sm:$0xff]
    %v375 = vld [vmem:[%s1 + $0xaa8] sm:$0xff]
    %v376 = vld [vmem:[%s1 + $0xab0] sm:$0xff]
    %v377 = vld [vmem:[%s1 + $0xab8] sm:$0xff]
    %v378 = vld [vmem:[%s1 + $0xac0] sm:$0xff]
    %v379 = vld [vmem:[%s1 + $0xac8] sm:$0xff]
    %v380 = vld [vmem:[%s1 + $0xad0] sm:$0xff]
    %v381 = vld [vmem:[%s1 + $0xad8] sm:$0xff]
    %v382 = vld [vmem:[%s1 + $0xae0] sm:$0xff]
    %v383 = vld [vmem:[%s1 + $0xae8] sm:$0xff]
    %v384 = vld [vmem:[%s1 + $0xaf0] sm:$0xff]
    %v385 = vld [vmem:[%s1 + $0xaf8] sm:$0xff]
    %v386 = vld [vmem:[%s1 + $0xb00] sm:$0xff]
    %v387 = vld [vmem:[%s1 + $0xb08] sm:$0xff]
    %v388 = vld [vmem:[%s1 + $0xb10] sm:$0xff]
    %v389 = vld [vmem:[%s1 + $0xb18] sm:$0xff]
    %v390 = vld [vmem:[%s1 + $0xb20] sm:$0xff]
    %v391 = vld [vmem:[%s1 + $0xb28] sm:$0xff]
    %v392 = vld [vmem:[%s1 + $0xb30] sm:$0xff]
    %v393 = vld [vmem:[%s1 + $0xb38] sm:$0xff]
    %v394 = vld [vmem:[%s1 + $0xb40] sm:$0xff]
    %v395 = vld [vmem:[%s1 + $0xb48] sm:$0xff]
    %v396 = vld [vmem:[%s1 + $0xb50] sm:$0xff]
    %v397 = vld [vmem:[%s1 + $0xb58] sm:$0xff]
    %v398 = vld [vmem:[%s1 + $0xb60] sm:$0xff]
    %v399 = vld [vmem:[%s1 + $0xb68] sm:$0xff]
    %v400 = vld [vmem:[%s1 + $0xb70] sm:$0xff]
    %v401 = vld [vmem:[%s1 + $0xb78] sm:$0xff]
    %v402 = vld [vmem:[%s1 + $0xb80] sm:$0xff]
    %v403 = vld [vmem:[%s1 + $0xb88] sm:$0xff]
    %v404 = vld [vmem:[%s1 + $0xb90] sm:$0xff]
    %v405 = vld [vmem:[%s1 + $0xb98] sm:$0xff]
    %v406 = vld [vmem:[%s1 + $0xba0] sm:$0xff]
    %v407 = vld [vmem:[%s1 + $0xba8] sm:$0xff]
    %v408 = vld [vmem:[%s1 + $0xbb0] sm:$0xff]
    %v409 = vld [vmem:[%s1 + $0xbb8] sm:$0xff]
    %v410 = vld [vmem:[%s1 + $0xbc0] sm:$0xff]
    %v411 = vld [vmem:[%s1 + $0xbc8] sm:$0xff]
    %v412 = vld [vmem:[%s1 + $0xbd0] sm:$0xff]
    %v413 = vld [vmem:[%s1 + $0xbd8] sm:$0xff]
    %v414 = vld [vmem:[%s1 + $0xbe0] sm:$0xff]
    %v415 = vld [vmem:[%s1 + $0xbe8] sm:$0xff]
    %v416 = vld [vmem:[%s1 + $0xbf0] sm:$0xff]
    %v417 = vld [vmem:[%s1 + $0xbf8] sm:$0xff]
    %v418 = vld [vmem:[%s1 + $0xc00] sm:$0xff]
    %v419 = vld [vmem:[%s1 + $0xc08] sm:$0xff]
    %v420 = vld [vmem:[%s1 + $0xc10] sm:$0xff]
    %v421 = vld [vmem:[%s1 + $0xc18] sm:$0xff]
    %v422 = vld [vmem:[%s1 + $0xc20] sm:$0xff]
    %v423 = vld [vmem:[%s1 + $0xc28] sm:$0xff]
    %v424 = vld [vmem:[%s1 + $0xc30] sm:$0xff]
    %v425 = vld [vmem:[%s1 + $0xc38] sm:$0xff]
    %v426 = vld [vmem:[%s2] sm:$0x3]
    %v428 = vlaneseq
    %v429 = vshrl.u32 %v428, 7
    %v430 = vsub.s32 0, %v429
    %v431 = vrot.slane %v426, %v430
    %v432 = vlaneseq
    %v433 = vshrl.u32 %v432, 7
    %v434 = vsub.s32 1, %v433
    %v435 = vrot.slane %v426, %v434
    %v442 = vcombine.high %v30, %v30
    %v444 = vunpack.c.l.s4 1983009808
    %v445 = vunpack.c.0.s8 %v444
    %v446 = vlaneseq
    %v447 = vshrl.u32 %v446, 7
    %v448 = vsub.s32 %v445, %v447
    %v449 = vrot.slane %v30, %v448
    %v451 = vunpack.c.l.s4 1983009808
    %v452 = vunpack.c.0.s8 %v451
    %v453 = vlaneseq
    %v454 = vshrl.u32 %v453, 7
    %v455 = vsub.s32 %v452, %v454
    %v456 = vrot.slane %v442, %v455
    %v457 = vcombine.high %v449, %v449
    %v458 = vcombine.high %v456, %v456
    %v459 = vcombine.high %v31, %v31
    %v461 = vunpack.c.l.s4 1983009808
    %v462 = vunpack.c.0.s8 %v461
    %v463 = vlaneseq
    %v464 = vshrl.u32 %v463, 7
    %v465 = vsub.s32 %v462, %v464
    %v466 = vrot.slane %v31, %v465
    %v468 = vunpack.c.l.s4 1983009808
    %v469 = vunpack.c.0.s8 %v468
    %v470 = vlaneseq
    %v471 = vshrl.u32 %v470, 7
    %v472 = vsub.s32 %v469, %v471
    %v473 = vrot.slane %v459, %v472
    %v474 = vcombine.high %v466, %v466
    %v475 = vcombine.high %v473, %v473
    %v476 = vcombine.high %v32, %v32
    %v478 = vunpack.c.l.s4 1983009808
    %v479 = vunpack.c.0.s8 %v478
    %v480 = vlaneseq
    %v481 = vshrl.u32 %v480, 7
    %v482 = vsub.s32 %v479, %v481
    %v483 = vrot.slane %v32, %v482
    %v485 = vunpack.c.l.s4 1983009808
    %v486 = vunpack.c.0.s8 %v485
    %v487 = vlaneseq
    %v488 = vshrl.u32 %v487, 7
    %v489 = vsub.s32 %v486, %v488
    %v490 = vrot.slane %v476, %v489
    %v491 = vcombine.high %v483, %v483
    %v492 = vcombine.high %v490, %v490
    %v494 = vunpack.c.l.s4 1983009808
    %v495 = vunpack.c.0.s8 %v494
    %v496 = vlaneseq
    %v497 = vshrl.u32 %v496, 7
    %v498 = vsub.s32 %v495, %v497
    %v499 = vrot.slane %v33, %v498
    %vm512 = vcmask 261120
    %v513 = vsel %vm512, %v499, 0
    %515 = vmatprep.subr.mxu0 %v35
    %516 = vmatpush1.msra.mxu0 %v34
    %517 = vmatprep.subr.mxu0 %v37
    %518 = vmatpush1.msra.mxu0 %v36
    %519 = vmatprep.subr.mxu0 %v39
    %520 = vmatpush1.msra.mxu0 %v38
    %521 = vmatprep.subr.mxu0 %v41
    %522 = vmatpush1.msra.mxu0 %v40
    %523 = vmatprep.subr.mxu0 %v43
    %524 = vmatpush1.msra.mxu0 %v42
    %525 = vmatprep.subr.mxu0 %v45
    %526 = vmatpush1.msra.mxu0 %v44
    %527 = vmatprep.subr.mxu0 %v47
    %528 = vmatpush1.msra.mxu0 %v46
    %529 = vmatprep.subr.mxu0 %v49
    %530 = vmatpush1.msra.mxu0 %v48
    %531 = vmatprep.subr.mxu0 %v51
    %532 = vmatpush1.msra.mxu0 %v50
    %533 = vmatprep.subr.mxu0 %v53
    %534 = vmatpush1.msra.mxu0 %v52
    %535 = vmatprep.subr.mxu0 %v55
    %536 = vmatpush1.msra.mxu0 %v54
    %537 = vmatprep.subr.mxu0 %v57
    %538 = vmatpush1.msra.mxu0 %v56
    %539 = vmatprep.subr.mxu0 %v59
    %540 = vmatpush1.msra.mxu0 %v58
    %541 = vmatprep.subr.mxu0 %v61
    %542 = vmatpush1.msra.mxu0 %v60
    %543 = vmatprep.subr.mxu0 %v63
    %544 = vmatpush1.msra.mxu0 %v62
    %545 = vmatprep.subr.mxu0 %v65
    %546 = vmatpush1.msra.mxu0 %v64
    %547 = vmatprep.subr.mxu0 %v67
    %548 = vmatpush1.msra.mxu0 %v66
    %549 = vmatprep.subr.mxu0 %v69
    %550 = vmatpush1.msra.mxu0 %v68
    %551 = vmatprep.subr.mxu0 %v71
    %552 = vmatpush1.msra.mxu0 %v70
    %553 = vmatprep.subr.mxu0 %v73
    %554 = vmatpush1.msra.mxu0 %v72
    %555 = vmatprep.subr.mxu0 %v75
    %556 = vmatpush1.msra.mxu0 %v74
    %557 = vmatprep.subr.mxu0 %v77
    %558 = vmatpush1.msra.mxu0 %v76
    %559 = vmatprep.subr.mxu0 %v79
    %560 = vmatpush1.msra.mxu0 %v78
    %561 = vmatprep.subr.mxu0 %v81
    %562 = vmatpush1.msra.mxu0 %v80
    %563 = vmatprep.subr.mxu0 %v83
    %564 = vmatpush1.msra.mxu0 %v82
    %565 = vmatprep.subr.mxu0 %v85
    %566 = vmatpush1.msra.mxu0 %v84
    %567 = vmatprep.subr.mxu0 %v87
    %568 = vmatpush1.msra.mxu0 %v86
    %569 = vmatprep.subr.mxu0 %v89
    %570 = vmatpush1.msra.mxu0 %v88
    %571 = vmatprep.subr.mxu0 %v91
    %572 = vmatpush1.msra.mxu0 %v90
    %573 = vmatprep.subr.mxu0 %v93
    %574 = vmatpush1.msra.mxu0 %v92
    %575 = vmatprep.subr.mxu0 %v95
    %576 = vmatpush1.msra.mxu0 %v94
    %577 = vmatprep.subr.mxu0 %v97
    %578 = vmatpush1.msra.mxu0 %v96
    %579 = vmatprep.mubr.f32.mxu0 %v457
    %580 = vmatmul.mubr.f32.gmra.mrb[0].mxu0 %v449
    %v581 = vpop.f32.mrb[0].mxu0
    %v582 = vadd.f32 %v431, %v581
    %v583 = vpop.f32.mrb[0].mxu0
    %v584 = vadd.f32 %v435, %v583
    %585 = vdwg.mxu0
    %586 = vmatprep.subr.mxu0 %v99
    %587 = vmatpush1.msra.mxu0 %v98
    %588 = vmatprep.subr.mxu0 %v101
    %589 = vmatpush1.msra.mxu0 %v100
    %590 = vmatprep.subr.mxu0 %v103
    %591 = vmatpush1.msra.mxu0 %v102
    %592 = vmatprep.subr.mxu0 %v105
    %593 = vmatpush1.msra.mxu0 %v104
    %594 = vmatprep.subr.mxu0 %v107
    %595 = vmatpush1.msra.mxu0 %v106
    %596 = vmatprep.subr.mxu0 %v109
    %597 = vmatpush1.msra.mxu0 %v108
    %598 = vmatprep.subr.mxu0 %v111
    %599 = vmatpush1.msra.mxu0 %v110
    %600 = vmatprep.subr.mxu0 %v113
    %601 = vmatpush1.msra.mxu0 %v112
    %602 = vmatprep.subr.mxu0 %v115
    %603 = vmatpush1.msra.mxu0 %v114
    %604 = vmatprep.subr.mxu0 %v117
    %605 = vmatpush1.msra.mxu0 %v116
    %606 = vmatprep.subr.mxu0 %v119
    %607 = vmatpush1.msra.mxu0 %v118
    %608 = vmatprep.subr.mxu0 %v121
    %609 = vmatpush1.msra.mxu0 %v120
    %610 = vmatprep.subr.mxu0 %v123
    %611 = vmatpush1.msra.mxu0 %v122
    %612 = vmatprep.subr.mxu0 %v125
    %613 = vmatpush1.msra.mxu0 %v124
    %614 = vmatprep.subr.mxu0 %v127
    %615 = vmatpush1.msra.mxu0 %v126
    %616 = vmatprep.subr.mxu0 %v129
    %617 = vmatpush1.msra.mxu0 %v128
    %618 = vmatprep.subr.mxu0 %v131
    %619 = vmatpush1.msra.mxu0 %v130
    %620 = vmatprep.subr.mxu0 %v133
    %621 = vmatpush1.msra.mxu0 %v132
    %622 = vmatprep.subr.mxu0 %v135
    %623 = vmatpush1.msra.mxu0 %v134
    %624 = vmatprep.subr.mxu0 %v137
    %625 = vmatpush1.msra.mxu0 %v136
    %626 = vmatprep.subr.mxu0 %v139
    %627 = vmatpush1.msra.mxu0 %v138
    %628 = vmatprep.subr.mxu0 %v141
    %629 = vmatpush1.msra.mxu0 %v140
    %630 = vmatprep.subr.mxu0 %v143
    %631 = vmatpush1.msra.mxu0 %v142
    %632 = vmatprep.subr.mxu0 %v145
    %633 = vmatpush1.msra.mxu0 %v144
    %634 = vmatprep.subr.mxu0 %v147
    %635 = vmatpush1.msra.mxu0 %v146
    %636 = vmatprep.subr.mxu0 %v149
    %637 = vmatpush1.msra.mxu0 %v148
    %638 = vmatprep.subr.mxu0 %v151
    %639 = vmatpush1.msra.mxu0 %v150
    %640 = vmatprep.subr.mxu0 %v153
    %641 = vmatpush1.msra.mxu0 %v152
    %642 = vmatprep.subr.mxu0 %v155
    %643 = vmatpush1.msra.mxu0 %v154
    %644 = vmatprep.subr.mxu0 %v157
    %645 = vmatpush1.msra.mxu0 %v156
    %646 = vmatprep.subr.mxu0 %v159
    %647 = vmatpush1.msra.mxu0 %v158
    %648 = vmatprep.subr.mxu0 %v161
    %649 = vmatpush1.msra.mxu0 %v160
    %650 = vmatprep.mubr.f32.mxu0 %v458
    %651 = vmatmul.mubr.f32.gmra.mrb[0].mxu0 %v456
    %v652 = vpop.f32.mrb[0].mxu0
    %v653 = vadd.f32 %v582, %v652
    %v654 = vpop.f32.mrb[0].mxu0
    %v655 = vadd.f32 %v584, %v654
    %656 = vdwg.mxu0
    %657 = vmatprep.subr.mxu0 %v163
    %658 = vmatpush1.msra.mxu0 %v162
    %659 = vmatprep.subr.mxu0 %v165
    %660 = vmatpush1.msra.mxu0 %v164
    %661 = vmatprep.subr.mxu0 %v167
    %662 = vmatpush1.msra.mxu0 %v166
    %663 = vmatprep.subr.mxu0 %v169
    %664 = vmatpush1.msra.mxu0 %v168
    %665 = vmatprep.subr.mxu0 %v171
    %666 = vmatpush1.msra.mxu0 %v170
    %667 = vmatprep.subr.mxu0 %v173
    %668 = vmatpush1.msra.mxu0 %v172
    %669 = vmatprep.subr.mxu0 %v175
    %670 = vmatpush1.msra.mxu0 %v174
    %671 = vmatprep.subr.mxu0 %v177
    %672 = vmatpush1.msra.mxu0 %v176
    %673 = vmatprep.subr.mxu0 %v179
    %674 = vmatpush1.msra.mxu0 %v178
    %675 = vmatprep.subr.mxu0 %v181
    %676 = vmatpush1.msra.mxu0 %v180
    %677 = vmatprep.subr.mxu0 %v183
    %678 = vmatpush1.msra.mxu0 %v182
    %679 = vmatprep.subr.mxu0 %v185
    %680 = vmatpush1.msra.mxu0 %v184
    %681 = vmatprep.subr.mxu0 %v187
    %682 = vmatpush1.msra.mxu0 %v186
    %683 = vmatprep.subr.mxu0 %v189
    %684 = vmatpush1.msra.mxu0 %v188
    %685 = vmatprep.subr.mxu0 %v191
    %686 = vmatpush1.msra.mxu0 %v190
    %687 = vmatprep.subr.mxu0 %v193
    %688 = vmatpush1.msra.mxu0 %v192
    %689 = vmatprep.subr.mxu0 %v195
    %690 = vmatpush1.msra.mxu0 %v194
    %691 = vmatprep.subr.mxu0 %v197
    %692 = vmatpush1.msra.mxu0 %v196
    %693 = vmatprep.subr.mxu0 %v199
    %694 = vmatpush1.msra.mxu0 %v198
    %695 = vmatprep.subr.mxu0 %v201
    %696 = vmatpush1.msra.mxu0 %v200
    %697 = vmatprep.subr.mxu0 %v203
    %698 = vmatpush1.msra.mxu0 %v202
    %699 = vmatprep.subr.mxu0 %v205
    %700 = vmatpush1.msra.mxu0 %v204
    %701 = vmatprep.subr.mxu0 %v207
    %702 = vmatpush1.msra.mxu0 %v206
    %703 = vmatprep.subr.mxu0 %v209
    %704 = vmatpush1.msra.mxu0 %v208
    %705 = vmatprep.subr.mxu0 %v211
    %706 = vmatpush1.msra.mxu0 %v210
    %707 = vmatprep.subr.mxu0 %v213
    %708 = vmatpush1.msra.mxu0 %v212
    %709 = vmatprep.subr.mxu0 %v215
    %710 = vmatpush1.msra.mxu0 %v214
    %711 = vmatprep.subr.mxu0 %v217
    %712 = vmatpush1.msra.mxu0 %v216
    %713 = vmatprep.subr.mxu0 %v219
    %714 = vmatpush1.msra.mxu0 %v218
    %715 = vmatprep.subr.mxu0 %v221
    %716 = vmatpush1.msra.mxu0 %v220
    %717 = vmatprep.subr.mxu0 %v223
    %718 = vmatpush1.msra.mxu0 %v222
    %719 = vmatprep.subr.mxu0 %v225
    %720 = vmatpush1.msra.mxu0 %v224
    %721 = vmatprep.mubr.f32.mxu0 %v474
    %722 = vmatmul.mubr.f32.gmra.mrb[0].mxu0 %v466
    %v723 = vpop.f32.mrb[0].mxu0
    %v724 = vadd.f32 %v653, %v723
    %v725 = vpop.f32.mrb[0].mxu0
    %v726 = vadd.f32 %v655, %v725
    %727 = vdwg.mxu0
    %728 = vmatprep.subr.mxu0 %v227
    %729 = vmatpush1.msra.mxu0 %v226
    %730 = vmatprep.subr.mxu0 %v229
    %731 = vmatpush1.msra.mxu0 %v228
    %732 = vmatprep.subr.mxu0 %v231
    %733 = vmatpush1.msra.mxu0 %v230
    %734 = vmatprep.subr.mxu0 %v233
    %735 = vmatpush1.msra.mxu0 %v232
    %736 = vmatprep.subr.mxu0 %v235
    %737 = vmatpush1.msra.mxu0 %v234
    %738 = vmatprep.subr.mxu0 %v237
    %739 = vmatpush1.msra.mxu0 %v236
    %740 = vmatprep.subr.mxu0 %v239
    %741 = vmatpush1.msra.mxu0 %v238
    %742 = vmatprep.subr.mxu0 %v241
    %743 = vmatpush1.msra.mxu0 %v240
    %744 = vmatprep.subr.mxu0 %v243
    %745 = vmatpush1.msra.mxu0 %v242
    %746 = vmatprep.subr.mxu0 %v245
    %747 = vmatpush1.msra.mxu0 %v244
    %748 = vmatprep.subr.mxu0 %v247
    %749 = vmatpush1.msra.mxu0 %v246
    %750 = vmatprep.subr.mxu0 %v249
    %751 = vmatpush1.msra.mxu0 %v248
    %752 = vmatprep.subr.mxu0 %v251
    %753 = vmatpush1.msra.mxu0 %v250
    %754 = vmatprep.subr.mxu0 %v253
    %755 = vmatpush1.msra.mxu0 %v252
    %756 = vmatprep.subr.mxu0 %v255
    %757 = vmatpush1.msra.mxu0 %v254
    %758 = vmatprep.subr.mxu0 %v257
    %759 = vmatpush1.msra.mxu0 %v256
    %760 = vmatprep.subr.mxu0 %v259
    %761 = vmatpush1.msra.mxu0 %v258
    %762 = vmatprep.subr.mxu0 %v261
    %763 = vmatpush1.msra.mxu0 %v260
    %764 = vmatprep.subr.mxu0 %v263
    %765 = vmatpush1.msra.mxu0 %v262
    %766 = vmatprep.subr.mxu0 %v265
    %767 = vmatpush1.msra.mxu0 %v264
    %768 = vmatprep.subr.mxu0 %v267
    %769 = vmatpush1.msra.mxu0 %v266
    %770 = vmatprep.subr.mxu0 %v269
    %771 = vmatpush1.msra.mxu0 %v268
    %772 = vmatprep.subr.mxu0 %v271
    %773 = vmatpush1.msra.mxu0 %v270
    %774 = vmatprep.subr.mxu0 %v273
    %775 = vmatpush1.msra.mxu0 %v272
    %776 = vmatprep.subr.mxu0 %v275
    %777 = vmatpush1.msra.mxu0 %v274
    %778 = vmatprep.subr.mxu0 %v277
    %779 = vmatpush1.msra.mxu0 %v276
    %780 = vmatprep.subr.mxu0 %v279
    %781 = vmatpush1.msra.mxu0 %v278
    %782 = vmatprep.subr.mxu0 %v281
    %783 = vmatpush1.msra.mxu0 %v280
    %784 = vmatprep.subr.mxu0 %v283
    %785 = vmatpush1.msra.mxu0 %v282
    %786 = vmatprep.subr.mxu0 %v285
    %787 = vmatpush1.msra.mxu0 %v284
    %788 = vmatprep.subr.mxu0 %v287
    %789 = vmatpush1.msra.mxu0 %v286
    %790 = vmatprep.subr.mxu0 %v289
    %791 = vmatpush1.msra.mxu0 %v288
    %792 = vmatprep.mubr.f32.mxu0 %v475
    %793 = vmatmul.mubr.f32.gmra.mrb[0].mxu0 %v473
    %v794 = vpop.f32.mrb[0].mxu0
    %v795 = vadd.f32 %v724, %v794
    %v796 = vpop.f32.mrb[0].mxu0
    %v797 = vadd.f32 %v726, %v796
    %798 = vdwg.mxu0
    %799 = vmatprep.subr.mxu0 %v291
    %800 = vmatpush1.msra.mxu0 %v290
    %801 = vmatprep.subr.mxu0 %v293
    %802 = vmatpush1.msra.mxu0 %v292
    %803 = vmatprep.subr.mxu0 %v295
    %804 = vmatpush1.msra.mxu0 %v294
    %805 = vmatprep.subr.mxu0 %v297
    %806 = vmatpush1.msra.mxu0 %v296
    %807 = vmatprep.subr.mxu0 %v299
    %808 = vmatpush1.msra.mxu0 %v298
    %809 = vmatprep.subr.mxu0 %v301
    %810 = vmatpush1.msra.mxu0 %v300
    %811 = vmatprep.subr.mxu0 %v303
    %812 = vmatpush1.msra.mxu0 %v302
    %813 = vmatprep.subr.mxu0 %v305
    %814 = vmatpush1.msra.mxu0 %v304
    %815 = vmatprep.subr.mxu0 %v307
    %816 = vmatpush1.msra.mxu0 %v306
    %817 = vmatprep.subr.mxu0 %v309
    %818 = vmatpush1.msra.mxu0 %v308
    %819 = vmatprep.subr.mxu0 %v311
    %820 = vmatpush1.msra.mxu0 %v310
    %821 = vmatprep.subr.mxu0 %v313
    %822 = vmatpush1.msra.mxu0 %v312
    %823 = vmatprep.subr.mxu0 %v315
    %824 = vmatpush1.msra.mxu0 %v314
    %825 = vmatprep.subr.mxu0 %v317
    %826 = vmatpush1.msra.mxu0 %v316
    %827 = vmatprep.subr.mxu0 %v319
    %828 = vmatpush1.msra.mxu0 %v318
    %829 = vmatprep.subr.mxu0 %v321
    %830 = vmatpush1.msra.mxu0 %v320
    %831 = vmatprep.subr.mxu0 %v323
    %832 = vmatpush1.msra.mxu0 %v322
    %833 = vmatprep.subr.mxu0 %v325
    %834 = vmatpush1.msra.mxu0 %v324
    %835 = vmatprep.subr.mxu0 %v327
    %836 = vmatpush1.msra.mxu0 %v326
    %837 = vmatprep.subr.mxu0 %v329
    %838 = vmatpush1.msra.mxu0 %v328
    %839 = vmatprep.subr.mxu0 %v331
    %840 = vmatpush1.msra.mxu0 %v330
    %841 = vmatprep.subr.mxu0 %v333
    %842 = vmatpush1.msra.mxu0 %v332
    %843 = vmatprep.subr.mxu0 %v335
    %844 = vmatpush1.msra.mxu0 %v334
    %845 = vmatprep.subr.mxu0 %v337
    %846 = vmatpush1.msra.mxu0 %v336
    %847 = vmatprep.subr.mxu0 %v339
    %848 = vmatpush1.msra.mxu0 %v338
    %849 = vmatprep.subr.mxu0 %v341
    %850 = vmatpush1.msra.mxu0 %v340
    %851 = vmatprep.subr.mxu0 %v343
    %852 = vmatpush1.msra.mxu0 %v342
    %853 = vmatprep.subr.mxu0 %v345
    %854 = vmatpush1.msra.mxu0 %v344
    %855 = vmatprep.subr.mxu0 %v347
    %856 = vmatpush1.msra.mxu0 %v346
    %857 = vmatprep.subr.mxu0 %v349
    %858 = vmatpush1.msra.mxu0 %v348
    %859 = vmatprep.subr.mxu0 %v351
    %860 = vmatpush1.msra.mxu0 %v350
    %861 = vmatprep.subr.mxu0 %v353
    %862 = vmatpush1.msra.mxu0 %v352
    %863 = vmatprep.mubr.f32.mxu0 %v491
    %864 = vmatmul.mubr.f32.gmra.mrb[0].mxu0 %v483
    %v865 = vpop.f32.mrb[0].mxu0
    %v866 = vadd.f32 %v795, %v865
    %v867 = vpop.f32.mrb[0].mxu0
    %v868 = vadd.f32 %v797, %v867
    %869 = vdwg.mxu0
    %870 = vmatprep.subr.mxu0 %v355
    %871 = vmatpush1.msra.mxu0 %v354
    %872 = vmatprep.subr.mxu0 %v357
    %873 = vmatpush1.msra.mxu0 %v356
    %874 = vmatprep.subr.mxu0 %v359
    %875 = vmatpush1.msra.mxu0 %v358
    %876 = vmatprep.subr.mxu0 %v361
    %877 = vmatpush1.msra.mxu0 %v360
    %878 = vmatprep.subr.mxu0 %v363
    %879 = vmatpush1.msra.mxu0 %v362
    %880 = vmatprep.subr.mxu0 %v365
    %881 = vmatpush1.msra.mxu0 %v364
    %882 = vmatprep.subr.mxu0 %v367
    %883 = vmatpush1.msra.mxu0 %v366
    %884 = vmatprep.subr.mxu0 %v369
    %885 = vmatpush1.msra.mxu0 %v368
    %886 = vmatprep.subr.mxu0 %v371
    %887 = vmatpush1.msra.mxu0 %v370
    %888 = vmatprep.subr.mxu0 %v373
    %889 = vmatpush1.msra.mxu0 %v372
    %890 = vmatprep.subr.mxu0 %v375
    %891 = vmatpush1.msra.mxu0 %v374
    %892 = vmatprep.subr.mxu0 %v377
    %893 = vmatpush1.msra.mxu0 %v376
    %894 = vmatprep.subr.mxu0 %v379
    %895 = vmatpush1.msra.mxu0 %v378
    %896 = vmatprep.subr.mxu0 %v381
    %897 = vmatpush1.msra.mxu0 %v380
    %898 = vmatprep.subr.mxu0 %v383
    %899 = vmatpush1.msra.mxu0 %v382
    %900 = vmatprep.subr.mxu0 %v385
    %901 = vmatpush1.msra.mxu0 %v384
    %902 = vmatprep.subr.mxu0 %v387
    %903 = vmatpush1.msra.mxu0 %v386
    %904 = vmatprep.subr.mxu0 %v389
    %905 = vmatpush1.msra.mxu0 %v388
    %906 = vmatprep.subr.mxu0 %v391
    %907 = vmatpush1.msra.mxu0 %v390
    %908 = vmatprep.subr.mxu0 %v393
    %909 = vmatpush1.msra.mxu0 %v392
    %910 = vmatprep.subr.mxu0 %v395
    %911 = vmatpush1.msra.mxu0 %v394
    %912 = vmatprep.subr.mxu0 %v397
    %913 = vmatpush1.msra.mxu0 %v396
    %914 = vmatprep.subr.mxu0 %v399
    %915 = vmatpush1.msra.mxu0 %v398
    %916 = vmatprep.subr.mxu0 %v401
    %917 = vmatpush1.msra.mxu0 %v400
    %918 = vmatprep.subr.mxu0 %v403
    %919 = vmatpush1.msra.mxu0 %v402
    %920 = vmatprep.subr.mxu0 %v405
    %921 = vmatpush1.msra.mxu0 %v404
    %922 = vmatprep.subr.mxu0 %v407
    %923 = vmatpush1.msra.mxu0 %v406
    %924 = vmatprep.subr.mxu0 %v409
    %925 = vmatpush1.msra.mxu0 %v408
    %926 = vmatprep.subr.mxu0 %v411
    %927 = vmatpush1.msra.mxu0 %v410
    %928 = vmatprep.subr.mxu0 %v413
    %929 = vmatpush1.msra.mxu0 %v412
    %930 = vmatprep.subr.mxu0 %v415
    %931 = vmatpush1.msra.mxu0 %v414
    %932 = vmatprep.subr.mxu0 %v417
    %933 = vmatpush1.msra.mxu0 %v416
    %934 = vmatprep.mubr.f32.mxu0 %v492
    %935 = vmatmul.mubr.f32.gmra.mrb[0].mxu0 %v490
    %v936 = vpop.f32.mrb[0].mxu0
    %v937 = vadd.f32 %v866, %v936
    %v938 = vpop.f32.mrb[0].mxu0
    %v939 = vadd.f32 %v868, %v938
    %940 = vdwg.mxu0
    %941 = vmatprep.subr.mxu0 %v419
    %942 = vmatpush1.msra.mxu0 %v418
    %943 = vmatprep.subr.mxu0 %v421
    %944 = vmatpush1.msra.mxu0 %v420
    %945 = vmatprep.subr.mxu0 %v423
    %946 = vmatpush1.msra.mxu0 %v422
    %947 = vmatprep.subr.mxu0 %v425
    %948 = vmatpush1.msra.mxu0 %v424
    %949 = vmatprep.subr.mxu0 0.0
    %950 = vmatpush1.msra.mxu0 0.0
    %951 = vmatprep.subr.mxu0 0.0
    %952 = vmatpush1.msra.mxu0 0.0
    %953 = vmatprep.subr.mxu0 0.0
    %954 = vmatpush1.msra.mxu0 0.0
    %955 = vmatprep.subr.mxu0 0.0
    %956 = vmatpush1.msra.mxu0 0.0
    %957 = vmatprep.subr.mxu0 0.0
    %958 = vmatpush1.msra.mxu0 0.0
    %959 = vmatprep.subr.mxu0 0.0
    %960 = vmatpush1.msra.mxu0 0.0
    %961 = vmatprep.subr.mxu0 0.0
    %962 = vmatpush1.msra.mxu0 0.0
    %963 = vmatprep.subr.mxu0 0.0
    %964 = vmatpush1.msra.mxu0 0.0
    %965 = vmatprep.subr.mxu0 0.0
    %966 = vmatpush1.msra.mxu0 0.0
    %967 = vmatprep.subr.mxu0 0.0
    %968 = vmatpush1.msra.mxu0 0.0
    %969 = vmatprep.subr.mxu0 0.0
    %970 = vmatpush1.msra.mxu0 0.0
    %971 = vmatprep.subr.mxu0 0.0
    %972 = vmatpush1.msra.mxu0 0.0
    %973 = vmatprep.subr.mxu0 0.0
    %974 = vmatpush1.msra.mxu0 0.0
    %975 = vmatprep.subr.mxu0 0.0
    %976 = vmatpush1.msra.mxu0 0.0
    %977 = vmatprep.subr.mxu0 0.0
    %978 = vmatpush1.msra.mxu0 0.0
    %979 = vmatprep.subr.mxu0 0.0
    %980 = vmatpush1.msra.mxu0 0.0
    %981 = vmatprep.subr.mxu0 0.0
    %982 = vmatpush1.msra.mxu0 0.0
    %983 = vmatprep.subr.mxu0 0.0
    %984 = vmatpush1.msra.mxu0 0.0
    %985 = vmatprep.subr.mxu0 0.0
    %986 = vmatpush1.msra.mxu0 0.0
    %987 = vmatprep.subr.mxu0 0.0
    %988 = vmatpush1.msra.mxu0 0.0
    %989 = vmatprep.subr.mxu0 0.0
    %990 = vmatpush1.msra.mxu0 0.0
    %991 = vmatprep.subr.mxu0 0.0
    %992 = vmatpush1.msra.mxu0 0.0
    %993 = vmatprep.subr.mxu0 0.0
    %994 = vmatpush1.msra.mxu0 0.0
    %995 = vmatprep.subr.mxu0 0.0
    %996 = vmatpush1.msra.mxu0 0.0
    %997 = vmatprep.subr.mxu0 0.0
    %998 = vmatpush1.msra.mxu0 0.0
    %999 = vmatprep.subr.mxu0 0.0
    %1000 = vmatpush1.msra.mxu0 0.0
    %1001 = vmatprep.subr.mxu0 0.0
    %1002 = vmatpush1.msra.mxu0 0.0
    %1003 = vmatprep.subr.mxu0 0.0
    %1004 = vmatpush1.msra.mxu0 0.0
    %1005 = vmatprep.mubr.f32.mxu0 0.0
    %1006 = vmatmul.mubr.f32.gmra.mrb[0].mxu0 %v513
    %v1007 = vpop.f32.mrb[0].mxu0
    %v1008 = vadd.f32 %v937, %v1007
    %v1009 = vpop.f32.mrb[0].mxu0
    %v1010 = vadd.f32 %v939, %v1009
    %1011 = vdwg.mxu0
    %v1014 = vcombine.low %v1008, %v1010
    %v1016 = vunpack.c.l.s4 1983009808
    %v1017 = vunpack.c.0.s8 %v1016
    %v1018 = vlaneseq
    %v1019 = vshrl.u32 %v1018, 7
    %v1020 = vsub.s32 %v1017, %v1019
    %v1021 = vrot.slane %v1014, %v1020
    %1023 = vst [vmem:[#allocation4] sm:$0xf] %v1021
    %v1024 = vld [vmem:[%s3] sm:$0xff]
    %v1025 = vld [vmem:[%s3 + $0x8] sm:$0xff]
    %v1026 = vld [vmem:[%s3 + $0x10] sm:$0xff]
    %v1027 = vld [vmem:[%s3 + $0x18] sm:$0xff]
    %v1028 = vld [vmem:[%s3 + $0x20] sm:$0xff]
    %v1029 = vld [vmem:[%s3 + $0x28] sm:$0xff]
    %v1030 = vld [vmem:[%s3 + $0x30] sm:$0xff]
    %v1031 = vld [vmem:[%s3 + $0x38] sm:$0xff]
    %v1032 = vld [vmem:[%s3 + $0x40] sm:$0xff]
    %v1033 = vld [vmem:[%s3 + $0x48] sm:$0xff]
    %v1034 = vld [vmem:[%s3 + $0x50] sm:$0xff]
    %v1035 = vld [vmem:[%s3 + $0x58] sm:$0xff]
    %v1036 = vld [vmem:[%s3 + $0x60] sm:$0xff]
    %v1037 = vld [vmem:[%s3 + $0x68] sm:$0xff]
    %v1038 = vld [vmem:[%s3 + $0x70] sm:$0xff]
    %v1039 = vld [vmem:[%s3 + $0x78] sm:$0xff]
    %v1040 = vld [vmem:[%s3 + $0x80] sm:$0xff]
    %v1041 = vld [vmem:[%s3 + $0x88] sm:$0xff]
    %v1042 = vld [vmem:[%s3 + $0x90] sm:$0xff]
    %v1043 = vld [vmem:[%s3 + $0x98] sm:$0xff]
    %v1044 = vld [vmem:[%s3 + $0xa0] sm:$0xff]
    %v1045 = vld [vmem:[%s3 + $0xa8] sm:$0xff]
    %v1046 = vld [vmem:[%s3 + $0xb0] sm:$0xff]
    %v1047 = vld [vmem:[%s3 + $0xb8] sm:$0xff]
    %v1048 = vld [vmem:[%s3 + $0xc0] sm:$0xff]
    %v1049 = vld [vmem:[%s3 + $0xc8] sm:$0xff]
    %v1050 = vld [vmem:[%s3 + $0xd0] sm:$0xff]
    %v1051 = vld [vmem:[%s3 + $0xd8] sm:$0xff]
    %v1052 = vld [vmem:[%s3 + $0xe0] sm:$0xff]
    %v1053 = vld [vmem:[%s3 + $0xe8] sm:$0xff]
    %v1054 = vld [vmem:[%s3 + $0xf0] sm:$0xff]
    %v1055 = vld [vmem:[%s3 + $0xf8] sm:$0xff]
    %v1056 = vld [vmem:[%s4] sm:$0x1]
    %v1058 = vlaneseq
    %v1059 = vshrl.u32 %v1058, 7
    %v1060 = vsub.s32 0, %v1059
    %v1061 = vrot.slane %v1056, %v1060
    %1063 = vmatprep.subr.mxu0 0.0
    %1064 = vmatpush1.msra.mxu0 %v1024
    %1065 = vmatprep.subr.mxu0 0.0
    %1066 = vmatpush1.msra.mxu0 %v1025
    %1067 = vmatprep.subr.mxu0 0.0
    %1068 = vmatpush1.msra.mxu0 %v1026
    %1069 = vmatprep.subr.mxu0 0.0
    %1070 = vmatpush1.msra.mxu0 %v1027
    %1071 = vmatprep.subr.mxu0 0.0
    %1072 = vmatpush1.msra.mxu0 %v1028
    %1073 = vmatprep.subr.mxu0 0.0
    %1074 = vmatpush1.msra.mxu0 %v1029
    %1075 = vmatprep.subr.mxu0 0.0
    %1076 = vmatpush1.msra.mxu0 %v1030
    %1077 = vmatprep.subr.mxu0 0.0
    %1078 = vmatpush1.msra.mxu0 %v1031
    %1079 = vmatprep.subr.mxu0 0.0
    %1080 = vmatpush1.msra.mxu0 %v1032
    %1081 = vmatprep.subr.mxu0 0.0
    %1082 = vmatpush1.msra.mxu0 %v1033
    %1083 = vmatprep.subr.mxu0 0.0
    %1084 = vmatpush1.msra.mxu0 %v1034
    %1085 = vmatprep.subr.mxu0 0.0
    %1086 = vmatpush1.msra.mxu0 %v1035
    %1087 = vmatprep.subr.mxu0 0.0
    %1088 = vmatpush1.msra.mxu0 %v1036
    %1089 = vmatprep.subr.mxu0 0.0
    %1090 = vmatpush1.msra.mxu0 %v1037
    %1091 = vmatprep.subr.mxu0 0.0
    %1092 = vmatpush1.msra.mxu0 %v1038
    %1093 = vmatprep.subr.mxu0 0.0
    %1094 = vmatpush1.msra.mxu0 %v1039
    %1095 = vmatprep.subr.mxu0 0.0
    %1096 = vmatpush1.msra.mxu0 %v1040
    %1097 = vmatprep.subr.mxu0 0.0
    %1098 = vmatpush1.msra.mxu0 %v1041
    %1099 = vmatprep.subr.mxu0 0.0
    %1100 = vmatpush1.msra.mxu0 %v1042
    %1101 = vmatprep.subr.mxu0 0.0
    %1102 = vmatpush1.msra.mxu0 %v1043
    %1103 = vmatprep.subr.mxu0 0.0
    %1104 = vmatpush1.msra.mxu0 %v1044
    %1105 = vmatprep.subr.mxu0 0.0
    %1106 = vmatpush1.msra.mxu0 %v1045
    %1107 = vmatprep.subr.mxu0 0.0
    %1108 = vmatpush1.msra.mxu0 %v1046
    %1109 = vmatprep.subr.mxu0 0.0
    %1110 = vmatpush1.msra.mxu0 %v1047
    %1111 = vmatprep.subr.mxu0 0.0
    %1112 = vmatpush1.msra.mxu0 %v1048
    %1113 = vmatprep.subr.mxu0 0.0
    %1114 = vmatpush1.msra.mxu0 %v1049
    %1115 = vmatprep.subr.mxu0 0.0
    %1116 = vmatpush1.msra.mxu0 %v1050
    %1117 = vmatprep.subr.mxu0 0.0
    %1118 = vmatpush1.msra.mxu0 %v1051
    %1119 = vmatprep.subr.mxu0 0.0
    %1120 = vmatpush1.msra.mxu0 %v1052
    %1121 = vmatprep.subr.mxu0 0.0
    %1122 = vmatpush1.msra.mxu0 %v1053
    %1123 = vmatprep.subr.mxu0 0.0
    %1124 = vmatpush1.msra.mxu0 %v1054
    %1125 = vmatprep.subr.mxu0 0.0
    %1126 = vmatpush1.msra.mxu0 %v1055
    %1127 = vmatprep.mubr.f32.mxu0 %v1010
    %1128 = vmatmul.mubr.f32.gmra.mrb[0].mxu0 %v1008
    %v1129 = vpop.f32.mrb[0].mxu0
    %v1130 = vadd.f32 %v1061, %v1129
    %v1131 = vpop.f32.mrb[0].mxu0
    %1132 = vdwg.mxu0
    %v1133 = vld [vmem:[%s5] sm:$0xff]
    %v1134 = vld [vmem:[%s5 + $0x8] sm:$0xff]
    %v1135 = vld [vmem:[%s5 + $0x10] sm:$0xff]
    %v1136 = vld [vmem:[%s5 + $0x18] sm:$0xff]
    %v1137 = vld [vmem:[%s5 + $0x20] sm:$0xff]
    %v1138 = vld [vmem:[%s5 + $0x28] sm:$0xff]
    %v1139 = vld [vmem:[%s5 + $0x30] sm:$0xff]
    %v1140 = vld [vmem:[%s5 + $0x38] sm:$0xff]
    %v1141 = vld [vmem:[%s5 + $0x40] sm:$0xff]
    %v1142 = vld [vmem:[%s5 + $0x48] sm:$0xff]
    %v1143 = vld [vmem:[%s5 + $0x50] sm:$0xff]
    %v1144 = vld [vmem:[%s5 + $0x58] sm:$0xff]
    %v1145 = vld [vmem:[%s5 + $0x60] sm:$0xff]
    %v1146 = vld [vmem:[%s5 + $0x68] sm:$0xff]
    %v1147 = vld [vmem:[%s5 + $0x70] sm:$0xff]
    %v1148 = vld [vmem:[%s5 + $0x78] sm:$0xff]
    %v1149 = vld [vmem:[%s6] sm:$0x1]
    %v1151 = vlaneseq
    %v1152 = vshrl.u32 %v1151, 7
    %v1153 = vsub.s32 0, %v1152
    %v1154 = vrot.slane %v1149, %v1153
    %1156 = vmatprep.subr.mxu0 0.0
    %1157 = vmatpush1.msra.mxu0 %v1133
    %1158 = vmatprep.subr.mxu0 0.0
    %1159 = vmatpush1.msra.mxu0 %v1134
    %1160 = vmatprep.subr.mxu0 0.0
    %1161 = vmatpush1.msra.mxu0 %v1135
    %1162 = vmatprep.subr.mxu0 0.0
    %1163 = vmatpush1.msra.mxu0 %v1136
    %1164 = vmatprep.subr.mxu0 0.0
    %1165 = vmatpush1.msra.mxu0 %v1137
    %1166 = vmatprep.subr.mxu0 0.0
    %1167 = vmatpush1.msra.mxu0 %v1138
    %1168 = vmatprep.subr.mxu0 0.0
    %1169 = vmatpush1.msra.mxu0 %v1139
    %1170 = vmatprep.subr.mxu0 0.0
    %1171 = vmatpush1.msra.mxu0 %v1140
    %1172 = vmatprep.subr.mxu0 0.0
    %1173 = vmatpush1.msra.mxu0 %v1141
    %1174 = vmatprep.subr.mxu0 0.0
    %1175 = vmatpush1.msra.mxu0 %v1142
    %1176 = vmatprep.subr.mxu0 0.0
    %1177 = vmatpush1.msra.mxu0 %v1143
    %1178 = vmatprep.subr.mxu0 0.0
    %1179 = vmatpush1.msra.mxu0 %v1144
    %1180 = vmatprep.subr.mxu0 0.0
    %1181 = vmatpush1.msra.mxu0 %v1145
    %1182 = vmatprep.subr.mxu0 0.0
    %1183 = vmatpush1.msra.mxu0 %v1146
    %1184 = vmatprep.subr.mxu0 0.0
    %1185 = vmatpush1.msra.mxu0 %v1147
    %1186 = vmatprep.subr.mxu0 0.0
    %1187 = vmatpush1.msra.mxu0 %v1148
    %1188 = vmatprep.subr.mxu0 0.0
    %1189 = vmatpush1.msra.mxu0 0.0
    %1190 = vmatprep.subr.mxu0 0.0
    %1191 = vmatpush1.msra.mxu0 0.0
    %1192 = vmatprep.subr.mxu0 0.0
    %1193 = vmatpush1.msra.mxu0 0.0
    %1194 = vmatprep.subr.mxu0 0.0
    %1195 = vmatpush1.msra.mxu0 0.0
    %1196 = vmatprep.subr.mxu0 0.0
    %1197 = vmatpush1.msra.mxu0 0.0
    %1198 = vmatprep.subr.mxu0 0.0
    %1199 = vmatpush1.msra.mxu0 0.0
    %1200 = vmatprep.subr.mxu0 0.0
    %1201 = vmatpush1.msra.mxu0 0.0
    %1202 = vmatprep.subr.mxu0 0.0
    %1203 = vmatpush1.msra.mxu0 0.0
    %1204 = vmatprep.subr.mxu0 0.0
    %1205 = vmatpush1.msra.mxu0 0.0
    %1206 = vmatprep.subr.mxu0 0.0
    %1207 = vmatpush1.msra.mxu0 0.0
    %1208 = vmatprep.subr.mxu0 0.0
    %1209 = vmatpush1.msra.mxu0 0.0
    %1210 = vmatprep.subr.mxu0 0.0
    %1211 = vmatpush1.msra.mxu0 0.0
    %1212 = vmatprep.subr.mxu0 0.0
    %1213 = vmatpush1.msra.mxu0 0.0
    %1214 = vmatprep.subr.mxu0 0.0
    %1215 = vmatpush1.msra.mxu0 0.0
    %1216 = vmatprep.subr.mxu0 0.0
    %1217 = vmatpush1.msra.mxu0 0.0
    %1218 = vmatprep.subr.mxu0 0.0
    %1219 = vmatpush1.msra.mxu0 0.0
    %1220 = vmatprep.mubr.f32.mxu0 0.0
    %1221 = vmatmul.mubr.f32.gmra.mrb[0].mxu0 %v1130
    %v1222 = vpop.f32.mrb[0].mxu0
    %v1223 = vadd.f32 %v1154, %v1222
    %v1224 = vpop.f32.mrb[0].mxu0
    %1225 = vdwg.mxu0
    %1226 = vst [vmem:[#allocation2] sm:$0x3] %v1223
    // Predicated region
    $region30: #{cnn_forward.5} parent=1 // pred_check
      _
    $region31: #{cnn_forward.5} parent=1 // pred_check_branch
      %1228 = sbr.rel (0) target = $region33
    $region32: #{cnn_forward.5} parent=1 // pred_region
      %s1230 = ssub.s32 32, 32
      %1231 = vsyncadd [#allocation3], %s1230
      %s1233 = sshll.u32 [#allocation2], 4
      %s1234 = int_to_ptr.vmem [resolvable:$true] %s1233
      %1236 = dma.vmem_to_hbm [thread:$0]  %s1234, 32, %s7, [#allocation3]
    $region33: #{cnn_forward.5} parent=1 // pred_fallthru
      _
    // Predicated region
    $region34: #{cnn_forward.5} parent=1 // pred_check
      _
    $region35: #{cnn_forward.5} parent=1 // pred_check_branch
      %1238 = sbr.rel (0) target = $region37
    $region36: #{cnn_forward.5} parent=1 // pred_region
      %s1240 = ssub.s32 64, 64
      %1241 = vsyncadd [#allocation5], %s1240
      %s1243 = sshll.u32 [#allocation4], 4
      %s1244 = int_to_ptr.vmem [resolvable:$true] %s1243
      %1246 = dma.vmem_to_hbm [thread:$0]  %s1244, 64, %s8, [#allocation5]
    $region37: #{cnn_forward.5} parent=1 // pred_fallthru
      _
    // Predicated region
    $region38: #{cnn_forward.5} parent=1 // pred_check
      _
    $region39: #{cnn_forward.5} parent=1 // pred_check_branch
      %1248 = sbr.rel (0) target = $region41
    $region40: #{cnn_forward.5} parent=1 // pred_region
      %1249 = dma.done [#allocation3], 32
    $region41: #{cnn_forward.5} parent=1 // pred_fallthru
      _
    // Predicated region
    $region42: #{cnn_forward.5} parent=1 // pred_check
      _
    $region43: #{cnn_forward.5} parent=1 // pred_check_branch
      %1251 = sbr.rel (0) target = $region45
    $region44: #{cnn_forward.5} parent=1 // pred_region
      %1252 = dma.done [#allocation5], 64
    $region45: #{cnn_forward.5} parent=1 // pred_fallthru
      _
    %1253 = vsyncpa [#allocation3], 1
    %1254 = vsyncpa [#allocation5], 1

// kernel: cnn_forward.4
$region0: #{cnn_forward.4}
  #allocation0 [shape = 'u32[]', space=smem, size = 0x4, offset = 0x4, fixed_abs, tag = 'smem constant byte address 0x4 - core index']
  #allocation1 [shape = 'u32[144,128]{1,0:T(1,128)}', space=vmem, size = 0x12000, scoped, tag = 'internal scratch']
  %s0 = inlined_call_operand.vmem [shape: f32[2,9,288], index: 0, kind: input, shape index: {}]
  %s1 = inlined_call_operand.vmem [shape: f32[2,9,288], index: 1, kind: input, shape index: {}]
  %s2 = inlined_call_operand.hbm [shape: f32[2,5,288,224], index: 2, kind: input, shape index: {}]
  %s3 = inlined_call_operand.hbm [shape: f32[1,224], index: 3, kind: input, shape index: {}]
  %s4 = inlined_call_operand.vmem [shape: f32[2,7,224], index: 4, kind: output, shape index: {}]
  %s5 = sld [smem:[#allocation0]]
  $region57: #{cnn_forward.4} parent=0
    _
  %s7 = ssub.s32 1, %s5
  %s8 = scalar_select 0, %s7, %s5
  $region1: #{cnn_forward.4} parent=0
    #allocation2 [shape = 'u8[2949120]{0}', space=vmem, size = 0x2d0000, scoped, tag = 'input window, operand 2, single buffered']
    #allocation3 [shape = 's32[2]{0}', space=sflag, size = 0x8, scoped, tag = 'scoped memory for cnn_forward.4']
    #allocation4 [shape = 'u8[1024]{0}', space=vmem, size = 0x400, scoped, tag = 'input window, operand 3, single buffered']
    #allocation5 [shape = 's32[1]{0}', space=sflag, size = 0x4, scoped, tag = 'scoped memory for cnn_forward.4']
    %9 = vsyncpa [#allocation3], 0
    %10 = vsyncpa [#allocation5], 0
    loop: start=0, step=1, limit=4
    $region2: #{cnn_forward.4} parent=1 // loop_pre_header
      _
    $region3: #{cnn_forward.4} parent=1 // loop_header
      %s12 = sphi 0, %s16
      %p13 = scmp.ge.s32.totalorder %s12, 4
      %s22 = sphi 0, %s24
      %s25 = sphi 0, %s22
      %s26 = sphi 0, %s25
      %s42 = sphi 0, %s26
      %s48 = sphi 0, %s50
      %s51 = sphi 0, %s48
      %s52 = sphi 0, %s51
      %s68 = sphi 0, %s52
      %s72 = sphi 0, %s72
      %s74 = sphi 0, %s72
      %s75 = sphi 0, %s74
      %s89 = sphi 0, %s75
      %s93 = sphi 0, %s93
      %s95 = sphi 0, %s93
      %s96 = sphi 0, %s95
      %s110 = sphi 0, %s96
      %s116 = sphi 0, %s118
      %s119 = sphi 0, %s116
      %s120 = sphi 0, %s119
      %s136 = sphi 0, %s120
    $region4: #{cnn_forward.4} parent=1 // loop_header_branch
      %15 = sbr.rel (%p13) target = $region8
    $region5: #{cnn_forward.4} parent=1 // loop_body
      %s17 = ssub.s32 %s12, 1
      %s18 = ssub.s32 %s12, 2
      %s19 = sadd.s32 %s12, 1
      %s20 = ssub.s32 %s12, %s19
      %p21 = scmp.eq.s32.totalorder %s20, 0
      %s23 = sadd.s32 %s22, 1
      %s24 = scalar_select %p21, %s22, %s23
      %p27 = pneg %p21
      %p28 = scmp.eq.s32.totalorder %s12, 1
      %p29 = por %p27, %p28
      %p30 = scmp.ne.s32.totalorder %s22, %s25
      %p31 = scmp.eq.s32.totalorder %s12, 0
      %p32 = por %p30, %p31
      %p33 = scmp.ne.s32.totalorder %s22, %s25
      %p34 = scmp.eq.s32.totalorder %s17, 1
      %p35 = por %p33, %p34
      %p36 = scmp.ne.s32.totalorder %s25, %s26
      %p37 = scmp.eq.s32.totalorder %s17, 0
      %p38 = por %p36, %p37
      %p39 = scmp.ne.s32.totalorder %s25, %s26
      %p40 = scmp.eq.s32.totalorder %s18, 1
      %p41 = por %p39, %p40
      %p43 = scmp.ne.s32.totalorder %s26, %s42
      %p44 = scmp.eq.s32.totalorder %s18, 0
      %p45 = por %p43, %p44
      %s46 = ssub.s32 %s12, %s19
      %p47 = scmp.eq.s32.totalorder %s46, 0
      %s49 = sadd.s32 %s48, 1
      %s50 = scalar_select %p47, %s48, %s49
      %p53 = pneg %p47
      %p54 = scmp.eq.s32.totalorder %s12, 1
      %p55 = por %p53, %p54
      %p56 = scmp.ne.s32.totalorder %s48, %s51
      %p57 = scmp.eq.s32.totalorder %s12, 0
      %p58 = por %p56, %p57
      %p59 = scmp.ne.s32.totalorder %s48, %s51
      %p60 = scmp.eq.s32.totalorder %s17, 1
      %p61 = por %p59, %p60
      %p62 = scmp.ne.s32.totalorder %s51, %s52
      %p63 = scmp.eq.s32.totalorder %s17, 0
      %p64 = por %p62, %p63
      %p65 = scmp.ne.s32.totalorder %s51, %s52
      %p66 = scmp.eq.s32.totalorder %s18, 1
      %p67 = por %p65, %p66
      %p69 = scmp.ne.s32.totalorder %s52, %s68
      %p70 = scmp.eq.s32.totalorder %s18, 0
      %p71 = por %p69, %p70
      %s73 = sadd.s32 %s72, 1
      %p76 = scmp.eq.s32.totalorder %s12, 1
      %p77 = scmp.ne.s32.totalorder %s72, %s74
      %p78 = scmp.eq.s32.totalorder %s12, 0
      %p79 = por %p77, %p78
      %p80 = scmp.ne.s32.totalorder %s72, %s74
      %p81 = scmp.eq.s32.totalorder %s17, 1
      %p82 = por %p80, %p81
      %p83 = scmp.ne.s32.totalorder %s74, %s75
      %p84 = scmp.eq.s32.totalorder %s17, 0
      %p85 = por %p83, %p84
      %p86 = scmp.ne.s32.totalorder %s74, %s75
      %p87 = scmp.eq.s32.totalorder %s18, 1
      %p88 = por %p86, %p87
      %p90 = scmp.ne.s32.totalorder %s75, %s89
      %p91 = scmp.eq.s32.totalorder %s18, 0
      %p92 = por %p90, %p91
      %s94 = sadd.s32 %s93, 1
      %p97 = scmp.eq.s32.totalorder %s12, 1
      %p98 = scmp.ne.s32.totalorder %s93, %s95
      %p99 = scmp.eq.s32.totalorder %s12, 0
      %p100 = por %p98, %p99
      %p101 = scmp.ne.s32.totalorder %s93, %s95
      %p102 = scmp.eq.s32.totalorder %s17, 1
      %p103 = por %p101, %p102
      %p104 = scmp.ne.s32.totalorder %s95, %s96
      %p105 = scmp.eq.s32.totalorder %s17, 0
      %p106 = por %p104, %p105
      %p107 = scmp.ne.s32.totalorder %s95, %s96
      %p108 = scmp.eq.s32.totalorder %s18, 1
      %p109 = por %p107, %p108
      %p111 = scmp.ne.s32.totalorder %s96, %s110
      %p112 = scmp.eq.s32.totalorder %s18, 0
      %p113 = por %p111, %p112
      %s114 = ssub.s32 %s12, %s19
      %p115 = scmp.eq.s32.totalorder %s114, 0
      %s117 = sadd.s32 %s116, 1
      %s118 = scalar_select %p115, %s116, %s117
      %p121 = pneg %p115
      %p122 = scmp.eq.s32.totalorder %s12, 1
      %p123 = por %p121, %p122
      %p124 = scmp.ne.s32.totalorder %s116, %s119
      %p125 = scmp.eq.s32.totalorder %s12, 0
      %p126 = por %p124, %p125
      %p127 = scmp.ne.s32.totalorder %s116, %s119
      %p128 = scmp.eq.s32.totalorder %s17, 1
      %p129 = por %p127, %p128
      %p130 = scmp.ne.s32.totalorder %s119, %s120
      %p131 = scmp.eq.s32.totalorder %s17, 0
      %p132 = por %p130, %p131
      %p133 = scmp.ne.s32.totalorder %s119, %s120
      %p134 = scmp.eq.s32.totalorder %s18, 1
      %p135 = por %p133, %p134
      %p137 = scmp.ne.s32.totalorder %s120, %s136
      %p138 = scmp.eq.s32.totalorder %s18, 0
      %p139 = por %p137, %p138
      %p140 = scmp.le.s32.totalorder 1, %s12
      %p141 = scmp.lt.s32.totalorder %s12, 3
      %p142 = pnand %p140, %p141
      %p143 = pneg %p142
      // Predicated region
      $region9: #{cnn_forward.4} parent=5 // pred_check
        _
      $region10: #{cnn_forward.4} parent=5 // pred_check_branch
        %145 = sbr.rel (%p142) target = $region12
      $region11: #{cnn_forward.4} parent=5 // pred_region
        %s146 = ssub.s32 %s12, 1
        // Predicated region
        $region13: #{cnn_forward.4} parent=11 // pred_check
          %p147 = pneg %p85
        $region14: #{cnn_forward.4} parent=11 // pred_check_branch
          %149 = sbr.rel (%p147) target = $region16
        $region15: #{cnn_forward.4} parent=11 // pred_region
          %s151 = ssub.s32 92160, 92160
          %152 = vsyncadd [#allocation3], %s151
          %s153 = sshll.u32 [#allocation2], 4
          %s154 = int_to_ptr.vmem [resolvable:$true] %s153
          %159 = dma.hbm_to_vmem [thread:$0]  %s2, 92160, %s154, [#allocation3], 256, 256, 16
        $region16: #{cnn_forward.4} parent=11 // pred_fallthru
          _
        // Predicated region
        $region17: #{cnn_forward.4} parent=11 // pred_check
          %p160 = pneg %p106
        $region18: #{cnn_forward.4} parent=11 // pred_check_branch
          %162 = sbr.rel (%p160) target = $region20
        $region19: #{cnn_forward.4} parent=11 // pred_region
          %s164 = ssub.s32 32, 32
          %165 = vsyncadd [#allocation5], %s164
          %s167 = sshll.u32 [#allocation4], 4
          %s168 = int_to_ptr.vmem [resolvable:$true] %s167
          %170 = dma.hbm_to_vmem [thread:$0]  %s3, 32, %s168, [#allocation5]
        $region20: #{cnn_forward.4} parent=11 // pred_fallthru
          _
      $region12: #{cnn_forward.4} parent=5 // pred_fallthru
        _
      %p171 = scmp.lt.s32.totalorder %s12, 2
      // Predicated region
      $region21: #{cnn_forward.4} parent=5 // pred_check
        %p172 = pneg %p171
      $region22: #{cnn_forward.4} parent=5 // pred_check_branch
        %174 = sbr.rel (%p172) target = $region24
      $region23: #{cnn_forward.4} parent=5 // pred_region
        // Predicated region
        $region25: #{cnn_forward.4} parent=23 // pred_check
          %p175 = pneg %p32
        $region26: #{cnn_forward.4} parent=23 // pred_check_branch
          %177 = sbr.rel (%p175) target = $region28
        $region27: #{cnn_forward.4} parent=23 // pred_region
          %p178 = scmp.lt.s32.totalorder %s12, 1
          %s179 = scalar_select %p178, %s12, 1
          %s180 = smul.addr %s179, 6
          %s181 = smul.addr %s180, 8
          %s182 = scalar_lea.vmem %s0, %s181
        $region28: #{cnn_forward.4} parent=23 // pred_fallthru
          _
        // Predicated region
        $region29: #{cnn_forward.4} parent=23 // pred_check
          %p183 = pneg %p58
        $region30: #{cnn_forward.4} parent=23 // pred_check_branch
          %185 = sbr.rel (%p183) target = $region32
        $region31: #{cnn_forward.4} parent=23 // pred_region
          %p186 = scmp.lt.s32.totalorder %s12, 1
          %s187 = scalar_select %p186, %s12, 1
          %s188 = smul.addr %s187, 6
          %s189 = smul.addr %s188, 8
          %s190 = scalar_lea.vmem %s1, %s189
        $region32: #{cnn_forward.4} parent=23 // pred_fallthru
          _
      $region24: #{cnn_forward.4} parent=5 // pred_fallthru
        _
      %p191 = scmp.le.s32.totalorder 1, %s12
      %p192 = scmp.lt.s32.totalorder %s12, 3
      %p193 = pnand %p191, %p192
      %p194 = pneg %p193
      // Predicated region
      $region33: #{cnn_forward.4} parent=5 // pred_check
        _
      $region34: #{cnn_forward.4} parent=5 // pred_check_branch
        %196 = sbr.rel (%p193) target = $region36
      $region35: #{cnn_forward.4} parent=5 // pred_region
        %s197 = ssub.s32 %s12, 1
        // Predicated region
        $region37: #{cnn_forward.4} parent=35 // pred_check
          %p198 = pneg %p85
        $region38: #{cnn_forward.4} parent=35 // pred_check_branch
          %200 = sbr.rel (%p198) target = $region40
        $region39: #{cnn_forward.4} parent=35 // pred_region
          %201 = dma.done [#allocation3], 92160
        $region40: #{cnn_forward.4} parent=35 // pred_fallthru
          _
        // Predicated region
        $region41: #{cnn_forward.4} parent=35 // pred_check
          %p202 = pneg %p106
        $region42: #{cnn_forward.4} parent=35 // pred_check_branch
          %204 = sbr.rel (%p202) target = $region44
        $region43: #{cnn_forward.4} parent=35 // pred_region
          %205 = dma.done [#allocation5], 32
        $region44: #{cnn_forward.4} parent=35 // pred_fallthru
          _
        %p206 = scmp.lt.s32.totalorder %s17, 1
        %s207 = scalar_select %p206, %s17, 1
        %s208 = smul.addr %s207, 6
        %s209 = smul.addr %s208, 8
        %s210 = scalar_lea.vmem %s0, %s209
        %p211 = pneg %p38
        %p212 = pneg %p35
        %p213 = scmp.lt.s32.totalorder %s17, 1
        %s214 = scalar_select %p213, %s17, 1
        %s215 = smul.addr %s214, 6
        %s216 = smul.addr %s215, 8
        %s217 = scalar_lea.vmem %s1, %s216
        %p218 = pneg %p64
        %p219 = pneg %p61
        %p220 = pneg %p85
        %p221 = pneg %p82
        %p222 = pneg %p106
        %p223 = pneg %p103
        %p224 = pneg %p132
        %p225 = pneg %p129
        %p226 = scmp.lt.s32.totalorder %s17, 1
        %s227 = scalar_select %p226, %s17, 1
        %s228 = smul.addr %s227, 2
        %s229 = smul.addr %s228, 8
        %s230 = scalar_lea.vmem %s4, %s229
        %p231 = scmp.lt.s32.totalorder %s17, 1
        %s232 = scalar_select %p231, %s17, 1
        %s233 = smul.addr %s232, 6
        %s234 = smul.addr %s233, 8
        %s235 = scalar_lea.vmem %s0, %s234
        %p236 = scmp.lt.s32.totalorder %s17, 1
        %s237 = scalar_select %p236, %s17, 1
        %s238 = smul.addr %s237, 6
        %s239 = smul.addr %s238, 8
        %s240 = scalar_lea.vmem %s1, %s239
        %p241 = scmp.lt.s32.totalorder %s17, 1
        %s242 = scalar_select %p241, %s17, 1
        %s243 = smul.addr %s242, 2
        %s244 = smul.addr %s243, 8
        %s245 = scalar_lea.vmem %s4, %s244
        %v246 = vld [vmem:[%s235] sm:$0x7f]
        %v247 = vld [vmem:[%s235 + $0x8] sm:$0x7f]
        %v248 = vld [vmem:[%s235 + $0x10] sm:$0x7f]
        %v249 = vld [vmem:[%s240] sm:$0x7f]
        %v250 = vld [vmem:[%s240 + $0x8] sm:$0x7f]
        %v251 = vld [vmem:[%s240 + $0x10] sm:$0x7f]
        %v252 = vld [vmem:[#allocation2] sm:$0xff]
        %v253 = vld [vmem:[#allocation2 + $0x8] sm:$0xff]
        %v254 = vld [vmem:[#allocation2 + $0x10] sm:$0xff]
        %v255 = vld [vmem:[#allocation2 + $0x18] sm:$0xff]
        %v256 = vld [vmem:[#allocation2 + $0x20] sm:$0xff]
        %v257 = vld [vmem:[#allocation2 + $0x28] sm:$0xff]
        %v258 = vld [vmem:[#allocation2 + $0x30] sm:$0xff]
        %v259 = vld [vmem:[#allocation2 + $0x38] sm:$0xff]
        %v260 = vld [vmem:[#allocation2 + $0x40] sm:$0xff]
        %v261 = vld [vmem:[#allocation2 + $0x48] sm:$0xff]
        %v262 = vld [vmem:[#allocation2 + $0x50] sm:$0xff]
        %v263 = vld [vmem:[#allocation2 + $0x58] sm:$0xff]
        %v264 = vld [vmem:[#allocation2 + $0x60] sm:$0xff]
        %v265 = vld [vmem:[#allocation2 + $0x68] sm:$0xff]
        %v266 = vld [vmem:[#allocation2 + $0x70] sm:$0xff]
        %v267 = vld [vmem:[#allocation2 + $0x78] sm:$0xff]
        %v268 = vld [vmem:[#allocation2 + $0x80] sm:$0xff]
        %v269 = vld [vmem:[#allocation2 + $0x88] sm:$0xff]
        %v270 = vld [vmem:[#allocation2 + $0x90] sm:$0xff]
        %v271 = vld [vmem:[#allocation2 + $0x98] sm:$0xff]
        %v272 = vld [vmem:[#allocation2 + $0xa0] sm:$0xff]
        %v273 = vld [vmem:[#allocation2 + $0xa8] sm:$0xff]
        %v274 = vld [vmem:[#allocation2 + $0xb0] sm:$0xff]
        %v275 = vld [vmem:[#allocation2 + $0xb8] sm:$0xff]
        %v276 = vld [vmem:[#allocation2 + $0xc0] sm:$0xff]
        %v277 = vld [vmem:[#allocation2 + $0xc8] sm:$0xff]
        %v278 = vld [vmem:[#allocation2 + $0xd0] sm:$0xff]
        %v279 = vld [vmem:[#allocation2 + $0xd8] sm:$0xff]
        %v280 = vld [vmem:[#allocation2 + $0xe0] sm:$0xff]
        %v281 = vld [vmem:[#allocation2 + $0xe8] sm:$0xff]
        %v282 = vld [vmem:[#allocation2 + $0xf0] sm:$0xff]
        %v283 = vld [vmem:[#allocation2 + $0xf8] sm:$0xff]
        %v284 = vld [vmem:[#allocation2 + $0x100] sm:$0xff]
        %v285 = vld [vmem:[#allocation2 + $0x108] sm:$0xff]
        %v286 = vld [vmem:[#allocation2 + $0x110] sm:$0xff]
        %v287 = vld [vmem:[#allocation2 + $0x118] sm:$0xff]
        %v288 = vld [vmem:[#allocation2 + $0x120] sm:$0xff]
        %v289 = vld [vmem:[#allocation2 + $0x128] sm:$0xff]
        %v290 = vld [vmem:[#allocation2 + $0x130] sm:$0xff]
        %v291 = vld [vmem:[#allocation2 + $0x138] sm:$0xff]
        %v292 = vld [vmem:[#allocation2 + $0x140] sm:$0xff]
        %v293 = vld [vmem:[#allocation2 + $0x148] sm:$0xff]
        %v294 = vld [vmem:[#allocation2 + $0x150] sm:$0xff]
        %v295 = vld [vmem:[#allocation2 + $0x158] sm:$0xff]
        %v296 = vld [vmem:[#allocation2 + $0x160] sm:$0xff]
        %v297 = vld [vmem:[#allocation2 + $0x168] sm:$0xff]
        %v298 = vld [vmem:[#allocation2 + $0x170] sm:$0xff]
        %v299 = vld [vmem:[#allocation2 + $0x178] sm:$0xff]
        %v300 = vld [vmem:[#allocation2 + $0x180] sm:$0xff]
        %v301 = vld [vmem:[#allocation2 + $0x188] sm:$0xff]
        %v302 = vld [vmem:[#allocation2 + $0x190] sm:$0xff]
        %v303 = vld [vmem:[#allocation2 + $0x198] sm:$0xff]
        %v304 = vld [vmem:[#allocation2 + $0x1a0] sm:$0xff]
        %v305 = vld [vmem:[#allocation2 + $0x1a8] sm:$0xff]
        %v306 = vld [vmem:[#allocation2 + $0x1b0] sm:$0xff]
        %v307 = vld [vmem:[#allocation2 + $0x1b8] sm:$0xff]
        %v308 = vld [vmem:[#allocation2 + $0x1c0] sm:$0xff]
        %v309 = vld [vmem:[#allocation2 + $0x1c8] sm:$0xff]
        %v310 = vld [vmem:[#allocation2 + $0x1d0] sm:$0xff]
        %v311 = vld [vmem:[#allocation2 + $0x1d8] sm:$0xff]
        %v312 = vld [vmem:[#allocation2 + $0x1e0] sm:$0xff]
        %v313 = vld [vmem:[#allocation2 + $0x1e8] sm:$0xff]
        %v314 = vld [vmem:[#allocation2 + $0x1f0] sm:$0xff]
        %v315 = vld [vmem:[#allocation2 + $0x1f8] sm:$0xff]
        %v316 = vld [vmem:[#allocation2 + $0x200] sm:$0xff]
        %v317 = vld [vmem:[#allocation2 + $0x208] sm:$0xff]
        %v318 = vld [vmem:[#allocation2 + $0x210] sm:$0xff]
        %v319 = vld [vmem:[#allocation2 + $0x218] sm:$0xff]
        %v320 = vld [vmem:[#allocation2 + $0x220] sm:$0xff]
        %v321 = vld [vmem:[#allocation2 + $0x228] sm:$0xff]
        %v322 = vld [vmem:[#allocation2 + $0x230] sm:$0xff]
        %v323 = vld [vmem:[#allocation2 + $0x238] sm:$0xff]
        %s324 = scalar_lea.vmem [#allocation2], 2880
        %v325 = vld [vmem:[%s324] sm:$0xff]
        %v326 = vld [vmem:[%s324 + $0x8] sm:$0xff]
        %v327 = vld [vmem:[%s324 + $0x10] sm:$0xff]
        %v328 = vld [vmem:[%s324 + $0x18] sm:$0xff]
        %v329 = vld [vmem:[%s324 + $0x20] sm:$0xff]
        %v330 = vld [vmem:[%s324 + $0x28] sm:$0xff]
        %v331 = vld [vmem:[%s324 + $0x30] sm:$0xff]
        %v332 = vld [vmem:[%s324 + $0x38] sm:$0xff]
        %v333 = vld [vmem:[%s324 + $0x40] sm:$0xff]
        %v334 = vld [vmem:[%s324 + $0x48] sm:$0xff]
        %v335 = vld [vmem:[%s324 + $0x50] sm:$0xff]
        %v336 = vld [vmem:[%s324 + $0x58] sm:$0xff]
        %v337 = vld [vmem:[%s324 + $0x60] sm:$0xff]
        %v338 = vld [vmem:[%s324 + $0x68] sm:$0xff]
        %v339 = vld [vmem:[%s324 + $0x70] sm:$0xff]
        %v340 = vld [vmem:[%s324 + $0x78] sm:$0xff]
        %v341 = vld [vmem:[%s324 + $0x80] sm:$0xff]
        %v342 = vld [vmem:[%s324 + $0x88] sm:$0xff]
        %v343 = vld [vmem:[%s324 + $0x90] sm:$0xff]
        %v344 = vld [vmem:[%s324 + $0x98] sm:$0xff]
        %v345 = vld [vmem:[%s324 + $0xa0] sm:$0xff]
        %v346 = vld [vmem:[%s324 + $0xa8] sm:$0xff]
        %v347 = vld [vmem:[%s324 + $0xb0] sm:$0xff]
        %v348 = vld [vmem:[%s324 + $0xb8] sm:$0xff]
        %v349 = vld [vmem:[%s324 + $0xc0] sm:$0xff]
        %v350 = vld [vmem:[%s324 + $0xc8] sm:$0xff]
        %v351 = vld [vmem:[%s324 + $0xd0] sm:$0xff]
        %v352 = vld [vmem:[%s324 + $0xd8] sm:$0xff]
        %v353 = vld [vmem:[%s324 + $0xe0] sm:$0xff]
        %v354 = vld [vmem:[%s324 + $0xe8] sm:$0xff]
        %v355 = vld [vmem:[%s324 + $0xf0] sm:$0xff]
        %v356 = vld [vmem:[%s324 + $0xf8] sm:$0xff]
        %v357 = vld [vmem:[%s324 + $0x100] sm:$0xff]
        %v358 = vld [vmem:[%s324 + $0x108] sm:$0xff]
        %v359 = vld [vmem:[%s324 + $0x110] sm:$0xff]
        %v360 = vld [vmem:[%s324 + $0x118] sm:$0xff]
        %v361 = vld [vmem:[%s324 + $0x120] sm:$0xff]
        %v362 = vld [vmem:[%s324 + $0x128] sm:$0xff]
        %v363 = vld [vmem:[%s324 + $0x130] sm:$0xff]
        %v364 = vld [vmem:[%s324 + $0x138] sm:$0xff]
        %v365 = vld [vmem:[%s324 + $0x140] sm:$0xff]
        %v366 = vld [vmem:[%s324 + $0x148] sm:$0xff]
        %v367 = vld [vmem:[%s324 + $0x150] sm:$0xff]
        %v368 = vld [vmem:[%s324 + $0x158] sm:$0xff]
        %v369 = vld [vmem:[%s324 + $0x160] sm:$0xff]
        %v370 = vld [vmem:[%s324 + $0x168] sm:$0xff]
        %v371 = vld [vmem:[%s324 + $0x170] sm:$0xff]
        %v372 = vld [vmem:[%s324 + $0x178] sm:$0xff]
        %v373 = vld [vmem:[%s324 + $0x180] sm:$0xff]
        %v374 = vld [vmem:[%s324 + $0x188] sm:$0xff]
        %v375 = vld [vmem:[%s324 + $0x190] sm:$0xff]
        %v376 = vld [vmem:[%s324 + $0x198] sm:$0xff]
        %v377 = vld [vmem:[%s324 + $0x1a0] sm:$0xff]
        %v378 = vld [vmem:[%s324 + $0x1a8] sm:$0xff]
        %v379 = vld [vmem:[%s324 + $0x1b0] sm:$0xff]
        %v380 = vld [vmem:[%s324 + $0x1b8] sm:$0xff]
        %v381 = vld [vmem:[%s324 + $0x1c0] sm:$0xff]
        %v382 = vld [vmem:[%s324 + $0x1c8] sm:$0xff]
        %v383 = vld [vmem:[%s324 + $0x1d0] sm:$0xff]
        %v384 = vld [vmem:[%s324 + $0x1d8] sm:$0xff]
        %v385 = vld [vmem:[%s324 + $0x1e0] sm:$0xff]
        %v386 = vld [vmem:[%s324 + $0x1e8] sm:$0xff]
        %v387 = vld [vmem:[%s324 + $0x1f0] sm:$0xff]
        %v388 = vld [vmem:[%s324 + $0x1f8] sm:$0xff]
        %v389 = vld [vmem:[%s324 + $0x200] sm:$0xff]
        %v390 = vld [vmem:[%s324 + $0x208] sm:$0xff]
        %v391 = vld [vmem:[%s324 + $0x210] sm:$0xff]
        %v392 = vld [vmem:[%s324 + $0x218] sm:$0xff]
        %v393 = vld [vmem:[%s324 + $0x220] sm:$0xff]
        %v394 = vld [vmem:[%s324 + $0x228] sm:$0xff]
        %v395 = vld [vmem:[%s324 + $0x230] sm:$0xff]
        %v396 = vld [vmem:[%s324 + $0x238] sm:$0xff]
        %v397 = vld [vmem:[%s235] sm:$0xfe]
        %v398 = vld [vmem:[%s235 + $0x8] sm:$0xfe]
        %v399 = vld [vmem:[%s235 + $0x10] sm:$0xfe]
        %s400 = scalar_lea.vmem [#allocation2], 576
        %v401 = vld [vmem:[%s400] sm:$0xff]
        %v402 = vld [vmem:[%s400 + $0x8] sm:$0xff]
        %v403 = vld [vmem:[%s400 + $0x10] sm:$0xff]
        %v404 = vld [vmem:[%s400 + $0x18] sm:$0xff]
        %v405 = vld [vmem:[%s400 + $0x20] sm:$0xff]
        %v406 = vld [vmem:[%s400 + $0x28] sm:$0xff]
        %v407 = vld [vmem:[%s400 + $0x30] sm:$0xff]
        %v408 = vld [vmem:[%s400 + $0x38] sm:$0xff]
        %v409 = vld [vmem:[%s400 + $0x40] sm:$0xff]
        %v410 = vld [vmem:[%s400 + $0x48] sm:$0xff]
        %v411 = vld [vmem:[%s400 + $0x50] sm:$0xff]
        %v412 = vld [vmem:[%s400 + $0x58] sm:$0xff]
        %v413 = vld [vmem:[%s400 + $0x60] sm:$0xff]
        %v414 = vld [vmem:[%s400 + $0x68] sm:$0xff]
        %v415 = vld [vmem:[%s400 + $0x70] sm:$0xff]
        %v416 = vld [vmem:[%s400 + $0x78] sm:$0xff]
        %v417 = vld [vmem:[%s400 + $0x80] sm:$0xff]
        %v418 = vld [vmem:[%s400 + $0x88] sm:$0xff]
        %v419 = vld [vmem:[%s400 + $0x90] sm:$0xff]
        %v420 = vld [vmem:[%s400 + $0x98] sm:$0xff]
        %v421 = vld [vmem:[%s400 + $0xa0] sm:$0xff]
        %v422 = vld [vmem:[%s400 + $0xa8] sm:$0xff]
        %v423 = vld [vmem:[%s400 + $0xb0] sm:$0xff]
        %v424 = vld [vmem:[%s400 + $0xb8] sm:$0xff]
        %v425 = vld [vmem:[%s400 + $0xc0] sm:$0xff]
        %v426 = vld [vmem:[%s400 + $0xc8] sm:$0xff]
        %v427 = vld [vmem:[%s400 + $0xd0] sm:$0xff]
        %v428 = vld [vmem:[%s400 + $0xd8] sm:$0xff]
        %v429 = vld [vmem:[%s400 + $0xe0] sm:$0xff]
        %v430 = vld [vmem:[%s400 + $0xe8] sm:$0xff]
        %v431 = vld [vmem:[%s400 + $0xf0] sm:$0xff]
        %v432 = vld [vmem:[%s400 + $0xf8] sm:$0xff]
        %v433 = vld [vmem:[%s400 + $0x100] sm:$0xff]
        %v434 = vld [vmem:[%s400 + $0x108] sm:$0xff]
        %v435 = vld [vmem:[%s400 + $0x110] sm:$0xff]
        %v436 = vld [vmem:[%s400 + $0x118] sm:$0xff]
        %v437 = vld [vmem:[%s400 + $0x120] sm:$0xff]
        %v438 = vld [vmem:[%s400 + $0x128] sm:$0xff]
        %v439 = vld [vmem:[%s400 + $0x130] sm:$0xff]
        %v440 = vld [vmem:[%s400 + $0x138] sm:$0xff]
        %v441 = vld [vmem:[%s400 + $0x140] sm:$0xff]
        %v442 = vld [vmem:[%s400 + $0x148] sm:$0xff]
        %v443 = vld [vmem:[%s400 + $0x150] sm:$0xff]
        %v444 = vld [vmem:[%s400 + $0x158] sm:$0xff]
        %v445 = vld [vmem:[%s400 + $0x160] sm:$0xff]
        %v446 = vld [vmem:[%s400 + $0x168] sm:$0xff]
        %v447 = vld [vmem:[%s400 + $0x170] sm:$0xff]
        %v448 = vld [vmem:[%s400 + $0x178] sm:$0xff]
        %v449 = vld [vmem:[%s400 + $0x180] sm:$0xff]
        %v450 = vld [vmem:[%s400 + $0x188] sm:$0xff]
        %v451 = vld [vmem:[%s400 + $0x190] sm:$0xff]
        %v452 = vld [vmem:[%s400 + $0x198] sm:$0xff]
        %v453 = vld [vmem:[%s400 + $0x1a0] sm:$0xff]
        %v454 = vld [vmem:[%s400 + $0x1a8] sm:$0xff]
        %v455 = vld [vmem:[%s400 + $0x1b0] sm:$0xff]
        %v456 = vld [vmem:[%s400 + $0x1b8] sm:$0xff]
        %v457 = vld [vmem:[%s400 + $0x1c0] sm:$0xff]
        %v458 = vld [vmem:[%s400 + $0x1c8] sm:$0xff]
        %v459 = vld [vmem:[%s400 + $0x1d0] sm:$0xff]
        %v460 = vld [vmem:[%s400 + $0x1d8] sm:$0xff]
        %v461 = vld [vmem:[%s400 + $0x1e0] sm:$0xff]
        %v462 = vld [vmem:[%s400 + $0x1e8] sm:$0xff]
        %v463 = vld [vmem:[%s400 + $0x1f0] sm:$0xff]
        %v464 = vld [vmem:[%s400 + $0x1f8] sm:$0xff]
        %v465 = vld [vmem:[%s400 + $0x200] sm:$0xff]
        %v466 = vld [vmem:[%s400 + $0x208] sm:$0xff]
        %v467 = vld [vmem:[%s400 + $0x210] sm:$0xff]
        %v468 = vld [vmem:[%s400 + $0x218] sm:$0xff]
        %v469 = vld [vmem:[%s400 + $0x220] sm:$0xff]
        %v470 = vld [vmem:[%s400 + $0x228] sm:$0xff]
        %v471 = vld [vmem:[%s400 + $0x230] sm:$0xff]
        %v472 = vld [vmem:[%s400 + $0x238] sm:$0xff]
        %s473 = scalar_lea.vmem [#allocation2], 3456
        %v474 = vld [vmem:[%s473] sm:$0xff]
        %v475 = vld [vmem:[%s473 + $0x8] sm:$0xff]
        %v476 = vld [vmem:[%s473 + $0x10] sm:$0xff]
        %v477 = vld [vmem:[%s473 + $0x18] sm:$0xff]
        %v478 = vld [vmem:[%s473 + $0x20] sm:$0xff]
        %v479 = vld [vmem:[%s473 + $0x28] sm:$0xff]
        %v480 = vld [vmem:[%s473 + $0x30] sm:$0xff]
        %v481 = vld [vmem:[%s473 + $0x38] sm:$0xff]
        %v482 = vld [vmem:[%s473 + $0x40] sm:$0xff]
        %v483 = vld [vmem:[%s473 + $0x48] sm:$0xff]
        %v484 = vld [vmem:[%s473 + $0x50] sm:$0xff]
        %v485 = vld [vmem:[%s473 + $0x58] sm:$0xff]
        %v486 = vld [vmem:[%s473 + $0x60] sm:$0xff]
        %v487 = vld [vmem:[%s473 + $0x68] sm:$0xff]
        %v488 = vld [vmem:[%s473 + $0x70] sm:$0xff]
        %v489 = vld [vmem:[%s473 + $0x78] sm:$0xff]
        %v490 = vld [vmem:[%s473 + $0x80] sm:$0xff]
        %v491 = vld [vmem:[%s473 + $0x88] sm:$0xff]
        %v492 = vld [vmem:[%s473 + $0x90] sm:$0xff]
        %v493 = vld [vmem:[%s473 + $0x98] sm:$0xff]
        %v494 = vld [vmem:[%s473 + $0xa0] sm:$0xff]
        %v495 = vld [vmem:[%s473 + $0xa8] sm:$0xff]
        %v496 = vld [vmem:[%s473 + $0xb0] sm:$0xff]
        %v497 = vld [vmem:[%s473 + $0xb8] sm:$0xff]
        %v498 = vld [vmem:[%s473 + $0xc0] sm:$0xff]
        %v499 = vld [vmem:[%s473 + $0xc8] sm:$0xff]
        %v500 = vld [vmem:[%s473 + $0xd0] sm:$0xff]
        %v501 = vld [vmem:[%s473 + $0xd8] sm:$0xff]
        %v502 = vld [vmem:[%s473 + $0xe0] sm:$0xff]
        %v503 = vld [vmem:[%s473 + $0xe8] sm:$0xff]
        %v504 = vld [vmem:[%s473 + $0xf0] sm:$0xff]
        %v505 = vld [vmem:[%s473 + $0xf8] sm:$0xff]
        %v506 = vld [vmem:[%s473 + $0x100] sm:$0xff]
        %v507 = vld [vmem:[%s473 + $0x108] sm:$0xff]
        %v508 = vld [vmem:[%s473 + $0x110] sm:$0xff]
        %v509 = vld [vmem:[%s473 + $0x118] sm:$0xff]
        %v510 = vld [vmem:[%s473 + $0x120] sm:$0xff]
        %v511 = vld [vmem:[%s473 + $0x128] sm:$0xff]
        %v512 = vld [vmem:[%s473 + $0x130] sm:$0xff]
        %v513 = vld [vmem:[%s473 + $0x138] sm:$0xff]
        %v514 = vld [vmem:[%s473 + $0x140] sm:$0xff]
        %v515 = vld [vmem:[%s473 + $0x148] sm:$0xff]
        %v516 = vld [vmem:[%s473 + $0x150] sm:$0xff]
        %v517 = vld [vmem:[%s473 + $0x158] sm:$0xff]
        %v518 = vld [vmem:[%s473 + $0x160] sm:$0xff]
        %v519 = vld [vmem:[%s473 + $0x168] sm:$0xff]
        %v520 = vld [vmem:[%s473 + $0x170] sm:$0xff]
        %v521 = vld [vmem:[%s473 + $0x178] sm:$0xff]
        %v522 = vld [vmem:[%s473 + $0x180] sm:$0xff]
        %v523 = vld [vmem:[%s473 + $0x188] sm:$0xff]
        %v524 = vld [vmem:[%s473 + $0x190] sm:$0xff]
        %v525 = vld [vmem:[%s473 + $0x198] sm:$0xff]
        %v526 = vld [vmem:[%s473 + $0x1a0] sm:$0xff]
        %v527 = vld [vmem:[%s473 + $0x1a8] sm:$0xff]
        %v528 = vld [vmem:[%s473 + $0x1b0] sm:$0xff]
        %v529 = vld [vmem:[%s473 + $0x1b8] sm:$0xff]
        %v530 = vld [vmem:[%s473 + $0x1c0] sm:$0xff]
        %v531 = vld [vmem:[%s473 + $0x1c8] sm:$0xff]
        %v532 = vld [vmem:[%s473 + $0x1d0] sm:$0xff]
        %v533 = vld [vmem:[%s473 + $0x1d8] sm:$0xff]
        %v534 = vld [vmem:[%s473 + $0x1e0] sm:$0xff]
        %v535 = vld [vmem:[%s473 + $0x1e8] sm:$0xff]
        %v536 = vld [vmem:[%s473 + $0x1f0] sm:$0xff]
        %v537 = vld [vmem:[%s473 + $0x1f8] sm:$0xff]
        %v538 = vld [vmem:[%s473 + $0x200] sm:$0xff]
        %v539 = vld [vmem:[%s473 + $0x208] sm:$0xff]
        %v540 = vld [vmem:[%s473 + $0x210] sm:$0xff]
        %v541 = vld [vmem:[%s473 + $0x218] sm:$0xff]
        %v542 = vld [vmem:[%s473 + $0x220] sm:$0xff]
        %v543 = vld [vmem:[%s473 + $0x228] sm:$0xff]
        %v544 = vld [vmem:[%s473 + $0x230] sm:$0xff]
        %v545 = vld [vmem:[%s473 + $0x238] sm:$0xff]
        %vm546 = vcmask 261120
        %v548 = vsel %vm546, %v251, 0
        %550 = vmatprep.subr.mxu0 %v402
        %551 = vmatpush1.msra.mxu0 %v401
        %552 = vmatprep.subr.mxu0 %v404
        %553 = vmatpush1.msra.mxu0 %v403
        %554 = vmatprep.subr.mxu0 %v406
        %555 = vmatpush1.msra.mxu0 %v405
        %556 = vmatprep.subr.mxu0 %v408
        %557 = vmatpush1.msra.mxu0 %v407
        %558 = vmatprep.subr.mxu0 %v410
        %559 = vmatpush1.msra.mxu0 %v409
        %560 = vmatprep.subr.mxu0 %v412
        %561 = vmatpush1.msra.mxu0 %v411
        %562 = vmatprep.subr.mxu0 %v414
        %563 = vmatpush1.msra.mxu0 %v413
        %564 = vmatprep.subr.mxu0 %v416
        %565 = vmatpush1.msra.mxu0 %v415
        %566 = vmatprep.subr.mxu0 %v418
        %567 = vmatpush1.msra.mxu0 %v417
        %568 = vmatprep.subr.mxu0 %v420
        %569 = vmatpush1.msra.mxu0 %v419
        %570 = vmatprep.subr.mxu0 %v422
        %571 = vmatpush1.msra.mxu0 %v421
        %572 = vmatprep.subr.mxu0 %v424
        %573 = vmatpush1.msra.mxu0 %v423
        %574 = vmatprep.subr.mxu0 %v426
        %575 = vmatpush1.msra.mxu0 %v425
        %576 = vmatprep.subr.mxu0 %v428
        %577 = vmatpush1.msra.mxu0 %v427
        %578 = vmatprep.subr.mxu0 %v430
        %579 = vmatpush1.msra.mxu0 %v429
        %580 = vmatprep.subr.mxu0 %v432
        %581 = vmatpush1.msra.mxu0 %v431
        %582 = vmatprep.subr.mxu0 %v434
        %583 = vmatpush1.msra.mxu0 %v433
        %584 = vmatprep.subr.mxu0 %v436
        %585 = vmatpush1.msra.mxu0 %v435
        %586 = vmatprep.subr.mxu0 %v438
        %587 = vmatpush1.msra.mxu0 %v437
        %588 = vmatprep.subr.mxu0 %v440
        %589 = vmatpush1.msra.mxu0 %v439
        %590 = vmatprep.subr.mxu0 %v442
        %591 = vmatpush1.msra.mxu0 %v441
        %592 = vmatprep.subr.mxu0 %v444
        %593 = vmatpush1.msra.mxu0 %v443
        %594 = vmatprep.subr.mxu0 %v446
        %595 = vmatpush1.msra.mxu0 %v445
        %596 = vmatprep.subr.mxu0 %v448
        %597 = vmatpush1.msra.mxu0 %v447
        %598 = vmatprep.subr.mxu0 %v450
        %599 = vmatpush1.msra.mxu0 %v449
        %600 = vmatprep.subr.mxu0 %v452
        %601 = vmatpush1.msra.mxu0 %v451
        %602 = vmatprep.subr.mxu0 %v454
        %603 = vmatpush1.msra.mxu0 %v453
        %604 = vmatprep.subr.mxu0 %v456
        %605 = vmatpush1.msra.mxu0 %v455
        %606 = vmatprep.subr.mxu0 %v458
        %607 = vmatpush1.msra.mxu0 %v457
        %608 = vmatprep.subr.mxu0 %v460
        %609 = vmatpush1.msra.mxu0 %v459
        %610 = vmatprep.subr.mxu0 %v462
        %611 = vmatpush1.msra.mxu0 %v461
        %612 = vmatprep.subr.mxu0 %v464
        %613 = vmatpush1.msra.mxu0 %v463
        %614 = vmatprep.mubr.f32.mxu0 %v250
        %615 = vmatmul.mubr.f32.gmra.mrb[0].mxu0 %v249
        %v616 = vpop.f32.mrb[0].mxu0
        %v617 = vadd.f32 0.0, %v616
        %v618 = vpop.f32.mrb[0].mxu0
        %v619 = vadd.f32 0.0, %v618
        %620 = vdwg.mxu0
        %621 = vmatprep.subr.mxu0 %v466
        %622 = vmatpush1.msra.mxu0 %v465
        %623 = vmatprep.subr.mxu0 %v468
        %624 = vmatpush1.msra.mxu0 %v467
        %625 = vmatprep.subr.mxu0 %v470
        %626 = vmatpush1.msra.mxu0 %v469
        %627 = vmatprep.subr.mxu0 %v472
        %628 = vmatpush1.msra.mxu0 %v471
        %629 = vmatprep.subr.mxu0 0.0
        %630 = vmatpush1.msra.mxu0 0.0
        %631 = vmatprep.subr.mxu0 0.0
        %632 = vmatpush1.msra.mxu0 0.0
        %633 = vmatprep.subr.mxu0 0.0
        %634 = vmatpush1.msra.mxu0 0.0
        %635 = vmatprep.subr.mxu0 0.0
        %636 = vmatpush1.msra.mxu0 0.0
        %637 = vmatprep.subr.mxu0 0.0
        %638 = vmatpush1.msra.mxu0 0.0
        %639 = vmatprep.subr.mxu0 0.0
        %640 = vmatpush1.msra.mxu0 0.0
        %641 = vmatprep.subr.mxu0 0.0
        %642 = vmatpush1.msra.mxu0 0.0
        %643 = vmatprep.subr.mxu0 0.0
        %644 = vmatpush1.msra.mxu0 0.0
        %645 = vmatprep.subr.mxu0 0.0
        %646 = vmatpush1.msra.mxu0 0.0
        %647 = vmatprep.subr.mxu0 0.0
        %648 = vmatpush1.msra.mxu0 0.0
        %649 = vmatprep.subr.mxu0 0.0
        %650 = vmatpush1.msra.mxu0 0.0
        %651 = vmatprep.subr.mxu0 0.0
        %652 = vmatpush1.msra.mxu0 0.0
        %653 = vmatprep.subr.mxu0 0.0
        %654 = vmatpush1.msra.mxu0 0.0
        %655 = vmatprep.subr.mxu0 0.0
        %656 = vmatpush1.msra.mxu0 0.0
        %657 = vmatprep.subr.mxu0 0.0
        %658 = vmatpush1.msra.mxu0 0.0
        %659 = vmatprep.subr.mxu0 0.0
        %660 = vmatpush1.msra.mxu0 0.0
        %661 = vmatprep.subr.mxu0 0.0
        %662 = vmatpush1.msra.mxu0 0.0
        %663 = vmatprep.subr.mxu0 0.0
        %664 = vmatpush1.msra.mxu0 0.0
        %665 = vmatprep.subr.mxu0 0.0
        %666 = vmatpush1.msra.mxu0 0.0
        %667 = vmatprep.subr.mxu0 0.0
        %668 = vmatpush1.msra.mxu0 0.0
        %669 = vmatprep.subr.mxu0 0.0
        %670 = vmatpush1.msra.mxu0 0.0
        %671 = vmatprep.subr.mxu0 0.0
        %672 = vmatpush1.msra.mxu0 0.0
        %673 = vmatprep.subr.mxu0 0.0
        %674 = vmatpush1.msra.mxu0 0.0
        %675 = vmatprep.subr.mxu0 0.0
        %676 = vmatpush1.msra.mxu0 0.0
        %677 = vmatprep.subr.mxu0 0.0
        %678 = vmatpush1.msra.mxu0 0.0
        %679 = vmatprep.subr.mxu0 0.0
        %680 = vmatpush1.msra.mxu0 0.0
        %681 = vmatprep.subr.mxu0 0.0
        %682 = vmatpush1.msra.mxu0 0.0
        %683 = vmatprep.subr.mxu0 0.0
        %684 = vmatpush1.msra.mxu0 0.0
        %685 = vmatprep.mubr.f32.mxu0 0.0
        %686 = vmatmul.mubr.f32.gmra.mrb[0].mxu0 %v548
        %v687 = vpop.f32.mrb[0].mxu0
        %v688 = vadd.f32 %v617, %v687
        %v689 = vpop.f32.mrb[0].mxu0
        %v690 = vadd.f32 %v619, %v689
        %691 = vdwg.mxu0
        %v693 = vsel %vm546, %v248, 0
        %695 = vmatprep.subr.mxu0 %v253
        %696 = vmatpush1.msra.mxu0 %v252
        %697 = vmatprep.subr.mxu0 %v255
        %698 = vmatpush1.msra.mxu0 %v254
        %699 = vmatprep.subr.mxu0 %v257
        %700 = vmatpush1.msra.mxu0 %v256
        %701 = vmatprep.subr.mxu0 %v259
        %702 = vmatpush1.msra.mxu0 %v258
        %703 = vmatprep.subr.mxu0 %v261
        %704 = vmatpush1.msra.mxu0 %v260
        %705 = vmatprep.subr.mxu0 %v263
        %706 = vmatpush1.msra.mxu0 %v262
        %707 = vmatprep.subr.mxu0 %v265
        %708 = vmatpush1.msra.mxu0 %v264
        %709 = vmatprep.subr.mxu0 %v267
        %710 = vmatpush1.msra.mxu0 %v266
        %711 = vmatprep.subr.mxu0 %v269
        %712 = vmatpush1.msra.mxu0 %v268
        %713 = vmatprep.subr.mxu0 %v271
        %714 = vmatpush1.msra.mxu0 %v270
        %715 = vmatprep.subr.mxu0 %v273
        %716 = vmatpush1.msra.mxu0 %v272
        %717 = vmatprep.subr.mxu0 %v275
        %718 = vmatpush1.msra.mxu0 %v274
        %719 = vmatprep.subr.mxu0 %v277
        %720 = vmatpush1.msra.mxu0 %v276
        %721 = vmatprep.subr.mxu0 %v279
        %722 = vmatpush1.msra.mxu0 %v278
        %723 = vmatprep.subr.mxu0 %v281
        %724 = vmatpush1.msra.mxu0 %v280
        %725 = vmatprep.subr.mxu0 %v283
        %726 = vmatpush1.msra.mxu0 %v282
        %727 = vmatprep.subr.mxu0 %v285
        %728 = vmatpush1.msra.mxu0 %v284
        %729 = vmatprep.subr.mxu0 %v287
        %730 = vmatpush1.msra.mxu0 %v286
        %731 = vmatprep.subr.mxu0 %v289
        %732 = vmatpush1.msra.mxu0 %v288
        %733 = vmatprep.subr.mxu0 %v291
        %734 = vmatpush1.msra.mxu0 %v290
        %735 = vmatprep.subr.mxu0 %v293
        %736 = vmatpush1.msra.mxu0 %v292
        %737 = vmatprep.subr.mxu0 %v295
        %738 = vmatpush1.msra.mxu0 %v294
        %739 = vmatprep.subr.mxu0 %v297
        %740 = vmatpush1.msra.mxu0 %v296
        %741 = vmatprep.subr.mxu0 %v299
        %742 = vmatpush1.msra.mxu0 %v298
        %743 = vmatprep.subr.mxu0 %v301
        %744 = vmatpush1.msra.mxu0 %v300
        %745 = vmatprep.subr.mxu0 %v303
        %746 = vmatpush1.msra.mxu0 %v302
        %747 = vmatprep.subr.mxu0 %v305
        %748 = vmatpush1.msra.mxu0 %v304
        %749 = vmatprep.subr.mxu0 %v307
        %750 = vmatpush1.msra.mxu0 %v306
        %751 = vmatprep.subr.mxu0 %v309
        %752 = vmatpush1.msra.mxu0 %v308
        %753 = vmatprep.subr.mxu0 %v311
        %754 = vmatpush1.msra.mxu0 %v310
        %755 = vmatprep.subr.mxu0 %v313
        %756 = vmatpush1.msra.mxu0 %v312
        %757 = vmatprep.subr.mxu0 %v315
        %758 = vmatpush1.msra.mxu0 %v314
        %759 = vmatprep.mubr.f32.mxu0 %v247
        %760 = vmatmul.mubr.f32.gmra.mrb[0].mxu0 %v246
        %v761 = vpop.f32.mrb[0].mxu0
        %v762 = vadd.f32 %v688, %v761
        %v763 = vpop.f32.mrb[0].mxu0
        %v764 = vadd.f32 %v690, %v763
        %765 = vdwg.mxu0
        %766 = vmatprep.subr.mxu0 %v317
        %767 = vmatpush1.msra.mxu0 %v316
        %768 = vmatprep.subr.mxu0 %v319
        %769 = vmatpush1.msra.mxu0 %v318
        %770 = vmatprep.subr.mxu0 %v321
        %771 = vmatpush1.msra.mxu0 %v320
        %772 = vmatprep.subr.mxu0 %v323
        %773 = vmatpush1.msra.mxu0 %v322
        %774 = vmatprep.subr.mxu0 0.0
        %775 = vmatpush1.msra.mxu0 0.0
        %776 = vmatprep.subr.mxu0 0.0
        %777 = vmatpush1.msra.mxu0 0.0
        %778 = vmatprep.subr.mxu0 0.0
        %779 = vmatpush1.msra.mxu0 0.0
        %780 = vmatprep.subr.mxu0 0.0
        %781 = vmatpush1.msra.mxu0 0.0
        %782 = vmatprep.subr.mxu0 0.0
        %783 = vmatpush1.msra.mxu0 0.0
        %784 = vmatprep.subr.mxu0 0.0
        %785 = vmatpush1.msra.mxu0 0.0
        %786 = vmatprep.subr.mxu0 0.0
        %787 = vmatpush1.msra.mxu0 0.0
        %788 = vmatprep.subr.mxu0 0.0
        %789 = vmatpush1.msra.mxu0 0.0
        %790 = vmatprep.subr.mxu0 0.0
        %791 = vmatpush1.msra.mxu0 0.0
        %792 = vmatprep.subr.mxu0 0.0
        %793 = vmatpush1.msra.mxu0 0.0
        %794 = vmatprep.subr.mxu0 0.0
        %795 = vmatpush1.msra.mxu0 0.0
        %796 = vmatprep.subr.mxu0 0.0
        %797 = vmatpush1.msra.mxu0 0.0
        %798 = vmatprep.subr.mxu0 0.0
        %799 = vmatpush1.msra.mxu0 0.0
        %800 = vmatprep.subr.mxu0 0.0
        %801 = vmatpush1.msra.mxu0 0.0
        %802 = vmatprep.subr.mxu0 0.0
        %803 = vmatpush1.msra.mxu0 0.0
        %804 = vmatprep.subr.mxu0 0.0
        %805 = vmatpush1.msra.mxu0 0.0
        %806 = vmatprep.subr.mxu0 0.0
        %807 = vmatpush1.msra.mxu0 0.0
        %808 = vmatprep.subr.mxu0 0.0
        %809 = vmatpush1.msra.mxu0 0.0
        %810 = vmatprep.subr.mxu0 0.0
        %811 = vmatpush1.msra.mxu0 0.0
        %812 = vmatprep.subr.mxu0 0.0
        %813 = vmatpush1.msra.mxu0 0.0
        %814 = vmatprep.subr.mxu0 0.0
        %815 = vmatpush1.msra.mxu0 0.0
        %816 = vmatprep.subr.mxu0 0.0
        %817 = vmatpush1.msra.mxu0 0.0
        %818 = vmatprep.subr.mxu0 0.0
        %819 = vmatpush1.msra.mxu0 0.0
        %820 = vmatprep.subr.mxu0 0.0
        %821 = vmatpush1.msra.mxu0 0.0
        %822 = vmatprep.subr.mxu0 0.0
        %823 = vmatpush1.msra.mxu0 0.0
        %824 = vmatprep.subr.mxu0 0.0
        %825 = vmatpush1.msra.mxu0 0.0
        %826 = vmatprep.subr.mxu0 0.0
        %827 = vmatpush1.msra.mxu0 0.0
        %828 = vmatprep.subr.mxu0 0.0
        %829 = vmatpush1.msra.mxu0 0.0
        %830 = vmatprep.mubr.f32.mxu0 0.0
        %831 = vmatmul.mubr.f32.gmra.mrb[0].mxu0 %v693
        %v832 = vpop.f32.mrb[0].mxu0
        %v833 = vadd.f32 %v762, %v832
        %v834 = vpop.f32.mrb[0].mxu0
        %v835 = vadd.f32 %v764, %v834
        %836 = vdwg.mxu0
        %837 = vmatprep.subr.mxu0 %v475
        %838 = vmatpush1.msra.mxu0 %v474
        %839 = vmatprep.subr.mxu0 %v477
        %840 = vmatpush1.msra.mxu0 %v476
        %841 = vmatprep.subr.mxu0 %v479
        %842 = vmatpush1.msra.mxu0 %v478
        %843 = vmatprep.subr.mxu0 %v481
        %844 = vmatpush1.msra.mxu0 %v480
        %845 = vmatprep.subr.mxu0 %v483
        %846 = vmatpush1.msra.mxu0 %v482
        %847 = vmatprep.subr.mxu0 %v485
        %848 = vmatpush1.msra.mxu0 %v484
        %849 = vmatprep.subr.mxu0 %v487
        %850 = vmatpush1.msra.mxu0 %v486
        %851 = vmatprep.subr.mxu0 %v489
        %852 = vmatpush1.msra.mxu0 %v488
        %853 = vmatprep.subr.mxu0 %v491
        %854 = vmatpush1.msra.mxu0 %v490
        %855 = vmatprep.subr.mxu0 %v493
        %856 = vmatpush1.msra.mxu0 %v492
        %857 = vmatprep.subr.mxu0 %v495
        %858 = vmatpush1.msra.mxu0 %v494
        %859 = vmatprep.subr.mxu0 %v497
        %860 = vmatpush1.msra.mxu0 %v496
        %861 = vmatprep.subr.mxu0 %v499
        %862 = vmatpush1.msra.mxu0 %v498
        %863 = vmatprep.subr.mxu0 %v501
        %864 = vmatpush1.msra.mxu0 %v500
        %865 = vmatprep.subr.mxu0 %v503
        %866 = vmatpush1.msra.mxu0 %v502
        %867 = vmatprep.subr.mxu0 %v505
        %868 = vmatpush1.msra.mxu0 %v504
        %869 = vmatprep.subr.mxu0 %v507
        %870 = vmatpush1.msra.mxu0 %v506
        %871 = vmatprep.subr.mxu0 %v509
        %872 = vmatpush1.msra.mxu0 %v508
        %873 = vmatprep.subr.mxu0 %v511
        %874 = vmatpush1.msra.mxu0 %v510
        %875 = vmatprep.subr.mxu0 %v513
        %876 = vmatpush1.msra.mxu0 %v512
        %877 = vmatprep.subr.mxu0 %v515
        %878 = vmatpush1.msra.mxu0 %v514
        %879 = vmatprep.subr.mxu0 %v517
        %880 = vmatpush1.msra.mxu0 %v516
        %881 = vmatprep.subr.mxu0 %v519
        %882 = vmatpush1.msra.mxu0 %v518
        %883 = vmatprep.subr.mxu0 %v521
        %884 = vmatpush1.msra.mxu0 %v520
        %885 = vmatprep.subr.mxu0 %v523
        %886 = vmatpush1.msra.mxu0 %v522
        %887 = vmatprep.subr.mxu0 %v525
        %888 = vmatpush1.msra.mxu0 %v524
        %889 = vmatprep.subr.mxu0 %v527
        %890 = vmatpush1.msra.mxu0 %v526
        %891 = vmatprep.subr.mxu0 %v529
        %892 = vmatpush1.msra.mxu0 %v528
        %893 = vmatprep.subr.mxu0 %v531
        %894 = vmatpush1.msra.mxu0 %v530
        %895 = vmatprep.subr.mxu0 %v533
        %896 = vmatpush1.msra.mxu0 %v532
        %897 = vmatprep.subr.mxu0 %v535
        %898 = vmatpush1.msra.mxu0 %v534
        %899 = vmatprep.subr.mxu0 %v537
        %900 = vmatpush1.msra.mxu0 %v536
        %901 = vmatprep.mubr.f32.mxu0 %v250
        %902 = vmatmul.mubr.f32.gmra.mrb[0].mxu0 %v249
        %v903 = vpop.f32.mrb[0].mxu0
        %v904 = vadd.f32 0.0, %v903
        %v905 = vpop.f32.mrb[0].mxu0
        %v906 = vadd.f32 0.0, %v905
        %907 = vdwg.mxu0
        %908 = vmatprep.subr.mxu0 %v539
        %909 = vmatpush1.msra.mxu0 %v538
        %910 = vmatprep.subr.mxu0 %v541
        %911 = vmatpush1.msra.mxu0 %v540
        %912 = vmatprep.subr.mxu0 %v543
        %913 = vmatpush1.msra.mxu0 %v542
        %914 = vmatprep.subr.mxu0 %v545
        %915 = vmatpush1.msra.mxu0 %v544
        %916 = vmatprep.subr.mxu0 0.0
        %917 = vmatpush1.msra.mxu0 0.0
        %918 = vmatprep.subr.mxu0 0.0
        %919 = vmatpush1.msra.mxu0 0.0
        %920 = vmatprep.subr.mxu0 0.0
        %921 = vmatpush1.msra.mxu0 0.0
        %922 = vmatprep.subr.mxu0 0.0
        %923 = vmatpush1.msra.mxu0 0.0
        %924 = vmatprep.subr.mxu0 0.0
        %925 = vmatpush1.msra.mxu0 0.0
        %926 = vmatprep.subr.mxu0 0.0
        %927 = vmatpush1.msra.mxu0 0.0
        %928 = vmatprep.subr.mxu0 0.0
        %929 = vmatpush1.msra.mxu0 0.0
        %930 = vmatprep.subr.mxu0 0.0
        %931 = vmatpush1.msra.mxu0 0.0
        %932 = vmatprep.subr.mxu0 0.0
        %933 = vmatpush1.msra.mxu0 0.0
        %934 = vmatprep.subr.mxu0 0.0
        %935 = vmatpush1.msra.mxu0 0.0
        %936 = vmatprep.subr.mxu0 0.0
        %937 = vmatpush1.msra.mxu0 0.0
        %938 = vmatprep.subr.mxu0 0.0
        %939 = vmatpush1.msra.mxu0 0.0
        %940 = vmatprep.subr.mxu0 0.0
        %941 = vmatpush1.msra.mxu0 0.0
        %942 = vmatprep.subr.mxu0 0.0
        %943 = vmatpush1.msra.mxu0 0.0
        %944 = vmatprep.subr.mxu0 0.0
        %945 = vmatpush1.msra.mxu0 0.0
        %946 = vmatprep.subr.mxu0 0.0
        %947 = vmatpush1.msra.mxu0 0.0
        %948 = vmatprep.subr.mxu0 0.0
        %949 = vmatpush1.msra.mxu0 0.0
        %950 = vmatprep.subr.mxu0 0.0
        %951 = vmatpush1.msra.mxu0 0.0
        %952 = vmatprep.subr.mxu0 0.0
        %953 = vmatpush1.msra.mxu0 0.0
        %954 = vmatprep.subr.mxu0 0.0
        %955 = vmatpush1.msra.mxu0 0.0
        %956 = vmatprep.subr.mxu0 0.0
        %957 = vmatpush1.msra.mxu0 0.0
        %958 = vmatprep.subr.mxu0 0.0
        %959 = vmatpush1.msra.mxu0 0.0
        %960 = vmatprep.subr.mxu0 0.0
        %961 = vmatpush1.msra.mxu0 0.0
        %962 = vmatprep.subr.mxu0 0.0
        %963 = vmatpush1.msra.mxu0 0.0
        %964 = vmatprep.subr.mxu0 0.0
        %965 = vmatpush1.msra.mxu0 0.0
        %966 = vmatprep.subr.mxu0 0.0
        %967 = vmatpush1.msra.mxu0 0.0
        %968 = vmatprep.subr.mxu0 0.0
        %969 = vmatpush1.msra.mxu0 0.0
        %970 = vmatprep.subr.mxu0 0.0
        %971 = vmatpush1.msra.mxu0 0.0
        %972 = vmatprep.mubr.f32.mxu0 0.0
        %973 = vmatmul.mubr.f32.gmra.mrb[0].mxu0 %v548
        %v974 = vpop.f32.mrb[0].mxu0
        %v975 = vadd.f32 %v904, %v974
        %v976 = vpop.f32.mrb[0].mxu0
        %v977 = vadd.f32 %v906, %v976
        %978 = vdwg.mxu0
        %979 = vmatprep.subr.mxu0 %v326
        %980 = vmatpush1.msra.mxu0 %v325
        %981 = vmatprep.subr.mxu0 %v328
        %982 = vmatpush1.msra.mxu0 %v327
        %983 = vmatprep.subr.mxu0 %v330
        %984 = vmatpush1.msra.mxu0 %v329
        %985 = vmatprep.subr.mxu0 %v332
        %986 = vmatpush1.msra.mxu0 %v331
        %987 = vmatprep.subr.mxu0 %v334
        %988 = vmatpush1.msra.mxu0 %v333
        %989 = vmatprep.subr.mxu0 %v336
        %990 = vmatpush1.msra.mxu0 %v335
        %991 = vmatprep.subr.mxu0 %v338
        %992 = vmatpush1.msra.mxu0 %v337
        %993 = vmatprep.subr.mxu0 %v340
        %994 = vmatpush1.msra.mxu0 %v339
        %995 = vmatprep.subr.mxu0 %v342
        %996 = vmatpush1.msra.mxu0 %v341
        %997 = vmatprep.subr.mxu0 %v344
        %998 = vmatpush1.msra.mxu0 %v343
        %999 = vmatprep.subr.mxu0 %v346
        %1000 = vmatpush1.msra.mxu0 %v345
        %1001 = vmatprep.subr.mxu0 %v348
        %1002 = vmatpush1.msra.mxu0 %v347
        %1003 = vmatprep.subr.mxu0 %v350
        %1004 = vmatpush1.msra.mxu0 %v349
        %1005 = vmatprep.subr.mxu0 %v352
        %1006 = vmatpush1.msra.mxu0 %v351
        %1007 = vmatprep.subr.mxu0 %v354
        %1008 = vmatpush1.msra.mxu0 %v353
        %1009 = vmatprep.subr.mxu0 %v356
        %1010 = vmatpush1.msra.mxu0 %v355
        %1011 = vmatprep.subr.mxu0 %v358
        %1012 = vmatpush1.msra.mxu0 %v357
        %1013 = vmatprep.subr.mxu0 %v360
        %1014 = vmatpush1.msra.mxu0 %v359
        %1015 = vmatprep.subr.mxu0 %v362
        %1016 = vmatpush1.msra.mxu0 %v361
        %1017 = vmatprep.subr.mxu0 %v364
        %1018 = vmatpush1.msra.mxu0 %v363
        %1019 = vmatprep.subr.mxu0 %v366
        %1020 = vmatpush1.msra.mxu0 %v365
        %1021 = vmatprep.subr.mxu0 %v368
        %1022 = vmatpush1.msra.mxu0 %v367
        %1023 = vmatprep.subr.mxu0 %v370
        %1024 = vmatpush1.msra.mxu0 %v369
        %1025 = vmatprep.subr.mxu0 %v372
        %1026 = vmatpush1.msra.mxu0 %v371
        %1027 = vmatprep.subr.mxu0 %v374
        %1028 = vmatpush1.msra.mxu0 %v373
        %1029 = vmatprep.subr.mxu0 %v376
        %1030 = vmatpush1.msra.mxu0 %v375
        %1031 = vmatprep.subr.mxu0 %v378
        %1032 = vmatpush1.msra.mxu0 %v377
        %1033 = vmatprep.subr.mxu0 %v380
        %1034 = vmatpush1.msra.mxu0 %v379
        %1035 = vmatprep.subr.mxu0 %v382
        %1036 = vmatpush1.msra.mxu0 %v381
        %1037 = vmatprep.subr.mxu0 %v384
        %1038 = vmatpush1.msra.mxu0 %v383
        %1039 = vmatprep.subr.mxu0 %v386
        %1040 = vmatpush1.msra.mxu0 %v385
        %1041 = vmatprep.subr.mxu0 %v388
        %1042 = vmatpush1.msra.mxu0 %v387
        %1043 = vmatprep.mubr.f32.mxu0 %v247
        %1044 = vmatmul.mubr.f32.gmra.mrb[0].mxu0 %v246
        %v1045 = vpop.f32.mrb[0].mxu0
        %v1046 = vadd.f32 %v975, %v1045
        %v1047 = vpop.f32.mrb[0].mxu0
        %v1048 = vadd.f32 %v977, %v1047
        %1049 = vdwg.mxu0
        %1050 = vmatprep.subr.mxu0 %v390
        %1051 = vmatpush1.msra.mxu0 %v389
        %1052 = vmatprep.subr.mxu0 %v392
        %1053 = vmatpush1.msra.mxu0 %v391
        %1054 = vmatprep.subr.mxu0 %v394
        %1055 = vmatpush1.msra.mxu0 %v393
        %1056 = vmatprep.subr.mxu0 %v396
        %1057 = vmatpush1.msra.mxu0 %v395
        %1058 = vmatprep.subr.mxu0 0.0
        %1059 = vmatpush1.msra.mxu0 0.0
        %1060 = vmatprep.subr.mxu0 0.0
        %1061 = vmatpush1.msra.mxu0 0.0
        %1062 = vmatprep.subr.mxu0 0.0
        %1063 = vmatpush1.msra.mxu0 0.0
        %1064 = vmatprep.subr.mxu0 0.0
        %1065 = vmatpush1.msra.mxu0 0.0
        %1066 = vmatprep.subr.mxu0 0.0
        %1067 = vmatpush1.msra.mxu0 0.0
        %1068 = vmatprep.subr.mxu0 0.0
        %1069 = vmatpush1.msra.mxu0 0.0
        %1070 = vmatprep.subr.mxu0 0.0
        %1071 = vmatpush1.msra.mxu0 0.0
        %1072 = vmatprep.subr.mxu0 0.0
        %1073 = vmatpush1.msra.mxu0 0.0
        %1074 = vmatprep.subr.mxu0 0.0
        %1075 = vmatpush1.msra.mxu0 0.0
        %1076 = vmatprep.subr.mxu0 0.0
        %1077 = vmatpush1.msra.mxu0 0.0
        %1078 = vmatprep.subr.mxu0 0.0
        %1079 = vmatpush1.msra.mxu0 0.0
        %1080 = vmatprep.subr.mxu0 0.0
        %1081 = vmatpush1.msra.mxu0 0.0
        %1082 = vmatprep.subr.mxu0 0.0
        %1083 = vmatpush1.msra.mxu0 0.0
        %1084 = vmatprep.subr.mxu0 0.0
        %1085 = vmatpush1.msra.mxu0 0.0
        %1086 = vmatprep.subr.mxu0 0.0
        %1087 = vmatpush1.msra.mxu0 0.0
        %1088 = vmatprep.subr.mxu0 0.0
        %1089 = vmatpush1.msra.mxu0 0.0
        %1090 = vmatprep.subr.mxu0 0.0
        %1091 = vmatpush1.msra.mxu0 0.0
        %1092 = vmatprep.subr.mxu0 0.0
        %1093 = vmatpush1.msra.mxu0 0.0
        %1094 = vmatprep.subr.mxu0 0.0
        %1095 = vmatpush1.msra.mxu0 0.0
        %1096 = vmatprep.subr.mxu0 0.0
        %1097 = vmatpush1.msra.mxu0 0.0
        %1098 = vmatprep.subr.mxu0 0.0
        %1099 = vmatpush1.msra.mxu0 0.0
        %1100 = vmatprep.subr.mxu0 0.0
        %1101 = vmatpush1.msra.mxu0 0.0
        %1102 = vmatprep.subr.mxu0 0.0
        %1103 = vmatpush1.msra.mxu0 0.0
        %1104 = vmatprep.subr.mxu0 0.0
        %1105 = vmatpush1.msra.mxu0 0.0
        %1106 = vmatprep.subr.mxu0 0.0
        %1107 = vmatpush1.msra.mxu0 0.0
        %1108 = vmatprep.subr.mxu0 0.0
        %1109 = vmatpush1.msra.mxu0 0.0
        %1110 = vmatprep.subr.mxu0 0.0
        %1111 = vmatpush1.msra.mxu0 0.0
        %1112 = vmatprep.subr.mxu0 0.0
        %1113 = vmatpush1.msra.mxu0 0.0
        %1114 = vmatprep.mubr.f32.mxu0 0.0
        %1115 = vmatmul.mubr.f32.gmra.mrb[0].mxu0 %v693
        %v1116 = vpop.f32.mrb[0].mxu0
        %v1117 = vadd.f32 %v1046, %v1116
        %v1118 = vpop.f32.mrb[0].mxu0
        %v1119 = vadd.f32 %v1048, %v1118
        %1120 = vdwg.mxu0
        %v1124 = vrot.slane %v397, 1
        %v1125 = vrot.slane %v398, 1
        %v1126 = vrot.slane %v399, 1
        %v1129 = vsel %vm546, %v1126, 0
        %1131 = vmatprep.subr.mxu0 %v402
        %1132 = vmatpush1.msra.mxu0 %v401
        %1133 = vmatprep.subr.mxu0 %v404
        %1134 = vmatpush1.msra.mxu0 %v403
        %1135 = vmatprep.subr.mxu0 %v406
        %1136 = vmatpush1.msra.mxu0 %v405
        %1137 = vmatprep.subr.mxu0 %v408
        %1138 = vmatpush1.msra.mxu0 %v407
        %1139 = vmatprep.subr.mxu0 %v410
        %1140 = vmatpush1.msra.mxu0 %v409
        %1141 = vmatprep.subr.mxu0 %v412
        %1142 = vmatpush1.msra.mxu0 %v411
        %1143 = vmatprep.subr.mxu0 %v414
        %1144 = vmatpush1.msra.mxu0 %v413
        %1145 = vmatprep.subr.mxu0 %v416
        %1146 = vmatpush1.msra.mxu0 %v415
        %1147 = vmatprep.subr.mxu0 %v418
        %1148 = vmatpush1.msra.mxu0 %v417
        %1149 = vmatprep.subr.mxu0 %v420
        %1150 = vmatpush1.msra.mxu0 %v419
        %1151 = vmatprep.subr.mxu0 %v422
        %1152 = vmatpush1.msra.mxu0 %v421
        %1153 = vmatprep.subr.mxu0 %v424
        %1154 = vmatpush1.msra.mxu0 %v423
        %1155 = vmatprep.subr.mxu0 %v426
        %1156 = vmatpush1.msra.mxu0 %v425
        %1157 = vmatprep.subr.mxu0 %v428
        %1158 = vmatpush1.msra.mxu0 %v427
        %1159 = vmatprep.subr.mxu0 %v430
        %1160 = vmatpush1.msra.mxu0 %v429
        %1161 = vmatprep.subr.mxu0 %v432
        %1162 = vmatpush1.msra.mxu0 %v431
        %1163 = vmatprep.subr.mxu0 %v434
        %1164 = vmatpush1.msra.mxu0 %v433
        %1165 = vmatprep.subr.mxu0 %v436
        %1166 = vmatpush1.msra.mxu0 %v435
        %1167 = vmatprep.subr.mxu0 %v438
        %1168 = vmatpush1.msra.mxu0 %v437
        %1169 = vmatprep.subr.mxu0 %v440
        %1170 = vmatpush1.msra.mxu0 %v439
        %1171 = vmatprep.subr.mxu0 %v442
        %1172 = vmatpush1.msra.mxu0 %v441
        %1173 = vmatprep.subr.mxu0 %v444
        %1174 = vmatpush1.msra.mxu0 %v443
        %1175 = vmatprep.subr.mxu0 %v446
        %1176 = vmatpush1.msra.mxu0 %v445
        %1177 = vmatprep.subr.mxu0 %v448
        %1178 = vmatpush1.msra.mxu0 %v447
        %1179 = vmatprep.subr.mxu0 %v450
        %1180 = vmatpush1.msra.mxu0 %v449
        %1181 = vmatprep.subr.mxu0 %v452
        %1182 = vmatpush1.msra.mxu0 %v451
        %1183 = vmatprep.subr.mxu0 %v454
        %1184 = vmatpush1.msra.mxu0 %v453
        %1185 = vmatprep.subr.mxu0 %v456
        %1186 = vmatpush1.msra.mxu0 %v455
        %1187 = vmatprep.subr.mxu0 %v458
        %1188 = vmatpush1.msra.mxu0 %v457
        %1189 = vmatprep.subr.mxu0 %v460
        %1190 = vmatpush1.msra.mxu0 %v459
        %1191 = vmatprep.subr.mxu0 %v462
        %1192 = vmatpush1.msra.mxu0 %v461
        %1193 = vmatprep.subr.mxu0 %v464
        %1194 = vmatpush1.msra.mxu0 %v463
        %1195 = vmatprep.mubr.f32.mxu0 %v1125
        %1196 = vmatmul.mubr.f32.gmra.mrb[0].mxu0 %v1124
        %v1197 = vpop.f32.mrb[0].mxu0
        %v1198 = vadd.f32 0.0, %v1197
        %v1199 = vpop.f32.mrb[0].mxu0
        %v1200 = vadd.f32 0.0, %v1199
        %1201 = vdwg.mxu0
        %1202 = vmatprep.subr.mxu0 %v466
        %1203 = vmatpush1.msra.mxu0 %v465
        %1204 = vmatprep.subr.mxu0 %v468
        %1205 = vmatpush1.msra.mxu0 %v467
        %1206 = vmatprep.subr.mxu0 %v470
        %1207 = vmatpush1.msra.mxu0 %v469
        %1208 = vmatprep.subr.mxu0 %v472
        %1209 = vmatpush1.msra.mxu0 %v471
        %1210 = vmatprep.subr.mxu0 0.0
        %1211 = vmatpush1.msra.mxu0 0.0
        %1212 = vmatprep.subr.mxu0 0.0
        %1213 = vmatpush1.msra.mxu0 0.0
        %1214 = vmatprep.subr.mxu0 0.0
        %1215 = vmatpush1.msra.mxu0 0.0
        %1216 = vmatprep.subr.mxu0 0.0
        %1217 = vmatpush1.msra.mxu0 0.0
        %1218 = vmatprep.subr.mxu0 0.0
        %1219 = vmatpush1.msra.mxu0 0.0
        %1220 = vmatprep.subr.mxu0 0.0
        %1221 = vmatpush1.msra.mxu0 0.0
        %1222 = vmatprep.subr.mxu0 0.0
        %1223 = vmatpush1.msra.mxu0 0.0
        %1224 = vmatprep.subr.mxu0 0.0
        %1225 = vmatpush1.msra.mxu0 0.0
        %1226 = vmatprep.subr.mxu0 0.0
        %1227 = vmatpush1.msra.mxu0 0.0
        %1228 = vmatprep.subr.mxu0 0.0
        %1229 = vmatpush1.msra.mxu0 0.0
        %1230 = vmatprep.subr.mxu0 0.0
        %1231 = vmatpush1.msra.mxu0 0.0
        %1232 = vmatprep.subr.mxu0 0.0
        %1233 = vmatpush1.msra.mxu0 0.0
        %1234 = vmatprep.subr.mxu0 0.0
        %1235 = vmatpush1.msra.mxu0 0.0
        %1236 = vmatprep.subr.mxu0 0.0
        %1237 = vmatpush1.msra.mxu0 0.0
        %1238 = vmatprep.subr.mxu0 0.0
        %1239 = vmatpush1.msra.mxu0 0.0
        %1240 = vmatprep.subr.mxu0 0.0
        %1241 = vmatpush1.msra.mxu0 0.0
        %1242 = vmatprep.subr.mxu0 0.0
        %1243 = vmatpush1.msra.mxu0 0.0
        %1244 = vmatprep.subr.mxu0 0.0
        %1245 = vmatpush1.msra.mxu0 0.0
        %1246 = vmatprep.subr.mxu0 0.0
        %1247 = vmatpush1.msra.mxu0 0.0
        %1248 = vmatprep.subr.mxu0 0.0
        %1249 = vmatpush1.msra.mxu0 0.0
        %1250 = vmatprep.subr.mxu0 0.0
        %1251 = vmatpush1.msra.mxu0 0.0
        %1252 = vmatprep.subr.mxu0 0.0
        %1253 = vmatpush1.msra.mxu0 0.0
        %1254 = vmatprep.subr.mxu0 0.0
        %1255 = vmatpush1.msra.mxu0 0.0
        %1256 = vmatprep.subr.mxu0 0.0
        %1257 = vmatpush1.msra.mxu0 0.0
        %1258 = vmatprep.subr.mxu0 0.0
        %1259 = vmatpush1.msra.mxu0 0.0
        %1260 = vmatprep.subr.mxu0 0.0
        %1261 = vmatpush1.msra.mxu0 0.0
        %1262 = vmatprep.subr.mxu0 0.0
        %1263 = vmatpush1.msra.mxu0 0.0
        %1264 = vmatprep.subr.mxu0 0.0
        %1265 = vmatpush1.msra.mxu0 0.0
        %1266 = vmatprep.mubr.f32.mxu0 0.0
        %1267 = vmatmul.mubr.f32.gmra.mrb[0].mxu0 %v1129
        %v1268 = vpop.f32.mrb[0].mxu0
        %v1269 = vadd.f32 %v1198, %v1268
        %v1270 = vpop.f32.mrb[0].mxu0
        %v1271 = vadd.f32 %v1200, %v1270
        %1272 = vdwg.mxu0
        %1273 = vmatprep.subr.mxu0 %v253
        %1274 = vmatpush1.msra.mxu0 %v252
        %1275 = vmatprep.subr.mxu0 %v255
        %1276 = vmatpush1.msra.mxu0 %v254
        %1277 = vmatprep.subr.mxu0 %v257
        %1278 = vmatpush1.msra.mxu0 %v256
        %1279 = vmatprep.subr.mxu0 %v259
        %1280 = vmatpush1.msra.mxu0 %v258
        %1281 = vmatprep.subr.mxu0 %v261
        %1282 = vmatpush1.msra.mxu0 %v260
        %1283 = vmatprep.subr.mxu0 %v263
        %1284 = vmatpush1.msra.mxu0 %v262
        %1285 = vmatprep.subr.mxu0 %v265
        %1286 = vmatpush1.msra.mxu0 %v264
        %1287 = vmatprep.subr.mxu0 %v267
        %1288 = vmatpush1.msra.mxu0 %v266
        %1289 = vmatprep.subr.mxu0 %v269
        %1290 = vmatpush1.msra.mxu0 %v268
        %1291 = vmatprep.subr.mxu0 %v271
        %1292 = vmatpush1.msra.mxu0 %v270
        %1293 = vmatprep.subr.mxu0 %v273
        %1294 = vmatpush1.msra.mxu0 %v272
        %1295 = vmatprep.subr.mxu0 %v275
        %1296 = vmatpush1.msra.mxu0 %v274
        %1297 = vmatprep.subr.mxu0 %v277
        %1298 = vmatpush1.msra.mxu0 %v276
        %1299 = vmatprep.subr.mxu0 %v279
        %1300 = vmatpush1.msra.mxu0 %v278
        %1301 = vmatprep.subr.mxu0 %v281
        %1302 = vmatpush1.msra.mxu0 %v280
        %1303 = vmatprep.subr.mxu0 %v283
        %1304 = vmatpush1.msra.mxu0 %v282
        %1305 = vmatprep.subr.mxu0 %v285
        %1306 = vmatpush1.msra.mxu0 %v284
        %1307 = vmatprep.subr.mxu0 %v287
        %1308 = vmatpush1.msra.mxu0 %v286
        %1309 = vmatprep.subr.mxu0 %v289
        %1310 = vmatpush1.msra.mxu0 %v288
        %1311 = vmatprep.subr.mxu0 %v291
        %1312 = vmatpush1.msra.mxu0 %v290
        %1313 = vmatprep.subr.mxu0 %v293
        %1314 = vmatpush1.msra.mxu0 %v292
        %1315 = vmatprep.subr.mxu0 %v295
        %1316 = vmatpush1.msra.mxu0 %v294
        %1317 = vmatprep.subr.mxu0 %v297
        %1318 = vmatpush1.msra.mxu0 %v296
        %1319 = vmatprep.subr.mxu0 %v299
        %1320 = vmatpush1.msra.mxu0 %v298
        %1321 = vmatprep.subr.mxu0 %v301
        %1322 = vmatpush1.msra.mxu0 %v300
        %1323 = vmatprep.subr.mxu0 %v303
        %1324 = vmatpush1.msra.mxu0 %v302
        %1325 = vmatprep.subr.mxu0 %v305
        %1326 = vmatpush1.msra.mxu0 %v304
        %1327 = vmatprep.subr.mxu0 %v307
        %1328 = vmatpush1.msra.mxu0 %v306
        %1329 = vmatprep.subr.mxu0 %v309
        %1330 = vmatpush1.msra.mxu0 %v308
        %1331 = vmatprep.subr.mxu0 %v311
        %1332 = vmatpush1.msra.mxu0 %v310
        %1333 = vmatprep.subr.mxu0 %v313
        %1334 = vmatpush1.msra.mxu0 %v312
        %1335 = vmatprep.subr.mxu0 %v315
        %1336 = vmatpush1.msra.mxu0 %v314
        %1337 = vmatprep.mubr.f32.mxu0 %v250
        %1338 = vmatmul.mubr.f32.gmra.mrb[0].mxu0 %v249
        %v1339 = vpop.f32.mrb[0].mxu0
        %v1340 = vadd.f32 %v1269, %v1339
        %v1341 = vpop.f32.mrb[0].mxu0
        %v1342 = vadd.f32 %v1271, %v1341
        %1343 = vdwg.mxu0
        %1344 = vmatprep.subr.mxu0 %v317
        %1345 = vmatpush1.msra.mxu0 %v316
        %1346 = vmatprep.subr.mxu0 %v319
        %1347 = vmatpush1.msra.mxu0 %v318
        %1348 = vmatprep.subr.mxu0 %v321
        %1349 = vmatpush1.msra.mxu0 %v320
        %1350 = vmatprep.subr.mxu0 %v323
        %1351 = vmatpush1.msra.mxu0 %v322
        %1352 = vmatprep.subr.mxu0 0.0
        %1353 = vmatpush1.msra.mxu0 0.0
        %1354 = vmatprep.subr.mxu0 0.0
        %1355 = vmatpush1.msra.mxu0 0.0
        %1356 = vmatprep.subr.mxu0 0.0
        %1357 = vmatpush1.msra.mxu0 0.0
        %1358 = vmatprep.subr.mxu0 0.0
        %1359 = vmatpush1.msra.mxu0 0.0
        %1360 = vmatprep.subr.mxu0 0.0
        %1361 = vmatpush1.msra.mxu0 0.0
        %1362 = vmatprep.subr.mxu0 0.0
        %1363 = vmatpush1.msra.mxu0 0.0
        %1364 = vmatprep.subr.mxu0 0.0
        %1365 = vmatpush1.msra.mxu0 0.0
        %1366 = vmatprep.subr.mxu0 0.0
        %1367 = vmatpush1.msra.mxu0 0.0
        %1368 = vmatprep.subr.mxu0 0.0
        %1369 = vmatpush1.msra.mxu0 0.0
        %1370 = vmatprep.subr.mxu0 0.0
        %1371 = vmatpush1.msra.mxu0 0.0
        %1372 = vmatprep.subr.mxu0 0.0
        %1373 = vmatpush1.msra.mxu0 0.0
        %1374 = vmatprep.subr.mxu0 0.0
        %1375 = vmatpush1.msra.mxu0 0.0
        %1376 = vmatprep.subr.mxu0 0.0
        %1377 = vmatpush1.msra.mxu0 0.0
        %1378 = vmatprep.subr.mxu0 0.0
        %1379 = vmatpush1.msra.mxu0 0.0
        %1380 = vmatprep.subr.mxu0 0.0
        %1381 = vmatpush1.msra.mxu0 0.0
        %1382 = vmatprep.subr.mxu0 0.0
        %1383 = vmatpush1.msra.mxu0 0.0
        %1384 = vmatprep.subr.mxu0 0.0
        %1385 = vmatpush1.msra.mxu0 0.0
        %1386 = vmatprep.subr.mxu0 0.0
        %1387 = vmatpush1.msra.mxu0 0.0
        %1388 = vmatprep.subr.mxu0 0.0
        %1389 = vmatpush1.msra.mxu0 0.0
        %1390 = vmatprep.subr.mxu0 0.0
        %1391 = vmatpush1.msra.mxu0 0.0
        %1392 = vmatprep.subr.mxu0 0.0
        %1393 = vmatpush1.msra.mxu0 0.0
        %1394 = vmatprep.subr.mxu0 0.0
        %1395 = vmatpush1.msra.mxu0 0.0
        %1396 = vmatprep.subr.mxu0 0.0
        %1397 = vmatpush1.msra.mxu0 0.0
        %1398 = vmatprep.subr.mxu0 0.0
        %1399 = vmatpush1.msra.mxu0 0.0
        %1400 = vmatprep.subr.mxu0 0.0
        %1401 = vmatpush1.msra.mxu0 0.0
        %1402 = vmatprep.subr.mxu0 0.0
        %1403 = vmatpush1.msra.mxu0 0.0
        %1404 = vmatprep.subr.mxu0 0.0
        %1405 = vmatpush1.msra.mxu0 0.0
        %1406 = vmatprep.subr.mxu0 0.0
        %1407 = vmatpush1.msra.mxu0 0.0
        %1408 = vmatprep.mubr.f32.mxu0 0.0
        %1409 = vmatmul.mubr.f32.gmra.mrb[0].mxu0 %v548
        %v1410 = vpop.f32.mrb[0].mxu0
        %v1411 = vadd.f32 %v1340, %v1410
        %v1412 = vpop.f32.mrb[0].mxu0
        %v1413 = vadd.f32 %v1342, %v1412
        %1414 = vdwg.mxu0
        %1415 = vmatprep.subr.mxu0 %v475
        %1416 = vmatpush1.msra.mxu0 %v474
        %1417 = vmatprep.subr.mxu0 %v477
        %1418 = vmatpush1.msra.mxu0 %v476
        %1419 = vmatprep.subr.mxu0 %v479
        %1420 = vmatpush1.msra.mxu0 %v478
        %1421 = vmatprep.subr.mxu0 %v481
        %1422 = vmatpush1.msra.mxu0 %v480
        %1423 = vmatprep.subr.mxu0 %v483
        %1424 = vmatpush1.msra.mxu0 %v482
        %1425 = vmatprep.subr.mxu0 %v485
        %1426 = vmatpush1.msra.mxu0 %v484
        %1427 = vmatprep.subr.mxu0 %v487
        %1428 = vmatpush1.msra.mxu0 %v486
        %1429 = vmatprep.subr.mxu0 %v489
        %1430 = vmatpush1.msra.mxu0 %v488
        %1431 = vmatprep.subr.mxu0 %v491
        %1432 = vmatpush1.msra.mxu0 %v490
        %1433 = vmatprep.subr.mxu0 %v493
        %1434 = vmatpush1.msra.mxu0 %v492
        %1435 = vmatprep.subr.mxu0 %v495
        %1436 = vmatpush1.msra.mxu0 %v494
        %1437 = vmatprep.subr.mxu0 %v497
        %1438 = vmatpush1.msra.mxu0 %v496
        %1439 = vmatprep.subr.mxu0 %v499
        %1440 = vmatpush1.msra.mxu0 %v498
        %1441 = vmatprep.subr.mxu0 %v501
        %1442 = vmatpush1.msra.mxu0 %v500
        %1443 = vmatprep.subr.mxu0 %v503
        %1444 = vmatpush1.msra.mxu0 %v502
        %1445 = vmatprep.subr.mxu0 %v505
        %1446 = vmatpush1.msra.mxu0 %v504
        %1447 = vmatprep.subr.mxu0 %v507
        %1448 = vmatpush1.msra.mxu0 %v506
        %1449 = vmatprep.subr.mxu0 %v509
        %1450 = vmatpush1.msra.mxu0 %v508
        %1451 = vmatprep.subr.mxu0 %v511
        %1452 = vmatpush1.msra.mxu0 %v510
        %1453 = vmatprep.subr.mxu0 %v513
        %1454 = vmatpush1.msra.mxu0 %v512
        %1455 = vmatprep.subr.mxu0 %v515
        %1456 = vmatpush1.msra.mxu0 %v514
        %1457 = vmatprep.subr.mxu0 %v517
        %1458 = vmatpush1.msra.mxu0 %v516
        %1459 = vmatprep.subr.mxu0 %v519
        %1460 = vmatpush1.msra.mxu0 %v518
        %1461 = vmatprep.subr.mxu0 %v521
        %1462 = vmatpush1.msra.mxu0 %v520
        %1463 = vmatprep.subr.mxu0 %v523
        %1464 = vmatpush1.msra.mxu0 %v522
        %1465 = vmatprep.subr.mxu0 %v525
        %1466 = vmatpush1.msra.mxu0 %v524
        %1467 = vmatprep.subr.mxu0 %v527
        %1468 = vmatpush1.msra.mxu0 %v526
        %1469 = vmatprep.subr.mxu0 %v529
        %1470 = vmatpush1.msra.mxu0 %v528
        %1471 = vmatprep.subr.mxu0 %v531
        %1472 = vmatpush1.msra.mxu0 %v530
        %1473 = vmatprep.subr.mxu0 %v533
        %1474 = vmatpush1.msra.mxu0 %v532
        %1475 = vmatprep.subr.mxu0 %v535
        %1476 = vmatpush1.msra.mxu0 %v534
        %1477 = vmatprep.subr.mxu0 %v537
        %1478 = vmatpush1.msra.mxu0 %v536
        %1479 = vmatprep.mubr.f32.mxu0 %v1125
        %1480 = vmatmul.mubr.f32.gmra.mrb[0].mxu0 %v1124
        %v1481 = vpop.f32.mrb[0].mxu0
        %v1482 = vadd.f32 0.0, %v1481
        %v1483 = vpop.f32.mrb[0].mxu0
        %v1484 = vadd.f32 0.0, %v1483
        %1485 = vdwg.mxu0
        %1486 = vmatprep.subr.mxu0 %v539
        %1487 = vmatpush1.msra.mxu0 %v538
        %1488 = vmatprep.subr.mxu0 %v541
        %1489 = vmatpush1.msra.mxu0 %v540
        %1490 = vmatprep.subr.mxu0 %v543
        %1491 = vmatpush1.msra.mxu0 %v542
        %1492 = vmatprep.subr.mxu0 %v545
        %1493 = vmatpush1.msra.mxu0 %v544
        %1494 = vmatprep.subr.mxu0 0.0
        %1495 = vmatpush1.msra.mxu0 0.0
        %1496 = vmatprep.subr.mxu0 0.0
        %1497 = vmatpush1.msra.mxu0 0.0
        %1498 = vmatprep.subr.mxu0 0.0
        %1499 = vmatpush1.msra.mxu0 0.0
        %1500 = vmatprep.subr.mxu0 0.0
        %1501 = vmatpush1.msra.mxu0 0.0
        %1502 = vmatprep.subr.mxu0 0.0
        %1503 = vmatpush1.msra.mxu0 0.0
        %1504 = vmatprep.subr.mxu0 0.0
        %1505 = vmatpush1.msra.mxu0 0.0
        %1506 = vmatprep.subr.mxu0 0.0
        %1507 = vmatpush1.msra.mxu0 0.0
        %1508 = vmatprep.subr.mxu0 0.0
        %1509 = vmatpush1.msra.mxu0 0.0
        %1510 = vmatprep.subr.mxu0 0.0
        %1511 = vmatpush1.msra.mxu0 0.0
        %1512 = vmatprep.subr.mxu0 0.0
        %1513 = vmatpush1.msra.mxu0 0.0
        %1514 = vmatprep.subr.mxu0 0.0
        %1515 = vmatpush1.msra.mxu0 0.0
        %1516 = vmatprep.subr.mxu0 0.0
        %1517 = vmatpush1.msra.mxu0 0.0
        %1518 = vmatprep.subr.mxu0 0.0
        %1519 = vmatpush1.msra.mxu0 0.0
        %1520 = vmatprep.subr.mxu0 0.0
        %1521 = vmatpush1.msra.mxu0 0.0
        %1522 = vmatprep.subr.mxu0 0.0
        %1523 = vmatpush1.msra.mxu0 0.0
        %1524 = vmatprep.subr.mxu0 0.0
        %1525 = vmatpush1.msra.mxu0 0.0
        %1526 = vmatprep.subr.mxu0 0.0
        %1527 = vmatpush1.msra.mxu0 0.0
        %1528 = vmatprep.subr.mxu0 0.0
        %1529 = vmatpush1.msra.mxu0 0.0
        %1530 = vmatprep.subr.mxu0 0.0
        %1531 = vmatpush1.msra.mxu0 0.0
        %1532 = vmatprep.subr.mxu0 0.0
        %1533 = vmatpush1.msra.mxu0 0.0
        %1534 = vmatprep.subr.mxu0 0.0
        %1535 = vmatpush1.msra.mxu0 0.0
        %1536 = vmatprep.subr.mxu0 0.0
        %1537 = vmatpush1.msra.mxu0 0.0
        %1538 = vmatprep.subr.mxu0 0.0
        %1539 = vmatpush1.msra.mxu0 0.0
        %1540 = vmatprep.subr.mxu0 0.0
        %1541 = vmatpush1.msra.mxu0 0.0
        %1542 = vmatprep.subr.mxu0 0.0
        %1543 = vmatpush1.msra.mxu0 0.0
        %1544 = vmatprep.subr.mxu0 0.0
        %1545 = vmatpush1.msra.mxu0 0.0
        %1546 = vmatprep.subr.mxu0 0.0
        %1547 = vmatpush1.msra.mxu0 0.0
        %1548 = vmatprep.subr.mxu0 0.0
        %1549 = vmatpush1.msra.mxu0 0.0
        %1550 = vmatprep.mubr.f32.mxu0 0.0
        %1551 = vmatmul.mubr.f32.gmra.mrb[0].mxu0 %v1129
        %v1552 = vpop.f32.mrb[0].mxu0
        %v1553 = vadd.f32 %v1482, %v1552
        %v1554 = vpop.f32.mrb[0].mxu0
        %v1555 = vadd.f32 %v1484, %v1554
        %1556 = vdwg.mxu0
        %1557 = vmatprep.subr.mxu0 %v326
        %1558 = vmatpush1.msra.mxu0 %v325
        %1559 = vmatprep.subr.mxu0 %v328
        %1560 = vmatpush1.msra.mxu0 %v327
        %1561 = vmatprep.subr.mxu0 %v330
        %1562 = vmatpush1.msra.mxu0 %v329
        %1563 = vmatprep.subr.mxu0 %v332
        %1564 = vmatpush1.msra.mxu0 %v331
        %1565 = vmatprep.subr.mxu0 %v334
        %1566 = vmatpush1.msra.mxu0 %v333
        %1567 = vmatprep.subr.mxu0 %v336
        %1568 = vmatpush1.msra.mxu0 %v335
        %1569 = vmatprep.subr.mxu0 %v338
        %1570 = vmatpush1.msra.mxu0 %v337
        %1571 = vmatprep.subr.mxu0 %v340
        %1572 = vmatpush1.msra.mxu0 %v339
        %1573 = vmatprep.subr.mxu0 %v342
        %1574 = vmatpush1.msra.mxu0 %v341
        %1575 = vmatprep.subr.mxu0 %v344
        %1576 = vmatpush1.msra.mxu0 %v343
        %1577 = vmatprep.subr.mxu0 %v346
        %1578 = vmatpush1.msra.mxu0 %v345
        %1579 = vmatprep.subr.mxu0 %v348
        %1580 = vmatpush1.msra.mxu0 %v347
        %1581 = vmatprep.subr.mxu0 %v350
        %1582 = vmatpush1.msra.mxu0 %v349
        %1583 = vmatprep.subr.mxu0 %v352
        %1584 = vmatpush1.msra.mxu0 %v351
        %1585 = vmatprep.subr.mxu0 %v354
        %1586 = vmatpush1.msra.mxu0 %v353
        %1587 = vmatprep.subr.mxu0 %v356
        %1588 = vmatpush1.msra.mxu0 %v355
        %1589 = vmatprep.subr.mxu0 %v358
        %1590 = vmatpush1.msra.mxu0 %v357
        %1591 = vmatprep.subr.mxu0 %v360
        %1592 = vmatpush1.msra.mxu0 %v359
        %1593 = vmatprep.subr.mxu0 %v362
        %1594 = vmatpush1.msra.mxu0 %v361
        %1595 = vmatprep.subr.mxu0 %v364
        %1596 = vmatpush1.msra.mxu0 %v363
        %1597 = vmatprep.subr.mxu0 %v366
        %1598 = vmatpush1.msra.mxu0 %v365
        %1599 = vmatprep.subr.mxu0 %v368
        %1600 = vmatpush1.msra.mxu0 %v367
        %1601 = vmatprep.subr.mxu0 %v370
        %1602 = vmatpush1.msra.mxu0 %v369
        %1603 = vmatprep.subr.mxu0 %v372
        %1604 = vmatpush1.msra.mxu0 %v371
        %1605 = vmatprep.subr.mxu0 %v374
        %1606 = vmatpush1.msra.mxu0 %v373
        %1607 = vmatprep.subr.mxu0 %v376
        %1608 = vmatpush1.msra.mxu0 %v375
        %1609 = vmatprep.subr.mxu0 %v378
        %1610 = vmatpush1.msra.mxu0 %v377
        %1611 = vmatprep.subr.mxu0 %v380
        %1612 = vmatpush1.msra.mxu0 %v379
        %1613 = vmatprep.subr.mxu0 %v382
        %1614 = vmatpush1.msra.mxu0 %v381
        %1615 = vmatprep.subr.mxu0 %v384
        %1616 = vmatpush1.msra.mxu0 %v383
        %1617 = vmatprep.subr.mxu0 %v386
        %1618 = vmatpush1.msra.mxu0 %v385
        %1619 = vmatprep.subr.mxu0 %v388
        %1620 = vmatpush1.msra.mxu0 %v387
        %1621 = vmatprep.mubr.f32.mxu0 %v250
        %1622 = vmatmul.mubr.f32.gmra.mrb[0].mxu0 %v249
        %v1623 = vpop.f32.mrb[0].mxu0
        %v1624 = vadd.f32 %v1553, %v1623
        %v1625 = vpop.f32.mrb[0].mxu0
        %v1626 = vadd.f32 %v1555, %v1625
        %1627 = vdwg.mxu0
        %1628 = vmatprep.subr.mxu0 %v390
        %1629 = vmatpush1.msra.mxu0 %v389
        %1630 = vmatprep.subr.mxu0 %v392
        %1631 = vmatpush1.msra.mxu0 %v391
        %1632 = vmatprep.subr.mxu0 %v394
        %1633 = vmatpush1.msra.mxu0 %v393
        %1634 = vmatprep.subr.mxu0 %v396
        %1635 = vmatpush1.msra.mxu0 %v395
        %1636 = vmatprep.subr.mxu0 0.0
        %1637 = vmatpush1.msra.mxu0 0.0
        %1638 = vmatprep.subr.mxu0 0.0
        %1639 = vmatpush1.msra.mxu0 0.0
        %1640 = vmatprep.subr.mxu0 0.0
        %1641 = vmatpush1.msra.mxu0 0.0
        %1642 = vmatprep.subr.mxu0 0.0
        %1643 = vmatpush1.msra.mxu0 0.0
        %1644 = vmatprep.subr.mxu0 0.0
        %1645 = vmatpush1.msra.mxu0 0.0
        %1646 = vmatprep.subr.mxu0 0.0
        %1647 = vmatpush1.msra.mxu0 0.0
        %1648 = vmatprep.subr.mxu0 0.0
        %1649 = vmatpush1.msra.mxu0 0.0
        %1650 = vmatprep.subr.mxu0 0.0
        %1651 = vmatpush1.msra.mxu0 0.0
        %1652 = vmatprep.subr.mxu0 0.0
        %1653 = vmatpush1.msra.mxu0 0.0
        %1654 = vmatprep.subr.mxu0 0.0
        %1655 = vmatpush1.msra.mxu0 0.0
        %1656 = vmatprep.subr.mxu0 0.0
        %1657 = vmatpush1.msra.mxu0 0.0
        %1658 = vmatprep.subr.mxu0 0.0
        %1659 = vmatpush1.msra.mxu0 0.0
        %1660 = vmatprep.subr.mxu0 0.0
        %1661 = vmatpush1.msra.mxu0 0.0
        %1662 = vmatprep.subr.mxu0 0.0
        %1663 = vmatpush1.msra.mxu0 0.0
        %1664 = vmatprep.subr.mxu0 0.0
        %1665 = vmatpush1.msra.mxu0 0.0
        %1666 = vmatprep.subr.mxu0 0.0
        %1667 = vmatpush1.msra.mxu0 0.0
        %1668 = vmatprep.subr.mxu0 0.0
        %1669 = vmatpush1.msra.mxu0 0.0
        %1670 = vmatprep.subr.mxu0 0.0
        %1671 = vmatpush1.msra.mxu0 0.0
        %1672 = vmatprep.subr.mxu0 0.0
        %1673 = vmatpush1.msra.mxu0 0.0
        %1674 = vmatprep.subr.mxu0 0.0
        %1675 = vmatpush1.msra.mxu0 0.0
        %1676 = vmatprep.subr.mxu0 0.0
        %1677 = vmatpush1.msra.mxu0 0.0
        %1678 = vmatprep.subr.mxu0 0.0
        %1679 = vmatpush1.msra.mxu0 0.0
        %1680 = vmatprep.subr.mxu0 0.0
        %1681 = vmatpush1.msra.mxu0 0.0
        %1682 = vmatprep.subr.mxu0 0.0
        %1683 = vmatpush1.msra.mxu0 0.0
        %1684 = vmatprep.subr.mxu0 0.0
        %1685 = vmatpush1.msra.mxu0 0.0
        %1686 = vmatprep.subr.mxu0 0.0
        %1687 = vmatpush1.msra.mxu0 0.0
        %1688 = vmatprep.subr.mxu0 0.0
        %1689 = vmatpush1.msra.mxu0 0.0
        %1690 = vmatprep.subr.mxu0 0.0
        %1691 = vmatpush1.msra.mxu0 0.0
        %1692 = vmatprep.mubr.f32.mxu0 0.0
        %1693 = vmatmul.mubr.f32.gmra.mrb[0].mxu0 %v548
        %v1694 = vpop.f32.mrb[0].mxu0
        %v1695 = vadd.f32 %v1624, %v1694
        %v1696 = vpop.f32.mrb[0].mxu0
        %v1697 = vadd.f32 %v1626, %v1696
        %1698 = vdwg.mxu0
        %v1699 = vld [vmem:[%s240] sm:$0xfe]
        %v1700 = vld [vmem:[%s240 + $0x8] sm:$0xfe]
        %v1701 = vld [vmem:[%s240 + $0x10] sm:$0xfe]
        %s1702 = scalar_lea.vmem [#allocation2], 1152
        %v1703 = vld [vmem:[%s1702] sm:$0xff]
        %v1704 = vld [vmem:[%s1702 + $0x8] sm:$0xff]
        %v1705 = vld [vmem:[%s1702 + $0x10] sm:$0xff]
        %v1706 = vld [vmem:[%s1702 + $0x18] sm:$0xff]
        %v1707 = vld [vmem:[%s1702 + $0x20] sm:$0xff]
        %v1708 = vld [vmem:[%s1702 + $0x28] sm:$0xff]
        %v1709 = vld [vmem:[%s1702 + $0x30] sm:$0xff]
        %v1710 = vld [vmem:[%s1702 + $0x38] sm:$0xff]
        %v1711 = vld [vmem:[%s1702 + $0x40] sm:$0xff]
        %v1712 = vld [vmem:[%s1702 + $0x48] sm:$0xff]
        %v1713 = vld [vmem:[%s1702 + $0x50] sm:$0xff]
        %v1714 = vld [vmem:[%s1702 + $0x58] sm:$0xff]
        %v1715 = vld [vmem:[%s1702 + $0x60] sm:$0xff]
        %v1716 = vld [vmem:[%s1702 + $0x68] sm:$0xff]
        %v1717 = vld [vmem:[%s1702 + $0x70] sm:$0xff]
        %v1718 = vld [vmem:[%s1702 + $0x78] sm:$0xff]
        %v1719 = vld [vmem:[%s1702 + $0x80] sm:$0xff]
        %v1720 = vld [vmem:[%s1702 + $0x88] sm:$0xff]
        %v1721 = vld [vmem:[%s1702 + $0x90] sm:$0xff]
        %v1722 = vld [vmem:[%s1702 + $0x98] sm:$0xff]
        %v1723 = vld [vmem:[%s1702 + $0xa0] sm:$0xff]
        %v1724 = vld [vmem:[%s1702 + $0xa8] sm:$0xff]
        %v1725 = vld [vmem:[%s1702 + $0xb0] sm:$0xff]
        %v1726 = vld [vmem:[%s1702 + $0xb8] sm:$0xff]
        %v1727 = vld [vmem:[%s1702 + $0xc0] sm:$0xff]
        %v1728 = vld [vmem:[%s1702 + $0xc8] sm:$0xff]
        %v1729 = vld [vmem:[%s1702 + $0xd0] sm:$0xff]
        %v1730 = vld [vmem:[%s1702 + $0xd8] sm:$0xff]
        %v1731 = vld [vmem:[%s1702 + $0xe0] sm:$0xff]
        %v1732 = vld [vmem:[%s1702 + $0xe8] sm:$0xff]
        %v1733 = vld [vmem:[%s1702 + $0xf0] sm:$0xff]
        %v1734 = vld [vmem:[%s1702 + $0xf8] sm:$0xff]
        %v1735 = vld [vmem:[%s1702 + $0x100] sm:$0xff]
        %v1736 = vld [vmem:[%s1702 + $0x108] sm:$0xff]
        %v1737 = vld [vmem:[%s1702 + $0x110] sm:$0xff]
        %v1738 = vld [vmem:[%s1702 + $0x118] sm:$0xff]
        %v1739 = vld [vmem:[%s1702 + $0x120] sm:$0xff]
        %v1740 = vld [vmem:[%s1702 + $0x128] sm:$0xff]
        %v1741 = vld [vmem:[%s1702 + $0x130] sm:$0xff]
        %v1742 = vld [vmem:[%s1702 + $0x138] sm:$0xff]
        %v1743 = vld [vmem:[%s1702 + $0x140] sm:$0xff]
        %v1744 = vld [vmem:[%s1702 + $0x148] sm:$0xff]
        %v1745 = vld [vmem:[%s1702 + $0x150] sm:$0xff]
        %v1746 = vld [vmem:[%s1702 + $0x158] sm:$0xff]
        %v1747 = vld [vmem:[%s1702 + $0x160] sm:$0xff]
        %v1748 = vld [vmem:[%s1702 + $0x168] sm:$0xff]
        %v1749 = vld [vmem:[%s1702 + $0x170] sm:$0xff]
        %v1750 = vld [vmem:[%s1702 + $0x178] sm:$0xff]
        %v1751 = vld [vmem:[%s1702 + $0x180] sm:$0xff]
        %v1752 = vld [vmem:[%s1702 + $0x188] sm:$0xff]
        %v1753 = vld [vmem:[%s1702 + $0x190] sm:$0xff]
        %v1754 = vld [vmem:[%s1702 + $0x198] sm:$0xff]
        %v1755 = vld [vmem:[%s1702 + $0x1a0] sm:$0xff]
        %v1756 = vld [vmem:[%s1702 + $0x1a8] sm:$0xff]
        %v1757 = vld [vmem:[%s1702 + $0x1b0] sm:$0xff]
        %v1758 = vld [vmem:[%s1702 + $0x1b8] sm:$0xff]
        %v1759 = vld [vmem:[%s1702 + $0x1c0] sm:$0xff]
        %v1760 = vld [vmem:[%s1702 + $0x1c8] sm:$0xff]
        %v1761 = vld [vmem:[%s1702 + $0x1d0] sm:$0xff]
        %v1762 = vld [vmem:[%s1702 + $0x1d8] sm:$0xff]
        %v1763 = vld [vmem:[%s1702 + $0x1e0] sm:$0xff]
        %v1764 = vld [vmem:[%s1702 + $0x1e8] sm:$0xff]
        %v1765 = vld [vmem:[%s1702 + $0x1f0] sm:$0xff]
        %v1766 = vld [vmem:[%s1702 + $0x1f8] sm:$0xff]
        %v1767 = vld [vmem:[%s1702 + $0x200] sm:$0xff]
        %v1768 = vld [vmem:[%s1702 + $0x208] sm:$0xff]
        %v1769 = vld [vmem:[%s1702 + $0x210] sm:$0xff]
        %v1770 = vld [vmem:[%s1702 + $0x218] sm:$0xff]
        %v1771 = vld [vmem:[%s1702 + $0x220] sm:$0xff]
        %v1772 = vld [vmem:[%s1702 + $0x228] sm:$0xff]
        %v1773 = vld [vmem:[%s1702 + $0x230] sm:$0xff]
        %v1774 = vld [vmem:[%s1702 + $0x238] sm:$0xff]
        %s1775 = scalar_lea.vmem [#allocation2], 4032
        %v1776 = vld [vmem:[%s1775] sm:$0xff]
        %v1777 = vld [vmem:[%s1775 + $0x8] sm:$0xff]
        %v1778 = vld [vmem:[%s1775 + $0x10] sm:$0xff]
        %v1779 = vld [vmem:[%s1775 + $0x18] sm:$0xff]
        %v1780 = vld [vmem:[%s1775 + $0x20] sm:$0xff]
        %v1781 = vld [vmem:[%s1775 + $0x28] sm:$0xff]
        %v1782 = vld [vmem:[%s1775 + $0x30] sm:$0xff]
        %v1783 = vld [vmem:[%s1775 + $0x38] sm:$0xff]
        %v1784 = vld [vmem:[%s1775 + $0x40] sm:$0xff]
        %v1785 = vld [vmem:[%s1775 + $0x48] sm:$0xff]
        %v1786 = vld [vmem:[%s1775 + $0x50] sm:$0xff]
        %v1787 = vld [vmem:[%s1775 + $0x58] sm:$0xff]
        %v1788 = vld [vmem:[%s1775 + $0x60] sm:$0xff]
        %v1789 = vld [vmem:[%s1775 + $0x68] sm:$0xff]
        %v1790 = vld [vmem:[%s1775 + $0x70] sm:$0xff]
        %v1791 = vld [vmem:[%s1775 + $0x78] sm:$0xff]
        %v1792 = vld [vmem:[%s1775 + $0x80] sm:$0xff]
        %v1793 = vld [vmem:[%s1775 + $0x88] sm:$0xff]
        %v1794 = vld [vmem:[%s1775 + $0x90] sm:$0xff]
        %v1795 = vld [vmem:[%s1775 + $0x98] sm:$0xff]
        %v1796 = vld [vmem:[%s1775 + $0xa0] sm:$0xff]
        %v1797 = vld [vmem:[%s1775 + $0xa8] sm:$0xff]
        %v1798 = vld [vmem:[%s1775 + $0xb0] sm:$0xff]
        %v1799 = vld [vmem:[%s1775 + $0xb8] sm:$0xff]
        %v1800 = vld [vmem:[%s1775 + $0xc0] sm:$0xff]
        %v1801 = vld [vmem:[%s1775 + $0xc8] sm:$0xff]
        %v1802 = vld [vmem:[%s1775 + $0xd0] sm:$0xff]
        %v1803 = vld [vmem:[%s1775 + $0xd8] sm:$0xff]
        %v1804 = vld [vmem:[%s1775 + $0xe0] sm:$0xff]
        %v1805 = vld [vmem:[%s1775 + $0xe8] sm:$0xff]
        %v1806 = vld [vmem:[%s1775 + $0xf0] sm:$0xff]
        %v1807 = vld [vmem:[%s1775 + $0xf8] sm:$0xff]
        %v1808 = vld [vmem:[%s1775 + $0x100] sm:$0xff]
        %v1809 = vld [vmem:[%s1775 + $0x108] sm:$0xff]
        %v1810 = vld [vmem:[%s1775 + $0x110] sm:$0xff]
        %v1811 = vld [vmem:[%s1775 + $0x118] sm:$0xff]
        %v1812 = vld [vmem:[%s1775 + $0x120] sm:$0xff]
        %v1813 = vld [vmem:[%s1775 + $0x128] sm:$0xff]
        %v1814 = vld [vmem:[%s1775 + $0x130] sm:$0xff]
        %v1815 = vld [vmem:[%s1775 + $0x138] sm:$0xff]
        %v1816 = vld [vmem:[%s1775 + $0x140] sm:$0xff]
        %v1817 = vld [vmem:[%s1775 + $0x148] sm:$0xff]
        %v1818 = vld [vmem:[%s1775 + $0x150] sm:$0xff]
        %v1819 = vld [vmem:[%s1775 + $0x158] sm:$0xff]
        %v1820 = vld [vmem:[%s1775 + $0x160] sm:$0xff]
        %v1821 = vld [vmem:[%s1775 + $0x168] sm:$0xff]
        %v1822 = vld [vmem:[%s1775 + $0x170] sm:$0xff]
        %v1823 = vld [vmem:[%s1775 + $0x178] sm:$0xff]
        %v1824 = vld [vmem:[%s1775 + $0x180] sm:$0xff]
        %v1825 = vld [vmem:[%s1775 + $0x188] sm:$0xff]
        %v1826 = vld [vmem:[%s1775 + $0x190] sm:$0xff]
        %v1827 = vld [vmem:[%s1775 + $0x198] sm:$0xff]
        %v1828 = vld [vmem:[%s1775 + $0x1a0] sm:$0xff]
        %v1829 = vld [vmem:[%s1775 + $0x1a8] sm:$0xff]
        %v1830 = vld [vmem:[%s1775 + $0x1b0] sm:$0xff]
        %v1831 = vld [vmem:[%s1775 + $0x1b8] sm:$0xff]
        %v1832 = vld [vmem:[%s1775 + $0x1c0] sm:$0xff]
        %v1833 = vld [vmem:[%s1775 + $0x1c8] sm:$0xff]
        %v1834 = vld [vmem:[%s1775 + $0x1d0] sm:$0xff]
        %v1835 = vld [vmem:[%s1775 + $0x1d8] sm:$0xff]
        %v1836 = vld [vmem:[%s1775 + $0x1e0] sm:$0xff]
        %v1837 = vld [vmem:[%s1775 + $0x1e8] sm:$0xff]
        %v1838 = vld [vmem:[%s1775 + $0x1f0] sm:$0xff]
        %v1839 = vld [vmem:[%s1775 + $0x1f8] sm:$0xff]
        %v1840 = vld [vmem:[%s1775 + $0x200] sm:$0xff]
        %v1841 = vld [vmem:[%s1775 + $0x208] sm:$0xff]
        %v1842 = vld [vmem:[%s1775 + $0x210] sm:$0xff]
        %v1843 = vld [vmem:[%s1775 + $0x218] sm:$0xff]
        %v1844 = vld [vmem:[%s1775 + $0x220] sm:$0xff]
        %v1845 = vld [vmem:[%s1775 + $0x228] sm:$0xff]
        %v1846 = vld [vmem:[%s1775 + $0x230] sm:$0xff]
        %v1847 = vld [vmem:[%s1775 + $0x238] sm:$0xff]
        %1848 = vmatprep.subr.mxu0 %v1704
        %1849 = vmatpush1.msra.mxu0 %v1703
        %1850 = vmatprep.subr.mxu0 %v1706
        %1851 = vmatpush1.msra.mxu0 %v1705
        %1852 = vmatprep.subr.mxu0 %v1708
        %1853 = vmatpush1.msra.mxu0 %v1707
        %1854 = vmatprep.subr.mxu0 %v1710
        %1855 = vmatpush1.msra.mxu0 %v1709
        %1856 = vmatprep.subr.mxu0 %v1712
        %1857 = vmatpush1.msra.mxu0 %v1711
        %1858 = vmatprep.subr.mxu0 %v1714
        %1859 = vmatpush1.msra.mxu0 %v1713
        %1860 = vmatprep.subr.mxu0 %v1716
        %1861 = vmatpush1.msra.mxu0 %v1715
        %1862 = vmatprep.subr.mxu0 %v1718
        %1863 = vmatpush1.msra.mxu0 %v1717
        %1864 = vmatprep.subr.mxu0 %v1720
        %1865 = vmatpush1.msra.mxu0 %v1719
        %1866 = vmatprep.subr.mxu0 %v1722
        %1867 = vmatpush1.msra.mxu0 %v1721
        %1868 = vmatprep.subr.mxu0 %v1724
        %1869 = vmatpush1.msra.mxu0 %v1723
        %1870 = vmatprep.subr.mxu0 %v1726
        %1871 = vmatpush1.msra.mxu0 %v1725
        %1872 = vmatprep.subr.mxu0 %v1728
        %1873 = vmatpush1.msra.mxu0 %v1727
        %1874 = vmatprep.subr.mxu0 %v1730
        %1875 = vmatpush1.msra.mxu0 %v1729
        %1876 = vmatprep.subr.mxu0 %v1732
        %1877 = vmatpush1.msra.mxu0 %v1731
        %1878 = vmatprep.subr.mxu0 %v1734
        %1879 = vmatpush1.msra.mxu0 %v1733
        %1880 = vmatprep.subr.mxu0 %v1736
        %1881 = vmatpush1.msra.mxu0 %v1735
        %1882 = vmatprep.subr.mxu0 %v1738
        %1883 = vmatpush1.msra.mxu0 %v1737
        %1884 = vmatprep.subr.mxu0 %v1740
        %1885 = vmatpush1.msra.mxu0 %v1739
        %1886 = vmatprep.subr.mxu0 %v1742
        %1887 = vmatpush1.msra.mxu0 %v1741
        %1888 = vmatprep.subr.mxu0 %v1744
        %1889 = vmatpush1.msra.mxu0 %v1743
        %1890 = vmatprep.subr.mxu0 %v1746
        %1891 = vmatpush1.msra.mxu0 %v1745
        %1892 = vmatprep.subr.mxu0 %v1748
        %1893 = vmatpush1.msra.mxu0 %v1747
        %1894 = vmatprep.subr.mxu0 %v1750
        %1895 = vmatpush1.msra.mxu0 %v1749
        %1896 = vmatprep.subr.mxu0 %v1752
        %1897 = vmatpush1.msra.mxu0 %v1751
        %1898 = vmatprep.subr.mxu0 %v1754
        %1899 = vmatpush1.msra.mxu0 %v1753
        %1900 = vmatprep.subr.mxu0 %v1756
        %1901 = vmatpush1.msra.mxu0 %v1755
        %1902 = vmatprep.subr.mxu0 %v1758
        %1903 = vmatpush1.msra.mxu0 %v1757
        %1904 = vmatprep.subr.mxu0 %v1760
        %1905 = vmatpush1.msra.mxu0 %v1759
        %1906 = vmatprep.subr.mxu0 %v1762
        %1907 = vmatpush1.msra.mxu0 %v1761
        %1908 = vmatprep.subr.mxu0 %v1764
        %1909 = vmatpush1.msra.mxu0 %v1763
        %1910 = vmatprep.subr.mxu0 %v1766
        %1911 = vmatpush1.msra.mxu0 %v1765
        %1912 = vmatprep.mubr.f32.mxu0 %v1125
        %1913 = vmatmul.mubr.f32.gmra.mrb[0].mxu0 %v1124
        %v1914 = vpop.f32.mrb[0].mxu0
        %v1915 = vadd.f32 0.0, %v1914
        %v1916 = vpop.f32.mrb[0].mxu0
        %v1917 = vadd.f32 0.0, %v1916
        %1918 = vdwg.mxu0
        %1919 = vmatprep.subr.mxu0 %v1768
        %1920 = vmatpush1.msra.mxu0 %v1767
        %1921 = vmatprep.subr.mxu0 %v1770
        %1922 = vmatpush1.msra.mxu0 %v1769
        %1923 = vmatprep.subr.mxu0 %v1772
        %1924 = vmatpush1.msra.mxu0 %v1771
        %1925 = vmatprep.subr.mxu0 %v1774
        %1926 = vmatpush1.msra.mxu0 %v1773
        %1927 = vmatprep.subr.mxu0 0.0
        %1928 = vmatpush1.msra.mxu0 0.0
        %1929 = vmatprep.subr.mxu0 0.0
        %1930 = vmatpush1.msra.mxu0 0.0
        %1931 = vmatprep.subr.mxu0 0.0
        %1932 = vmatpush1.msra.mxu0 0.0
        %1933 = vmatprep.subr.mxu0 0.0
        %1934 = vmatpush1.msra.mxu0 0.0
        %1935 = vmatprep.subr.mxu0 0.0
        %1936 = vmatpush1.msra.mxu0 0.0
        %1937 = vmatprep.subr.mxu0 0.0
        %1938 = vmatpush1.msra.mxu0 0.0
        %1939 = vmatprep.subr.mxu0 0.0
        %1940 = vmatpush1.msra.mxu0 0.0
        %1941 = vmatprep.subr.mxu0 0.0
        %1942 = vmatpush1.msra.mxu0 0.0
        %1943 = vmatprep.subr.mxu0 0.0
        %1944 = vmatpush1.msra.mxu0 0.0
        %1945 = vmatprep.subr.mxu0 0.0
        %1946 = vmatpush1.msra.mxu0 0.0
        %1947 = vmatprep.subr.mxu0 0.0
        %1948 = vmatpush1.msra.mxu0 0.0
        %1949 = vmatprep.subr.mxu0 0.0
        %1950 = vmatpush1.msra.mxu0 0.0
        %1951 = vmatprep.subr.mxu0 0.0
        %1952 = vmatpush1.msra.mxu0 0.0
        %1953 = vmatprep.subr.mxu0 0.0
        %1954 = vmatpush1.msra.mxu0 0.0
        %1955 = vmatprep.subr.mxu0 0.0
        %1956 = vmatpush1.msra.mxu0 0.0
        %1957 = vmatprep.subr.mxu0 0.0
        %1958 = vmatpush1.msra.mxu0 0.0
        %1959 = vmatprep.subr.mxu0 0.0
        %1960 = vmatpush1.msra.mxu0 0.0
        %1961 = vmatprep.subr.mxu0 0.0
        %1962 = vmatpush1.msra.mxu0 0.0
        %1963 = vmatprep.subr.mxu0 0.0
        %1964 = vmatpush1.msra.mxu0 0.0
        %1965 = vmatprep.subr.mxu0 0.0
        %1966 = vmatpush1.msra.mxu0 0.0
        %1967 = vmatprep.subr.mxu0 0.0
        %1968 = vmatpush1.msra.mxu0 0.0
        %1969 = vmatprep.subr.mxu0 0.0
        %1970 = vmatpush1.msra.mxu0 0.0
        %1971 = vmatprep.subr.mxu0 0.0
        %1972 = vmatpush1.msra.mxu0 0.0
        %1973 = vmatprep.subr.mxu0 0.0
        %1974 = vmatpush1.msra.mxu0 0.0
        %1975 = vmatprep.subr.mxu0 0.0
        %1976 = vmatpush1.msra.mxu0 0.0
        %1977 = vmatprep.subr.mxu0 0.0
        %1978 = vmatpush1.msra.mxu0 0.0
        %1979 = vmatprep.subr.mxu0 0.0
        %1980 = vmatpush1.msra.mxu0 0.0
        %1981 = vmatprep.subr.mxu0 0.0
        %1982 = vmatpush1.msra.mxu0 0.0
        %1983 = vmatprep.mubr.f32.mxu0 0.0
        %1984 = vmatmul.mubr.f32.gmra.mrb[0].mxu0 %v1129
        %v1985 = vpop.f32.mrb[0].mxu0
        %v1986 = vadd.f32 %v1915, %v1985
        %v1987 = vpop.f32.mrb[0].mxu0
        %v1988 = vadd.f32 %v1917, %v1987
        %1989 = vdwg.mxu0
        %v1990 = vadd.f32 %v833, %v1986
        %v1991 = vadd.f32 %v835, %v1988
        %1992 = vmatprep.subr.mxu0 %v1777
        %1993 = vmatpush1.msra.mxu0 %v1776
        %1994 = vmatprep.subr.mxu0 %v1779
        %1995 = vmatpush1.msra.mxu0 %v1778
        %1996 = vmatprep.subr.mxu0 %v1781
        %1997 = vmatpush1.msra.mxu0 %v1780
        %1998 = vmatprep.subr.mxu0 %v1783
        %1999 = vmatpush1.msra.mxu0 %v1782
        %2000 = vmatprep.subr.mxu0 %v1785
        %2001 = vmatpush1.msra.mxu0 %v1784
        %2002 = vmatprep.subr.mxu0 %v1787
        %2003 = vmatpush1.msra.mxu0 %v1786
        %2004 = vmatprep.subr.mxu0 %v1789
        %2005 = vmatpush1.msra.mxu0 %v1788
        %2006 = vmatprep.subr.mxu0 %v1791
        %2007 = vmatpush1.msra.mxu0 %v1790
        %2008 = vmatprep.subr.mxu0 %v1793
        %2009 = vmatpush1.msra.mxu0 %v1792
        %2010 = vmatprep.subr.mxu0 %v1795
        %2011 = vmatpush1.msra.mxu0 %v1794
        %2012 = vmatprep.subr.mxu0 %v1797
        %2013 = vmatpush1.msra.mxu0 %v1796
        %2014 = vmatprep.subr.mxu0 %v1799
        %2015 = vmatpush1.msra.mxu0 %v1798
        %2016 = vmatprep.subr.mxu0 %v1801
        %2017 = vmatpush1.msra.mxu0 %v1800
        %2018 = vmatprep.subr.mxu0 %v1803
        %2019 = vmatpush1.msra.mxu0 %v1802
        %2020 = vmatprep.subr.mxu0 %v1805
        %2021 = vmatpush1.msra.mxu0 %v1804
        %2022 = vmatprep.subr.mxu0 %v1807
        %2023 = vmatpush1.msra.mxu0 %v1806
        %2024 = vmatprep.subr.mxu0 %v1809
        %2025 = vmatpush1.msra.mxu0 %v1808
        %2026 = vmatprep.subr.mxu0 %v1811
        %2027 = vmatpush1.msra.mxu0 %v1810
        %2028 = vmatprep.subr.mxu0 %v1813
        %2029 = vmatpush1.msra.mxu0 %v1812
        %2030 = vmatprep.subr.mxu0 %v1815
        %2031 = vmatpush1.msra.mxu0 %v1814
        %2032 = vmatprep.subr.mxu0 %v1817
        %2033 = vmatpush1.msra.mxu0 %v1816
        %2034 = vmatprep.subr.mxu0 %v1819
        %2035 = vmatpush1.msra.mxu0 %v1818
        %2036 = vmatprep.subr.mxu0 %v1821
        %2037 = vmatpush1.msra.mxu0 %v1820
        %2038 = vmatprep.subr.mxu0 %v1823
        %2039 = vmatpush1.msra.mxu0 %v1822
        %2040 = vmatprep.subr.mxu0 %v1825
        %2041 = vmatpush1.msra.mxu0 %v1824
        %2042 = vmatprep.subr.mxu0 %v1827
        %2043 = vmatpush1.msra.mxu0 %v1826
        %2044 = vmatprep.subr.mxu0 %v1829
        %2045 = vmatpush1.msra.mxu0 %v1828
        %2046 = vmatprep.subr.mxu0 %v1831
        %2047 = vmatpush1.msra.mxu0 %v1830
        %2048 = vmatprep.subr.mxu0 %v1833
        %2049 = vmatpush1.msra.mxu0 %v1832
        %2050 = vmatprep.subr.mxu0 %v1835
        %2051 = vmatpush1.msra.mxu0 %v1834
        %2052 = vmatprep.subr.mxu0 %v1837
        %2053 = vmatpush1.msra.mxu0 %v1836
        %2054 = vmatprep.subr.mxu0 %v1839
        %2055 = vmatpush1.msra.mxu0 %v1838
        %2056 = vmatprep.mubr.f32.mxu0 %v1125
        %2057 = vmatmul.mubr.f32.gmra.mrb[0].mxu0 %v1124
        %v2058 = vpop.f32.mrb[0].mxu0
        %v2059 = vadd.f32 0.0, %v2058
        %v2060 = vpop.f32.mrb[0].mxu0
        %v2061 = vadd.f32 0.0, %v2060
        %2062 = vdwg.mxu0
        %2063 = vmatprep.subr.mxu0 %v1841
        %2064 = vmatpush1.msra.mxu0 %v1840
        %2065 = vmatprep.subr.mxu0 %v1843
        %2066 = vmatpush1.msra.mxu0 %v1842
        %2067 = vmatprep.subr.mxu0 %v1845
        %2068 = vmatpush1.msra.mxu0 %v1844
        %2069 = vmatprep.subr.mxu0 %v1847
        %2070 = vmatpush1.msra.mxu0 %v1846
        %2071 = vmatprep.subr.mxu0 0.0
        %2072 = vmatpush1.msra.mxu0 0.0
        %2073 = vmatprep.subr.mxu0 0.0
        %2074 = vmatpush1.msra.mxu0 0.0
        %2075 = vmatprep.subr.mxu0 0.0
        %2076 = vmatpush1.msra.mxu0 0.0
        %2077 = vmatprep.subr.mxu0 0.0
        %2078 = vmatpush1.msra.mxu0 0.0
        %2079 = vmatprep.subr.mxu0 0.0
        %2080 = vmatpush1.msra.mxu0 0.0
        %2081 = vmatprep.subr.mxu0 0.0
        %2082 = vmatpush1.msra.mxu0 0.0
        %2083 = vmatprep.subr.mxu0 0.0
        %2084 = vmatpush1.msra.mxu0 0.0
        %2085 = vmatprep.subr.mxu0 0.0
        %2086 = vmatpush1.msra.mxu0 0.0
        %2087 = vmatprep.subr.mxu0 0.0
        %2088 = vmatpush1.msra.mxu0 0.0
        %2089 = vmatprep.subr.mxu0 0.0
        %2090 = vmatpush1.msra.mxu0 0.0
        %2091 = vmatprep.subr.mxu0 0.0
        %2092 = vmatpush1.msra.mxu0 0.0
        %2093 = vmatprep.subr.mxu0 0.0
        %2094 = vmatpush1.msra.mxu0 0.0
        %2095 = vmatprep.subr.mxu0 0.0
        %2096 = vmatpush1.msra.mxu0 0.0
        %2097 = vmatprep.subr.mxu0 0.0
        %2098 = vmatpush1.msra.mxu0 0.0
        %2099 = vmatprep.subr.mxu0 0.0
        %2100 = vmatpush1.msra.mxu0 0.0
        %2101 = vmatprep.subr.mxu0 0.0
        %2102 = vmatpush1.msra.mxu0 0.0
        %2103 = vmatprep.subr.mxu0 0.0
        %2104 = vmatpush1.msra.mxu0 0.0
        %2105 = vmatprep.subr.mxu0 0.0
        %2106 = vmatpush1.msra.mxu0 0.0
        %2107 = vmatprep.subr.mxu0 0.0
        %2108 = vmatpush1.msra.mxu0 0.0
        %2109 = vmatprep.subr.mxu0 0.0
        %2110 = vmatpush1.msra.mxu0 0.0
        %2111 = vmatprep.subr.mxu0 0.0
        %2112 = vmatpush1.msra.mxu0 0.0
        %2113 = vmatprep.subr.mxu0 0.0
        %2114 = vmatpush1.msra.mxu0 0.0
        %2115 = vmatprep.subr.mxu0 0.0
        %2116 = vmatpush1.msra.mxu0 0.0
        %2117 = vmatprep.subr.mxu0 0.0
        %2118 = vmatpush1.msra.mxu0 0.0
        %2119 = vmatprep.subr.mxu0 0.0
        %2120 = vmatpush1.msra.mxu0 0.0
        %2121 = vmatprep.subr.mxu0 0.0
        %2122 = vmatpush1.msra.mxu0 0.0
        %2123 = vmatprep.subr.mxu0 0.0
        %2124 = vmatpush1.msra.mxu0 0.0
        %2125 = vmatprep.subr.mxu0 0.0
        %2126 = vmatpush1.msra.mxu0 0.0
        %2127 = vmatprep.mubr.f32.mxu0 0.0
        %2128 = vmatmul.mubr.f32.gmra.mrb[0].mxu0 %v1129
        %v2129 = vpop.f32.mrb[0].mxu0
        %v2130 = vadd.f32 %v2059, %v2129
        %v2131 = vpop.f32.mrb[0].mxu0
        %v2132 = vadd.f32 %v2061, %v2131
        %2133 = vdwg.mxu0
        %v2134 = vadd.f32 %v1117, %v2130
        %v2135 = vadd.f32 %v1119, %v2132
        %v2139 = vrot.slane %v1699, 1
        %v2140 = vrot.slane %v1700, 1
        %v2141 = vrot.slane %v1701, 1
        %v2144 = vsel %vm546, %v2141, 0
        %2146 = vmatprep.subr.mxu0 %v1704
        %2147 = vmatpush1.msra.mxu0 %v1703
        %2148 = vmatprep.subr.mxu0 %v1706
        %2149 = vmatpush1.msra.mxu0 %v1705
        %2150 = vmatprep.subr.mxu0 %v1708
        %2151 = vmatpush1.msra.mxu0 %v1707
        %2152 = vmatprep.subr.mxu0 %v1710
        %2153 = vmatpush1.msra.mxu0 %v1709
        %2154 = vmatprep.subr.mxu0 %v1712
        %2155 = vmatpush1.msra.mxu0 %v1711
        %2156 = vmatprep.subr.mxu0 %v1714
        %2157 = vmatpush1.msra.mxu0 %v1713
        %2158 = vmatprep.subr.mxu0 %v1716
        %2159 = vmatpush1.msra.mxu0 %v1715
        %2160 = vmatprep.subr.mxu0 %v1718
        %2161 = vmatpush1.msra.mxu0 %v1717
        %2162 = vmatprep.subr.mxu0 %v1720
        %2163 = vmatpush1.msra.mxu0 %v1719
        %2164 = vmatprep.subr.mxu0 %v1722
        %2165 = vmatpush1.msra.mxu0 %v1721
        %2166 = vmatprep.subr.mxu0 %v1724
        %2167 = vmatpush1.msra.mxu0 %v1723
        %2168 = vmatprep.subr.mxu0 %v1726
        %2169 = vmatpush1.msra.mxu0 %v1725
        %2170 = vmatprep.subr.mxu0 %v1728
        %2171 = vmatpush1.msra.mxu0 %v1727
        %2172 = vmatprep.subr.mxu0 %v1730
        %2173 = vmatpush1.msra.mxu0 %v1729
        %2174 = vmatprep.subr.mxu0 %v1732
        %2175 = vmatpush1.msra.mxu0 %v1731
        %2176 = vmatprep.subr.mxu0 %v1734
        %2177 = vmatpush1.msra.mxu0 %v1733
        %2178 = vmatprep.subr.mxu0 %v1736
        %2179 = vmatpush1.msra.mxu0 %v1735
        %2180 = vmatprep.subr.mxu0 %v1738
        %2181 = vmatpush1.msra.mxu0 %v1737
        %2182 = vmatprep.subr.mxu0 %v1740
        %2183 = vmatpush1.msra.mxu0 %v1739
        %2184 = vmatprep.subr.mxu0 %v1742
        %2185 = vmatpush1.msra.mxu0 %v1741
        %2186 = vmatprep.subr.mxu0 %v1744
        %2187 = vmatpush1.msra.mxu0 %v1743
        %2188 = vmatprep.subr.mxu0 %v1746
        %2189 = vmatpush1.msra.mxu0 %v1745
        %2190 = vmatprep.subr.mxu0 %v1748
        %2191 = vmatpush1.msra.mxu0 %v1747
        %2192 = vmatprep.subr.mxu0 %v1750
        %2193 = vmatpush1.msra.mxu0 %v1749
        %2194 = vmatprep.subr.mxu0 %v1752
        %2195 = vmatpush1.msra.mxu0 %v1751
        %2196 = vmatprep.subr.mxu0 %v1754
        %2197 = vmatpush1.msra.mxu0 %v1753
        %2198 = vmatprep.subr.mxu0 %v1756
        %2199 = vmatpush1.msra.mxu0 %v1755
        %2200 = vmatprep.subr.mxu0 %v1758
        %2201 = vmatpush1.msra.mxu0 %v1757
        %2202 = vmatprep.subr.mxu0 %v1760
        %2203 = vmatpush1.msra.mxu0 %v1759
        %2204 = vmatprep.subr.mxu0 %v1762
        %2205 = vmatpush1.msra.mxu0 %v1761
        %2206 = vmatprep.subr.mxu0 %v1764
        %2207 = vmatpush1.msra.mxu0 %v1763
        %2208 = vmatprep.subr.mxu0 %v1766
        %2209 = vmatpush1.msra.mxu0 %v1765
        %2210 = vmatprep.mubr.f32.mxu0 %v2140
        %2211 = vmatmul.mubr.f32.gmra.mrb[0].mxu0 %v2139
        %v2212 = vpop.f32.mrb[0].mxu0
        %v2213 = vadd.f32 0.0, %v2212
        %v2214 = vpop.f32.mrb[0].mxu0
        %v2215 = vadd.f32 0.0, %v2214
        %2216 = vdwg.mxu0
        %2217 = vmatprep.subr.mxu0 %v1768
        %2218 = vmatpush1.msra.mxu0 %v1767
        %2219 = vmatprep.subr.mxu0 %v1770
        %2220 = vmatpush1.msra.mxu0 %v1769
        %2221 = vmatprep.subr.mxu0 %v1772
        %2222 = vmatpush1.msra.mxu0 %v1771
        %2223 = vmatprep.subr.mxu0 %v1774
        %2224 = vmatpush1.msra.mxu0 %v1773
        %2225 = vmatprep.subr.mxu0 0.0
        %2226 = vmatpush1.msra.mxu0 0.0
        %2227 = vmatprep.subr.mxu0 0.0
        %2228 = vmatpush1.msra.mxu0 0.0
        %2229 = vmatprep.subr.mxu0 0.0
        %2230 = vmatpush1.msra.mxu0 0.0
        %2231 = vmatprep.subr.mxu0 0.0
        %2232 = vmatpush1.msra.mxu0 0.0
        %2233 = vmatprep.subr.mxu0 0.0
        %2234 = vmatpush1.msra.mxu0 0.0
        %2235 = vmatprep.subr.mxu0 0.0
        %2236 = vmatpush1.msra.mxu0 0.0
        %2237 = vmatprep.subr.mxu0 0.0
        %2238 = vmatpush1.msra.mxu0 0.0
        %2239 = vmatprep.subr.mxu0 0.0
        %2240 = vmatpush1.msra.mxu0 0.0
        %2241 = vmatprep.subr.mxu0 0.0
        %2242 = vmatpush1.msra.mxu0 0.0
        %2243 = vmatprep.subr.mxu0 0.0
        %2244 = vmatpush1.msra.mxu0 0.0
        %2245 = vmatprep.subr.mxu0 0.0
        %2246 = vmatpush1.msra.mxu0 0.0
        %2247 = vmatprep.subr.mxu0 0.0
        %2248 = vmatpush1.msra.mxu0 0.0
        %2249 = vmatprep.subr.mxu0 0.0
        %2250 = vmatpush1.msra.mxu0 0.0
        %2251 = vmatprep.subr.mxu0 0.0
        %2252 = vmatpush1.msra.mxu0 0.0
        %2253 = vmatprep.subr.mxu0 0.0
        %2254 = vmatpush1.msra.mxu0 0.0
        %2255 = vmatprep.subr.mxu0 0.0
        %2256 = vmatpush1.msra.mxu0 0.0
        %2257 = vmatprep.subr.mxu0 0.0
        %2258 = vmatpush1.msra.mxu0 0.0
        %2259 = vmatprep.subr.mxu0 0.0
        %2260 = vmatpush1.msra.mxu0 0.0
        %2261 = vmatprep.subr.mxu0 0.0
        %2262 = vmatpush1.msra.mxu0 0.0
        %2263 = vmatprep.subr.mxu0 0.0
        %2264 = vmatpush1.msra.mxu0 0.0
        %2265 = vmatprep.subr.mxu0 0.0
        %2266 = vmatpush1.msra.mxu0 0.0
        %2267 = vmatprep.subr.mxu0 0.0
        %2268 = vmatpush1.msra.mxu0 0.0
        %2269 = vmatprep.subr.mxu0 0.0
        %2270 = vmatpush1.msra.mxu0 0.0
        %2271 = vmatprep.subr.mxu0 0.0
        %2272 = vmatpush1.msra.mxu0 0.0
        %2273 = vmatprep.subr.mxu0 0.0
        %2274 = vmatpush1.msra.mxu0 0.0
        %2275 = vmatprep.subr.mxu0 0.0
        %2276 = vmatpush1.msra.mxu0 0.0
        %2277 = vmatprep.subr.mxu0 0.0
        %2278 = vmatpush1.msra.mxu0 0.0
        %2279 = vmatprep.subr.mxu0 0.0
        %2280 = vmatpush1.msra.mxu0 0.0
        %2281 = vmatprep.mubr.f32.mxu0 0.0
        %2282 = vmatmul.mubr.f32.gmra.mrb[0].mxu0 %v2144
        %v2283 = vpop.f32.mrb[0].mxu0
        %v2284 = vadd.f32 %v2213, %v2283
        %v2285 = vpop.f32.mrb[0].mxu0
        %v2286 = vadd.f32 %v2215, %v2285
        %2287 = vdwg.mxu0
        %v2288 = vadd.f32 %v1411, %v2284
        %v2289 = vadd.f32 %v1413, %v2286
        %2290 = vmatprep.subr.mxu0 %v1777
        %2291 = vmatpush1.msra.mxu0 %v1776
        %2292 = vmatprep.subr.mxu0 %v1779
        %2293 = vmatpush1.msra.mxu0 %v1778
        %2294 = vmatprep.subr.mxu0 %v1781
        %2295 = vmatpush1.msra.mxu0 %v1780
        %2296 = vmatprep.subr.mxu0 %v1783
        %2297 = vmatpush1.msra.mxu0 %v1782
        %2298 = vmatprep.subr.mxu0 %v1785
        %2299 = vmatpush1.msra.mxu0 %v1784
        %2300 = vmatprep.subr.mxu0 %v1787
        %2301 = vmatpush1.msra.mxu0 %v1786
        %2302 = vmatprep.subr.mxu0 %v1789
        %2303 = vmatpush1.msra.mxu0 %v1788
        %2304 = vmatprep.subr.mxu0 %v1791
        %2305 = vmatpush1.msra.mxu0 %v1790
        %2306 = vmatprep.subr.mxu0 %v1793
        %2307 = vmatpush1.msra.mxu0 %v1792
        %2308 = vmatprep.subr.mxu0 %v1795
        %2309 = vmatpush1.msra.mxu0 %v1794
        %2310 = vmatprep.subr.mxu0 %v1797
        %2311 = vmatpush1.msra.mxu0 %v1796
        %2312 = vmatprep.subr.mxu0 %v1799
        %2313 = vmatpush1.msra.mxu0 %v1798
        %2314 = vmatprep.subr.mxu0 %v1801
        %2315 = vmatpush1.msra.mxu0 %v1800
        %2316 = vmatprep.subr.mxu0 %v1803
        %2317 = vmatpush1.msra.mxu0 %v1802
        %2318 = vmatprep.subr.mxu0 %v1805
        %2319 = vmatpush1.msra.mxu0 %v1804
        %2320 = vmatprep.subr.mxu0 %v1807
        %2321 = vmatpush1.msra.mxu0 %v1806
        %2322 = vmatprep.subr.mxu0 %v1809
        %2323 = vmatpush1.msra.mxu0 %v1808
        %2324 = vmatprep.subr.mxu0 %v1811
        %2325 = vmatpush1.msra.mxu0 %v1810
        %2326 = vmatprep.subr.mxu0 %v1813
        %2327 = vmatpush1.msra.mxu0 %v1812
        %2328 = vmatprep.subr.mxu0 %v1815
        %2329 = vmatpush1.msra.mxu0 %v1814
        %2330 = vmatprep.subr.mxu0 %v1817
        %2331 = vmatpush1.msra.mxu0 %v1816
        %2332 = vmatprep.subr.mxu0 %v1819
        %2333 = vmatpush1.msra.mxu0 %v1818
        %2334 = vmatprep.subr.mxu0 %v1821
        %2335 = vmatpush1.msra.mxu0 %v1820
        %2336 = vmatprep.subr.mxu0 %v1823
        %2337 = vmatpush1.msra.mxu0 %v1822
        %2338 = vmatprep.subr.mxu0 %v1825
        %2339 = vmatpush1.msra.mxu0 %v1824
        %2340 = vmatprep.subr.mxu0 %v1827
        %2341 = vmatpush1.msra.mxu0 %v1826
        %2342 = vmatprep.subr.mxu0 %v1829
        %2343 = vmatpush1.msra.mxu0 %v1828
        %2344 = vmatprep.subr.mxu0 %v1831
        %2345 = vmatpush1.msra.mxu0 %v1830
        %2346 = vmatprep.subr.mxu0 %v1833
        %2347 = vmatpush1.msra.mxu0 %v1832
        %2348 = vmatprep.subr.mxu0 %v1835
        %2349 = vmatpush1.msra.mxu0 %v1834
        %2350 = vmatprep.subr.mxu0 %v1837
        %2351 = vmatpush1.msra.mxu0 %v1836
        %2352 = vmatprep.subr.mxu0 %v1839
        %2353 = vmatpush1.msra.mxu0 %v1838
        %2354 = vmatprep.mubr.f32.mxu0 %v2140
        %2355 = vmatmul.mubr.f32.gmra.mrb[0].mxu0 %v2139
        %v2356 = vpop.f32.mrb[0].mxu0
        %v2357 = vadd.f32 0.0, %v2356
        %v2358 = vpop.f32.mrb[0].mxu0
        %v2359 = vadd.f32 0.0, %v2358
        %2360 = vdwg.mxu0
        %2361 = vmatprep.subr.mxu0 %v1841
        %2362 = vmatpush1.msra.mxu0 %v1840
        %2363 = vmatprep.subr.mxu0 %v1843
        %2364 = vmatpush1.msra.mxu0 %v1842
        %2365 = vmatprep.subr.mxu0 %v1845
        %2366 = vmatpush1.msra.mxu0 %v1844
        %2367 = vmatprep.subr.mxu0 %v1847
        %2368 = vmatpush1.msra.mxu0 %v1846
        %2369 = vmatprep.subr.mxu0 0.0
        %2370 = vmatpush1.msra.mxu0 0.0
        %2371 = vmatprep.subr.mxu0 0.0
        %2372 = vmatpush1.msra.mxu0 0.0
        %2373 = vmatprep.subr.mxu0 0.0
        %2374 = vmatpush1.msra.mxu0 0.0
        %2375 = vmatprep.subr.mxu0 0.0
        %2376 = vmatpush1.msra.mxu0 0.0
        %2377 = vmatprep.subr.mxu0 0.0
        %2378 = vmatpush1.msra.mxu0 0.0
        %2379 = vmatprep.subr.mxu0 0.0
        %2380 = vmatpush1.msra.mxu0 0.0
        %2381 = vmatprep.subr.mxu0 0.0
        %2382 = vmatpush1.msra.mxu0 0.0
        %2383 = vmatprep.subr.mxu0 0.0
        %2384 = vmatpush1.msra.mxu0 0.0
        %2385 = vmatprep.subr.mxu0 0.0
        %2386 = vmatpush1.msra.mxu0 0.0
        %2387 = vmatprep.subr.mxu0 0.0
        %2388 = vmatpush1.msra.mxu0 0.0
        %2389 = vmatprep.subr.mxu0 0.0
        %2390 = vmatpush1.msra.mxu0 0.0
        %2391 = vmatprep.subr.mxu0 0.0
        %2392 = vmatpush1.msra.mxu0 0.0
        %2393 = vmatprep.subr.mxu0 0.0
        %2394 = vmatpush1.msra.mxu0 0.0
        %2395 = vmatprep.subr.mxu0 0.0
        %2396 = vmatpush1.msra.mxu0 0.0
        %2397 = vmatprep.subr.mxu0 0.0
        %2398 = vmatpush1.msra.mxu0 0.0
        %2399 = vmatprep.subr.mxu0 0.0
        %2400 = vmatpush1.msra.mxu0 0.0
        %2401 = vmatprep.subr.mxu0 0.0
        %2402 = vmatpush1.msra.mxu0 0.0
        %2403 = vmatprep.subr.mxu0 0.0
        %2404 = vmatpush1.msra.mxu0 0.0
        %2405 = vmatprep.subr.mxu0 0.0
        %2406 = vmatpush1.msra.mxu0 0.0
        %2407 = vmatprep.subr.mxu0 0.0
        %2408 = vmatpush1.msra.mxu0 0.0
        %2409 = vmatprep.subr.mxu0 0.0
        %2410 = vmatpush1.msra.mxu0 0.0
        %2411 = vmatprep.subr.mxu0 0.0
        %2412 = vmatpush1.msra.mxu0 0.0
        %2413 = vmatprep.subr.mxu0 0.0
        %2414 = vmatpush1.msra.mxu0 0.0
        %2415 = vmatprep.subr.mxu0 0.0
        %2416 = vmatpush1.msra.mxu0 0.0
        %2417 = vmatprep.subr.mxu0 0.0
        %2418 = vmatpush1.msra.mxu0 0.0
        %2419 = vmatprep.subr.mxu0 0.0
        %2420 = vmatpush1.msra.mxu0 0.0
        %2421 = vmatprep.subr.mxu0 0.0
        %2422 = vmatpush1.msra.mxu0 0.0
        %2423 = vmatprep.subr.mxu0 0.0
        %2424 = vmatpush1.msra.mxu0 0.0
        %2425 = vmatprep.mubr.f32.mxu0 0.0
        %2426 = vmatmul.mubr.f32.gmra.mrb[0].mxu0 %v2144
        %v2427 = vpop.f32.mrb[0].mxu0
        %v2428 = vadd.f32 %v2357, %v2427
        %v2429 = vpop.f32.mrb[0].mxu0
        %v2430 = vadd.f32 %v2359, %v2429
        %2431 = vdwg.mxu0
        %v2432 = vadd.f32 %v1695, %v2428
        %v2433 = vadd.f32 %v1697, %v2430
        %v2434 = vld [vmem:[%s235] sm:$0xfc]
        %v2435 = vld [vmem:[%s235 + $0x8] sm:$0xfc]
        %v2436 = vld [vmem:[%s235 + $0x10] sm:$0xfc]
        %v2437 = vld [vmem:[%s235 + $0x18] sm:$0x1]
        %v2438 = vld [vmem:[%s235 + $0x20] sm:$0x1]
        %v2439 = vld [vmem:[%s235 + $0x28] sm:$0x1]
        %s2440 = scalar_lea.vmem [#allocation2], 1728
        %v2441 = vld [vmem:[%s2440] sm:$0xff]
        %v2442 = vld [vmem:[%s2440 + $0x8] sm:$0xff]
        %v2443 = vld [vmem:[%s2440 + $0x10] sm:$0xff]
        %v2444 = vld [vmem:[%s2440 + $0x18] sm:$0xff]
        %v2445 = vld [vmem:[%s2440 + $0x20] sm:$0xff]
        %v2446 = vld [vmem:[%s2440 + $0x28] sm:$0xff]
        %v2447 = vld [vmem:[%s2440 + $0x30] sm:$0xff]
        %v2448 = vld [vmem:[%s2440 + $0x38] sm:$0xff]
        %v2449 = vld [vmem:[%s2440 + $0x40] sm:$0xff]
        %v2450 = vld [vmem:[%s2440 + $0x48] sm:$0xff]
        %v2451 = vld [vmem:[%s2440 + $0x50] sm:$0xff]
        %v2452 = vld [vmem:[%s2440 + $0x58] sm:$0xff]
        %v2453 = vld [vmem:[%s2440 + $0x60] sm:$0xff]
        %v2454 = vld [vmem:[%s2440 + $0x68] sm:$0xff]
        %v2455 = vld [vmem:[%s2440 + $0x70] sm:$0xff]
        %v2456 = vld [vmem:[%s2440 + $0x78] sm:$0xff]
        %v2457 = vld [vmem:[%s2440 + $0x80] sm:$0xff]
        %v2458 = vld [vmem:[%s2440 + $0x88] sm:$0xff]
        %v2459 = vld [vmem:[%s2440 + $0x90] sm:$0xff]
        %v2460 = vld [vmem:[%s2440 + $0x98] sm:$0xff]
        %v2461 = vld [vmem:[%s2440 + $0xa0] sm:$0xff]
        %v2462 = vld [vmem:[%s2440 + $0xa8] sm:$0xff]
        %v2463 = vld [vmem:[%s2440 + $0xb0] sm:$0xff]
        %v2464 = vld [vmem:[%s2440 + $0xb8] sm:$0xff]
        %v2465 = vld [vmem:[%s2440 + $0xc0] sm:$0xff]
        %v2466 = vld [vmem:[%s2440 + $0xc8] sm:$0xff]
        %v2467 = vld [vmem:[%s2440 + $0xd0] sm:$0xff]
        %v2468 = vld [vmem:[%s2440 + $0xd8] sm:$0xff]
        %v2469 = vld [vmem:[%s2440 + $0xe0] sm:$0xff]
        %v2470 = vld [vmem:[%s2440 + $0xe8] sm:$0xff]
        %v2471 = vld [vmem:[%s2440 + $0xf0] sm:$0xff]
        %v2472 = vld [vmem:[%s2440 + $0xf8] sm:$0xff]
        %v2473 = vld [vmem:[%s2440 + $0x100] sm:$0xff]
        %v2474 = vld [vmem:[%s2440 + $0x108] sm:$0xff]
        %v2475 = vld [vmem:[%s2440 + $0x110] sm:$0xff]
        %v2476 = vld [vmem:[%s2440 + $0x118] sm:$0xff]
        %v2477 = vld [vmem:[%s2440 + $0x120] sm:$0xff]
        %v2478 = vld [vmem:[%s2440 + $0x128] sm:$0xff]
        %v2479 = vld [vmem:[%s2440 + $0x130] sm:$0xff]
        %v2480 = vld [vmem:[%s2440 + $0x138] sm:$0xff]
        %v2481 = vld [vmem:[%s2440 + $0x140] sm:$0xff]
        %v2482 = vld [vmem:[%s2440 + $0x148] sm:$0xff]
        %v2483 = vld [vmem:[%s2440 + $0x150] sm:$0xff]
        %v2484 = vld [vmem:[%s2440 + $0x158] sm:$0xff]
        %v2485 = vld [vmem:[%s2440 + $0x160] sm:$0xff]
        %v2486 = vld [vmem:[%s2440 + $0x168] sm:$0xff]
        %v2487 = vld [vmem:[%s2440 + $0x170] sm:$0xff]
        %v2488 = vld [vmem:[%s2440 + $0x178] sm:$0xff]
        %v2489 = vld [vmem:[%s2440 + $0x180] sm:$0xff]
        %v2490 = vld [vmem:[%s2440 + $0x188] sm:$0xff]
        %v2491 = vld [vmem:[%s2440 + $0x190] sm:$0xff]
        %v2492 = vld [vmem:[%s2440 + $0x198] sm:$0xff]
        %v2493 = vld [vmem:[%s2440 + $0x1a0] sm:$0xff]
        %v2494 = vld [vmem:[%s2440 + $0x1a8] sm:$0xff]
        %v2495 = vld [vmem:[%s2440 + $0x1b0] sm:$0xff]
        %v2496 = vld [vmem:[%s2440 + $0x1b8] sm:$0xff]
        %v2497 = vld [vmem:[%s2440 + $0x1c0] sm:$0xff]
        %v2498 = vld [vmem:[%s2440 + $0x1c8] sm:$0xff]
        %v2499 = vld [vmem:[%s2440 + $0x1d0] sm:$0xff]
        %v2500 = vld [vmem:[%s2440 + $0x1d8] sm:$0xff]
        %v2501 = vld [vmem:[%s2440 + $0x1e0] sm:$0xff]
        %v2502 = vld [vmem:[%s2440 + $0x1e8] sm:$0xff]
        %v2503 = vld [vmem:[%s2440 + $0x1f0] sm:$0xff]
        %v2504 = vld [vmem:[%s2440 + $0x1f8] sm:$0xff]
        %v2505 = vld [vmem:[%s2440 + $0x200] sm:$0xff]
        %v2506 = vld [vmem:[%s2440 + $0x208] sm:$0xff]
        %v2507 = vld [vmem:[%s2440 + $0x210] sm:$0xff]
        %v2508 = vld [vmem:[%s2440 + $0x218] sm:$0xff]
        %v2509 = vld [vmem:[%s2440 + $0x220] sm:$0xff]
        %v2510 = vld [vmem:[%s2440 + $0x228] sm:$0xff]
        %v2511 = vld [vmem:[%s2440 + $0x230] sm:$0xff]
        %v2512 = vld [vmem:[%s2440 + $0x238] sm:$0xff]
        %s2513 = scalar_lea.vmem [#allocation2], 4608
        %v2514 = vld [vmem:[%s2513] sm:$0xff]
        %v2515 = vld [vmem:[%s2513 + $0x8] sm:$0xff]
        %v2516 = vld [vmem:[%s2513 + $0x10] sm:$0xff]
        %v2517 = vld [vmem:[%s2513 + $0x18] sm:$0xff]
        %v2518 = vld [vmem:[%s2513 + $0x20] sm:$0xff]
        %v2519 = vld [vmem:[%s2513 + $0x28] sm:$0xff]
        %v2520 = vld [vmem:[%s2513 + $0x30] sm:$0xff]
        %v2521 = vld [vmem:[%s2513 + $0x38] sm:$0xff]
        %v2522 = vld [vmem:[%s2513 + $0x40] sm:$0xff]
        %v2523 = vld [vmem:[%s2513 + $0x48] sm:$0xff]
        %v2524 = vld [vmem:[%s2513 + $0x50] sm:$0xff]
        %v2525 = vld [vmem:[%s2513 + $0x58] sm:$0xff]
        %v2526 = vld [vmem:[%s2513 + $0x60] sm:$0xff]
        %v2527 = vld [vmem:[%s2513 + $0x68] sm:$0xff]
        %v2528 = vld [vmem:[%s2513 + $0x70] sm:$0xff]
        %v2529 = vld [vmem:[%s2513 + $0x78] sm:$0xff]
        %v2530 = vld [vmem:[%s2513 + $0x80] sm:$0xff]
        %v2531 = vld [vmem:[%s2513 + $0x88] sm:$0xff]
        %v2532 = vld [vmem:[%s2513 + $0x90] sm:$0xff]
        %v2533 = vld [vmem:[%s2513 + $0x98] sm:$0xff]
        %v2534 = vld [vmem:[%s2513 + $0xa0] sm:$0xff]
        %v2535 = vld [vmem:[%s2513 + $0xa8] sm:$0xff]
        %v2536 = vld [vmem:[%s2513 + $0xb0] sm:$0xff]
        %v2537 = vld [vmem:[%s2513 + $0xb8] sm:$0xff]
        %v2538 = vld [vmem:[%s2513 + $0xc0] sm:$0xff]
        %v2539 = vld [vmem:[%s2513 + $0xc8] sm:$0xff]
        %v2540 = vld [vmem:[%s2513 + $0xd0] sm:$0xff]
        %v2541 = vld [vmem:[%s2513 + $0xd8] sm:$0xff]
        %v2542 = vld [vmem:[%s2513 + $0xe0] sm:$0xff]
        %v2543 = vld [vmem:[%s2513 + $0xe8] sm:$0xff]
        %v2544 = vld [vmem:[%s2513 + $0xf0] sm:$0xff]
        %v2545 = vld [vmem:[%s2513 + $0xf8] sm:$0xff]
        %v2546 = vld [vmem:[%s2513 + $0x100] sm:$0xff]
        %v2547 = vld [vmem:[%s2513 + $0x108] sm:$0xff]
        %v2548 = vld [vmem:[%s2513 + $0x110] sm:$0xff]
        %v2549 = vld [vmem:[%s2513 + $0x118] sm:$0xff]
        %v2550 = vld [vmem:[%s2513 + $0x120] sm:$0xff]
        %v2551 = vld [vmem:[%s2513 + $0x128] sm:$0xff]
        %v2552 = vld [vmem:[%s2513 + $0x130] sm:$0xff]
        %v2553 = vld [vmem:[%s2513 + $0x138] sm:$0xff]
        %v2554 = vld [vmem:[%s2513 + $0x140] sm:$0xff]
        %v2555 = vld [vmem:[%s2513 + $0x148] sm:$0xff]
        %v2556 = vld [vmem:[%s2513 + $0x150] sm:$0xff]
        %v2557 = vld [vmem:[%s2513 + $0x158] sm:$0xff]
        %v2558 = vld [vmem:[%s2513 + $0x160] sm:$0xff]
        %v2559 = vld [vmem:[%s2513 + $0x168] sm:$0xff]
        %v2560 = vld [vmem:[%s2513 + $0x170] sm:$0xff]
        %v2561 = vld [vmem:[%s2513 + $0x178] sm:$0xff]
        %v2562 = vld [vmem:[%s2513 + $0x180] sm:$0xff]
        %v2563 = vld [vmem:[%s2513 + $0x188] sm:$0xff]
        %v2564 = vld [vmem:[%s2513 + $0x190] sm:$0xff]
        %v2565 = vld [vmem:[%s2513 + $0x198] sm:$0xff]
        %v2566 = vld [vmem:[%s2513 + $0x1a0] sm:$0xff]
        %v2567 = vld [vmem:[%s2513 + $0x1a8] sm:$0xff]
        %v2568 = vld [vmem:[%s2513 + $0x1b0] sm:$0xff]
        %v2569 = vld [vmem:[%s2513 + $0x1b8] sm:$0xff]
        %v2570 = vld [vmem:[%s2513 + $0x1c0] sm:$0xff]
        %v2571 = vld [vmem:[%s2513 + $0x1c8] sm:$0xff]
        %v2572 = vld [vmem:[%s2513 + $0x1d0] sm:$0xff]
        %v2573 = vld [vmem:[%s2513 + $0x1d8] sm:$0xff]
        %v2574 = vld [vmem:[%s2513 + $0x1e0] sm:$0xff]
        %v2575 = vld [vmem:[%s2513 + $0x1e8] sm:$0xff]
        %v2576 = vld [vmem:[%s2513 + $0x1f0] sm:$0xff]
        %v2577 = vld [vmem:[%s2513 + $0x1f8] sm:$0xff]
        %v2578 = vld [vmem:[%s2513 + $0x200] sm:$0xff]
        %v2579 = vld [vmem:[%s2513 + $0x208] sm:$0xff]
        %v2580 = vld [vmem:[%s2513 + $0x210] sm:$0xff]
        %v2581 = vld [vmem:[%s2513 + $0x218] sm:$0xff]
        %v2582 = vld [vmem:[%s2513 + $0x220] sm:$0xff]
        %v2583 = vld [vmem:[%s2513 + $0x228] sm:$0xff]
        %v2584 = vld [vmem:[%s2513 + $0x230] sm:$0xff]
        %v2585 = vld [vmem:[%s2513 + $0x238] sm:$0xff]
        %2586 = vmatprep.subr.mxu0 %v2442
        %2587 = vmatpush1.msra.mxu0 %v2441
        %2588 = vmatprep.subr.mxu0 %v2444
        %2589 = vmatpush1.msra.mxu0 %v2443
        %2590 = vmatprep.subr.mxu0 %v2446
        %2591 = vmatpush1.msra.mxu0 %v2445
        %2592 = vmatprep.subr.mxu0 %v2448
        %2593 = vmatpush1.msra.mxu0 %v2447
        %2594 = vmatprep.subr.mxu0 %v2450
        %2595 = vmatpush1.msra.mxu0 %v2449
        %2596 = vmatprep.subr.mxu0 %v2452
        %2597 = vmatpush1.msra.mxu0 %v2451
        %2598 = vmatprep.subr.mxu0 %v2454
        %2599 = vmatpush1.msra.mxu0 %v2453
        %2600 = vmatprep.subr.mxu0 %v2456
        %2601 = vmatpush1.msra.mxu0 %v2455
        %2602 = vmatprep.subr.mxu0 %v2458
        %2603 = vmatpush1.msra.mxu0 %v2457
        %2604 = vmatprep.subr.mxu0 %v2460
        %2605 = vmatpush1.msra.mxu0 %v2459
        %2606 = vmatprep.subr.mxu0 %v2462
        %2607 = vmatpush1.msra.mxu0 %v2461
        %2608 = vmatprep.subr.mxu0 %v2464
        %2609 = vmatpush1.msra.mxu0 %v2463
        %2610 = vmatprep.subr.mxu0 %v2466
        %2611 = vmatpush1.msra.mxu0 %v2465
        %2612 = vmatprep.subr.mxu0 %v2468
        %2613 = vmatpush1.msra.mxu0 %v2467
        %2614 = vmatprep.subr.mxu0 %v2470
        %2615 = vmatpush1.msra.mxu0 %v2469
        %2616 = vmatprep.subr.mxu0 %v2472
        %2617 = vmatpush1.msra.mxu0 %v2471
        %2618 = vmatprep.subr.mxu0 %v2474
        %2619 = vmatpush1.msra.mxu0 %v2473
        %2620 = vmatprep.subr.mxu0 %v2476
        %2621 = vmatpush1.msra.mxu0 %v2475
        %2622 = vmatprep.subr.mxu0 %v2478
        %2623 = vmatpush1.msra.mxu0 %v2477
        %2624 = vmatprep.subr.mxu0 %v2480
        %2625 = vmatpush1.msra.mxu0 %v2479
        %2626 = vmatprep.subr.mxu0 %v2482
        %2627 = vmatpush1.msra.mxu0 %v2481
        %2628 = vmatprep.subr.mxu0 %v2484
        %2629 = vmatpush1.msra.mxu0 %v2483
        %2630 = vmatprep.subr.mxu0 %v2486
        %2631 = vmatpush1.msra.mxu0 %v2485
        %2632 = vmatprep.subr.mxu0 %v2488
        %2633 = vmatpush1.msra.mxu0 %v2487
        %2634 = vmatprep.subr.mxu0 %v2490
        %2635 = vmatpush1.msra.mxu0 %v2489
        %2636 = vmatprep.subr.mxu0 %v2492
        %2637 = vmatpush1.msra.mxu0 %v2491
        %2638 = vmatprep.subr.mxu0 %v2494
        %2639 = vmatpush1.msra.mxu0 %v2493
        %2640 = vmatprep.subr.mxu0 %v2496
        %2641 = vmatpush1.msra.mxu0 %v2495
        %2642 = vmatprep.subr.mxu0 %v2498
        %2643 = vmatpush1.msra.mxu0 %v2497
        %2644 = vmatprep.subr.mxu0 %v2500
        %2645 = vmatpush1.msra.mxu0 %v2499
        %2646 = vmatprep.subr.mxu0 %v2502
        %2647 = vmatpush1.msra.mxu0 %v2501
        %2648 = vmatprep.subr.mxu0 %v2504
        %2649 = vmatpush1.msra.mxu0 %v2503
        %2650 = vmatprep.mubr.f32.mxu0 %v2140
        %2651 = vmatmul.mubr.f32.gmra.mrb[0].mxu0 %v2139
        %v2652 = vpop.f32.mrb[0].mxu0
        %v2653 = vadd.f32 0.0, %v2652
        %v2654 = vpop.f32.mrb[0].mxu0
        %v2655 = vadd.f32 0.0, %v2654
        %2656 = vdwg.mxu0
        %2657 = vmatprep.subr.mxu0 %v2506
        %2658 = vmatpush1.msra.mxu0 %v2505
        %2659 = vmatprep.subr.mxu0 %v2508
        %2660 = vmatpush1.msra.mxu0 %v2507
        %2661 = vmatprep.subr.mxu0 %v2510
        %2662 = vmatpush1.msra.mxu0 %v2509
        %2663 = vmatprep.subr.mxu0 %v2512
        %2664 = vmatpush1.msra.mxu0 %v2511
        %2665 = vmatprep.subr.mxu0 0.0
        %2666 = vmatpush1.msra.mxu0 0.0
        %2667 = vmatprep.subr.mxu0 0.0
        %2668 = vmatpush1.msra.mxu0 0.0
        %2669 = vmatprep.subr.mxu0 0.0
        %2670 = vmatpush1.msra.mxu0 0.0
        %2671 = vmatprep.subr.mxu0 0.0
        %2672 = vmatpush1.msra.mxu0 0.0
        %2673 = vmatprep.subr.mxu0 0.0
        %2674 = vmatpush1.msra.mxu0 0.0
        %2675 = vmatprep.subr.mxu0 0.0
        %2676 = vmatpush1.msra.mxu0 0.0
        %2677 = vmatprep.subr.mxu0 0.0
        %2678 = vmatpush1.msra.mxu0 0.0
        %2679 = vmatprep.subr.mxu0 0.0
        %2680 = vmatpush1.msra.mxu0 0.0
        %2681 = vmatprep.subr.mxu0 0.0
        %2682 = vmatpush1.msra.mxu0 0.0
        %2683 = vmatprep.subr.mxu0 0.0
        %2684 = vmatpush1.msra.mxu0 0.0
        %2685 = vmatprep.subr.mxu0 0.0
        %2686 = vmatpush1.msra.mxu0 0.0
        %2687 = vmatprep.subr.mxu0 0.0
        %2688 = vmatpush1.msra.mxu0 0.0
        %2689 = vmatprep.subr.mxu0 0.0
        %2690 = vmatpush1.msra.mxu0 0.0
        %2691 = vmatprep.subr.mxu0 0.0
        %2692 = vmatpush1.msra.mxu0 0.0
        %2693 = vmatprep.subr.mxu0 0.0
        %2694 = vmatpush1.msra.mxu0 0.0
        %2695 = vmatprep.subr.mxu0 0.0
        %2696 = vmatpush1.msra.mxu0 0.0
        %2697 = vmatprep.subr.mxu0 0.0
        %2698 = vmatpush1.msra.mxu0 0.0
        %2699 = vmatprep.subr.mxu0 0.0
        %2700 = vmatpush1.msra.mxu0 0.0
        %2701 = vmatprep.subr.mxu0 0.0
        %2702 = vmatpush1.msra.mxu0 0.0
        %2703 = vmatprep.subr.mxu0 0.0
        %2704 = vmatpush1.msra.mxu0 0.0
        %2705 = vmatprep.subr.mxu0 0.0
        %2706 = vmatpush1.msra.mxu0 0.0
        %2707 = vmatprep.subr.mxu0 0.0
        %2708 = vmatpush1.msra.mxu0 0.0
        %2709 = vmatprep.subr.mxu0 0.0
        %2710 = vmatpush1.msra.mxu0 0.0
        %2711 = vmatprep.subr.mxu0 0.0
        %2712 = vmatpush1.msra.mxu0 0.0
        %2713 = vmatprep.subr.mxu0 0.0
        %2714 = vmatpush1.msra.mxu0 0.0
        %2715 = vmatprep.subr.mxu0 0.0
        %2716 = vmatpush1.msra.mxu0 0.0
        %2717 = vmatprep.subr.mxu0 0.0
        %2718 = vmatpush1.msra.mxu0 0.0
        %2719 = vmatprep.subr.mxu0 0.0
        %2720 = vmatpush1.msra.mxu0 0.0
        %2721 = vmatprep.mubr.f32.mxu0 0.0
        %2722 = vmatmul.mubr.f32.gmra.mrb[0].mxu0 %v2144
        %v2723 = vpop.f32.mrb[0].mxu0
        %v2724 = vadd.f32 %v2653, %v2723
        %v2725 = vpop.f32.mrb[0].mxu0
        %v2726 = vadd.f32 %v2655, %v2725
        %2727 = vdwg.mxu0
        %v2728 = vadd.f32 %v1990, %v2724
        %v2729 = vadd.f32 %v1991, %v2726
        %2730 = vmatprep.subr.mxu0 %v2515
        %2731 = vmatpush1.msra.mxu0 %v2514
        %2732 = vmatprep.subr.mxu0 %v2517
        %2733 = vmatpush1.msra.mxu0 %v2516
        %2734 = vmatprep.subr.mxu0 %v2519
        %2735 = vmatpush1.msra.mxu0 %v2518
        %2736 = vmatprep.subr.mxu0 %v2521
        %2737 = vmatpush1.msra.mxu0 %v2520
        %2738 = vmatprep.subr.mxu0 %v2523
        %2739 = vmatpush1.msra.mxu0 %v2522
        %2740 = vmatprep.subr.mxu0 %v2525
        %2741 = vmatpush1.msra.mxu0 %v2524
        %2742 = vmatprep.subr.mxu0 %v2527
        %2743 = vmatpush1.msra.mxu0 %v2526
        %2744 = vmatprep.subr.mxu0 %v2529
        %2745 = vmatpush1.msra.mxu0 %v2528
        %2746 = vmatprep.subr.mxu0 %v2531
        %2747 = vmatpush1.msra.mxu0 %v2530
        %2748 = vmatprep.subr.mxu0 %v2533
        %2749 = vmatpush1.msra.mxu0 %v2532
        %2750 = vmatprep.subr.mxu0 %v2535
        %2751 = vmatpush1.msra.mxu0 %v2534
        %2752 = vmatprep.subr.mxu0 %v2537
        %2753 = vmatpush1.msra.mxu0 %v2536
        %2754 = vmatprep.subr.mxu0 %v2539
        %2755 = vmatpush1.msra.mxu0 %v2538
        %2756 = vmatprep.subr.mxu0 %v2541
        %2757 = vmatpush1.msra.mxu0 %v2540
        %2758 = vmatprep.subr.mxu0 %v2543
        %2759 = vmatpush1.msra.mxu0 %v2542
        %2760 = vmatprep.subr.mxu0 %v2545
        %2761 = vmatpush1.msra.mxu0 %v2544
        %2762 = vmatprep.subr.mxu0 %v2547
        %2763 = vmatpush1.msra.mxu0 %v2546
        %2764 = vmatprep.subr.mxu0 %v2549
        %2765 = vmatpush1.msra.mxu0 %v2548
        %2766 = vmatprep.subr.mxu0 %v2551
        %2767 = vmatpush1.msra.mxu0 %v2550
        %2768 = vmatprep.subr.mxu0 %v2553
        %2769 = vmatpush1.msra.mxu0 %v2552
        %2770 = vmatprep.subr.mxu0 %v2555
        %2771 = vmatpush1.msra.mxu0 %v2554
        %2772 = vmatprep.subr.mxu0 %v2557
        %2773 = vmatpush1.msra.mxu0 %v2556
        %2774 = vmatprep.subr.mxu0 %v2559
        %2775 = vmatpush1.msra.mxu0 %v2558
        %2776 = vmatprep.subr.mxu0 %v2561
        %2777 = vmatpush1.msra.mxu0 %v2560
        %2778 = vmatprep.subr.mxu0 %v2563
        %2779 = vmatpush1.msra.mxu0 %v2562
        %2780 = vmatprep.subr.mxu0 %v2565
        %2781 = vmatpush1.msra.mxu0 %v2564
        %2782 = vmatprep.subr.mxu0 %v2567
        %2783 = vmatpush1.msra.mxu0 %v2566
        %2784 = vmatprep.subr.mxu0 %v2569
        %2785 = vmatpush1.msra.mxu0 %v2568
        %2786 = vmatprep.subr.mxu0 %v2571
        %2787 = vmatpush1.msra.mxu0 %v2570
        %2788 = vmatprep.subr.mxu0 %v2573
        %2789 = vmatpush1.msra.mxu0 %v2572
        %2790 = vmatprep.subr.mxu0 %v2575
        %2791 = vmatpush1.msra.mxu0 %v2574
        %2792 = vmatprep.subr.mxu0 %v2577
        %2793 = vmatpush1.msra.mxu0 %v2576
        %2794 = vmatprep.mubr.f32.mxu0 %v2140
        %2795 = vmatmul.mubr.f32.gmra.mrb[0].mxu0 %v2139
        %v2796 = vpop.f32.mrb[0].mxu0
        %v2797 = vadd.f32 0.0, %v2796
        %v2798 = vpop.f32.mrb[0].mxu0
        %v2799 = vadd.f32 0.0, %v2798
        %2800 = vdwg.mxu0
        %2801 = vmatprep.subr.mxu0 %v2579
        %2802 = vmatpush1.msra.mxu0 %v2578
        %2803 = vmatprep.subr.mxu0 %v2581
        %2804 = vmatpush1.msra.mxu0 %v2580
        %2805 = vmatprep.subr.mxu0 %v2583
        %2806 = vmatpush1.msra.mxu0 %v2582
        %2807 = vmatprep.subr.mxu0 %v2585
        %2808 = vmatpush1.msra.mxu0 %v2584
        %2809 = vmatprep.subr.mxu0 0.0
        %2810 = vmatpush1.msra.mxu0 0.0
        %2811 = vmatprep.subr.mxu0 0.0
        %2812 = vmatpush1.msra.mxu0 0.0
        %2813 = vmatprep.subr.mxu0 0.0
        %2814 = vmatpush1.msra.mxu0 0.0
        %2815 = vmatprep.subr.mxu0 0.0
        %2816 = vmatpush1.msra.mxu0 0.0
        %2817 = vmatprep.subr.mxu0 0.0
        %2818 = vmatpush1.msra.mxu0 0.0
        %2819 = vmatprep.subr.mxu0 0.0
        %2820 = vmatpush1.msra.mxu0 0.0
        %2821 = vmatprep.subr.mxu0 0.0
        %2822 = vmatpush1.msra.mxu0 0.0
        %2823 = vmatprep.subr.mxu0 0.0
        %2824 = vmatpush1.msra.mxu0 0.0
        %2825 = vmatprep.subr.mxu0 0.0
        %2826 = vmatpush1.msra.mxu0 0.0
        %2827 = vmatprep.subr.mxu0 0.0
        %2828 = vmatpush1.msra.mxu0 0.0
        %2829 = vmatprep.subr.mxu0 0.0
        %2830 = vmatpush1.msra.mxu0 0.0
        %2831 = vmatprep.subr.mxu0 0.0
        %2832 = vmatpush1.msra.mxu0 0.0
        %2833 = vmatprep.subr.mxu0 0.0
        %2834 = vmatpush1.msra.mxu0 0.0
        %2835 = vmatprep.subr.mxu0 0.0
        %2836 = vmatpush1.msra.mxu0 0.0
        %2837 = vmatprep.subr.mxu0 0.0
        %2838 = vmatpush1.msra.mxu0 0.0
        %2839 = vmatprep.subr.mxu0 0.0
        %2840 = vmatpush1.msra.mxu0 0.0
        %2841 = vmatprep.subr.mxu0 0.0
        %2842 = vmatpush1.msra.mxu0 0.0
        %2843 = vmatprep.subr.mxu0 0.0
        %2844 = vmatpush1.msra.mxu0 0.0
        %2845 = vmatprep.subr.mxu0 0.0
        %2846 = vmatpush1.msra.mxu0 0.0
        %2847 = vmatprep.subr.mxu0 0.0
        %2848 = vmatpush1.msra.mxu0 0.0
        %2849 = vmatprep.subr.mxu0 0.0
        %2850 = vmatpush1.msra.mxu0 0.0
        %2851 = vmatprep.subr.mxu0 0.0
        %2852 = vmatpush1.msra.mxu0 0.0
        %2853 = vmatprep.subr.mxu0 0.0
        %2854 = vmatpush1.msra.mxu0 0.0
        %2855 = vmatprep.subr.mxu0 0.0
        %2856 = vmatpush1.msra.mxu0 0.0
        %2857 = vmatprep.subr.mxu0 0.0
        %2858 = vmatpush1.msra.mxu0 0.0
        %2859 = vmatprep.subr.mxu0 0.0
        %2860 = vmatpush1.msra.mxu0 0.0
        %2861 = vmatprep.subr.mxu0 0.0
        %2862 = vmatpush1.msra.mxu0 0.0
        %2863 = vmatprep.subr.mxu0 0.0
        %2864 = vmatpush1.msra.mxu0 0.0
        %2865 = vmatprep.mubr.f32.mxu0 0.0
        %2866 = vmatmul.mubr.f32.gmra.mrb[0].mxu0 %v2144
        %v2867 = vpop.f32.mrb[0].mxu0
        %v2868 = vadd.f32 %v2797, %v2867
        %v2869 = vpop.f32.mrb[0].mxu0
        %v2870 = vadd.f32 %v2799, %v2869
        %2871 = vdwg.mxu0
        %v2872 = vadd.f32 %v2134, %v2868
        %v2873 = vadd.f32 %v2135, %v2870
        %vm2880 = vcmask 1045504
        %v2881 = vrot.slane %v2434, 2
        %v2882 = vrot.slane %v2437, 2
        %v2883 = vsel %vm2880, %v2881, %v2882
        %v2884 = vrot.slane %v2435, 2
        %v2885 = vrot.slane %v2438, 2
        %v2886 = vsel %vm2880, %v2884, %v2885
        %v2887 = vrot.slane %v2436, 2
        %v2888 = vrot.slane %v2439, 2
        %v2889 = vsel %vm2880, %v2887, %v2888
        %v2892 = vsel %vm546, %v2889, 0
        %2894 = vmatprep.subr.mxu0 %v2442
        %2895 = vmatpush1.msra.mxu0 %v2441
        %2896 = vmatprep.subr.mxu0 %v2444
        %2897 = vmatpush1.msra.mxu0 %v2443
        %2898 = vmatprep.subr.mxu0 %v2446
        %2899 = vmatpush1.msra.mxu0 %v2445
        %2900 = vmatprep.subr.mxu0 %v2448
        %2901 = vmatpush1.msra.mxu0 %v2447
        %2902 = vmatprep.subr.mxu0 %v2450
        %2903 = vmatpush1.msra.mxu0 %v2449
        %2904 = vmatprep.subr.mxu0 %v2452
        %2905 = vmatpush1.msra.mxu0 %v2451
        %2906 = vmatprep.subr.mxu0 %v2454
        %2907 = vmatpush1.msra.mxu0 %v2453
        %2908 = vmatprep.subr.mxu0 %v2456
        %2909 = vmatpush1.msra.mxu0 %v2455
        %2910 = vmatprep.subr.mxu0 %v2458
        %2911 = vmatpush1.msra.mxu0 %v2457
        %2912 = vmatprep.subr.mxu0 %v2460
        %2913 = vmatpush1.msra.mxu0 %v2459
        %2914 = vmatprep.subr.mxu0 %v2462
        %2915 = vmatpush1.msra.mxu0 %v2461
        %2916 = vmatprep.subr.mxu0 %v2464
        %2917 = vmatpush1.msra.mxu0 %v2463
        %2918 = vmatprep.subr.mxu0 %v2466
        %2919 = vmatpush1.msra.mxu0 %v2465
        %2920 = vmatprep.subr.mxu0 %v2468
        %2921 = vmatpush1.msra.mxu0 %v2467
        %2922 = vmatprep.subr.mxu0 %v2470
        %2923 = vmatpush1.msra.mxu0 %v2469
        %2924 = vmatprep.subr.mxu0 %v2472
        %2925 = vmatpush1.msra.mxu0 %v2471
        %2926 = vmatprep.subr.mxu0 %v2474
        %2927 = vmatpush1.msra.mxu0 %v2473
        %2928 = vmatprep.subr.mxu0 %v2476
        %2929 = vmatpush1.msra.mxu0 %v2475
        %2930 = vmatprep.subr.mxu0 %v2478
        %2931 = vmatpush1.msra.mxu0 %v2477
        %2932 = vmatprep.subr.mxu0 %v2480
        %2933 = vmatpush1.msra.mxu0 %v2479
        %2934 = vmatprep.subr.mxu0 %v2482
        %2935 = vmatpush1.msra.mxu0 %v2481
        %2936 = vmatprep.subr.mxu0 %v2484
        %2937 = vmatpush1.msra.mxu0 %v2483
        %2938 = vmatprep.subr.mxu0 %v2486
        %2939 = vmatpush1.msra.mxu0 %v2485
        %2940 = vmatprep.subr.mxu0 %v2488
        %2941 = vmatpush1.msra.mxu0 %v2487
        %2942 = vmatprep.subr.mxu0 %v2490
        %2943 = vmatpush1.msra.mxu0 %v2489
        %2944 = vmatprep.subr.mxu0 %v2492
        %2945 = vmatpush1.msra.mxu0 %v2491
        %2946 = vmatprep.subr.mxu0 %v2494
        %2947 = vmatpush1.msra.mxu0 %v2493
        %2948 = vmatprep.subr.mxu0 %v2496
        %2949 = vmatpush1.msra.mxu0 %v2495
        %2950 = vmatprep.subr.mxu0 %v2498
        %2951 = vmatpush1.msra.mxu0 %v2497
        %2952 = vmatprep.subr.mxu0 %v2500
        %2953 = vmatpush1.msra.mxu0 %v2499
        %2954 = vmatprep.subr.mxu0 %v2502
        %2955 = vmatpush1.msra.mxu0 %v2501
        %2956 = vmatprep.subr.mxu0 %v2504
        %2957 = vmatpush1.msra.mxu0 %v2503
        %2958 = vmatprep.mubr.f32.mxu0 %v2886
        %2959 = vmatmul.mubr.f32.gmra.mrb[0].mxu0 %v2883
        %v2960 = vpop.f32.mrb[0].mxu0
        %v2961 = vadd.f32 0.0, %v2960
        %v2962 = vpop.f32.mrb[0].mxu0
        %v2963 = vadd.f32 0.0, %v2962
        %2964 = vdwg.mxu0
        %2965 = vmatprep.subr.mxu0 %v2506
        %2966 = vmatpush1.msra.mxu0 %v2505
        %2967 = vmatprep.subr.mxu0 %v2508
        %2968 = vmatpush1.msra.mxu0 %v2507
        %2969 = vmatprep.subr.mxu0 %v2510
        %2970 = vmatpush1.msra.mxu0 %v2509
        %2971 = vmatprep.subr.mxu0 %v2512
        %2972 = vmatpush1.msra.mxu0 %v2511
        %2973 = vmatprep.subr.mxu0 0.0
        %2974 = vmatpush1.msra.mxu0 0.0
        %2975 = vmatprep.subr.mxu0 0.0
        %2976 = vmatpush1.msra.mxu0 0.0
        %2977 = vmatprep.subr.mxu0 0.0
        %2978 = vmatpush1.msra.mxu0 0.0
        %2979 = vmatprep.subr.mxu0 0.0
        %2980 = vmatpush1.msra.mxu0 0.0
        %2981 = vmatprep.subr.mxu0 0.0
        %2982 = vmatpush1.msra.mxu0 0.0
        %2983 = vmatprep.subr.mxu0 0.0
        %2984 = vmatpush1.msra.mxu0 0.0
        %2985 = vmatprep.subr.mxu0 0.0
        %2986 = vmatpush1.msra.mxu0 0.0
        %2987 = vmatprep.subr.mxu0 0.0
        %2988 = vmatpush1.msra.mxu0 0.0
        %2989 = vmatprep.subr.mxu0 0.0
        %2990 = vmatpush1.msra.mxu0 0.0
        %2991 = vmatprep.subr.mxu0 0.0
        %2992 = vmatpush1.msra.mxu0 0.0
        %2993 = vmatprep.subr.mxu0 0.0
        %2994 = vmatpush1.msra.mxu0 0.0
        %2995 = vmatprep.subr.mxu0 0.0
        %2996 = vmatpush1.msra.mxu0 0.0
        %2997 = vmatprep.subr.mxu0 0.0
        %2998 = vmatpush1.msra.mxu0 0.0
        %2999 = vmatprep.subr.mxu0 0.0
        %3000 = vmatpush1.msra.mxu0 0.0
        %3001 = vmatprep.subr.mxu0 0.0
        %3002 = vmatpush1.msra.mxu0 0.0
        %3003 = vmatprep.subr.mxu0 0.0
        %3004 = vmatpush1.msra.mxu0 0.0
        %3005 = vmatprep.subr.mxu0 0.0
        %3006 = vmatpush1.msra.mxu0 0.0
        %3007 = vmatprep.subr.mxu0 0.0
        %3008 = vmatpush1.msra.mxu0 0.0
        %3009 = vmatprep.subr.mxu0 0.0
        %3010 = vmatpush1.msra.mxu0 0.0
        %3011 = vmatprep.subr.mxu0 0.0
        %3012 = vmatpush1.msra.mxu0 0.0
        %3013 = vmatprep.subr.mxu0 0.0
        %3014 = vmatpush1.msra.mxu0 0.0
        %3015 = vmatprep.subr.mxu0 0.0
        %3016 = vmatpush1.msra.mxu0 0.0
        %3017 = vmatprep.subr.mxu0 0.0
        %3018 = vmatpush1.msra.mxu0 0.0
        %3019 = vmatprep.subr.mxu0 0.0
        %3020 = vmatpush1.msra.mxu0 0.0
        %3021 = vmatprep.subr.mxu0 0.0
        %3022 = vmatpush1.msra.mxu0 0.0
        %3023 = vmatprep.subr.mxu0 0.0
        %3024 = vmatpush1.msra.mxu0 0.0
        %3025 = vmatprep.subr.mxu0 0.0
        %3026 = vmatpush1.msra.mxu0 0.0
        %3027 = vmatprep.subr.mxu0 0.0
        %3028 = vmatpush1.msra.mxu0 0.0
        %3029 = vmatprep.mubr.f32.mxu0 0.0
        %3030 = vmatmul.mubr.f32.gmra.mrb[0].mxu0 %v2892
        %v3031 = vpop.f32.mrb[0].mxu0
        %v3032 = vadd.f32 %v2961, %v3031
        %v3033 = vpop.f32.mrb[0].mxu0
        %v3034 = vadd.f32 %v2963, %v3033
        %3035 = vdwg.mxu0
        %v3036 = vadd.f32 %v2288, %v3032
        %v3037 = vadd.f32 %v2289, %v3034
        %3038 = vmatprep.subr.mxu0 %v2515
        %3039 = vmatpush1.msra.mxu0 %v2514
        %3040 = vmatprep.subr.mxu0 %v2517
        %3041 = vmatpush1.msra.mxu0 %v2516
        %3042 = vmatprep.subr.mxu0 %v2519
        %3043 = vmatpush1.msra.mxu0 %v2518
        %3044 = vmatprep.subr.mxu0 %v2521
        %3045 = vmatpush1.msra.mxu0 %v2520
        %3046 = vmatprep.subr.mxu0 %v2523
        %3047 = vmatpush1.msra.mxu0 %v2522
        %3048 = vmatprep.subr.mxu0 %v2525
        %3049 = vmatpush1.msra.mxu0 %v2524
        %3050 = vmatprep.subr.mxu0 %v2527
        %3051 = vmatpush1.msra.mxu0 %v2526
        %3052 = vmatprep.subr.mxu0 %v2529
        %3053 = vmatpush1.msra.mxu0 %v2528
        %3054 = vmatprep.subr.mxu0 %v2531
        %3055 = vmatpush1.msra.mxu0 %v2530
        %3056 = vmatprep.subr.mxu0 %v2533
        %3057 = vmatpush1.msra.mxu0 %v2532
        %3058 = vmatprep.subr.mxu0 %v2535
        %3059 = vmatpush1.msra.mxu0 %v2534
        %3060 = vmatprep.subr.mxu0 %v2537
        %3061 = vmatpush1.msra.mxu0 %v2536
        %3062 = vmatprep.subr.mxu0 %v2539
        %3063 = vmatpush1.msra.mxu0 %v2538
        %3064 = vmatprep.subr.mxu0 %v2541
        %3065 = vmatpush1.msra.mxu0 %v2540
        %3066 = vmatprep.subr.mxu0 %v2543
        %3067 = vmatpush1.msra.mxu0 %v2542
        %3068 = vmatprep.subr.mxu0 %v2545
        %3069 = vmatpush1.msra.mxu0 %v2544
        %3070 = vmatprep.subr.mxu0 %v2547
        %3071 = vmatpush1.msra.mxu0 %v2546
        %3072 = vmatprep.subr.mxu0 %v2549
        %3073 = vmatpush1.msra.mxu0 %v2548
        %3074 = vmatprep.subr.mxu0 %v2551
        %3075 = vmatpush1.msra.mxu0 %v2550
        %3076 = vmatprep.subr.mxu0 %v2553
        %3077 = vmatpush1.msra.mxu0 %v2552
        %3078 = vmatprep.subr.mxu0 %v2555
        %3079 = vmatpush1.msra.mxu0 %v2554
        %3080 = vmatprep.subr.mxu0 %v2557
        %3081 = vmatpush1.msra.mxu0 %v2556
        %3082 = vmatprep.subr.mxu0 %v2559
        %3083 = vmatpush1.msra.mxu0 %v2558
        %3084 = vmatprep.subr.mxu0 %v2561
        %3085 = vmatpush1.msra.mxu0 %v2560
        %3086 = vmatprep.subr.mxu0 %v2563
        %3087 = vmatpush1.msra.mxu0 %v2562
        %3088 = vmatprep.subr.mxu0 %v2565
        %3089 = vmatpush1.msra.mxu0 %v2564
        %3090 = vmatprep.subr.mxu0 %v2567
        %3091 = vmatpush1.msra.mxu0 %v2566
        %3092 = vmatprep.subr.mxu0 %v2569
        %3093 = vmatpush1.msra.mxu0 %v2568
        %3094 = vmatprep.subr.mxu0 %v2571
        %3095 = vmatpush1.msra.mxu0 %v2570
        %3096 = vmatprep.subr.mxu0 %v2573
        %3097 = vmatpush1.msra.mxu0 %v2572
        %3098 = vmatprep.subr.mxu0 %v2575
        %3099 = vmatpush1.msra.mxu0 %v2574
        %3100 = vmatprep.subr.mxu0 %v2577
        %3101 = vmatpush1.msra.mxu0 %v2576
        %3102 = vmatprep.mubr.f32.mxu0 %v2886
        %3103 = vmatmul.mubr.f32.gmra.mrb[0].mxu0 %v2883
        %v3104 = vpop.f32.mrb[0].mxu0
        %v3105 = vadd.f32 0.0, %v3104
        %v3106 = vpop.f32.mrb[0].mxu0
        %v3107 = vadd.f32 0.0, %v3106
        %3108 = vdwg.mxu0
        %3109 = vmatprep.subr.mxu0 %v2579
        %3110 = vmatpush1.msra.mxu0 %v2578
        %3111 = vmatprep.subr.mxu0 %v2581
        %3112 = vmatpush1.msra.mxu0 %v2580
        %3113 = vmatprep.subr.mxu0 %v2583
        %3114 = vmatpush1.msra.mxu0 %v2582
        %3115 = vmatprep.subr.mxu0 %v2585
        %3116 = vmatpush1.msra.mxu0 %v2584
        %3117 = vmatprep.subr.mxu0 0.0
        %3118 = vmatpush1.msra.mxu0 0.0
        %3119 = vmatprep.subr.mxu0 0.0
        %3120 = vmatpush1.msra.mxu0 0.0
        %3121 = vmatprep.subr.mxu0 0.0
        %3122 = vmatpush1.msra.mxu0 0.0
        %3123 = vmatprep.subr.mxu0 0.0
        %3124 = vmatpush1.msra.mxu0 0.0
        %3125 = vmatprep.subr.mxu0 0.0
        %3126 = vmatpush1.msra.mxu0 0.0
        %3127 = vmatprep.subr.mxu0 0.0
        %3128 = vmatpush1.msra.mxu0 0.0
        %3129 = vmatprep.subr.mxu0 0.0
        %3130 = vmatpush1.msra.mxu0 0.0
        %3131 = vmatprep.subr.mxu0 0.0
        %3132 = vmatpush1.msra.mxu0 0.0
        %3133 = vmatprep.subr.mxu0 0.0
        %3134 = vmatpush1.msra.mxu0 0.0
        %3135 = vmatprep.subr.mxu0 0.0
        %3136 = vmatpush1.msra.mxu0 0.0
        %3137 = vmatprep.subr.mxu0 0.0
        %3138 = vmatpush1.msra.mxu0 0.0
        %3139 = vmatprep.subr.mxu0 0.0
        %3140 = vmatpush1.msra.mxu0 0.0
        %3141 = vmatprep.subr.mxu0 0.0
        %3142 = vmatpush1.msra.mxu0 0.0
        %3143 = vmatprep.subr.mxu0 0.0
        %3144 = vmatpush1.msra.mxu0 0.0
        %3145 = vmatprep.subr.mxu0 0.0
        %3146 = vmatpush1.msra.mxu0 0.0
        %3147 = vmatprep.subr.mxu0 0.0
        %3148 = vmatpush1.msra.mxu0 0.0
        %3149 = vmatprep.subr.mxu0 0.0
        %3150 = vmatpush1.msra.mxu0 0.0
        %3151 = vmatprep.subr.mxu0 0.0
        %3152 = vmatpush1.msra.mxu0 0.0
        %3153 = vmatprep.subr.mxu0 0.0
        %3154 = vmatpush1.msra.mxu0 0.0
        %3155 = vmatprep.subr.mxu0 0.0
        %3156 = vmatpush1.msra.mxu0 0.0
        %3157 = vmatprep.subr.mxu0 0.0
        %3158 = vmatpush1.msra.mxu0 0.0
        %3159 = vmatprep.subr.mxu0 0.0
        %3160 = vmatpush1.msra.mxu0 0.0
        %3161 = vmatprep.subr.mxu0 0.0
        %3162 = vmatpush1.msra.mxu0 0.0
        %3163 = vmatprep.subr.mxu0 0.0
        %3164 = vmatpush1.msra.mxu0 0.0
        %3165 = vmatprep.subr.mxu0 0.0
        %3166 = vmatpush1.msra.mxu0 0.0
        %3167 = vmatprep.subr.mxu0 0.0
        %3168 = vmatpush1.msra.mxu0 0.0
        %3169 = vmatprep.subr.mxu0 0.0
        %3170 = vmatpush1.msra.mxu0 0.0
        %3171 = vmatprep.subr.mxu0 0.0
        %3172 = vmatpush1.msra.mxu0 0.0
        %3173 = vmatprep.mubr.f32.mxu0 0.0
        %3174 = vmatmul.mubr.f32.gmra.mrb[0].mxu0 %v2892
        %v3175 = vpop.f32.mrb[0].mxu0
        %v3176 = vadd.f32 %v3105, %v3175
        %v3177 = vpop.f32.mrb[0].mxu0
        %v3178 = vadd.f32 %v3107, %v3177
        %3179 = vdwg.mxu0
        %v3180 = vadd.f32 %v2432, %v3176
        %v3181 = vadd.f32 %v2433, %v3178
        %v3182 = vld [vmem:[%s240] sm:$0xfc]
        %v3183 = vld [vmem:[%s240 + $0x8] sm:$0xfc]
        %v3184 = vld [vmem:[%s240 + $0x10] sm:$0xfc]
        %v3185 = vld [vmem:[%s240 + $0x18] sm:$0x1]
        %v3186 = vld [vmem:[%s240 + $0x20] sm:$0x1]
        %v3187 = vld [vmem:[%s240 + $0x28] sm:$0x1]
        %s3188 = scalar_lea.vmem [#allocation2], 2304
        %v3189 = vld [vmem:[%s3188] sm:$0xff]
        %v3190 = vld [vmem:[%s3188 + $0x8] sm:$0xff]
        %v3191 = vld [vmem:[%s3188 + $0x10] sm:$0xff]
        %v3192 = vld [vmem:[%s3188 + $0x18] sm:$0xff]
        %v3193 = vld [vmem:[%s3188 + $0x20] sm:$0xff]
        %v3194 = vld [vmem:[%s3188 + $0x28] sm:$0xff]
        %v3195 = vld [vmem:[%s3188 + $0x30] sm:$0xff]
        %v3196 = vld [vmem:[%s3188 + $0x38] sm:$0xff]
        %v3197 = vld [vmem:[%s3188 + $0x40] sm:$0xff]
        %v3198 = vld [vmem:[%s3188 + $0x48] sm:$0xff]
        %v3199 = vld [vmem:[%s3188 + $0x50] sm:$0xff]
        %v3200 = vld [vmem:[%s3188 + $0x58] sm:$0xff]
        %v3201 = vld [vmem:[%s3188 + $0x60] sm:$0xff]
        %v3202 = vld [vmem:[%s3188 + $0x68] sm:$0xff]
        %v3203 = vld [vmem:[%s3188 + $0x70] sm:$0xff]
        %v3204 = vld [vmem:[%s3188 + $0x78] sm:$0xff]
        %v3205 = vld [vmem:[%s3188 + $0x80] sm:$0xff]
        %v3206 = vld [vmem:[%s3188 + $0x88] sm:$0xff]
        %v3207 = vld [vmem:[%s3188 + $0x90] sm:$0xff]
        %v3208 = vld [vmem:[%s3188 + $0x98] sm:$0xff]
        %v3209 = vld [vmem:[%s3188 + $0xa0] sm:$0xff]
        %v3210 = vld [vmem:[%s3188 + $0xa8] sm:$0xff]
        %v3211 = vld [vmem:[%s3188 + $0xb0] sm:$0xff]
        %v3212 = vld [vmem:[%s3188 + $0xb8] sm:$0xff]
        %v3213 = vld [vmem:[%s3188 + $0xc0] sm:$0xff]
        %v3214 = vld [vmem:[%s3188 + $0xc8] sm:$0xff]
        %v3215 = vld [vmem:[%s3188 + $0xd0] sm:$0xff]
        %v3216 = vld [vmem:[%s3188 + $0xd8] sm:$0xff]
        %v3217 = vld [vmem:[%s3188 + $0xe0] sm:$0xff]
        %v3218 = vld [vmem:[%s3188 + $0xe8] sm:$0xff]
        %v3219 = vld [vmem:[%s3188 + $0xf0] sm:$0xff]
        %v3220 = vld [vmem:[%s3188 + $0xf8] sm:$0xff]
        %v3221 = vld [vmem:[%s3188 + $0x100] sm:$0xff]
        %v3222 = vld [vmem:[%s3188 + $0x108] sm:$0xff]
        %v3223 = vld [vmem:[%s3188 + $0x110] sm:$0xff]
        %v3224 = vld [vmem:[%s3188 + $0x118] sm:$0xff]
        %v3225 = vld [vmem:[%s3188 + $0x120] sm:$0xff]
        %v3226 = vld [vmem:[%s3188 + $0x128] sm:$0xff]
        %v3227 = vld [vmem:[%s3188 + $0x130] sm:$0xff]
        %v3228 = vld [vmem:[%s3188 + $0x138] sm:$0xff]
        %v3229 = vld [vmem:[%s3188 + $0x140] sm:$0xff]
        %v3230 = vld [vmem:[%s3188 + $0x148] sm:$0xff]
        %v3231 = vld [vmem:[%s3188 + $0x150] sm:$0xff]
        %v3232 = vld [vmem:[%s3188 + $0x158] sm:$0xff]
        %v3233 = vld [vmem:[%s3188 + $0x160] sm:$0xff]
        %v3234 = vld [vmem:[%s3188 + $0x168] sm:$0xff]
        %v3235 = vld [vmem:[%s3188 + $0x170] sm:$0xff]
        %v3236 = vld [vmem:[%s3188 + $0x178] sm:$0xff]
        %v3237 = vld [vmem:[%s3188 + $0x180] sm:$0xff]
        %v3238 = vld [vmem:[%s3188 + $0x188] sm:$0xff]
        %v3239 = vld [vmem:[%s3188 + $0x190] sm:$0xff]
        %v3240 = vld [vmem:[%s3188 + $0x198] sm:$0xff]
        %v3241 = vld [vmem:[%s3188 + $0x1a0] sm:$0xff]
        %v3242 = vld [vmem:[%s3188 + $0x1a8] sm:$0xff]
        %v3243 = vld [vmem:[%s3188 + $0x1b0] sm:$0xff]
        %v3244 = vld [vmem:[%s3188 + $0x1b8] sm:$0xff]
        %v3245 = vld [vmem:[%s3188 + $0x1c0] sm:$0xff]
        %v3246 = vld [vmem:[%s3188 + $0x1c8] sm:$0xff]
        %v3247 = vld [vmem:[%s3188 + $0x1d0] sm:$0xff]
        %v3248 = vld [vmem:[%s3188 + $0x1d8] sm:$0xff]
        %v3249 = vld [vmem:[%s3188 + $0x1e0] sm:$0xff]
        %v3250 = vld [vmem:[%s3188 + $0x1e8] sm:$0xff]
        %v3251 = vld [vmem:[%s3188 + $0x1f0] sm:$0xff]
        %v3252 = vld [vmem:[%s3188 + $0x1f8] sm:$0xff]
        %v3253 = vld [vmem:[%s3188 + $0x200] sm:$0xff]
        %v3254 = vld [vmem:[%s3188 + $0x208] sm:$0xff]
        %v3255 = vld [vmem:[%s3188 + $0x210] sm:$0xff]
        %v3256 = vld [vmem:[%s3188 + $0x218] sm:$0xff]
        %v3257 = vld [vmem:[%s3188 + $0x220] sm:$0xff]
        %v3258 = vld [vmem:[%s3188 + $0x228] sm:$0xff]
        %v3259 = vld [vmem:[%s3188 + $0x230] sm:$0xff]
        %v3260 = vld [vmem:[%s3188 + $0x238] sm:$0xff]
        %s3261 = scalar_lea.vmem [#allocation2], 5184
        %v3262 = vld [vmem:[%s3261] sm:$0xff]
        %v3263 = vld [vmem:[%s3261 + $0x8] sm:$0xff]
        %v3264 = vld [vmem:[%s3261 + $0x10] sm:$0xff]
        %v3265 = vld [vmem:[%s3261 + $0x18] sm:$0xff]
        %v3266 = vld [vmem:[%s3261 + $0x20] sm:$0xff]
        %v3267 = vld [vmem:[%s3261 + $0x28] sm:$0xff]
        %v3268 = vld [vmem:[%s3261 + $0x30] sm:$0xff]
        %v3269 = vld [vmem:[%s3261 + $0x38] sm:$0xff]
        %v3270 = vld [vmem:[%s3261 + $0x40] sm:$0xff]
        %v3271 = vld [vmem:[%s3261 + $0x48] sm:$0xff]
        %v3272 = vld [vmem:[%s3261 + $0x50] sm:$0xff]
        %v3273 = vld [vmem:[%s3261 + $0x58] sm:$0xff]
        %v3274 = vld [vmem:[%s3261 + $0x60] sm:$0xff]
        %v3275 = vld [vmem:[%s3261 + $0x68] sm:$0xff]
        %v3276 = vld [vmem:[%s3261 + $0x70] sm:$0xff]
        %v3277 = vld [vmem:[%s3261 + $0x78] sm:$0xff]
        %v3278 = vld [vmem:[%s3261 + $0x80] sm:$0xff]
        %v3279 = vld [vmem:[%s3261 + $0x88] sm:$0xff]
        %v3280 = vld [vmem:[%s3261 + $0x90] sm:$0xff]
        %v3281 = vld [vmem:[%s3261 + $0x98] sm:$0xff]
        %v3282 = vld [vmem:[%s3261 + $0xa0] sm:$0xff]
        %v3283 = vld [vmem:[%s3261 + $0xa8] sm:$0xff]
        %v3284 = vld [vmem:[%s3261 + $0xb0] sm:$0xff]
        %v3285 = vld [vmem:[%s3261 + $0xb8] sm:$0xff]
        %v3286 = vld [vmem:[%s3261 + $0xc0] sm:$0xff]
        %v3287 = vld [vmem:[%s3261 + $0xc8] sm:$0xff]
        %v3288 = vld [vmem:[%s3261 + $0xd0] sm:$0xff]
        %v3289 = vld [vmem:[%s3261 + $0xd8] sm:$0xff]
        %v3290 = vld [vmem:[%s3261 + $0xe0] sm:$0xff]
        %v3291 = vld [vmem:[%s3261 + $0xe8] sm:$0xff]
        %v3292 = vld [vmem:[%s3261 + $0xf0] sm:$0xff]
        %v3293 = vld [vmem:[%s3261 + $0xf8] sm:$0xff]
        %v3294 = vld [vmem:[%s3261 + $0x100] sm:$0xff]
        %v3295 = vld [vmem:[%s3261 + $0x108] sm:$0xff]
        %v3296 = vld [vmem:[%s3261 + $0x110] sm:$0xff]
        %v3297 = vld [vmem:[%s3261 + $0x118] sm:$0xff]
        %v3298 = vld [vmem:[%s3261 + $0x120] sm:$0xff]
        %v3299 = vld [vmem:[%s3261 + $0x128] sm:$0xff]
        %v3300 = vld [vmem:[%s3261 + $0x130] sm:$0xff]
        %v3301 = vld [vmem:[%s3261 + $0x138] sm:$0xff]
        %v3302 = vld [vmem:[%s3261 + $0x140] sm:$0xff]
        %v3303 = vld [vmem:[%s3261 + $0x148] sm:$0xff]
        %v3304 = vld [vmem:[%s3261 + $0x150] sm:$0xff]
        %v3305 = vld [vmem:[%s3261 + $0x158] sm:$0xff]
        %v3306 = vld [vmem:[%s3261 + $0x160] sm:$0xff]
        %v3307 = vld [vmem:[%s3261 + $0x168] sm:$0xff]
        %v3308 = vld [vmem:[%s3261 + $0x170] sm:$0xff]
        %v3309 = vld [vmem:[%s3261 + $0x178] sm:$0xff]
        %v3310 = vld [vmem:[%s3261 + $0x180] sm:$0xff]
        %v3311 = vld [vmem:[%s3261 + $0x188] sm:$0xff]
        %v3312 = vld [vmem:[%s3261 + $0x190] sm:$0xff]
        %v3313 = vld [vmem:[%s3261 + $0x198] sm:$0xff]
        %v3314 = vld [vmem:[%s3261 + $0x1a0] sm:$0xff]
        %v3315 = vld [vmem:[%s3261 + $0x1a8] sm:$0xff]
        %v3316 = vld [vmem:[%s3261 + $0x1b0] sm:$0xff]
        %v3317 = vld [vmem:[%s3261 + $0x1b8] sm:$0xff]
        %v3318 = vld [vmem:[%s3261 + $0x1c0] sm:$0xff]
        %v3319 = vld [vmem:[%s3261 + $0x1c8] sm:$0xff]
        %v3320 = vld [vmem:[%s3261 + $0x1d0] sm:$0xff]
        %v3321 = vld [vmem:[%s3261 + $0x1d8] sm:$0xff]
        %v3322 = vld [vmem:[%s3261 + $0x1e0] sm:$0xff]
        %v3323 = vld [vmem:[%s3261 + $0x1e8] sm:$0xff]
        %v3324 = vld [vmem:[%s3261 + $0x1f0] sm:$0xff]
        %v3325 = vld [vmem:[%s3261 + $0x1f8] sm:$0xff]
        %v3326 = vld [vmem:[%s3261 + $0x200] sm:$0xff]
        %v3327 = vld [vmem:[%s3261 + $0x208] sm:$0xff]
        %v3328 = vld [vmem:[%s3261 + $0x210] sm:$0xff]
        %v3329 = vld [vmem:[%s3261 + $0x218] sm:$0xff]
        %v3330 = vld [vmem:[%s3261 + $0x220] sm:$0xff]
        %v3331 = vld [vmem:[%s3261 + $0x228] sm:$0xff]
        %v3332 = vld [vmem:[%s3261 + $0x230] sm:$0xff]
        %v3333 = vld [vmem:[%s3261 + $0x238] sm:$0xff]
        %3334 = vmatprep.subr.mxu0 %v3190
        %3335 = vmatpush1.msra.mxu0 %v3189
        %3336 = vmatprep.subr.mxu0 %v3192
        %3337 = vmatpush1.msra.mxu0 %v3191
        %3338 = vmatprep.subr.mxu0 %v3194
        %3339 = vmatpush1.msra.mxu0 %v3193
        %3340 = vmatprep.subr.mxu0 %v3196
        %3341 = vmatpush1.msra.mxu0 %v3195
        %3342 = vmatprep.subr.mxu0 %v3198
        %3343 = vmatpush1.msra.mxu0 %v3197
        %3344 = vmatprep.subr.mxu0 %v3200
        %3345 = vmatpush1.msra.mxu0 %v3199
        %3346 = vmatprep.subr.mxu0 %v3202
        %3347 = vmatpush1.msra.mxu0 %v3201
        %3348 = vmatprep.subr.mxu0 %v3204
        %3349 = vmatpush1.msra.mxu0 %v3203
        %3350 = vmatprep.subr.mxu0 %v3206
        %3351 = vmatpush1.msra.mxu0 %v3205
        %3352 = vmatprep.subr.mxu0 %v3208
        %3353 = vmatpush1.msra.mxu0 %v3207
        %3354 = vmatprep.subr.mxu0 %v3210
        %3355 = vmatpush1.msra.mxu0 %v3209
        %3356 = vmatprep.subr.mxu0 %v3212
        %3357 = vmatpush1.msra.mxu0 %v3211
        %3358 = vmatprep.subr.mxu0 %v3214
        %3359 = vmatpush1.msra.mxu0 %v3213
        %3360 = vmatprep.subr.mxu0 %v3216
        %3361 = vmatpush1.msra.mxu0 %v3215
        %3362 = vmatprep.subr.mxu0 %v3218
        %3363 = vmatpush1.msra.mxu0 %v3217
        %3364 = vmatprep.subr.mxu0 %v3220
        %3365 = vmatpush1.msra.mxu0 %v3219
        %3366 = vmatprep.subr.mxu0 %v3222
        %3367 = vmatpush1.msra.mxu0 %v3221
        %3368 = vmatprep.subr.mxu0 %v3224
        %3369 = vmatpush1.msra.mxu0 %v3223
        %3370 = vmatprep.subr.mxu0 %v3226
        %3371 = vmatpush1.msra.mxu0 %v3225
        %3372 = vmatprep.subr.mxu0 %v3228
        %3373 = vmatpush1.msra.mxu0 %v3227
        %3374 = vmatprep.subr.mxu0 %v3230
        %3375 = vmatpush1.msra.mxu0 %v3229
        %3376 = vmatprep.subr.mxu0 %v3232
        %3377 = vmatpush1.msra.mxu0 %v3231
        %3378 = vmatprep.subr.mxu0 %v3234
        %3379 = vmatpush1.msra.mxu0 %v3233
        %3380 = vmatprep.subr.mxu0 %v3236
        %3381 = vmatpush1.msra.mxu0 %v3235
        %3382 = vmatprep.subr.mxu0 %v3238
        %3383 = vmatpush1.msra.mxu0 %v3237
        %3384 = vmatprep.subr.mxu0 %v3240
        %3385 = vmatpush1.msra.mxu0 %v3239
        %3386 = vmatprep.subr.mxu0 %v3242
        %3387 = vmatpush1.msra.mxu0 %v3241
        %3388 = vmatprep.subr.mxu0 %v3244
        %3389 = vmatpush1.msra.mxu0 %v3243
        %3390 = vmatprep.subr.mxu0 %v3246
        %3391 = vmatpush1.msra.mxu0 %v3245
        %3392 = vmatprep.subr.mxu0 %v3248
        %3393 = vmatpush1.msra.mxu0 %v3247
        %3394 = vmatprep.subr.mxu0 %v3250
        %3395 = vmatpush1.msra.mxu0 %v3249
        %3396 = vmatprep.subr.mxu0 %v3252
        %3397 = vmatpush1.msra.mxu0 %v3251
        %3398 = vmatprep.mubr.f32.mxu0 %v2886
        %3399 = vmatmul.mubr.f32.gmra.mrb[0].mxu0 %v2883
        %v3400 = vpop.f32.mrb[0].mxu0
        %v3401 = vadd.f32 0.0, %v3400
        %v3402 = vpop.f32.mrb[0].mxu0
        %v3403 = vadd.f32 0.0, %v3402
        %3404 = vdwg.mxu0
        %3405 = vmatprep.subr.mxu0 %v3254
        %3406 = vmatpush1.msra.mxu0 %v3253
        %3407 = vmatprep.subr.mxu0 %v3256
        %3408 = vmatpush1.msra.mxu0 %v3255
        %3409 = vmatprep.subr.mxu0 %v3258
        %3410 = vmatpush1.msra.mxu0 %v3257
        %3411 = vmatprep.subr.mxu0 %v3260
        %3412 = vmatpush1.msra.mxu0 %v3259
        %3413 = vmatprep.subr.mxu0 0.0
        %3414 = vmatpush1.msra.mxu0 0.0
        %3415 = vmatprep.subr.mxu0 0.0
        %3416 = vmatpush1.msra.mxu0 0.0
        %3417 = vmatprep.subr.mxu0 0.0
        %3418 = vmatpush1.msra.mxu0 0.0
        %3419 = vmatprep.subr.mxu0 0.0
        %3420 = vmatpush1.msra.mxu0 0.0
        %3421 = vmatprep.subr.mxu0 0.0
        %3422 = vmatpush1.msra.mxu0 0.0
        %3423 = vmatprep.subr.mxu0 0.0
        %3424 = vmatpush1.msra.mxu0 0.0
        %3425 = vmatprep.subr.mxu0 0.0
        %3426 = vmatpush1.msra.mxu0 0.0
        %3427 = vmatprep.subr.mxu0 0.0
        %3428 = vmatpush1.msra.mxu0 0.0
        %3429 = vmatprep.subr.mxu0 0.0
        %3430 = vmatpush1.msra.mxu0 0.0
        %3431 = vmatprep.subr.mxu0 0.0
        %3432 = vmatpush1.msra.mxu0 0.0
        %3433 = vmatprep.subr.mxu0 0.0
        %3434 = vmatpush1.msra.mxu0 0.0
        %3435 = vmatprep.subr.mxu0 0.0
        %3436 = vmatpush1.msra.mxu0 0.0
        %3437 = vmatprep.subr.mxu0 0.0
        %3438 = vmatpush1.msra.mxu0 0.0
        %3439 = vmatprep.subr.mxu0 0.0
        %3440 = vmatpush1.msra.mxu0 0.0
        %3441 = vmatprep.subr.mxu0 0.0
        %3442 = vmatpush1.msra.mxu0 0.0
        %3443 = vmatprep.subr.mxu0 0.0
        %3444 = vmatpush1.msra.mxu0 0.0
        %3445 = vmatprep.subr.mxu0 0.0
        %3446 = vmatpush1.msra.mxu0 0.0
        %3447 = vmatprep.subr.mxu0 0.0
        %3448 = vmatpush1.msra.mxu0 0.0
        %3449 = vmatprep.subr.mxu0 0.0
        %3450 = vmatpush1.msra.mxu0 0.0
        %3451 = vmatprep.subr.mxu0 0.0
        %3452 = vmatpush1.msra.mxu0 0.0
        %3453 = vmatprep.subr.mxu0 0.0
        %3454 = vmatpush1.msra.mxu0 0.0
        %3455 = vmatprep.subr.mxu0 0.0
        %3456 = vmatpush1.msra.mxu0 0.0
        %3457 = vmatprep.subr.mxu0 0.0
        %3458 = vmatpush1.msra.mxu0 0.0
        %3459 = vmatprep.subr.mxu0 0.0
        %3460 = vmatpush1.msra.mxu0 0.0
        %3461 = vmatprep.subr.mxu0 0.0
        %3462 = vmatpush1.msra.mxu0 0.0
        %3463 = vmatprep.subr.mxu0 0.0
        %3464 = vmatpush1.msra.mxu0 0.0
        %3465 = vmatprep.subr.mxu0 0.0
        %3466 = vmatpush1.msra.mxu0 0.0
        %3467 = vmatprep.subr.mxu0 0.0
        %3468 = vmatpush1.msra.mxu0 0.0
        %3469 = vmatprep.mubr.f32.mxu0 0.0
        %3470 = vmatmul.mubr.f32.gmra.mrb[0].mxu0 %v2892
        %v3471 = vpop.f32.mrb[0].mxu0
        %v3472 = vadd.f32 %v3401, %v3471
        %v3473 = vpop.f32.mrb[0].mxu0
        %v3474 = vadd.f32 %v3403, %v3473
        %3475 = vdwg.mxu0
        %v3476 = vadd.f32 %v2728, %v3472
        %v3477 = vadd.f32 %v2729, %v3474
        %3478 = vmatprep.subr.mxu0 %v3263
        %3479 = vmatpush1.msra.mxu0 %v3262
        %3480 = vmatprep.subr.mxu0 %v3265
        %3481 = vmatpush1.msra.mxu0 %v3264
        %3482 = vmatprep.subr.mxu0 %v3267
        %3483 = vmatpush1.msra.mxu0 %v3266
        %3484 = vmatprep.subr.mxu0 %v3269
        %3485 = vmatpush1.msra.mxu0 %v3268
        %3486 = vmatprep.subr.mxu0 %v3271
        %3487 = vmatpush1.msra.mxu0 %v3270
        %3488 = vmatprep.subr.mxu0 %v3273
        %3489 = vmatpush1.msra.mxu0 %v3272
        %3490 = vmatprep.subr.mxu0 %v3275
        %3491 = vmatpush1.msra.mxu0 %v3274
        %3492 = vmatprep.subr.mxu0 %v3277
        %3493 = vmatpush1.msra.mxu0 %v3276
        %3494 = vmatprep.subr.mxu0 %v3279
        %3495 = vmatpush1.msra.mxu0 %v3278
        %3496 = vmatprep.subr.mxu0 %v3281
        %3497 = vmatpush1.msra.mxu0 %v3280
        %3498 = vmatprep.subr.mxu0 %v3283
        %3499 = vmatpush1.msra.mxu0 %v3282
        %3500 = vmatprep.subr.mxu0 %v3285
        %3501 = vmatpush1.msra.mxu0 %v3284
        %3502 = vmatprep.subr.mxu0 %v3287
        %3503 = vmatpush1.msra.mxu0 %v3286
        %3504 = vmatprep.subr.mxu0 %v3289
        %3505 = vmatpush1.msra.mxu0 %v3288
        %3506 = vmatprep.subr.mxu0 %v3291
        %3507 = vmatpush1.msra.mxu0 %v3290
        %3508 = vmatprep.subr.mxu0 %v3293
        %3509 = vmatpush1.msra.mxu0 %v3292
        %3510 = vmatprep.subr.mxu0 %v3295
        %3511 = vmatpush1.msra.mxu0 %v3294
        %3512 = vmatprep.subr.mxu0 %v3297
        %3513 = vmatpush1.msra.mxu0 %v3296
        %3514 = vmatprep.subr.mxu0 %v3299
        %3515 = vmatpush1.msra.mxu0 %v3298
        %3516 = vmatprep.subr.mxu0 %v3301
        %3517 = vmatpush1.msra.mxu0 %v3300
        %3518 = vmatprep.subr.mxu0 %v3303
        %3519 = vmatpush1.msra.mxu0 %v3302
        %3520 = vmatprep.subr.mxu0 %v3305
        %3521 = vmatpush1.msra.mxu0 %v3304
        %3522 = vmatprep.subr.mxu0 %v3307
        %3523 = vmatpush1.msra.mxu0 %v3306
        %3524 = vmatprep.subr.mxu0 %v3309
        %3525 = vmatpush1.msra.mxu0 %v3308
        %3526 = vmatprep.subr.mxu0 %v3311
        %3527 = vmatpush1.msra.mxu0 %v3310
        %3528 = vmatprep.subr.mxu0 %v3313
        %3529 = vmatpush1.msra.mxu0 %v3312
        %3530 = vmatprep.subr.mxu0 %v3315
        %3531 = vmatpush1.msra.mxu0 %v3314
        %3532 = vmatprep.subr.mxu0 %v3317
        %3533 = vmatpush1.msra.mxu0 %v3316
        %3534 = vmatprep.subr.mxu0 %v3319
        %3535 = vmatpush1.msra.mxu0 %v3318
        %3536 = vmatprep.subr.mxu0 %v3321
        %3537 = vmatpush1.msra.mxu0 %v3320
        %3538 = vmatprep.subr.mxu0 %v3323
        %3539 = vmatpush1.msra.mxu0 %v3322
        %3540 = vmatprep.subr.mxu0 %v3325
        %3541 = vmatpush1.msra.mxu0 %v3324
        %3542 = vmatprep.mubr.f32.mxu0 %v2886
        %3543 = vmatmul.mubr.f32.gmra.mrb[0].mxu0 %v2883
        %v3544 = vpop.f32.mrb[0].mxu0
        %v3545 = vadd.f32 0.0, %v3544
        %v3546 = vpop.f32.mrb[0].mxu0
        %v3547 = vadd.f32 0.0, %v3546
        %3548 = vdwg.mxu0
        %3549 = vmatprep.subr.mxu0 %v3327
        %3550 = vmatpush1.msra.mxu0 %v3326
        %3551 = vmatprep.subr.mxu0 %v3329
        %3552 = vmatpush1.msra.mxu0 %v3328
        %3553 = vmatprep.subr.mxu0 %v3331
        %3554 = vmatpush1.msra.mxu0 %v3330
        %3555 = vmatprep.subr.mxu0 %v3333
        %3556 = vmatpush1.msra.mxu0 %v3332
        %3557 = vmatprep.subr.mxu0 0.0
        %3558 = vmatpush1.msra.mxu0 0.0
        %3559 = vmatprep.subr.mxu0 0.0
        %3560 = vmatpush1.msra.mxu0 0.0
        %3561 = vmatprep.subr.mxu0 0.0
        %3562 = vmatpush1.msra.mxu0 0.0
        %3563 = vmatprep.subr.mxu0 0.0
        %3564 = vmatpush1.msra.mxu0 0.0
        %3565 = vmatprep.subr.mxu0 0.0
        %3566 = vmatpush1.msra.mxu0 0.0
        %3567 = vmatprep.subr.mxu0 0.0
        %3568 = vmatpush1.msra.mxu0 0.0
        %3569 = vmatprep.subr.mxu0 0.0
        %3570 = vmatpush1.msra.mxu0 0.0
        %3571 = vmatprep.subr.mxu0 0.0
        %3572 = vmatpush1.msra.mxu0 0.0
        %3573 = vmatprep.subr.mxu0 0.0
        %3574 = vmatpush1.msra.mxu0 0.0
        %3575 = vmatprep.subr.mxu0 0.0
        %3576 = vmatpush1.msra.mxu0 0.0
        %3577 = vmatprep.subr.mxu0 0.0
        %3578 = vmatpush1.msra.mxu0 0.0
        %3579 = vmatprep.subr.mxu0 0.0
        %3580 = vmatpush1.msra.mxu0 0.0
        %3581 = vmatprep.subr.mxu0 0.0
        %3582 = vmatpush1.msra.mxu0 0.0
        %3583 = vmatprep.subr.mxu0 0.0
        %3584 = vmatpush1.msra.mxu0 0.0
        %3585 = vmatprep.subr.mxu0 0.0
        %3586 = vmatpush1.msra.mxu0 0.0
        %3587 = vmatprep.subr.mxu0 0.0
        %3588 = vmatpush1.msra.mxu0 0.0
        %3589 = vmatprep.subr.mxu0 0.0
        %3590 = vmatpush1.msra.mxu0 0.0
        %3591 = vmatprep.subr.mxu0 0.0
        %3592 = vmatpush1.msra.mxu0 0.0
        %3593 = vmatprep.subr.mxu0 0.0
        %3594 = vmatpush1.msra.mxu0 0.0
        %3595 = vmatprep.subr.mxu0 0.0
        %3596 = vmatpush1.msra.mxu0 0.0
        %3597 = vmatprep.subr.mxu0 0.0
        %3598 = vmatpush1.msra.mxu0 0.0
        %3599 = vmatprep.subr.mxu0 0.0
        %3600 = vmatpush1.msra.mxu0 0.0
        %3601 = vmatprep.subr.mxu0 0.0
        %3602 = vmatpush1.msra.mxu0 0.0
        %3603 = vmatprep.subr.mxu0 0.0
        %3604 = vmatpush1.msra.mxu0 0.0
        %3605 = vmatprep.subr.mxu0 0.0
        %3606 = vmatpush1.msra.mxu0 0.0
        %3607 = vmatprep.subr.mxu0 0.0
        %3608 = vmatpush1.msra.mxu0 0.0
        %3609 = vmatprep.subr.mxu0 0.0
        %3610 = vmatpush1.msra.mxu0 0.0
        %3611 = vmatprep.subr.mxu0 0.0
        %3612 = vmatpush1.msra.mxu0 0.0
        %3613 = vmatprep.mubr.f32.mxu0 0.0
        %3614 = vmatmul.mubr.f32.gmra.mrb[0].mxu0 %v2892
        %v3615 = vpop.f32.mrb[0].mxu0
        %v3616 = vadd.f32 %v3545, %v3615
        %v3617 = vpop.f32.mrb[0].mxu0
        %v3618 = vadd.f32 %v3547, %v3617
        %3619 = vdwg.mxu0
        %v3620 = vadd.f32 %v2872, %v3616
        %v3621 = vadd.f32 %v2873, %v3618
        %v3628 = vrot.slane %v3182, 2
        %v3629 = vrot.slane %v3185, 2
        %v3630 = vsel %vm2880, %v3628, %v3629
        %v3631 = vrot.slane %v3183, 2
        %v3632 = vrot.slane %v3186, 2
        %v3633 = vsel %vm2880, %v3631, %v3632
        %v3634 = vrot.slane %v3184, 2
        %v3635 = vrot.slane %v3187, 2
        %v3636 = vsel %vm2880, %v3634, %v3635
        %v3639 = vsel %vm546, %v3636, 0
        %3641 = vmatprep.subr.mxu0 %v3190
        %3642 = vmatpush1.msra.mxu0 %v3189
        %3643 = vmatprep.subr.mxu0 %v3192
        %3644 = vmatpush1.msra.mxu0 %v3191
        %3645 = vmatprep.subr.mxu0 %v3194
        %3646 = vmatpush1.msra.mxu0 %v3193
        %3647 = vmatprep.subr.mxu0 %v3196
        %3648 = vmatpush1.msra.mxu0 %v3195
        %3649 = vmatprep.subr.mxu0 %v3198
        %3650 = vmatpush1.msra.mxu0 %v3197
        %3651 = vmatprep.subr.mxu0 %v3200
        %3652 = vmatpush1.msra.mxu0 %v3199
        %3653 = vmatprep.subr.mxu0 %v3202
        %3654 = vmatpush1.msra.mxu0 %v3201
        %3655 = vmatprep.subr.mxu0 %v3204
        %3656 = vmatpush1.msra.mxu0 %v3203
        %3657 = vmatprep.subr.mxu0 %v3206
        %3658 = vmatpush1.msra.mxu0 %v3205
        %3659 = vmatprep.subr.mxu0 %v3208
        %3660 = vmatpush1.msra.mxu0 %v3207
        %3661 = vmatprep.subr.mxu0 %v3210
        %3662 = vmatpush1.msra.mxu0 %v3209
        %3663 = vmatprep.subr.mxu0 %v3212
        %3664 = vmatpush1.msra.mxu0 %v3211
        %3665 = vmatprep.subr.mxu0 %v3214
        %3666 = vmatpush1.msra.mxu0 %v3213
        %3667 = vmatprep.subr.mxu0 %v3216
        %3668 = vmatpush1.msra.mxu0 %v3215
        %3669 = vmatprep.subr.mxu0 %v3218
        %3670 = vmatpush1.msra.mxu0 %v3217
        %3671 = vmatprep.subr.mxu0 %v3220
        %3672 = vmatpush1.msra.mxu0 %v3219
        %3673 = vmatprep.subr.mxu0 %v3222
        %3674 = vmatpush1.msra.mxu0 %v3221
        %3675 = vmatprep.subr.mxu0 %v3224
        %3676 = vmatpush1.msra.mxu0 %v3223
        %3677 = vmatprep.subr.mxu0 %v3226
        %3678 = vmatpush1.msra.mxu0 %v3225
        %3679 = vmatprep.subr.mxu0 %v3228
        %3680 = vmatpush1.msra.mxu0 %v3227
        %3681 = vmatprep.subr.mxu0 %v3230
        %3682 = vmatpush1.msra.mxu0 %v3229
        %3683 = vmatprep.subr.mxu0 %v3232
        %3684 = vmatpush1.msra.mxu0 %v3231
        %3685 = vmatprep.subr.mxu0 %v3234
        %3686 = vmatpush1.msra.mxu0 %v3233
        %3687 = vmatprep.subr.mxu0 %v3236
        %3688 = vmatpush1.msra.mxu0 %v3235
        %3689 = vmatprep.subr.mxu0 %v3238
        %3690 = vmatpush1.msra.mxu0 %v3237
        %3691 = vmatprep.subr.mxu0 %v3240
        %3692 = vmatpush1.msra.mxu0 %v3239
        %3693 = vmatprep.subr.mxu0 %v3242
        %3694 = vmatpush1.msra.mxu0 %v3241
        %3695 = vmatprep.subr.mxu0 %v3244
        %3696 = vmatpush1.msra.mxu0 %v3243
        %3697 = vmatprep.subr.mxu0 %v3246
        %3698 = vmatpush1.msra.mxu0 %v3245
        %3699 = vmatprep.subr.mxu0 %v3248
        %3700 = vmatpush1.msra.mxu0 %v3247
        %3701 = vmatprep.subr.mxu0 %v3250
        %3702 = vmatpush1.msra.mxu0 %v3249
        %3703 = vmatprep.subr.mxu0 %v3252
        %3704 = vmatpush1.msra.mxu0 %v3251
        %3705 = vmatprep.mubr.f32.mxu0 %v3633
        %3706 = vmatmul.mubr.f32.gmra.mrb[0].mxu0 %v3630
        %v3707 = vpop.f32.mrb[0].mxu0
        %v3708 = vadd.f32 0.0, %v3707
        %v3709 = vpop.f32.mrb[0].mxu0
        %v3710 = vadd.f32 0.0, %v3709
        %3711 = vdwg.mxu0
        %3712 = vmatprep.subr.mxu0 %v3254
        %3713 = vmatpush1.msra.mxu0 %v3253
        %3714 = vmatprep.subr.mxu0 %v3256
        %3715 = vmatpush1.msra.mxu0 %v3255
        %3716 = vmatprep.subr.mxu0 %v3258
        %3717 = vmatpush1.msra.mxu0 %v3257
        %3718 = vmatprep.subr.mxu0 %v3260
        %3719 = vmatpush1.msra.mxu0 %v3259
        %3720 = vmatprep.subr.mxu0 0.0
        %3721 = vmatpush1.msra.mxu0 0.0
        %3722 = vmatprep.subr.mxu0 0.0
        %3723 = vmatpush1.msra.mxu0 0.0
        %3724 = vmatprep.subr.mxu0 0.0
        %3725 = vmatpush1.msra.mxu0 0.0
        %3726 = vmatprep.subr.mxu0 0.0
        %3727 = vmatpush1.msra.mxu0 0.0
        %3728 = vmatprep.subr.mxu0 0.0
        %3729 = vmatpush1.msra.mxu0 0.0
        %3730 = vmatprep.subr.mxu0 0.0
        %3731 = vmatpush1.msra.mxu0 0.0
        %3732 = vmatprep.subr.mxu0 0.0
        %3733 = vmatpush1.msra.mxu0 0.0
        %3734 = vmatprep.subr.mxu0 0.0
        %3735 = vmatpush1.msra.mxu0 0.0
        %3736 = vmatprep.subr.mxu0 0.0
        %3737 = vmatpush1.msra.mxu0 0.0
        %3738 = vmatprep.subr.mxu0 0.0
        %3739 = vmatpush1.msra.mxu0 0.0
        %3740 = vmatprep.subr.mxu0 0.0
        %3741 = vmatpush1.msra.mxu0 0.0
        %3742 = vmatprep.subr.mxu0 0.0
        %3743 = vmatpush1.msra.mxu0 0.0
        %3744 = vmatprep.subr.mxu0 0.0
        %3745 = vmatpush1.msra.mxu0 0.0
        %3746 = vmatprep.subr.mxu0 0.0
        %3747 = vmatpush1.msra.mxu0 0.0
        %3748 = vmatprep.subr.mxu0 0.0
        %3749 = vmatpush1.msra.mxu0 0.0
        %3750 = vmatprep.subr.mxu0 0.0
        %3751 = vmatpush1.msra.mxu0 0.0
        %3752 = vmatprep.subr.mxu0 0.0
        %3753 = vmatpush1.msra.mxu0 0.0
        %3754 = vmatprep.subr.mxu0 0.0
        %3755 = vmatpush1.msra.mxu0 0.0
        %3756 = vmatprep.subr.mxu0 0.0
        %3757 = vmatpush1.msra.mxu0 0.0
        %3758 = vmatprep.subr.mxu0 0.0
        %3759 = vmatpush1.msra.mxu0 0.0
        %3760 = vmatprep.subr.mxu0 0.0
        %3761 = vmatpush1.msra.mxu0 0.0
        %3762 = vmatprep.subr.mxu0 0.0
        %3763 = vmatpush1.msra.mxu0 0.0
        %3764 = vmatprep.subr.mxu0 0.0
        %3765 = vmatpush1.msra.mxu0 0.0
        %3766 = vmatprep.subr.mxu0 0.0
        %3767 = vmatpush1.msra.mxu0 0.0
        %3768 = vmatprep.subr.mxu0 0.0
        %3769 = vmatpush1.msra.mxu0 0.0
        %3770 = vmatprep.subr.mxu0 0.0
        %3771 = vmatpush1.msra.mxu0 0.0
        %3772 = vmatprep.subr.mxu0 0.0
        %3773 = vmatpush1.msra.mxu0 0.0
        %3774 = vmatprep.subr.mxu0 0.0
        %3775 = vmatpush1.msra.mxu0 0.0
        %3776 = vmatprep.mubr.f32.mxu0 0.0
        %3777 = vmatmul.mubr.f32.gmra.mrb[0].mxu0 %v3639
        %v3778 = vpop.f32.mrb[0].mxu0
        %v3779 = vadd.f32 %v3708, %v3778
        %v3780 = vpop.f32.mrb[0].mxu0
        %v3781 = vadd.f32 %v3710, %v3780
        %3782 = vdwg.mxu0
        %v3783 = vadd.f32 %v3036, %v3779
        %v3784 = vadd.f32 %v3037, %v3781
        %3785 = vmatprep.subr.mxu0 %v3263
        %3786 = vmatpush1.msra.mxu0 %v3262
        %3787 = vmatprep.subr.mxu0 %v3265
        %3788 = vmatpush1.msra.mxu0 %v3264
        %3789 = vmatprep.subr.mxu0 %v3267
        %3790 = vmatpush1.msra.mxu0 %v3266
        %3791 = vmatprep.subr.mxu0 %v3269
        %3792 = vmatpush1.msra.mxu0 %v3268
        %3793 = vmatprep.subr.mxu0 %v3271
        %3794 = vmatpush1.msra.mxu0 %v3270
        %3795 = vmatprep.subr.mxu0 %v3273
        %3796 = vmatpush1.msra.mxu0 %v3272
        %3797 = vmatprep.subr.mxu0 %v3275
        %3798 = vmatpush1.msra.mxu0 %v3274
        %3799 = vmatprep.subr.mxu0 %v3277
        %3800 = vmatpush1.msra.mxu0 %v3276
        %3801 = vmatprep.subr.mxu0 %v3279
        %3802 = vmatpush1.msra.mxu0 %v3278
        %3803 = vmatprep.subr.mxu0 %v3281
        %3804 = vmatpush1.msra.mxu0 %v3280
        %3805 = vmatprep.subr.mxu0 %v3283
        %3806 = vmatpush1.msra.mxu0 %v3282
        %3807 = vmatprep.subr.mxu0 %v3285
        %3808 = vmatpush1.msra.mxu0 %v3284
        %3809 = vmatprep.subr.mxu0 %v3287
        %3810 = vmatpush1.msra.mxu0 %v3286
        %3811 = vmatprep.subr.mxu0 %v3289
        %3812 = vmatpush1.msra.mxu0 %v3288
        %3813 = vmatprep.subr.mxu0 %v3291
        %3814 = vmatpush1.msra.mxu0 %v3290
        %3815 = vmatprep.subr.mxu0 %v3293
        %3816 = vmatpush1.msra.mxu0 %v3292
        %3817 = vmatprep.subr.mxu0 %v3295
        %3818 = vmatpush1.msra.mxu0 %v3294
        %3819 = vmatprep.subr.mxu0 %v3297
        %3820 = vmatpush1.msra.mxu0 %v3296
        %3821 = vmatprep.subr.mxu0 %v3299
        %3822 = vmatpush1.msra.mxu0 %v3298
        %3823 = vmatprep.subr.mxu0 %v3301
        %3824 = vmatpush1.msra.mxu0 %v3300
        %3825 = vmatprep.subr.mxu0 %v3303
        %3826 = vmatpush1.msra.mxu0 %v3302
        %3827 = vmatprep.subr.mxu0 %v3305
        %3828 = vmatpush1.msra.mxu0 %v3304
        %3829 = vmatprep.subr.mxu0 %v3307
        %3830 = vmatpush1.msra.mxu0 %v3306
        %3831 = vmatprep.subr.mxu0 %v3309
        %3832 = vmatpush1.msra.mxu0 %v3308
        %3833 = vmatprep.subr.mxu0 %v3311
        %3834 = vmatpush1.msra.mxu0 %v3310
        %3835 = vmatprep.subr.mxu0 %v3313
        %3836 = vmatpush1.msra.mxu0 %v3312
        %3837 = vmatprep.subr.mxu0 %v3315
        %3838 = vmatpush1.msra.mxu0 %v3314
        %3839 = vmatprep.subr.mxu0 %v3317
        %3840 = vmatpush1.msra.mxu0 %v3316
        %3841 = vmatprep.subr.mxu0 %v3319
        %3842 = vmatpush1.msra.mxu0 %v3318
        %3843 = vmatprep.subr.mxu0 %v3321
        %3844 = vmatpush1.msra.mxu0 %v3320
        %3845 = vmatprep.subr.mxu0 %v3323
        %3846 = vmatpush1.msra.mxu0 %v3322
        %3847 = vmatprep.subr.mxu0 %v3325
        %3848 = vmatpush1.msra.mxu0 %v3324
        %3849 = vmatprep.mubr.f32.mxu0 %v3633
        %3850 = vmatmul.mubr.f32.gmra.mrb[0].mxu0 %v3630
        %v3851 = vpop.f32.mrb[0].mxu0
        %v3852 = vadd.f32 0.0, %v3851
        %v3853 = vpop.f32.mrb[0].mxu0
        %v3854 = vadd.f32 0.0, %v3853
        %3855 = vdwg.mxu0
        %3856 = vmatprep.subr.mxu0 %v3327
        %3857 = vmatpush1.msra.mxu0 %v3326
        %3858 = vmatprep.subr.mxu0 %v3329
        %3859 = vmatpush1.msra.mxu0 %v3328
        %3860 = vmatprep.subr.mxu0 %v3331
        %3861 = vmatpush1.msra.mxu0 %v3330
        %3862 = vmatprep.subr.mxu0 %v3333
        %3863 = vmatpush1.msra.mxu0 %v3332
        %3864 = vmatprep.subr.mxu0 0.0
        %3865 = vmatpush1.msra.mxu0 0.0
        %3866 = vmatprep.subr.mxu0 0.0
        %3867 = vmatpush1.msra.mxu0 0.0
        %3868 = vmatprep.subr.mxu0 0.0
        %3869 = vmatpush1.msra.mxu0 0.0
        %3870 = vmatprep.subr.mxu0 0.0
        %3871 = vmatpush1.msra.mxu0 0.0
        %3872 = vmatprep.subr.mxu0 0.0
        %3873 = vmatpush1.msra.mxu0 0.0
        %3874 = vmatprep.subr.mxu0 0.0
        %3875 = vmatpush1.msra.mxu0 0.0
        %3876 = vmatprep.subr.mxu0 0.0
        %3877 = vmatpush1.msra.mxu0 0.0
        %3878 = vmatprep.subr.mxu0 0.0
        %3879 = vmatpush1.msra.mxu0 0.0
        %3880 = vmatprep.subr.mxu0 0.0
        %3881 = vmatpush1.msra.mxu0 0.0
        %3882 = vmatprep.subr.mxu0 0.0
        %3883 = vmatpush1.msra.mxu0 0.0
        %3884 = vmatprep.subr.mxu0 0.0
        %3885 = vmatpush1.msra.mxu0 0.0
        %3886 = vmatprep.subr.mxu0 0.0
        %3887 = vmatpush1.msra.mxu0 0.0
        %3888 = vmatprep.subr.mxu0 0.0
        %3889 = vmatpush1.msra.mxu0 0.0
        %3890 = vmatprep.subr.mxu0 0.0
        %3891 = vmatpush1.msra.mxu0 0.0
        %3892 = vmatprep.subr.mxu0 0.0
        %3893 = vmatpush1.msra.mxu0 0.0
        %3894 = vmatprep.subr.mxu0 0.0
        %3895 = vmatpush1.msra.mxu0 0.0
        %3896 = vmatprep.subr.mxu0 0.0
        %3897 = vmatpush1.msra.mxu0 0.0
        %3898 = vmatprep.subr.mxu0 0.0
        %3899 = vmatpush1.msra.mxu0 0.0
        %3900 = vmatprep.subr.mxu0 0.0
        %3901 = vmatpush1.msra.mxu0 0.0
        %3902 = vmatprep.subr.mxu0 0.0
        %3903 = vmatpush1.msra.mxu0 0.0
        %3904 = vmatprep.subr.mxu0 0.0
        %3905 = vmatpush1.msra.mxu0 0.0
        %3906 = vmatprep.subr.mxu0 0.0
        %3907 = vmatpush1.msra.mxu0 0.0
        %3908 = vmatprep.subr.mxu0 0.0
        %3909 = vmatpush1.msra.mxu0 0.0
        %3910 = vmatprep.subr.mxu0 0.0
        %3911 = vmatpush1.msra.mxu0 0.0
        %3912 = vmatprep.subr.mxu0 0.0
        %3913 = vmatpush1.msra.mxu0 0.0
        %3914 = vmatprep.subr.mxu0 0.0
        %3915 = vmatpush1.msra.mxu0 0.0
        %3916 = vmatprep.subr.mxu0 0.0
        %3917 = vmatpush1.msra.mxu0 0.0
        %3918 = vmatprep.subr.mxu0 0.0
        %3919 = vmatpush1.msra.mxu0 0.0
        %3920 = vmatprep.mubr.f32.mxu0 0.0
        %3921 = vmatmul.mubr.f32.gmra.mrb[0].mxu0 %v3639
        %v3922 = vpop.f32.mrb[0].mxu0
        %v3923 = vadd.f32 %v3852, %v3922
        %v3924 = vpop.f32.mrb[0].mxu0
        %v3925 = vadd.f32 %v3854, %v3924
        %3926 = vdwg.mxu0
        %v3927 = vadd.f32 %v3180, %v3923
        %v3928 = vadd.f32 %v3181, %v3925
        %v3929 = vmax.f32 %v3476, %v3620
        %v3930 = vmax.f32 %v3477, %v3621
        %v3931 = vmax.f32 %v3783, %v3927
        %v3932 = vmax.f32 %v3784, %v3928
        %v3933 = vmax.f32 %v3929, %v3931
        %v3934 = vmax.f32 %v3930, %v3932
        %v3935 = vld [vmem:[#allocation4] sm:$0x3]
        %v3937 = vlaneseq
        %v3938 = vshrl.u32 %v3937, 7
        %v3939 = vsub.s32 0, %v3938
        %v3940 = vrot.slane %v3935, %v3939
        %v3941 = vlaneseq
        %v3942 = vshrl.u32 %v3941, 7
        %v3943 = vsub.s32 1, %v3942
        %v3944 = vrot.slane %v3935, %v3943
        %v3947 = vadd.f32 %v3933, %v3940
        %v3948 = vadd.f32 %v3934, %v3944
        %v3949 = vmax.f32 %v3947, 0.0
        %v3950 = vmax.f32 %v3948, 0.0
        %3951 = vst [vmem:[%s245] sm:$0x7f] %v3949
        %vm3952 = vcmask 784384
        %3953 = vst.msk [vmem:[%s245 + $0x8] sm:$0x7f] %vm3952, %v3950
        %p3954 = scmp.lt.s32.totalorder %s17, 1
        %s3955 = scalar_select %p3954, %s17, 1
        %s3956 = smul.addr %s3955, 2
        %s3957 = smul.addr %s3956, 8
        %s3958 = scalar_lea.vmem %s4, %s3957
        // Predicated region
        $region45: #{cnn_forward.4} parent=35 // pred_check
          %p3959 = pneg %p129
        $region46: #{cnn_forward.4} parent=35 // pred_check_branch
          %3961 = sbr.rel (%p3959) target = $region48
        $region47: #{cnn_forward.4} parent=35 // pred_region
          _
        $region48: #{cnn_forward.4} parent=35 // pred_fallthru
          _
      $region36: #{cnn_forward.4} parent=5 // pred_fallthru
        _
      %p3962 = scmp.le.s32.totalorder 2, %s12
      // Predicated region
      $region49: #{cnn_forward.4} parent=5 // pred_check
        %p3963 = pneg %p3962
      $region50: #{cnn_forward.4} parent=5 // pred_check_branch
        %3965 = sbr.rel (%p3963) target = $region52
      $region51: #{cnn_forward.4} parent=5 // pred_region
        %s3966 = ssub.s32 %s12, 2
        // Predicated region
        $region53: #{cnn_forward.4} parent=51 // pred_check
          %p3967 = pneg %p135
        $region54: #{cnn_forward.4} parent=51 // pred_check_branch
          %3969 = sbr.rel (%p3967) target = $region56
        $region55: #{cnn_forward.4} parent=51 // pred_region
          %p3970 = scmp.lt.s32.totalorder %s18, 1
          %s3971 = scalar_select %p3970, %s18, 1
          %s3972 = smul.addr %s3971, 2
          %s3973 = smul.addr %s3972, 8
          %s3974 = scalar_lea.vmem %s4, %s3973
        $region56: #{cnn_forward.4} parent=51 // pred_fallthru
          _
      $region52: #{cnn_forward.4} parent=5 // pred_fallthru
        _
    $region6: #{cnn_forward.4} parent=1 // loop_footer
      %s16 = sadd.s32 1, %s12
    $region7: #{cnn_forward.4} parent=1 // loop_footer_branch
      %11 = sbr.rel target = $region3
    $region8: #{cnn_forward.4} parent=1 // loop_exit
      _
    %3975 = vsyncpa [#allocation3], 1
    %s3976 = scalar_lea.sflag [#allocation3], 1
    %3977 = vsyncpa %s3976, 1
    %3978 = vsyncpa [#allocation5], 1

</llo_original>
